<compile_context>
chip_gen: v5e
topology: v5e:2x2
jax: 0.10.0
libtpu: 0.0.40
codegen_flags: <defaults>
</compile_context>

<pallas_src>
import math
from functools import partial

import jax
import jax.numpy as jnp
from jax import lax
from jax.experimental import pallas as pl
from jax.experimental.pallas import tpu as pltpu

# ----------------------------- model config -----------------------------
VOCAB = 40            # len(symbols) + 1
D_MODEL = 32          # transformer encoder/decoder hidden
N_HEADS = 2
D_HEAD = D_MODEL // N_HEADS
FFN_FILTER = 64
FFN_KERNELS = (3, 1)  # position-wise FFN conv kernel sizes
N_ENC_LAYERS = 2
N_DEC_LAYERS = 2
VP_FILTER = 32        # variance predictor filter size
VP_KERNEL = 3
N_BINS = 32           # pitch / energy quantization bins
N_MEL = 16            # n_mel_channels
POST_KERNEL = 5
POST_LAYERS = 3
MAX_MEL = 32          # static max frame length after length regulation
MAX_POS = 64          # positional-encoding table size


# ----------------------- in-kernel helper functions -----------------------
def _ln(x, g, b):
    """LayerNorm over the last axis. x: (M, C); g, b: (1, C)."""
    mu = jnp.mean(x, axis=-1, keepdims=True)
    var = jnp.mean((x - mu) ** 2, axis=-1, keepdims=True)
    return (x - mu) * lax.rsqrt(var + 1e-5) * g + b


def _shift_rows(x, s):
    """result[t] = x[t + s] with zero padding at the boundary.  x: (T, C)."""
    if s == 0:
        return x
    C = x.shape[1]
    z = jnp.zeros((abs(s), C), x.dtype)
    if s > 0:
        return jnp.concatenate([x[s:, :], z], axis=0)
    return jnp.concatenate([z, x[:s, :]], axis=0)


def _conv_same(x, w, b, ksize, activation):
    """'same'-padded 1-D conv via im2col: ONE dot of (T, k*Cin)@(k*Cin, Cout).

    x: (T, Cin); w: (k*Cin, Cout) (tap-major rows); b: (1, Cout).
    The halo is assembled in VMEM (no HBM pad round-trip).
    """
    if ksize == 1:
        col = x
    else:
        pad = (ksize - 1) // 2
        col = jnp.concatenate(
            [_shift_rows(x, tap - pad) for tap in range(ksize)], axis=-1)
    y = jnp.dot(col, w, preferred_element_type=jnp.float32) + b
    if activation == "relu":
        y = jnp.maximum(y, 0.0)
    elif activation == "tanh":
        y = jnp.tanh(y)
    return y


def _fft_stack(x, bias, keep, Wl, n_layers):
    """Stack of FFT blocks (self-attention + conv FFN), all in VMEM.

    x: (T, D); bias: (1, T) additive key mask; keep: (T, 1) multiplicative mask.
    Wl: dict of per-layer-stacked weight refs (leading axis = layer index).
    """
    scale = 1.0 / math.sqrt(D_HEAD)
    for l in range(n_layers):
        resid = x
        q = jnp.dot(x, Wl['wq'][l], preferred_element_type=jnp.float32) + Wl['bq'][l]
        k = jnp.dot(x, Wl['wk'][l], preferred_element_type=jnp.float32) + Wl['bk'][l]
        v = jnp.dot(x, Wl['wv'][l], preferred_element_type=jnp.float32) + Wl['bv'][l]
        wo = Wl['wo'][l]
        acc = Wl['bo'][l]                                       # (1, D) -> broadcast
        for h in range(N_HEADS):                                # heads = static lane slices
            sl = slice(h * D_HEAD, (h + 1) * D_HEAD)
            qh, kh, vh = q[:, sl], k[:, sl], v[:, sl]
            s = jnp.einsum('td,sd->ts', qh, kh,
                           preferred_element_type=jnp.float32) * scale + bias
            s = s - jnp.max(s, axis=-1, keepdims=True)
            p = jnp.exp(s)
            p = p * pl.reciprocal(jnp.sum(p, axis=-1, keepdims=True), approx=True)
            oh = jnp.dot(p, vh, preferred_element_type=jnp.float32)
            # output projection split per head (avoids a head concat)
            acc = acc + jnp.dot(oh, wo[sl, :], preferred_element_type=jnp.float32)
        x = _ln(acc + resid, Wl['ln1_g'][l], Wl['ln1_b'][l]) * keep

        resid = x
        h1 = _conv_same(x, Wl['c1_w'][l], Wl['c1_b'][l], FFN_KERNELS[0], "relu")
        h2 = _conv_same(h1, Wl['c2_w'][l], Wl['c2_b'][l], FFN_KERNELS[1], "none")
        x = _ln(h2 + resid, Wl['ln2_g'][l], Wl['ln2_b'][l]) * keep
    return x


def _bucket_embed(val, bins_row, emb):
    """In-kernel bucketize + embedding lookup (one-hot matmul).

    val: (T, 1); bins_row: (1, N_BINS-1); emb: (N_BINS, D) -> (T, D).
    """
    T = val.shape[0]
    idx = jnp.sum((bins_row < val).astype(jnp.int32), axis=-1, keepdims=True)
    onehot = (idx == lax.broadcasted_iota(jnp.int32, (T, N_BINS), 1)).astype(jnp.float32)
    return jnp.dot(onehot, emb, preferred_element_type=jnp.float32)


# ----------------------------- fused kernels -----------------------------
def _stage1_kernel(x_ref, bias_ref, keep_ref, *rest,
                   treedef, n_w, pitch_scale, energy_scale):
    """Encoder (N_ENC_LAYERS FFT blocks) + variance adaptor (pre length-regulator)."""
    W = jax.tree_util.tree_unflatten(treedef, list(rest[:n_w]))
    xa_ref, ld_ref, pt_ref, en_ref = rest[n_w:]

    x = x_ref[0]          # (T, D)  — phoneme emb + pos, already masked
    bias = bias_ref[0]    # (1, T)  — additive key-padding mask
    keep = keep_ref[0]    # (T, 1)  — 1.0 keep / 0.0 pad

    x = _fft_stack(x, bias, keep, W['enc'], N_ENC_LAYERS)

    def vp(xin, i):
        Wv = W['vp']
        h = _conv_same(xin, Wv['c1_w'][i], Wv['c1_b'][i], VP_KERNEL, "relu")
        h = _ln(h, Wv['ln1_g'][i], Wv['ln1_b'][i])
        h = _conv_same(h, Wv['c2_w'][i], Wv['c2_b'][i], VP_KERNEL, "relu")
        h = _ln(h, Wv['ln2_g'][i], Wv['ln2_b'][i])
        out = jnp.dot(h, Wv['lin_w'][i],
                      preferred_element_type=jnp.float32) + Wv['lin_b'][i]
        return out * keep                                   # (T, 1) masked

    log_dur = vp(x, 0)
    pitch = vp(x, 1) * pitch_scale
    x = x + _bucket_embed(pitch, W['bins'][0], W['var_emb'][0])
    energy = vp(x, 2) * energy_scale
    x = x + _bucket_embed(energy, W['bins'][1], W['var_emb'][1])

    xa_ref[0] = x
    ld_ref[0] = log_dur
    pt_ref[0] = pitch
    en_ref[0] = energy


def _stage2_kernel(x_ref, bias_ref, keep_ref, *rest, treedef, n_w):
    """Decoder (N_DEC_LAYERS FFT blocks) + mel linear + postnet."""
    W = jax.tree_util.tree_unflatten(treedef, list(rest[:n_w]))
    mel_ref, post_ref = rest[n_w:]

    x = x_ref[0]          # (MAX_MEL, D) — expanded frames + pos, masked
    bias = bias_ref[0]
    keep = keep_ref[0]

    x = _fft_stack(x, bias, keep, W['dec'], N_DEC_LAYERS)
    mel = jnp.dot(x, W['mel_w'][...],
                  preferred_element_type=jnp.float32) + W['mel_b'][...]

    # TODO(synk): reference PostNet uses BatchNorm between conv layers; omitted
    # (inference-mode forward with synthetic weights).
    P = W['post']
    h = _conv_same(mel, P['w0'][...], P['b0'][...], POST_KERNEL, "tanh")
    h = _conv_same(h, P['w1'][...], P['b1'][...], POST_KERNEL, "tanh")
    h = _conv_same(h, P['w2'][...], P['b2'][...], POST_KERNEL, "none")

    mel_ref[0] = mel
    post_ref[0] = h + mel


# ----------------------------- call wrappers -----------------------------
def _bspec(shape):
    """Per-batch block (grid axis 0 selects the batch row)."""
    nd = len(shape)
    blk = (1,) + tuple(shape[1:])
    return pl.BlockSpec(blk, lambda b, _n=nd: (b,) + (0,) * (_n - 1))


def _wspec(arr):
    """Full-array weight block, identical for every grid step (VMEM-resident)."""
    nd = arr.ndim
    return pl.BlockSpec(arr.shape, lambda b, _n=nd: (0,) * _n)


def _run_stage1(x, bias, keep, wtree, pitch_scale, energy_scale):
    B, T, D = x.shape
    leaves, treedef = jax.tree_util.tree_flatten(wtree)
    kernel = partial(_stage1_kernel, treedef=treedef, n_w=len(leaves),
                     pitch_scale=float(pitch_scale),
                     energy_scale=float(energy_scale))
    out_shape = (jax.ShapeDtypeStruct((B, T, D), jnp.float32),
                 jax.ShapeDtypeStruct((B, T, 1), jnp.float32),
                 jax.ShapeDtypeStruct((B, T, 1), jnp.float32),
                 jax.ShapeDtypeStruct((B, T, 1), jnp.float32))
    return pl.pallas_call(
        kernel,
        out_shape=out_shape,
        grid=(B,),
        in_specs=[_bspec(x.shape), _bspec(bias.shape), _bspec(keep.shape)]
                 + [_wspec(l) for l in leaves],
        out_specs=tuple(_bspec(s.shape) for s in out_shape),
        compiler_params=pltpu.CompilerParams(dimension_semantics=("parallel",)),
    )(x, bias, keep, *leaves)


def _run_stage2(x, bias, keep, wtree):
    B, Tm, D = x.shape
    leaves, treedef = jax.tree_util.tree_flatten(wtree)
    kernel = partial(_stage2_kernel, treedef=treedef, n_w=len(leaves))
    out_shape = (jax.ShapeDtypeStruct((B, Tm, N_MEL), jnp.float32),
                 jax.ShapeDtypeStruct((B, Tm, N_MEL), jnp.float32))
    return pl.pallas_call(
        kernel,
        out_shape=out_shape,
        grid=(B,),
        in_specs=[_bspec(x.shape), _bspec(bias.shape), _bspec(keep.shape)]
                 + [_wspec(l) for l in leaves],
        out_specs=tuple(_bspec(s.shape) for s in out_shape),
        compiler_params=pltpu.CompilerParams(dimension_semantics=("parallel",)),
    )(x, bias, keep, *leaves)


# ----------------------------- parameters -----------------------------
def _init(key, shape, scale=0.02):
    return (scale * jax.random.normal(key, shape)).astype(jnp.float32)


def _sinusoid_table(n_pos, d):
    pos = jnp.arange(n_pos, dtype=jnp.float32)[:, None]
    i = jnp.arange(d, dtype=jnp.float32)[None, :]
    angle = pos / jnp.power(10000.0, (2.0 * jnp.floor(i / 2.0)) / d)
    table = jnp.where((jnp.arange(d) % 2)[None, :] == 0,
                      jnp.sin(angle), jnp.cos(angle))
    return table.astype(jnp.float32)


def _init_fft_stack(nk, n_layers):
    k1, k2 = FFN_KERNELS
    z = lambda *s: jnp.zeros(s, jnp.float32)
    o = lambda *s: jnp.ones(s, jnp.float32)

    def one():
        return dict(
            wq=_init(nk(), (D_MODEL, D_MODEL)), bq=z(1, D_MODEL),
            wk=_init(nk(), (D_MODEL, D_MODEL)), bk=z(1, D_MODEL),
            wv=_init(nk(), (D_MODEL, D_MODEL)), bv=z(1, D_MODEL),
            wo=_init(nk(), (D_MODEL, D_MODEL)), bo=z(1, D_MODEL),
            ln1_g=o(1, D_MODEL), ln1_b=z(1, D_MODEL),
            c1_w=_init(nk(), (k1 * D_MODEL, FFN_FILTER)), c1_b=z(1, FFN_FILTER),
            c2_w=_init(nk(), (k2 * FFN_FILTER, D_MODEL)), c2_b=z(1, D_MODEL),
            ln2_g=o(1, D_MODEL), ln2_b=z(1, D_MODEL),
        )

    layers = [one() for _ in range(n_layers)]
    return jax.tree_util.tree_map(lambda *xs: jnp.stack(xs, axis=0), *layers)


def _init_vp_stack(nk):
    z = lambda *s: jnp.zeros(s, jnp.float32)
    o = lambda *s: jnp.ones(s, jnp.float32)

    def one(out_bias):
        return dict(
            c1_w=_init(nk(), (VP_KERNEL * D_MODEL, VP_FILTER)), c1_b=z(1, VP_FILTER),
            ln1_g=o(1, VP_FILTER), ln1_b=z(1, VP_FILTER),
            c2_w=_init(nk(), (VP_KERNEL * VP_FILTER, VP_FILTER)), c2_b=z(1, VP_FILTER),
            ln2_g=o(1, VP_FILTER), ln2_b=z(1, VP_FILTER),
            lin_w=_init(nk(), (VP_FILTER, 1)),
            lin_b=jnp.full((1, 1), out_bias, jnp.float32),
        )

    preds = [one(1.0), one(0.0), one(0.0)]        # duration, pitch, energy
    return jax.tree_util.tree_map(lambda *xs: jnp.stack(xs, axis=0), *preds)


def init_params(key):
    keys = iter(jax.random.split(key, 128))
    nk = lambda: next(keys)

    phoneme_emb = _init(nk(), (VOCAB, D_MODEL), scale=0.1).at[0].set(0.0)  # padding_idx=0
    bins = jnp.stack(
        [jnp.linspace(-2.0, 2.0, N_BINS - 1, dtype=jnp.float32)] * 2, axis=0)[:, None, :]

    return dict(
        phoneme_emb=phoneme_emb,
        pos_table=_sinusoid_table(MAX_POS, D_MODEL),
        enc=_init_fft_stack(nk, N_ENC_LAYERS),
        dec=_init_fft_stack(nk, N_DEC_LAYERS),
        vp=_init_vp_stack(nk),
        bins=bins,                                             # (2, 1, N_BINS-1)
        var_emb=jnp.stack([_init(nk(), (N_BINS, D_MODEL)),
                           _init(nk(), (N_BINS, D_MODEL))], axis=0),
        mel_w=_init(nk(), (D_MODEL, N_MEL)),
        mel_b=jnp.zeros((1, N_MEL), jnp.float32),
        post=dict(
            w0=_init(nk(), (POST_KERNEL * N_MEL, D_MODEL)),
            b0=jnp.zeros((1, D_MODEL), jnp.float32),
            w1=_init(nk(), (POST_KERNEL * D_MODEL, D_MODEL)),
            b1=jnp.zeros((1, D_MODEL), jnp.float32),
            w2=_init(nk(), (POST_KERNEL * D_MODEL, N_MEL)),
            b2=jnp.zeros((1, N_MEL), jnp.float32),
        ),
    )


# ----------------------------- forward pass -----------------------------
def get_mask_from_lengths(lengths, max_len):
    ids = jnp.arange(max_len, dtype=jnp.int32)[None, :]
    return ids >= lengths[:, None]          # True = padded


def fastspeech2_forward(params, speakers, texts, text_lens, max_text_len,
                        mel_lens=None, max_mel_len=None, pitches=None,
                        energies=None, durations=None, pitch_scale=1.0,
                        energy_scale=1.0, duration_scale=1.0):
    B, T = texts.shape
    sequence_masks = get_mask_from_lengths(text_lens, max_text_len)
    # training-only frame mask (unused in the inference path; recomputed below)
    _ = (get_mask_from_lengths(mel_lens, max_mel_len)
         if mel_lens is not None else None)

    keep_src = (~sequence_masks).astype(jnp.float32)[..., None]          # (B, T, 1)
    bias_src = jnp.where(sequence_masks, -1e9, 0.0).astype(jnp.float32)[:, None, :]

    # embedding lookup + positional encoding (data-dependent gather -> JAX glue)
    x = params['phoneme_emb'][texts] + params['pos_table'][:max_text_len][None]
    x = x * keep_src

    # ---- fused kernel 1: encoder + variance adaptor (pre length-regulator) ----
    w1 = {'enc': params['enc'], 'vp': params['vp'],
          'bins': params['bins'], 'var_emb': params['var_emb']}
    x_adapted, log_d, pitch, energy = _run_stage1(
        x, bias_src, keep_src, w1, pitch_scale, energy_scale)
    log_duration = log_d[..., 0]
    pitch = pitch[..., 0]
    energy = energy[..., 0]

    # ---- length regulator: data-dependent gather (JAX glue) ----
    # TODO(synk): true dynamic max_mel_len replaced by static MAX_MEL padding.
    dur = jnp.clip(jnp.round((jnp.exp(log_duration) - 1.0) * duration_scale), 0.0, None)
    dur = jnp.where(sequence_masks, 0.0, dur).astype(jnp.int32)
    mel_lens_out = jnp.clip(jnp.sum(dur, axis=1), 0, MAX_MEL)
    cum = jnp.cumsum(dur, axis=1)                                        # (B, T)
    frames = jnp.arange(MAX_MEL, dtype=jnp.int32)[None, :, None]
    idx = jnp.sum((frames >= cum[:, None, :]).astype(jnp.int32), axis=-1)
    idx = jnp.clip(idx, 0, T - 1)
    expanded = jnp.take_along_axis(x_adapted, idx[..., None], axis=1)    # (B, MAX_MEL, D)

    frame_masks = get_mask_from_lengths(mel_lens_out, MAX_MEL)
    keep_frm = (~frame_masks).astype(jnp.float32)[..., None]
    bias_frm = jnp.where(frame_masks, -1e9, 0.0).astype(jnp.float32)[:, None, :]
    x_dec = (expanded + params['pos_table'][:MAX_MEL][None]) * keep_frm

    # ---- fused kernel 2: decoder + mel linear + postnet ----
    w2 = {'dec': params['dec'], 'mel_w': params['mel_w'], 'mel_b': params['mel_b'],
          'post': params['post']}
    mel_spectrogram, mel_spectrogram_postnet = _run_stage2(x_dec, bias_frm, keep_frm, w2)

    return (mel_spectrogram_postnet, mel_spectrogram, log_duration, pitch, energy,
            sequence_masks, frame_masks, text_lens, mel_lens_out)


# ----------------------------- main -----------------------------
if __name__ == "__main__":
    key = jax.random.PRNGKey(0)
    k_param, k_text = jax.random.split(key)

    params = init_params(k_param)

    B, T = 2, 8
    speakers = jnp.zeros((B,), dtype=jnp.int32)
    texts = jax.random.randint(k_text, (B, T), 1, VOCAB, dtype=jnp.int32)
    text_lens = jnp.array([8, 6], dtype=jnp.int32)
    # zero out padded phoneme ids (second sequence has length 6)
    texts = jnp.where(get_mask_from_lengths(text_lens, T), 0, texts)

    fwd = jax.jit(fastspeech2_forward, static_argnums=(4,))
    outputs = fwd(params, speakers, texts, text_lens, T)
    outputs = jax.block_until_ready(outputs)

    mel_post, mel, log_d, pitch, energy, seq_mask, frame_mask, tl, ml = outputs
    assert mel_post.shape == (B, MAX_MEL, N_MEL)
    assert mel.shape == (B, MAX_MEL, N_MEL)
    assert log_d.shape == (B, T) and pitch.shape == (B, T) and energy.shape == (B, T)
    assert seq_mask.shape == (B, T) and frame_mask.shape == (B, MAX_MEL)
    assert bool(jnp.all(jnp.isfinite(mel_post)))
    assert bool(jnp.all(jnp.isfinite(mel)))

    print("KERNEL_OK")
</pallas_src>

<mosaic_0001>
module attributes {stable_mosaic.version = 11 : i64} {
  func.func @_stage1_kernel(%arg0: i32, %arg1: memref<1x8x32xf32, #tpu.memory_space<vmem>>, %arg2: memref<1x1x8xf32, #tpu.memory_space<vmem>>, %arg3: memref<1x8x1xf32, #tpu.memory_space<vmem>>, %arg4: memref<2x1x31xf32, #tpu.memory_space<vmem>>, %arg5: memref<2x1x32xf32, #tpu.memory_space<vmem>>, %arg6: memref<2x1x32xf32, #tpu.memory_space<vmem>>, %arg7: memref<2x1x32xf32, #tpu.memory_space<vmem>>, %arg8: memref<2x1x32xf32, #tpu.memory_space<vmem>>, %arg9: memref<2x1x64xf32, #tpu.memory_space<vmem>>, %arg10: memref<2x96x64xf32, #tpu.memory_space<vmem>>, %arg11: memref<2x1x32xf32, #tpu.memory_space<vmem>>, %arg12: memref<2x64x32xf32, #tpu.memory_space<vmem>>, %arg13: memref<2x1x32xf32, #tpu.memory_space<vmem>>, %arg14: memref<2x1x32xf32, #tpu.memory_space<vmem>>, %arg15: memref<2x1x32xf32, #tpu.memory_space<vmem>>, %arg16: memref<2x1x32xf32, #tpu.memory_space<vmem>>, %arg17: memref<2x32x32xf32, #tpu.memory_space<vmem>>, %arg18: memref<2x32x32xf32, #tpu.memory_space<vmem>>, %arg19: memref<2x32x32xf32, #tpu.memory_space<vmem>>, %arg20: memref<2x32x32xf32, #tpu.memory_space<vmem>>, %arg21: memref<2x32x32xf32, #tpu.memory_space<vmem>>, %arg22: memref<3x1x32xf32, #tpu.memory_space<vmem>>, %arg23: memref<3x96x32xf32, #tpu.memory_space<vmem>>, %arg24: memref<3x1x32xf32, #tpu.memory_space<vmem>>, %arg25: memref<3x96x32xf32, #tpu.memory_space<vmem>>, %arg26: memref<3x1x1xf32, #tpu.memory_space<vmem>>, %arg27: memref<3x32x1xf32, #tpu.memory_space<vmem>>, %arg28: memref<3x1x32xf32, #tpu.memory_space<vmem>>, %arg29: memref<3x1x32xf32, #tpu.memory_space<vmem>>, %arg30: memref<3x1x32xf32, #tpu.memory_space<vmem>>, %arg31: memref<3x1x32xf32, #tpu.memory_space<vmem>>, %arg32: memref<1x8x32xf32, #tpu.memory_space<vmem>>, %arg33: memref<1x8x1xf32, #tpu.memory_space<vmem>>, %arg34: memref<1x8x1xf32, #tpu.memory_space<vmem>>, %arg35: memref<1x8x1xf32, #tpu.memory_space<vmem>>) attributes {dimension_semantics = [#tpu.dimension_semantics<parallel>], iteration_bounds = array<i64: 2>, scalar_prefetch = 0 : i64, scratch_operands = 0 : i64, tpu.core_type = #tpu.core_type<tc>, window_params = [{transform_indices = @transform_0, window_bounds = array<i64: 1, 8, 32>}, {transform_indices = @transform_1, window_bounds = array<i64: 1, 1, 8>}, {transform_indices = @transform_2, window_bounds = array<i64: 1, 8, 1>}, {pipeline_mode = #tpu.pipeline_mode<synchronous>, transform_indices = @transform_3, window_bounds = array<i64: 2, 1, 31>}, {pipeline_mode = #tpu.pipeline_mode<synchronous>, transform_indices = @transform_4, window_bounds = array<i64: 2, 1, 32>}, {pipeline_mode = #tpu.pipeline_mode<synchronous>, transform_indices = @transform_5, window_bounds = array<i64: 2, 1, 32>}, {pipeline_mode = #tpu.pipeline_mode<synchronous>, transform_indices = @transform_6, window_bounds = array<i64: 2, 1, 32>}, {pipeline_mode = #tpu.pipeline_mode<synchronous>, transform_indices = @transform_7, window_bounds = array<i64: 2, 1, 32>}, {pipeline_mode = #tpu.pipeline_mode<synchronous>, transform_indices = @transform_8, window_bounds = array<i64: 2, 1, 64>}, {pipeline_mode = #tpu.pipeline_mode<synchronous>, transform_indices = @transform_9, window_bounds = array<i64: 2, 96, 64>}, {pipeline_mode = #tpu.pipeline_mode<synchronous>, transform_indices = @transform_10, window_bounds = array<i64: 2, 1, 32>}, {pipeline_mode = #tpu.pipeline_mode<synchronous>, transform_indices = @transform_11, window_bounds = array<i64: 2, 64, 32>}, {pipeline_mode = #tpu.pipeline_mode<synchronous>, transform_indices = @transform_12, window_bounds = array<i64: 2, 1, 32>}, {pipeline_mode = #tpu.pipeline_mode<synchronous>, transform_indices = @transform_13, window_bounds = array<i64: 2, 1, 32>}, {pipeline_mode = #tpu.pipeline_mode<synchronous>, transform_indices = @transform_14, window_bounds = array<i64: 2, 1, 32>}, {pipeline_mode = #tpu.pipeline_mode<synchronous>, transform_indices = @transform_15, window_bounds = array<i64: 2, 1, 32>}, {pipeline_mode = #tpu.pipeline_mode<synchronous>, transform_indices = @transform_16, window_bounds = array<i64: 2, 32, 32>}, {pipeline_mode = #tpu.pipeline_mode<synchronous>, transform_indices = @transform_17, window_bounds = array<i64: 2, 32, 32>}, {pipeline_mode = #tpu.pipeline_mode<synchronous>, transform_indices = @transform_18, window_bounds = array<i64: 2, 32, 32>}, {pipeline_mode = #tpu.pipeline_mode<synchronous>, transform_indices = @transform_19, window_bounds = array<i64: 2, 32, 32>}, {pipeline_mode = #tpu.pipeline_mode<synchronous>, transform_indices = @transform_20, window_bounds = array<i64: 2, 32, 32>}, {pipeline_mode = #tpu.pipeline_mode<synchronous>, transform_indices = @transform_21, window_bounds = array<i64: 3, 1, 32>}, {pipeline_mode = #tpu.pipeline_mode<synchronous>, transform_indices = @transform_22, window_bounds = array<i64: 3, 96, 32>}, {pipeline_mode = #tpu.pipeline_mode<synchronous>, transform_indices = @transform_23, window_bounds = array<i64: 3, 1, 32>}, {pipeline_mode = #tpu.pipeline_mode<synchronous>, transform_indices = @transform_24, window_bounds = array<i64: 3, 96, 32>}, {pipeline_mode = #tpu.pipeline_mode<synchronous>, transform_indices = @transform_25, window_bounds = array<i64: 3, 1, 1>}, {pipeline_mode = #tpu.pipeline_mode<synchronous>, transform_indices = @transform_26, window_bounds = array<i64: 3, 32, 1>}, {pipeline_mode = #tpu.pipeline_mode<synchronous>, transform_indices = @transform_27, window_bounds = array<i64: 3, 1, 32>}, {pipeline_mode = #tpu.pipeline_mode<synchronous>, transform_indices = @transform_28, window_bounds = array<i64: 3, 1, 32>}, {pipeline_mode = #tpu.pipeline_mode<synchronous>, transform_indices = @transform_29, window_bounds = array<i64: 3, 1, 32>}, {pipeline_mode = #tpu.pipeline_mode<synchronous>, transform_indices = @transform_30, window_bounds = array<i64: 3, 1, 32>}, {transform_indices = @transform_31, window_bounds = array<i64: 1, 8, 32>}, {transform_indices = @transform_32, window_bounds = array<i64: 1, 8, 1>}, {transform_indices = @transform_33, window_bounds = array<i64: 1, 8, 1>}, {transform_indices = @transform_34, window_bounds = array<i64: 1, 8, 1>}]} {
    %c0 = arith.constant 0 : index
    %c0_0 = arith.constant 0 : index
    %c0_1 = arith.constant 0 : index
    %0 = vector.load %arg1[%c0, %c0_0, %c0_1] : memref<1x8x32xf32, #tpu.memory_space<vmem>>, vector<1x8x32xf32>
    %1 = vector.shape_cast %0 : vector<1x8x32xf32> to vector<8x32xf32>
    %c0_2 = arith.constant 0 : index
    %c0_3 = arith.constant 0 : index
    %c0_4 = arith.constant 0 : index
    %2 = vector.load %arg2[%c0_2, %c0_3, %c0_4] : memref<1x1x8xf32, #tpu.memory_space<vmem>>, vector<1x1x8xf32>
    %3 = vector.shape_cast %2 : vector<1x1x8xf32> to vector<1x8xf32>
    %c0_5 = arith.constant 0 : index
    %c0_6 = arith.constant 0 : index
    %c0_7 = arith.constant 0 : index
    %4 = vector.load %arg3[%c0_5, %c0_6, %c0_7] : memref<1x8x1xf32, #tpu.memory_space<vmem>>, vector<1x8x1xf32>
    %5 = vector.shape_cast %4 : vector<1x8x1xf32> to vector<8x1xf32>
    %c0_8 = arith.constant 0 : index
    %c0_9 = arith.constant 0 : index
    %c0_10 = arith.constant 0 : index
    %6 = vector.load %arg19[%c0_8, %c0_9, %c0_10] : memref<2x32x32xf32, #tpu.memory_space<vmem>>, vector<1x32x32xf32>
    %7 = vector.shape_cast %6 : vector<1x32x32xf32> to vector<32x32xf32>
    %cst = arith.constant dense<0.000000e+00> : vector<8x32xf32>
    %8 = tpu.matmul %1, %7, %cst {dimension_numbers = #tpu.dot_dimension_numbers<[1], [0], [0], [1], [0, 0, 1, 1], [], []>} : vector<8x32xf32>, vector<32x32xf32>, vector<8x32xf32> -> vector<8x32xf32>
    %c0_11 = arith.constant 0 : index
    %c0_12 = arith.constant 0 : index
    %c0_13 = arith.constant 0 : index
    %9 = vector.load %arg7[%c0_11, %c0_12, %c0_13] : memref<2x1x32xf32, #tpu.memory_space<vmem>>, vector<1x1x32xf32>
    %10 = vector.shape_cast %9 : vector<1x1x32xf32> to vector<1x32xf32>
    %11 = vector.broadcast %10 : vector<1x32xf32> to vector<8x32xf32>
    %12 = arith.addf %8, %11 : vector<8x32xf32>
    %c0_14 = arith.constant 0 : index
    %c0_15 = arith.constant 0 : index
    %c0_16 = arith.constant 0 : index
    %13 = vector.load %arg17[%c0_14, %c0_15, %c0_16] : memref<2x32x32xf32, #tpu.memory_space<vmem>>, vector<1x32x32xf32>
    %14 = vector.shape_cast %13 : vector<1x32x32xf32> to vector<32x32xf32>
    %cst_17 = arith.constant dense<0.000000e+00> : vector<8x32xf32>
    %15 = tpu.matmul %1, %14, %cst_17 {dimension_numbers = #tpu.dot_dimension_numbers<[1], [0], [0], [1], [0, 0, 1, 1], [], []>} : vector<8x32xf32>, vector<32x32xf32>, vector<8x32xf32> -> vector<8x32xf32>
    %c0_18 = arith.constant 0 : index
    %c0_19 = arith.constant 0 : index
    %c0_20 = arith.constant 0 : index
    %16 = vector.load %arg5[%c0_18, %c0_19, %c0_20] : memref<2x1x32xf32, #tpu.memory_space<vmem>>, vector<1x1x32xf32>
    %17 = vector.shape_cast %16 : vector<1x1x32xf32> to vector<1x32xf32>
    %18 = vector.broadcast %17 : vector<1x32xf32> to vector<8x32xf32>
    %19 = arith.addf %15, %18 : vector<8x32xf32>
    %c0_21 = arith.constant 0 : index
    %c0_22 = arith.constant 0 : index
    %c0_23 = arith.constant 0 : index
    %20 = vector.load %arg20[%c0_21, %c0_22, %c0_23] : memref<2x32x32xf32, #tpu.memory_space<vmem>>, vector<1x32x32xf32>
    %21 = vector.shape_cast %20 : vector<1x32x32xf32> to vector<32x32xf32>
    %cst_24 = arith.constant dense<0.000000e+00> : vector<8x32xf32>
    %22 = tpu.matmul %1, %21, %cst_24 {dimension_numbers = #tpu.dot_dimension_numbers<[1], [0], [0], [1], [0, 0, 1, 1], [], []>} : vector<8x32xf32>, vector<32x32xf32>, vector<8x32xf32> -> vector<8x32xf32>
    %c0_25 = arith.constant 0 : index
    %c0_26 = arith.constant 0 : index
    %c0_27 = arith.constant 0 : index
    %23 = vector.load %arg8[%c0_25, %c0_26, %c0_27] : memref<2x1x32xf32, #tpu.memory_space<vmem>>, vector<1x1x32xf32>
    %24 = vector.shape_cast %23 : vector<1x1x32xf32> to vector<1x32xf32>
    %25 = vector.broadcast %24 : vector<1x32xf32> to vector<8x32xf32>
    %26 = arith.addf %22, %25 : vector<8x32xf32>
    %c0_28 = arith.constant 0 : index
    %c0_29 = arith.constant 0 : index
    %c0_30 = arith.constant 0 : index
    %27 = vector.load %arg18[%c0_28, %c0_29, %c0_30] : memref<2x32x32xf32, #tpu.memory_space<vmem>>, vector<1x32x32xf32>
    %28 = vector.shape_cast %27 : vector<1x32x32xf32> to vector<32x32xf32>
    %c0_31 = arith.constant 0 : index
    %c0_32 = arith.constant 0 : index
    %c0_33 = arith.constant 0 : index
    %29 = vector.load %arg6[%c0_31, %c0_32, %c0_33] : memref<2x1x32xf32, #tpu.memory_space<vmem>>, vector<1x1x32xf32>
    %30 = vector.shape_cast %29 : vector<1x1x32xf32> to vector<1x32xf32>
    %31 = vector.extract_strided_slice %12 {offsets = [0, 0], sizes = [8, 16], strides = [1, 1]} : vector<8x32xf32> to vector<8x16xf32>
    %32 = vector.extract_strided_slice %19 {offsets = [0, 0], sizes = [8, 16], strides = [1, 1]} : vector<8x32xf32> to vector<8x16xf32>
    %33 = vector.extract_strided_slice %26 {offsets = [0, 0], sizes = [8, 16], strides = [1, 1]} : vector<8x32xf32> to vector<8x16xf32>
    "tpu.trace_start"() <{level = 10 : i32, message = "td,sd->ts"}> : () -> ()
    %cst_34 = arith.constant dense<0.000000e+00> : vector<8x8xf32>
    %34 = tpu.matmul %31, %32, %cst_34 {dimension_numbers = #tpu.dot_dimension_numbers<[1], [1], [0], [0], [0, 0, 1, 0], [], []>} : vector<8x16xf32>, vector<8x16xf32>, vector<8x8xf32> -> vector<8x8xf32>
    "tpu.trace_stop"() : () -> ()
    %cst_35 = arith.constant 2.500000e-01 : f32
    %35 = vector.broadcast %cst_35 : f32 to vector<8x8xf32>
    %36 = arith.mulf %34, %35 : vector<8x8xf32>
    %37 = vector.broadcast %3 : vector<1x8xf32> to vector<8x8xf32>
    %38 = arith.addf %36, %37 : vector<8x8xf32>
    %cst_36 = arith.constant dense<0xFF800000> : vector<8xf32>
    %39 = vector.multi_reduction <maximumf>, %38, %cst_36 [1] : vector<8x8xf32> to vector<8xf32>
    %40 = vector.shape_cast %39 : vector<8xf32> to vector<8x1xf32>
    %41 = vector.broadcast %40 : vector<8x1xf32> to vector<8x8xf32>
    %42 = arith.subf %38, %41 : vector<8x8xf32>
    %43 = math.exp %42 : vector<8x8xf32>
    %cst_37 = arith.constant dense<0.000000e+00> : vector<8xf32>
    %44 = vector.multi_reduction <add>, %43, %cst_37 [1] : vector<8x8xf32> to vector<8xf32>
    %45 = vector.shape_cast %44 : vector<8xf32> to vector<8x1xf32>
    %46 = tpu.reciprocal %45 {approx = true} : vector<8x1xf32> -> vector<8x1xf32>
    %47 = vector.broadcast %46 : vector<8x1xf32> to vector<8x8xf32>
    %48 = arith.mulf %43, %47 : vector<8x8xf32>
    %cst_38 = arith.constant dense<0.000000e+00> : vector<8x16xf32>
    %49 = tpu.matmul %48, %33, %cst_38 {dimension_numbers = #tpu.dot_dimension_numbers<[1], [0], [0], [1], [0, 0, 1, 1], [], []>} : vector<8x8xf32>, vector<8x16xf32>, vector<8x16xf32> -> vector<8x16xf32>
    %50 = vector.extract_strided_slice %28 {offsets = [0, 0], sizes = [16, 32], strides = [1, 1]} : vector<32x32xf32> to vector<16x32xf32>
    %cst_39 = arith.constant dense<0.000000e+00> : vector<8x32xf32>
    %51 = tpu.matmul %49, %50, %cst_39 {dimension_numbers = #tpu.dot_dimension_numbers<[1], [0], [0], [1], [0, 0, 1, 1], [], []>} : vector<8x16xf32>, vector<16x32xf32>, vector<8x32xf32> -> vector<8x32xf32>
    %52 = vector.broadcast %30 : vector<1x32xf32> to vector<8x32xf32>
    %53 = arith.addf %52, %51 : vector<8x32xf32>
    %54 = vector.extract_strided_slice %12 {offsets = [0, 16], sizes = [8, 16], strides = [1, 1]} : vector<8x32xf32> to vector<8x16xf32>
    %55 = vector.extract_strided_slice %19 {offsets = [0, 16], sizes = [8, 16], strides = [1, 1]} : vector<8x32xf32> to vector<8x16xf32>
    %56 = vector.extract_strided_slice %26 {offsets = [0, 16], sizes = [8, 16], strides = [1, 1]} : vector<8x32xf32> to vector<8x16xf32>
    "tpu.trace_start"() <{level = 10 : i32, message = "td,sd->ts"}> : () -> ()
    %cst_40 = arith.constant dense<0.000000e+00> : vector<8x8xf32>
    %57 = tpu.matmul %54, %55, %cst_40 {dimension_numbers = #tpu.dot_dimension_numbers<[1], [1], [0], [0], [0, 0, 1, 0], [], []>} : vector<8x16xf32>, vector<8x16xf32>, vector<8x8xf32> -> vector<8x8xf32>
    "tpu.trace_stop"() : () -> ()
    %cst_41 = arith.constant 2.500000e-01 : f32
    %58 = vector.broadcast %cst_41 : f32 to vector<8x8xf32>
    %59 = arith.mulf %57, %58 : vector<8x8xf32>
    %60 = vector.broadcast %3 : vector<1x8xf32> to vector<8x8xf32>
    %61 = arith.addf %59, %60 : vector<8x8xf32>
    %cst_42 = arith.constant dense<0xFF800000> : vector<8xf32>
    %62 = vector.multi_reduction <maximumf>, %61, %cst_42 [1] : vector<8x8xf32> to vector<8xf32>
    %63 = vector.shape_cast %62 : vector<8xf32> to vector<8x1xf32>
    %64 = vector.broadcast %63 : vector<8x1xf32> to vector<8x8xf32>
    %65 = arith.subf %61, %64 : vector<8x8xf32>
    %66 = math.exp %65 : vector<8x8xf32>
    %cst_43 = arith.constant dense<0.000000e+00> : vector<8xf32>
    %67 = vector.multi_reduction <add>, %66, %cst_43 [1] : vector<8x8xf32> to vector<8xf32>
    %68 = vector.shape_cast %67 : vector<8xf32> to vector<8x1xf32>
    %69 = tpu.reciprocal %68 {approx = true} : vector<8x1xf32> -> vector<8x1xf32>
    %70 = vector.broadcast %69 : vector<8x1xf32> to vector<8x8xf32>
    %71 = arith.mulf %66, %70 : vector<8x8xf32>
    %cst_44 = arith.constant dense<0.000000e+00> : vector<8x16xf32>
    %72 = tpu.matmul %71, %56, %cst_44 {dimension_numbers = #tpu.dot_dimension_numbers<[1], [0], [0], [1], [0, 0, 1, 1], [], []>} : vector<8x8xf32>, vector<8x16xf32>, vector<8x16xf32> -> vector<8x16xf32>
    %73 = vector.extract_strided_slice %28 {offsets = [16, 0], sizes = [16, 32], strides = [1, 1]} : vector<32x32xf32> to vector<16x32xf32>
    %cst_45 = arith.constant dense<0.000000e+00> : vector<8x32xf32>
    %74 = tpu.matmul %72, %73, %cst_45 {dimension_numbers = #tpu.dot_dimension_numbers<[1], [0], [0], [1], [0, 0, 1, 1], [], []>} : vector<8x16xf32>, vector<16x32xf32>, vector<8x32xf32> -> vector<8x32xf32>
    %75 = arith.addf %53, %74 : vector<8x32xf32>
    %76 = arith.addf %75, %1 : vector<8x32xf32>
    %c0_46 = arith.constant 0 : index
    %c0_47 = arith.constant 0 : index
    %c0_48 = arith.constant 0 : index
    %77 = vector.load %arg14[%c0_46, %c0_47, %c0_48] : memref<2x1x32xf32, #tpu.memory_space<vmem>>, vector<1x1x32xf32>
    %78 = vector.shape_cast %77 : vector<1x1x32xf32> to vector<1x32xf32>
    %c0_49 = arith.constant 0 : index
    %c0_50 = arith.constant 0 : index
    %c0_51 = arith.constant 0 : index
    %79 = vector.load %arg13[%c0_49, %c0_50, %c0_51] : memref<2x1x32xf32, #tpu.memory_space<vmem>>, vector<1x1x32xf32>
    %80 = vector.shape_cast %79 : vector<1x1x32xf32> to vector<1x32xf32>
    %cst_52 = arith.constant dense<0.000000e+00> : vector<8xf32>
    %81 = vector.multi_reduction <add>, %76, %cst_52 [1] : vector<8x32xf32> to vector<8xf32>
    %82 = vector.shape_cast %81 : vector<8xf32> to vector<8x1xf32>
    %cst_53 = arith.constant 3.200000e+01 : f32
    %83 = vector.broadcast %cst_53 : f32 to vector<8x1xf32>
    %84 = arith.divf %82, %83 : vector<8x1xf32>
    %85 = vector.broadcast %84 : vector<8x1xf32> to vector<8x32xf32>
    %86 = arith.subf %76, %85 : vector<8x32xf32>
    %87 = arith.mulf %86, %86 : vector<8x32xf32>
    %cst_54 = arith.constant dense<0.000000e+00> : vector<8xf32>
    %88 = vector.multi_reduction <add>, %87, %cst_54 [1] : vector<8x32xf32> to vector<8xf32>
    %89 = vector.shape_cast %88 : vector<8xf32> to vector<8x1xf32>
    %cst_55 = arith.constant 3.200000e+01 : f32
    %90 = vector.broadcast %cst_55 : f32 to vector<8x1xf32>
    %91 = arith.divf %89, %90 : vector<8x1xf32>
    %92 = vector.broadcast %84 : vector<8x1xf32> to vector<8x32xf32>
    %93 = arith.subf %76, %92 : vector<8x32xf32>
    %cst_56 = arith.constant 9.99999974E-6 : f32
    %94 = vector.broadcast %cst_56 : f32 to vector<8x1xf32>
    %95 = arith.addf %91, %94 : vector<8x1xf32>
    %96 = math.rsqrt %95 : vector<8x1xf32>
    %97 = vector.broadcast %96 : vector<8x1xf32> to vector<8x32xf32>
    %98 = arith.mulf %93, %97 : vector<8x32xf32>
    %99 = vector.broadcast %78 : vector<1x32xf32> to vector<8x32xf32>
    %100 = arith.mulf %98, %99 : vector<8x32xf32>
    %101 = vector.broadcast %80 : vector<1x32xf32> to vector<8x32xf32>
    %102 = arith.addf %100, %101 : vector<8x32xf32>
    %103 = vector.broadcast %5 : vector<8x1xf32> to vector<8x32xf32>
    %104 = arith.mulf %102, %103 : vector<8x32xf32>
    %c0_57 = arith.constant 0 : index
    %c0_58 = arith.constant 0 : index
    %c0_59 = arith.constant 0 : index
    %105 = vector.load %arg10[%c0_57, %c0_58, %c0_59] : memref<2x96x64xf32, #tpu.memory_space<vmem>>, vector<1x96x64xf32>
    %106 = vector.shape_cast %105 : vector<1x96x64xf32> to vector<96x64xf32>
    %c0_60 = arith.constant 0 : index
    %c0_61 = arith.constant 0 : index
    %c0_62 = arith.constant 0 : index
    %107 = vector.load %arg9[%c0_60, %c0_61, %c0_62] : memref<2x1x64xf32, #tpu.memory_space<vmem>>, vector<1x1x64xf32>
    %108 = vector.shape_cast %107 : vector<1x1x64xf32> to vector<1x64xf32>
    %cst_63 = arith.constant 0.000000e+00 : f32
    %109 = vector.broadcast %cst_63 : f32 to vector<1x32xf32>
    %110 = vector.extract_strided_slice %104 {offsets = [0, 0], sizes = [7, 32], strides = [1, 1]} : vector<8x32xf32> to vector<7x32xf32>
    %111 = tpu.concatenate %109, %110 in 0 : vector<1x32xf32>, vector<7x32xf32> -> vector<8x32xf32>
    %cst_64 = arith.constant 0.000000e+00 : f32
    %112 = vector.broadcast %cst_64 : f32 to vector<1x32xf32>
    %113 = vector.extract_strided_slice %104 {offsets = [1, 0], sizes = [7, 32], strides = [1, 1]} : vector<8x32xf32> to vector<7x32xf32>
    %114 = tpu.concatenate %113, %112 in 0 : vector<7x32xf32>, vector<1x32xf32> -> vector<8x32xf32>
    %115 = tpu.concatenate %111, %104, %114 in 1 : vector<8x32xf32>, vector<8x32xf32>, vector<8x32xf32> -> vector<8x96xf32>
    %cst_65 = arith.constant dense<0.000000e+00> : vector<8x64xf32>
    %116 = tpu.matmul %115, %106, %cst_65 {dimension_numbers = #tpu.dot_dimension_numbers<[1], [0], [0], [1], [0, 0, 1, 1], [], []>} : vector<8x96xf32>, vector<96x64xf32>, vector<8x64xf32> -> vector<8x64xf32>
    %117 = vector.broadcast %108 : vector<1x64xf32> to vector<8x64xf32>
    %118 = arith.addf %116, %117 : vector<8x64xf32>
    %cst_66 = arith.constant 0.000000e+00 : f32
    %119 = vector.broadcast %cst_66 : f32 to vector<8x64xf32>
    %120 = arith.maximumf %118, %119 : vector<8x64xf32>
    %c0_67 = arith.constant 0 : index
    %c0_68 = arith.constant 0 : index
    %c0_69 = arith.constant 0 : index
    %121 = vector.load %arg12[%c0_67, %c0_68, %c0_69] : memref<2x64x32xf32, #tpu.memory_space<vmem>>, vector<1x64x32xf32>
    %122 = vector.shape_cast %121 : vector<1x64x32xf32> to vector<64x32xf32>
    %c0_70 = arith.constant 0 : index
    %c0_71 = arith.constant 0 : index
    %c0_72 = arith.constant 0 : index
    %123 = vector.load %arg11[%c0_70, %c0_71, %c0_72] : memref<2x1x32xf32, #tpu.memory_space<vmem>>, vector<1x1x32xf32>
    %124 = vector.shape_cast %123 : vector<1x1x32xf32> to vector<1x32xf32>
    %cst_73 = arith.constant dense<0.000000e+00> : vector<8x32xf32>
    %125 = tpu.matmul %120, %122, %cst_73 {dimension_numbers = #tpu.dot_dimension_numbers<[1], [0], [0], [1], [0, 0, 1, 1], [], []>} : vector<8x64xf32>, vector<64x32xf32>, vector<8x32xf32> -> vector<8x32xf32>
    %126 = vector.broadcast %124 : vector<1x32xf32> to vector<8x32xf32>
    %127 = arith.addf %125, %126 : vector<8x32xf32>
    %128 = arith.addf %127, %104 : vector<8x32xf32>
    %c0_74 = arith.constant 0 : index
    %c0_75 = arith.constant 0 : index
    %c0_76 = arith.constant 0 : index
    %129 = vector.load %arg16[%c0_74, %c0_75, %c0_76] : memref<2x1x32xf32, #tpu.memory_space<vmem>>, vector<1x1x32xf32>
    %130 = vector.shape_cast %129 : vector<1x1x32xf32> to vector<1x32xf32>
    %c0_77 = arith.constant 0 : index
    %c0_78 = arith.constant 0 : index
    %c0_79 = arith.constant 0 : index
    %131 = vector.load %arg15[%c0_77, %c0_78, %c0_79] : memref<2x1x32xf32, #tpu.memory_space<vmem>>, vector<1x1x32xf32>
    %132 = vector.shape_cast %131 : vector<1x1x32xf32> to vector<1x32xf32>
    %cst_80 = arith.constant dense<0.000000e+00> : vector<8xf32>
    %133 = vector.multi_reduction <add>, %128, %cst_80 [1] : vector<8x32xf32> to vector<8xf32>
    %134 = vector.shape_cast %133 : vector<8xf32> to vector<8x1xf32>
    %cst_81 = arith.constant 3.200000e+01 : f32
    %135 = vector.broadcast %cst_81 : f32 to vector<8x1xf32>
    %136 = arith.divf %134, %135 : vector<8x1xf32>
    %137 = vector.broadcast %136 : vector<8x1xf32> to vector<8x32xf32>
    %138 = arith.subf %128, %137 : vector<8x32xf32>
    %139 = arith.mulf %138, %138 : vector<8x32xf32>
    %cst_82 = arith.constant dense<0.000000e+00> : vector<8xf32>
    %140 = vector.multi_reduction <add>, %139, %cst_82 [1] : vector<8x32xf32> to vector<8xf32>
    %141 = vector.shape_cast %140 : vector<8xf32> to vector<8x1xf32>
    %cst_83 = arith.constant 3.200000e+01 : f32
    %142 = vector.broadcast %cst_83 : f32 to vector<8x1xf32>
    %143 = arith.divf %141, %142 : vector<8x1xf32>
    %144 = vector.broadcast %136 : vector<8x1xf32> to vector<8x32xf32>
    %145 = arith.subf %128, %144 : vector<8x32xf32>
    %cst_84 = arith.constant 9.99999974E-6 : f32
    %146 = vector.broadcast %cst_84 : f32 to vector<8x1xf32>
    %147 = arith.addf %143, %146 : vector<8x1xf32>
    %148 = math.rsqrt %147 : vector<8x1xf32>
    %149 = vector.broadcast %148 : vector<8x1xf32> to vector<8x32xf32>
    %150 = arith.mulf %145, %149 : vector<8x32xf32>
    %151 = vector.broadcast %130 : vector<1x32xf32> to vector<8x32xf32>
    %152 = arith.mulf %150, %151 : vector<8x32xf32>
    %153 = vector.broadcast %132 : vector<1x32xf32> to vector<8x32xf32>
    %154 = arith.addf %152, %153 : vector<8x32xf32>
    %155 = vector.broadcast %5 : vector<8x1xf32> to vector<8x32xf32>
    %156 = arith.mulf %154, %155 : vector<8x32xf32>
    %c1 = arith.constant 1 : index
    %c0_85 = arith.constant 0 : index
    %c0_86 = arith.constant 0 : index
    %157 = vector.load %arg19[%c1, %c0_85, %c0_86] : memref<2x32x32xf32, #tpu.memory_space<vmem>>, vector<1x32x32xf32>
    %158 = vector.shape_cast %157 : vector<1x32x32xf32> to vector<32x32xf32>
    %cst_87 = arith.constant dense<0.000000e+00> : vector<8x32xf32>
    %159 = tpu.matmul %156, %158, %cst_87 {dimension_numbers = #tpu.dot_dimension_numbers<[1], [0], [0], [1], [0, 0, 1, 1], [], []>} : vector<8x32xf32>, vector<32x32xf32>, vector<8x32xf32> -> vector<8x32xf32>
    %c1_88 = arith.constant 1 : index
    %c0_89 = arith.constant 0 : index
    %c0_90 = arith.constant 0 : index
    %160 = vector.load %arg7[%c1_88, %c0_89, %c0_90] : memref<2x1x32xf32, #tpu.memory_space<vmem>>, vector<1x1x32xf32>
    %161 = vector.shape_cast %160 : vector<1x1x32xf32> to vector<1x32xf32>
    %162 = vector.broadcast %161 : vector<1x32xf32> to vector<8x32xf32>
    %163 = arith.addf %159, %162 : vector<8x32xf32>
    %c1_91 = arith.constant 1 : index
    %c0_92 = arith.constant 0 : index
    %c0_93 = arith.constant 0 : index
    %164 = vector.load %arg17[%c1_91, %c0_92, %c0_93] : memref<2x32x32xf32, #tpu.memory_space<vmem>>, vector<1x32x32xf32>
    %165 = vector.shape_cast %164 : vector<1x32x32xf32> to vector<32x32xf32>
    %cst_94 = arith.constant dense<0.000000e+00> : vector<8x32xf32>
    %166 = tpu.matmul %156, %165, %cst_94 {dimension_numbers = #tpu.dot_dimension_numbers<[1], [0], [0], [1], [0, 0, 1, 1], [], []>} : vector<8x32xf32>, vector<32x32xf32>, vector<8x32xf32> -> vector<8x32xf32>
    %c1_95 = arith.constant 1 : index
    %c0_96 = arith.constant 0 : index
    %c0_97 = arith.constant 0 : index
    %167 = vector.load %arg5[%c1_95, %c0_96, %c0_97] : memref<2x1x32xf32, #tpu.memory_space<vmem>>, vector<1x1x32xf32>
    %168 = vector.shape_cast %167 : vector<1x1x32xf32> to vector<1x32xf32>
    %169 = vector.broadcast %168 : vector<1x32xf32> to vector<8x32xf32>
    %170 = arith.addf %166, %169 : vector<8x32xf32>
    %c1_98 = arith.constant 1 : index
    %c0_99 = arith.constant 0 : index
    %c0_100 = arith.constant 0 : index
    %171 = vector.load %arg20[%c1_98, %c0_99, %c0_100] : memref<2x32x32xf32, #tpu.memory_space<vmem>>, vector<1x32x32xf32>
    %172 = vector.shape_cast %171 : vector<1x32x32xf32> to vector<32x32xf32>
    %cst_101 = arith.constant dense<0.000000e+00> : vector<8x32xf32>
    %173 = tpu.matmul %156, %172, %cst_101 {dimension_numbers = #tpu.dot_dimension_numbers<[1], [0], [0], [1], [0, 0, 1, 1], [], []>} : vector<8x32xf32>, vector<32x32xf32>, vector<8x32xf32> -> vector<8x32xf32>
    %c1_102 = arith.constant 1 : index
    %c0_103 = arith.constant 0 : index
    %c0_104 = arith.constant 0 : index
    %174 = vector.load %arg8[%c1_102, %c0_103, %c0_104] : memref<2x1x32xf32, #tpu.memory_space<vmem>>, vector<1x1x32xf32>
    %175 = vector.shape_cast %174 : vector<1x1x32xf32> to vector<1x32xf32>
    %176 = vector.broadcast %175 : vector<1x32xf32> to vector<8x32xf32>
    %177 = arith.addf %173, %176 : vector<8x32xf32>
    %c1_105 = arith.constant 1 : index
    %c0_106 = arith.constant 0 : index
    %c0_107 = arith.constant 0 : index
    %178 = vector.load %arg18[%c1_105, %c0_106, %c0_107] : memref<2x32x32xf32, #tpu.memory_space<vmem>>, vector<1x32x32xf32>
    %179 = vector.shape_cast %178 : vector<1x32x32xf32> to vector<32x32xf32>
    %c1_108 = arith.constant 1 : index
    %c0_109 = arith.constant 0 : index
    %c0_110 = arith.constant 0 : index
    %180 = vector.load %arg6[%c1_108, %c0_109, %c0_110] : memref<2x1x32xf32, #tpu.memory_space<vmem>>, vector<1x1x32xf32>
    %181 = vector.shape_cast %180 : vector<1x1x32xf32> to vector<1x32xf32>
    %182 = vector.extract_strided_slice %163 {offsets = [0, 0], sizes = [8, 16], strides = [1, 1]} : vector<8x32xf32> to vector<8x16xf32>
    %183 = vector.extract_strided_slice %170 {offsets = [0, 0], sizes = [8, 16], strides = [1, 1]} : vector<8x32xf32> to vector<8x16xf32>
    %184 = vector.extract_strided_slice %177 {offsets = [0, 0], sizes = [8, 16], strides = [1, 1]} : vector<8x32xf32> to vector<8x16xf32>
    "tpu.trace_start"() <{level = 10 : i32, message = "td,sd->ts"}> : () -> ()
    %cst_111 = arith.constant dense<0.000000e+00> : vector<8x8xf32>
    %185 = tpu.matmul %182, %183, %cst_111 {dimension_numbers = #tpu.dot_dimension_numbers<[1], [1], [0], [0], [0, 0, 1, 0], [], []>} : vector<8x16xf32>, vector<8x16xf32>, vector<8x8xf32> -> vector<8x8xf32>
    "tpu.trace_stop"() : () -> ()
    %cst_112 = arith.constant 2.500000e-01 : f32
    %186 = vector.broadcast %cst_112 : f32 to vector<8x8xf32>
    %187 = arith.mulf %185, %186 : vector<8x8xf32>
    %188 = vector.broadcast %3 : vector<1x8xf32> to vector<8x8xf32>
    %189 = arith.addf %187, %188 : vector<8x8xf32>
    %cst_113 = arith.constant dense<0xFF800000> : vector<8xf32>
    %190 = vector.multi_reduction <maximumf>, %189, %cst_113 [1] : vector<8x8xf32> to vector<8xf32>
    %191 = vector.shape_cast %190 : vector<8xf32> to vector<8x1xf32>
    %192 = vector.broadcast %191 : vector<8x1xf32> to vector<8x8xf32>
    %193 = arith.subf %189, %192 : vector<8x8xf32>
    %194 = math.exp %193 : vector<8x8xf32>
    %cst_114 = arith.constant dense<0.000000e+00> : vector<8xf32>
    %195 = vector.multi_reduction <add>, %194, %cst_114 [1] : vector<8x8xf32> to vector<8xf32>
    %196 = vector.shape_cast %195 : vector<8xf32> to vector<8x1xf32>
    %197 = tpu.reciprocal %196 {approx = true} : vector<8x1xf32> -> vector<8x1xf32>
    %198 = vector.broadcast %197 : vector<8x1xf32> to vector<8x8xf32>
    %199 = arith.mulf %194, %198 : vector<8x8xf32>
    %cst_115 = arith.constant dense<0.000000e+00> : vector<8x16xf32>
    %200 = tpu.matmul %199, %184, %cst_115 {dimension_numbers = #tpu.dot_dimension_numbers<[1], [0], [0], [1], [0, 0, 1, 1], [], []>} : vector<8x8xf32>, vector<8x16xf32>, vector<8x16xf32> -> vector<8x16xf32>
    %201 = vector.extract_strided_slice %179 {offsets = [0, 0], sizes = [16, 32], strides = [1, 1]} : vector<32x32xf32> to vector<16x32xf32>
    %cst_116 = arith.constant dense<0.000000e+00> : vector<8x32xf32>
    %202 = tpu.matmul %200, %201, %cst_116 {dimension_numbers = #tpu.dot_dimension_numbers<[1], [0], [0], [1], [0, 0, 1, 1], [], []>} : vector<8x16xf32>, vector<16x32xf32>, vector<8x32xf32> -> vector<8x32xf32>
    %203 = vector.broadcast %181 : vector<1x32xf32> to vector<8x32xf32>
    %204 = arith.addf %203, %202 : vector<8x32xf32>
    %205 = vector.extract_strided_slice %163 {offsets = [0, 16], sizes = [8, 16], strides = [1, 1]} : vector<8x32xf32> to vector<8x16xf32>
    %206 = vector.extract_strided_slice %170 {offsets = [0, 16], sizes = [8, 16], strides = [1, 1]} : vector<8x32xf32> to vector<8x16xf32>
    %207 = vector.extract_strided_slice %177 {offsets = [0, 16], sizes = [8, 16], strides = [1, 1]} : vector<8x32xf32> to vector<8x16xf32>
    "tpu.trace_start"() <{level = 10 : i32, message = "td,sd->ts"}> : () -> ()
    %cst_117 = arith.constant dense<0.000000e+00> : vector<8x8xf32>
    %208 = tpu.matmul %205, %206, %cst_117 {dimension_numbers = #tpu.dot_dimension_numbers<[1], [1], [0], [0], [0, 0, 1, 0], [], []>} : vector<8x16xf32>, vector<8x16xf32>, vector<8x8xf32> -> vector<8x8xf32>
    "tpu.trace_stop"() : () -> ()
    %cst_118 = arith.constant 2.500000e-01 : f32
    %209 = vector.broadcast %cst_118 : f32 to vector<8x8xf32>
    %210 = arith.mulf %208, %209 : vector<8x8xf32>
    %211 = vector.broadcast %3 : vector<1x8xf32> to vector<8x8xf32>
    %212 = arith.addf %210, %211 : vector<8x8xf32>
    %cst_119 = arith.constant dense<0xFF800000> : vector<8xf32>
    %213 = vector.multi_reduction <maximumf>, %212, %cst_119 [1] : vector<8x8xf32> to vector<8xf32>
    %214 = vector.shape_cast %213 : vector<8xf32> to vector<8x1xf32>
    %215 = vector.broadcast %214 : vector<8x1xf32> to vector<8x8xf32>
    %216 = arith.subf %212, %215 : vector<8x8xf32>
    %217 = math.exp %216 : vector<8x8xf32>
    %cst_120 = arith.constant dense<0.000000e+00> : vector<8xf32>
    %218 = vector.multi_reduction <add>, %217, %cst_120 [1] : vector<8x8xf32> to vector<8xf32>
    %219 = vector.shape_cast %218 : vector<8xf32> to vector<8x1xf32>
    %220 = tpu.reciprocal %219 {approx = true} : vector<8x1xf32> -> vector<8x1xf32>
    %221 = vector.broadcast %220 : vector<8x1xf32> to vector<8x8xf32>
    %222 = arith.mulf %217, %221 : vector<8x8xf32>
    %cst_121 = arith.constant dense<0.000000e+00> : vector<8x16xf32>
    %223 = tpu.matmul %222, %207, %cst_121 {dimension_numbers = #tpu.dot_dimension_numbers<[1], [0], [0], [1], [0, 0, 1, 1], [], []>} : vector<8x8xf32>, vector<8x16xf32>, vector<8x16xf32> -> vector<8x16xf32>
    %224 = vector.extract_strided_slice %179 {offsets = [16, 0], sizes = [16, 32], strides = [1, 1]} : vector<32x32xf32> to vector<16x32xf32>
    %cst_122 = arith.constant dense<0.000000e+00> : vector<8x32xf32>
    %225 = tpu.matmul %223, %224, %cst_122 {dimension_numbers = #tpu.dot_dimension_numbers<[1], [0], [0], [1], [0, 0, 1, 1], [], []>} : vector<8x16xf32>, vector<16x32xf32>, vector<8x32xf32> -> vector<8x32xf32>
    %226 = arith.addf %204, %225 : vector<8x32xf32>
    %227 = arith.addf %226, %156 : vector<8x32xf32>
    %c1_123 = arith.constant 1 : index
    %c0_124 = arith.constant 0 : index
    %c0_125 = arith.constant 0 : index
    %228 = vector.load %arg14[%c1_123, %c0_124, %c0_125] : memref<2x1x32xf32, #tpu.memory_space<vmem>>, vector<1x1x32xf32>
    %229 = vector.shape_cast %228 : vector<1x1x32xf32> to vector<1x32xf32>
    %c1_126 = arith.constant 1 : index
    %c0_127 = arith.constant 0 : index
    %c0_128 = arith.constant 0 : index
    %230 = vector.load %arg13[%c1_126, %c0_127, %c0_128] : memref<2x1x32xf32, #tpu.memory_space<vmem>>, vector<1x1x32xf32>
    %231 = vector.shape_cast %230 : vector<1x1x32xf32> to vector<1x32xf32>
    %cst_129 = arith.constant dense<0.000000e+00> : vector<8xf32>
    %232 = vector.multi_reduction <add>, %227, %cst_129 [1] : vector<8x32xf32> to vector<8xf32>
    %233 = vector.shape_cast %232 : vector<8xf32> to vector<8x1xf32>
    %cst_130 = arith.constant 3.200000e+01 : f32
    %234 = vector.broadcast %cst_130 : f32 to vector<8x1xf32>
    %235 = arith.divf %233, %234 : vector<8x1xf32>
    %236 = vector.broadcast %235 : vector<8x1xf32> to vector<8x32xf32>
    %237 = arith.subf %227, %236 : vector<8x32xf32>
    %238 = arith.mulf %237, %237 : vector<8x32xf32>
    %cst_131 = arith.constant dense<0.000000e+00> : vector<8xf32>
    %239 = vector.multi_reduction <add>, %238, %cst_131 [1] : vector<8x32xf32> to vector<8xf32>
    %240 = vector.shape_cast %239 : vector<8xf32> to vector<8x1xf32>
    %cst_132 = arith.constant 3.200000e+01 : f32
    %241 = vector.broadcast %cst_132 : f32 to vector<8x1xf32>
    %242 = arith.divf %240, %241 : vector<8x1xf32>
    %243 = vector.broadcast %235 : vector<8x1xf32> to vector<8x32xf32>
    %244 = arith.subf %227, %243 : vector<8x32xf32>
    %cst_133 = arith.constant 9.99999974E-6 : f32
    %245 = vector.broadcast %cst_133 : f32 to vector<8x1xf32>
    %246 = arith.addf %242, %245 : vector<8x1xf32>
    %247 = math.rsqrt %246 : vector<8x1xf32>
    %248 = vector.broadcast %247 : vector<8x1xf32> to vector<8x32xf32>
    %249 = arith.mulf %244, %248 : vector<8x32xf32>
    %250 = vector.broadcast %229 : vector<1x32xf32> to vector<8x32xf32>
    %251 = arith.mulf %249, %250 : vector<8x32xf32>
    %252 = vector.broadcast %231 : vector<1x32xf32> to vector<8x32xf32>
    %253 = arith.addf %251, %252 : vector<8x32xf32>
    %254 = vector.broadcast %5 : vector<8x1xf32> to vector<8x32xf32>
    %255 = arith.mulf %253, %254 : vector<8x32xf32>
    %c1_134 = arith.constant 1 : index
    %c0_135 = arith.constant 0 : index
    %c0_136 = arith.constant 0 : index
    %256 = vector.load %arg10[%c1_134, %c0_135, %c0_136] : memref<2x96x64xf32, #tpu.memory_space<vmem>>, vector<1x96x64xf32>
    %257 = vector.shape_cast %256 : vector<1x96x64xf32> to vector<96x64xf32>
    %c1_137 = arith.constant 1 : index
    %c0_138 = arith.constant 0 : index
    %c0_139 = arith.constant 0 : index
    %258 = vector.load %arg9[%c1_137, %c0_138, %c0_139] : memref<2x1x64xf32, #tpu.memory_space<vmem>>, vector<1x1x64xf32>
    %259 = vector.shape_cast %258 : vector<1x1x64xf32> to vector<1x64xf32>
    %cst_140 = arith.constant 0.000000e+00 : f32
    %260 = vector.broadcast %cst_140 : f32 to vector<1x32xf32>
    %261 = vector.extract_strided_slice %255 {offsets = [0, 0], sizes = [7, 32], strides = [1, 1]} : vector<8x32xf32> to vector<7x32xf32>
    %262 = tpu.concatenate %260, %261 in 0 : vector<1x32xf32>, vector<7x32xf32> -> vector<8x32xf32>
    %cst_141 = arith.constant 0.000000e+00 : f32
    %263 = vector.broadcast %cst_141 : f32 to vector<1x32xf32>
    %264 = vector.extract_strided_slice %255 {offsets = [1, 0], sizes = [7, 32], strides = [1, 1]} : vector<8x32xf32> to vector<7x32xf32>
    %265 = tpu.concatenate %264, %263 in 0 : vector<7x32xf32>, vector<1x32xf32> -> vector<8x32xf32>
    %266 = tpu.concatenate %262, %255, %265 in 1 : vector<8x32xf32>, vector<8x32xf32>, vector<8x32xf32> -> vector<8x96xf32>
    %cst_142 = arith.constant dense<0.000000e+00> : vector<8x64xf32>
    %267 = tpu.matmul %266, %257, %cst_142 {dimension_numbers = #tpu.dot_dimension_numbers<[1], [0], [0], [1], [0, 0, 1, 1], [], []>} : vector<8x96xf32>, vector<96x64xf32>, vector<8x64xf32> -> vector<8x64xf32>
    %268 = vector.broadcast %259 : vector<1x64xf32> to vector<8x64xf32>
    %269 = arith.addf %267, %268 : vector<8x64xf32>
    %cst_143 = arith.constant 0.000000e+00 : f32
    %270 = vector.broadcast %cst_143 : f32 to vector<8x64xf32>
    %271 = arith.maximumf %269, %270 : vector<8x64xf32>
    %c1_144 = arith.constant 1 : index
    %c0_145 = arith.constant 0 : index
    %c0_146 = arith.constant 0 : index
    %272 = vector.load %arg12[%c1_144, %c0_145, %c0_146] : memref<2x64x32xf32, #tpu.memory_space<vmem>>, vector<1x64x32xf32>
    %273 = vector.shape_cast %272 : vector<1x64x32xf32> to vector<64x32xf32>
    %c1_147 = arith.constant 1 : index
    %c0_148 = arith.constant 0 : index
    %c0_149 = arith.constant 0 : index
    %274 = vector.load %arg11[%c1_147, %c0_148, %c0_149] : memref<2x1x32xf32, #tpu.memory_space<vmem>>, vector<1x1x32xf32>
    %275 = vector.shape_cast %274 : vector<1x1x32xf32> to vector<1x32xf32>
    %cst_150 = arith.constant dense<0.000000e+00> : vector<8x32xf32>
    %276 = tpu.matmul %271, %273, %cst_150 {dimension_numbers = #tpu.dot_dimension_numbers<[1], [0], [0], [1], [0, 0, 1, 1], [], []>} : vector<8x64xf32>, vector<64x32xf32>, vector<8x32xf32> -> vector<8x32xf32>
    %277 = vector.broadcast %275 : vector<1x32xf32> to vector<8x32xf32>
    %278 = arith.addf %276, %277 : vector<8x32xf32>
    %279 = arith.addf %278, %255 : vector<8x32xf32>
    %c1_151 = arith.constant 1 : index
    %c0_152 = arith.constant 0 : index
    %c0_153 = arith.constant 0 : index
    %280 = vector.load %arg16[%c1_151, %c0_152, %c0_153] : memref<2x1x32xf32, #tpu.memory_space<vmem>>, vector<1x1x32xf32>
    %281 = vector.shape_cast %280 : vector<1x1x32xf32> to vector<1x32xf32>
    %c1_154 = arith.constant 1 : index
    %c0_155 = arith.constant 0 : index
    %c0_156 = arith.constant 0 : index
    %282 = vector.load %arg15[%c1_154, %c0_155, %c0_156] : memref<2x1x32xf32, #tpu.memory_space<vmem>>, vector<1x1x32xf32>
    %283 = vector.shape_cast %282 : vector<1x1x32xf32> to vector<1x32xf32>
    %cst_157 = arith.constant dense<0.000000e+00> : vector<8xf32>
    %284 = vector.multi_reduction <add>, %279, %cst_157 [1] : vector<8x32xf32> to vector<8xf32>
    %285 = vector.shape_cast %284 : vector<8xf32> to vector<8x1xf32>
    %cst_158 = arith.constant 3.200000e+01 : f32
    %286 = vector.broadcast %cst_158 : f32 to vector<8x1xf32>
    %287 = arith.divf %285, %286 : vector<8x1xf32>
    %288 = vector.broadcast %287 : vector<8x1xf32> to vector<8x32xf32>
    %289 = arith.subf %279, %288 : vector<8x32xf32>
    %290 = arith.mulf %289, %289 : vector<8x32xf32>
    %cst_159 = arith.constant dense<0.000000e+00> : vector<8xf32>
    %291 = vector.multi_reduction <add>, %290, %cst_159 [1] : vector<8x32xf32> to vector<8xf32>
    %292 = vector.shape_cast %291 : vector<8xf32> to vector<8x1xf32>
    %cst_160 = arith.constant 3.200000e+01 : f32
    %293 = vector.broadcast %cst_160 : f32 to vector<8x1xf32>
    %294 = arith.divf %292, %293 : vector<8x1xf32>
    %295 = vector.broadcast %287 : vector<8x1xf32> to vector<8x32xf32>
    %296 = arith.subf %279, %295 : vector<8x32xf32>
    %cst_161 = arith.constant 9.99999974E-6 : f32
    %297 = vector.broadcast %cst_161 : f32 to vector<8x1xf32>
    %298 = arith.addf %294, %297 : vector<8x1xf32>
    %299 = math.rsqrt %298 : vector<8x1xf32>
    %300 = vector.broadcast %299 : vector<8x1xf32> to vector<8x32xf32>
    %301 = arith.mulf %296, %300 : vector<8x32xf32>
    %302 = vector.broadcast %281 : vector<1x32xf32> to vector<8x32xf32>
    %303 = arith.mulf %301, %302 : vector<8x32xf32>
    %304 = vector.broadcast %283 : vector<1x32xf32> to vector<8x32xf32>
    %305 = arith.addf %303, %304 : vector<8x32xf32>
    %306 = vector.broadcast %5 : vector<8x1xf32> to vector<8x32xf32>
    %307 = arith.mulf %305, %306 : vector<8x32xf32>
    %c0_162 = arith.constant 0 : index
    %c0_163 = arith.constant 0 : index
    %c0_164 = arith.constant 0 : index
    %308 = vector.load %arg23[%c0_162, %c0_163, %c0_164] : memref<3x96x32xf32, #tpu.memory_space<vmem>>, vector<1x96x32xf32>
    %309 = vector.shape_cast %308 : vector<1x96x32xf32> to vector<96x32xf32>
    %c0_165 = arith.constant 0 : index
    %c0_166 = arith.constant 0 : index
    %c0_167 = arith.constant 0 : index
    %310 = vector.load %arg22[%c0_165, %c0_166, %c0_167] : memref<3x1x32xf32, #tpu.memory_space<vmem>>, vector<1x1x32xf32>
    %311 = vector.shape_cast %310 : vector<1x1x32xf32> to vector<1x32xf32>
    %cst_168 = arith.constant 0.000000e+00 : f32
    %312 = vector.broadcast %cst_168 : f32 to vector<1x32xf32>
    %313 = vector.extract_strided_slice %307 {offsets = [0, 0], sizes = [7, 32], strides = [1, 1]} : vector<8x32xf32> to vector<7x32xf32>
    %314 = tpu.concatenate %312, %313 in 0 : vector<1x32xf32>, vector<7x32xf32> -> vector<8x32xf32>
    %cst_169 = arith.constant 0.000000e+00 : f32
    %315 = vector.broadcast %cst_169 : f32 to vector<1x32xf32>
    %316 = vector.extract_strided_slice %307 {offsets = [1, 0], sizes = [7, 32], strides = [1, 1]} : vector<8x32xf32> to vector<7x32xf32>
    %317 = tpu.concatenate %316, %315 in 0 : vector<7x32xf32>, vector<1x32xf32> -> vector<8x32xf32>
    %318 = tpu.concatenate %314, %307, %317 in 1 : vector<8x32xf32>, vector<8x32xf32>, vector<8x32xf32> -> vector<8x96xf32>
    %cst_170 = arith.constant dense<0.000000e+00> : vector<8x32xf32>
    %319 = tpu.matmul %318, %309, %cst_170 {dimension_numbers = #tpu.dot_dimension_numbers<[1], [0], [0], [1], [0, 0, 1, 1], [], []>} : vector<8x96xf32>, vector<96x32xf32>, vector<8x32xf32> -> vector<8x32xf32>
    %320 = vector.broadcast %311 : vector<1x32xf32> to vector<8x32xf32>
    %321 = arith.addf %319, %320 : vector<8x32xf32>
    %cst_171 = arith.constant 0.000000e+00 : f32
    %322 = vector.broadcast %cst_171 : f32 to vector<8x32xf32>
    %323 = arith.maximumf %321, %322 : vector<8x32xf32>
    %c0_172 = arith.constant 0 : index
    %c0_173 = arith.constant 0 : index
    %c0_174 = arith.constant 0 : index
    %324 = vector.load %arg29[%c0_172, %c0_173, %c0_174] : memref<3x1x32xf32, #tpu.memory_space<vmem>>, vector<1x1x32xf32>
    %325 = vector.shape_cast %324 : vector<1x1x32xf32> to vector<1x32xf32>
    %c0_175 = arith.constant 0 : index
    %c0_176 = arith.constant 0 : index
    %c0_177 = arith.constant 0 : index
    %326 = vector.load %arg28[%c0_175, %c0_176, %c0_177] : memref<3x1x32xf32, #tpu.memory_space<vmem>>, vector<1x1x32xf32>
    %327 = vector.shape_cast %326 : vector<1x1x32xf32> to vector<1x32xf32>
    %cst_178 = arith.constant dense<0.000000e+00> : vector<8xf32>
    %328 = vector.multi_reduction <add>, %323, %cst_178 [1] : vector<8x32xf32> to vector<8xf32>
    %329 = vector.shape_cast %328 : vector<8xf32> to vector<8x1xf32>
    %cst_179 = arith.constant 3.200000e+01 : f32
    %330 = vector.broadcast %cst_179 : f32 to vector<8x1xf32>
    %331 = arith.divf %329, %330 : vector<8x1xf32>
    %332 = vector.broadcast %331 : vector<8x1xf32> to vector<8x32xf32>
    %333 = arith.subf %323, %332 : vector<8x32xf32>
    %334 = arith.mulf %333, %333 : vector<8x32xf32>
    %cst_180 = arith.constant dense<0.000000e+00> : vector<8xf32>
    %335 = vector.multi_reduction <add>, %334, %cst_180 [1] : vector<8x32xf32> to vector<8xf32>
    %336 = vector.shape_cast %335 : vector<8xf32> to vector<8x1xf32>
    %cst_181 = arith.constant 3.200000e+01 : f32
    %337 = vector.broadcast %cst_181 : f32 to vector<8x1xf32>
    %338 = arith.divf %336, %337 : vector<8x1xf32>
    %339 = vector.broadcast %331 : vector<8x1xf32> to vector<8x32xf32>
    %340 = arith.subf %323, %339 : vector<8x32xf32>
    %cst_182 = arith.constant 9.99999974E-6 : f32
    %341 = vector.broadcast %cst_182 : f32 to vector<8x1xf32>
    %342 = arith.addf %338, %341 : vector<8x1xf32>
    %343 = math.rsqrt %342 : vector<8x1xf32>
    %344 = vector.broadcast %343 : vector<8x1xf32> to vector<8x32xf32>
    %345 = arith.mulf %340, %344 : vector<8x32xf32>
    %346 = vector.broadcast %325 : vector<1x32xf32> to vector<8x32xf32>
    %347 = arith.mulf %345, %346 : vector<8x32xf32>
    %348 = vector.broadcast %327 : vector<1x32xf32> to vector<8x32xf32>
    %349 = arith.addf %347, %348 : vector<8x32xf32>
    %c0_183 = arith.constant 0 : index
    %c0_184 = arith.constant 0 : index
    %c0_185 = arith.constant 0 : index
    %350 = vector.load %arg25[%c0_183, %c0_184, %c0_185] : memref<3x96x32xf32, #tpu.memory_space<vmem>>, vector<1x96x32xf32>
    %351 = vector.shape_cast %350 : vector<1x96x32xf32> to vector<96x32xf32>
    %c0_186 = arith.constant 0 : index
    %c0_187 = arith.constant 0 : index
    %c0_188 = arith.constant 0 : index
    %352 = vector.load %arg24[%c0_186, %c0_187, %c0_188] : memref<3x1x32xf32, #tpu.memory_space<vmem>>, vector<1x1x32xf32>
    %353 = vector.shape_cast %352 : vector<1x1x32xf32> to vector<1x32xf32>
    %cst_189 = arith.constant 0.000000e+00 : f32
    %354 = vector.broadcast %cst_189 : f32 to vector<1x32xf32>
    %355 = vector.extract_strided_slice %349 {offsets = [0, 0], sizes = [7, 32], strides = [1, 1]} : vector<8x32xf32> to vector<7x32xf32>
    %356 = tpu.concatenate %354, %355 in 0 : vector<1x32xf32>, vector<7x32xf32> -> vector<8x32xf32>
    %cst_190 = arith.constant 0.000000e+00 : f32
    %357 = vector.broadcast %cst_190 : f32 to vector<1x32xf32>
    %358 = vector.extract_strided_slice %349 {offsets = [1, 0], sizes = [7, 32], strides = [1, 1]} : vector<8x32xf32> to vector<7x32xf32>
    %359 = tpu.concatenate %358, %357 in 0 : vector<7x32xf32>, vector<1x32xf32> -> vector<8x32xf32>
    %360 = tpu.concatenate %356, %349, %359 in 1 : vector<8x32xf32>, vector<8x32xf32>, vector<8x32xf32> -> vector<8x96xf32>
    %cst_191 = arith.constant dense<0.000000e+00> : vector<8x32xf32>
    %361 = tpu.matmul %360, %351, %cst_191 {dimension_numbers = #tpu.dot_dimension_numbers<[1], [0], [0], [1], [0, 0, 1, 1], [], []>} : vector<8x96xf32>, vector<96x32xf32>, vector<8x32xf32> -> vector<8x32xf32>
    %362 = vector.broadcast %353 : vector<1x32xf32> to vector<8x32xf32>
    %363 = arith.addf %361, %362 : vector<8x32xf32>
    %cst_192 = arith.constant 0.000000e+00 : f32
    %364 = vector.broadcast %cst_192 : f32 to vector<8x32xf32>
    %365 = arith.maximumf %363, %364 : vector<8x32xf32>
    %c0_193 = arith.constant 0 : index
    %c0_194 = arith.constant 0 : index
    %c0_195 = arith.constant 0 : index
    %366 = vector.load %arg31[%c0_193, %c0_194, %c0_195] : memref<3x1x32xf32, #tpu.memory_space<vmem>>, vector<1x1x32xf32>
    %367 = vector.shape_cast %366 : vector<1x1x32xf32> to vector<1x32xf32>
    %c0_196 = arith.constant 0 : index
    %c0_197 = arith.constant 0 : index
    %c0_198 = arith.constant 0 : index
    %368 = vector.load %arg30[%c0_196, %c0_197, %c0_198] : memref<3x1x32xf32, #tpu.memory_space<vmem>>, vector<1x1x32xf32>
    %369 = vector.shape_cast %368 : vector<1x1x32xf32> to vector<1x32xf32>
    %cst_199 = arith.constant dense<0.000000e+00> : vector<8xf32>
    %370 = vector.multi_reduction <add>, %365, %cst_199 [1] : vector<8x32xf32> to vector<8xf32>
    %371 = vector.shape_cast %370 : vector<8xf32> to vector<8x1xf32>
    %cst_200 = arith.constant 3.200000e+01 : f32
    %372 = vector.broadcast %cst_200 : f32 to vector<8x1xf32>
    %373 = arith.divf %371, %372 : vector<8x1xf32>
    %374 = vector.broadcast %373 : vector<8x1xf32> to vector<8x32xf32>
    %375 = arith.subf %365, %374 : vector<8x32xf32>
    %376 = arith.mulf %375, %375 : vector<8x32xf32>
    %cst_201 = arith.constant dense<0.000000e+00> : vector<8xf32>
    %377 = vector.multi_reduction <add>, %376, %cst_201 [1] : vector<8x32xf32> to vector<8xf32>
    %378 = vector.shape_cast %377 : vector<8xf32> to vector<8x1xf32>
    %cst_202 = arith.constant 3.200000e+01 : f32
    %379 = vector.broadcast %cst_202 : f32 to vector<8x1xf32>
    %380 = arith.divf %378, %379 : vector<8x1xf32>
    %381 = vector.broadcast %373 : vector<8x1xf32> to vector<8x32xf32>
    %382 = arith.subf %365, %381 : vector<8x32xf32>
    %cst_203 = arith.constant 9.99999974E-6 : f32
    %383 = vector.broadcast %cst_203 : f32 to vector<8x1xf32>
    %384 = arith.addf %380, %383 : vector<8x1xf32>
    %385 = math.rsqrt %384 : vector<8x1xf32>
    %386 = vector.broadcast %385 : vector<8x1xf32> to vector<8x32xf32>
    %387 = arith.mulf %382, %386 : vector<8x32xf32>
    %388 = vector.broadcast %367 : vector<1x32xf32> to vector<8x32xf32>
    %389 = arith.mulf %387, %388 : vector<8x32xf32>
    %390 = vector.broadcast %369 : vector<1x32xf32> to vector<8x32xf32>
    %391 = arith.addf %389, %390 : vector<8x32xf32>
    %c0_204 = arith.constant 0 : index
    %c0_205 = arith.constant 0 : index
    %c0_206 = arith.constant 0 : index
    %392 = vector.load %arg27[%c0_204, %c0_205, %c0_206] : memref<3x32x1xf32, #tpu.memory_space<vmem>>, vector<1x32x1xf32>
    %393 = vector.shape_cast %392 : vector<1x32x1xf32> to vector<32x1xf32>
    %cst_207 = arith.constant dense<0.000000e+00> : vector<8x1xf32>
    %394 = tpu.matmul %391, %393, %cst_207 {dimension_numbers = #tpu.dot_dimension_numbers<[1], [0], [0], [1], [0, 0, 1, 1], [], []>} : vector<8x32xf32>, vector<32x1xf32>, vector<8x1xf32> -> vector<8x1xf32>
    %c0_208 = arith.constant 0 : index
    %c0_209 = arith.constant 0 : index
    %c0_210 = arith.constant 0 : index
    %395 = vector.load %arg26[%c0_208, %c0_209, %c0_210] : memref<3x1x1xf32, #tpu.memory_space<vmem>>, vector<1x1x1xf32>
    %396 = vector.shape_cast %395 : vector<1x1x1xf32> to vector<1x1xf32>
    %397 = vector.broadcast %396 : vector<1x1xf32> to vector<8x1xf32>
    %398 = arith.addf %394, %397 : vector<8x1xf32>
    %399 = arith.mulf %398, %5 : vector<8x1xf32>
    %c1_211 = arith.constant 1 : index
    %c0_212 = arith.constant 0 : index
    %c0_213 = arith.constant 0 : index
    %400 = vector.load %arg23[%c1_211, %c0_212, %c0_213] : memref<3x96x32xf32, #tpu.memory_space<vmem>>, vector<1x96x32xf32>
    %401 = vector.shape_cast %400 : vector<1x96x32xf32> to vector<96x32xf32>
    %c1_214 = arith.constant 1 : index
    %c0_215 = arith.constant 0 : index
    %c0_216 = arith.constant 0 : index
    %402 = vector.load %arg22[%c1_214, %c0_215, %c0_216] : memref<3x1x32xf32, #tpu.memory_space<vmem>>, vector<1x1x32xf32>
    %403 = vector.shape_cast %402 : vector<1x1x32xf32> to vector<1x32xf32>
    %cst_217 = arith.constant 0.000000e+00 : f32
    %404 = vector.broadcast %cst_217 : f32 to vector<1x32xf32>
    %405 = vector.extract_strided_slice %307 {offsets = [0, 0], sizes = [7, 32], strides = [1, 1]} : vector<8x32xf32> to vector<7x32xf32>
    %406 = tpu.concatenate %404, %405 in 0 : vector<1x32xf32>, vector<7x32xf32> -> vector<8x32xf32>
    %cst_218 = arith.constant 0.000000e+00 : f32
    %407 = vector.broadcast %cst_218 : f32 to vector<1x32xf32>
    %408 = vector.extract_strided_slice %307 {offsets = [1, 0], sizes = [7, 32], strides = [1, 1]} : vector<8x32xf32> to vector<7x32xf32>
    %409 = tpu.concatenate %408, %407 in 0 : vector<7x32xf32>, vector<1x32xf32> -> vector<8x32xf32>
    %410 = tpu.concatenate %406, %307, %409 in 1 : vector<8x32xf32>, vector<8x32xf32>, vector<8x32xf32> -> vector<8x96xf32>
    %cst_219 = arith.constant dense<0.000000e+00> : vector<8x32xf32>
    %411 = tpu.matmul %410, %401, %cst_219 {dimension_numbers = #tpu.dot_dimension_numbers<[1], [0], [0], [1], [0, 0, 1, 1], [], []>} : vector<8x96xf32>, vector<96x32xf32>, vector<8x32xf32> -> vector<8x32xf32>
    %412 = vector.broadcast %403 : vector<1x32xf32> to vector<8x32xf32>
    %413 = arith.addf %411, %412 : vector<8x32xf32>
    %cst_220 = arith.constant 0.000000e+00 : f32
    %414 = vector.broadcast %cst_220 : f32 to vector<8x32xf32>
    %415 = arith.maximumf %413, %414 : vector<8x32xf32>
    %c1_221 = arith.constant 1 : index
    %c0_222 = arith.constant 0 : index
    %c0_223 = arith.constant 0 : index
    %416 = vector.load %arg29[%c1_221, %c0_222, %c0_223] : memref<3x1x32xf32, #tpu.memory_space<vmem>>, vector<1x1x32xf32>
    %417 = vector.shape_cast %416 : vector<1x1x32xf32> to vector<1x32xf32>
    %c1_224 = arith.constant 1 : index
    %c0_225 = arith.constant 0 : index
    %c0_226 = arith.constant 0 : index
    %418 = vector.load %arg28[%c1_224, %c0_225, %c0_226] : memref<3x1x32xf32, #tpu.memory_space<vmem>>, vector<1x1x32xf32>
    %419 = vector.shape_cast %418 : vector<1x1x32xf32> to vector<1x32xf32>
    %cst_227 = arith.constant dense<0.000000e+00> : vector<8xf32>
    %420 = vector.multi_reduction <add>, %415, %cst_227 [1] : vector<8x32xf32> to vector<8xf32>
    %421 = vector.shape_cast %420 : vector<8xf32> to vector<8x1xf32>
    %cst_228 = arith.constant 3.200000e+01 : f32
    %422 = vector.broadcast %cst_228 : f32 to vector<8x1xf32>
    %423 = arith.divf %421, %422 : vector<8x1xf32>
    %424 = vector.broadcast %423 : vector<8x1xf32> to vector<8x32xf32>
    %425 = arith.subf %415, %424 : vector<8x32xf32>
    %426 = arith.mulf %425, %425 : vector<8x32xf32>
    %cst_229 = arith.constant dense<0.000000e+00> : vector<8xf32>
    %427 = vector.multi_reduction <add>, %426, %cst_229 [1] : vector<8x32xf32> to vector<8xf32>
    %428 = vector.shape_cast %427 : vector<8xf32> to vector<8x1xf32>
    %cst_230 = arith.constant 3.200000e+01 : f32
    %429 = vector.broadcast %cst_230 : f32 to vector<8x1xf32>
    %430 = arith.divf %428, %429 : vector<8x1xf32>
    %431 = vector.broadcast %423 : vector<8x1xf32> to vector<8x32xf32>
    %432 = arith.subf %415, %431 : vector<8x32xf32>
    %cst_231 = arith.constant 9.99999974E-6 : f32
    %433 = vector.broadcast %cst_231 : f32 to vector<8x1xf32>
    %434 = arith.addf %430, %433 : vector<8x1xf32>
    %435 = math.rsqrt %434 : vector<8x1xf32>
    %436 = vector.broadcast %435 : vector<8x1xf32> to vector<8x32xf32>
    %437 = arith.mulf %432, %436 : vector<8x32xf32>
    %438 = vector.broadcast %417 : vector<1x32xf32> to vector<8x32xf32>
    %439 = arith.mulf %437, %438 : vector<8x32xf32>
    %440 = vector.broadcast %419 : vector<1x32xf32> to vector<8x32xf32>
    %441 = arith.addf %439, %440 : vector<8x32xf32>
    %c1_232 = arith.constant 1 : index
    %c0_233 = arith.constant 0 : index
    %c0_234 = arith.constant 0 : index
    %442 = vector.load %arg25[%c1_232, %c0_233, %c0_234] : memref<3x96x32xf32, #tpu.memory_space<vmem>>, vector<1x96x32xf32>
    %443 = vector.shape_cast %442 : vector<1x96x32xf32> to vector<96x32xf32>
    %c1_235 = arith.constant 1 : index
    %c0_236 = arith.constant 0 : index
    %c0_237 = arith.constant 0 : index
    %444 = vector.load %arg24[%c1_235, %c0_236, %c0_237] : memref<3x1x32xf32, #tpu.memory_space<vmem>>, vector<1x1x32xf32>
    %445 = vector.shape_cast %444 : vector<1x1x32xf32> to vector<1x32xf32>
    %cst_238 = arith.constant 0.000000e+00 : f32
    %446 = vector.broadcast %cst_238 : f32 to vector<1x32xf32>
    %447 = vector.extract_strided_slice %441 {offsets = [0, 0], sizes = [7, 32], strides = [1, 1]} : vector<8x32xf32> to vector<7x32xf32>
    %448 = tpu.concatenate %446, %447 in 0 : vector<1x32xf32>, vector<7x32xf32> -> vector<8x32xf32>
    %cst_239 = arith.constant 0.000000e+00 : f32
    %449 = vector.broadcast %cst_239 : f32 to vector<1x32xf32>
    %450 = vector.extract_strided_slice %441 {offsets = [1, 0], sizes = [7, 32], strides = [1, 1]} : vector<8x32xf32> to vector<7x32xf32>
    %451 = tpu.concatenate %450, %449 in 0 : vector<7x32xf32>, vector<1x32xf32> -> vector<8x32xf32>
    %452 = tpu.concatenate %448, %441, %451 in 1 : vector<8x32xf32>, vector<8x32xf32>, vector<8x32xf32> -> vector<8x96xf32>
    %cst_240 = arith.constant dense<0.000000e+00> : vector<8x32xf32>
    %453 = tpu.matmul %452, %443, %cst_240 {dimension_numbers = #tpu.dot_dimension_numbers<[1], [0], [0], [1], [0, 0, 1, 1], [], []>} : vector<8x96xf32>, vector<96x32xf32>, vector<8x32xf32> -> vector<8x32xf32>
    %454 = vector.broadcast %445 : vector<1x32xf32> to vector<8x32xf32>
    %455 = arith.addf %453, %454 : vector<8x32xf32>
    %cst_241 = arith.constant 0.000000e+00 : f32
    %456 = vector.broadcast %cst_241 : f32 to vector<8x32xf32>
    %457 = arith.maximumf %455, %456 : vector<8x32xf32>
    %c1_242 = arith.constant 1 : index
    %c0_243 = arith.constant 0 : index
    %c0_244 = arith.constant 0 : index
    %458 = vector.load %arg31[%c1_242, %c0_243, %c0_244] : memref<3x1x32xf32, #tpu.memory_space<vmem>>, vector<1x1x32xf32>
    %459 = vector.shape_cast %458 : vector<1x1x32xf32> to vector<1x32xf32>
    %c1_245 = arith.constant 1 : index
    %c0_246 = arith.constant 0 : index
    %c0_247 = arith.constant 0 : index
    %460 = vector.load %arg30[%c1_245, %c0_246, %c0_247] : memref<3x1x32xf32, #tpu.memory_space<vmem>>, vector<1x1x32xf32>
    %461 = vector.shape_cast %460 : vector<1x1x32xf32> to vector<1x32xf32>
    %cst_248 = arith.constant dense<0.000000e+00> : vector<8xf32>
    %462 = vector.multi_reduction <add>, %457, %cst_248 [1] : vector<8x32xf32> to vector<8xf32>
    %463 = vector.shape_cast %462 : vector<8xf32> to vector<8x1xf32>
    %cst_249 = arith.constant 3.200000e+01 : f32
    %464 = vector.broadcast %cst_249 : f32 to vector<8x1xf32>
    %465 = arith.divf %463, %464 : vector<8x1xf32>
    %466 = vector.broadcast %465 : vector<8x1xf32> to vector<8x32xf32>
    %467 = arith.subf %457, %466 : vector<8x32xf32>
    %468 = arith.mulf %467, %467 : vector<8x32xf32>
    %cst_250 = arith.constant dense<0.000000e+00> : vector<8xf32>
    %469 = vector.multi_reduction <add>, %468, %cst_250 [1] : vector<8x32xf32> to vector<8xf32>
    %470 = vector.shape_cast %469 : vector<8xf32> to vector<8x1xf32>
    %cst_251 = arith.constant 3.200000e+01 : f32
    %471 = vector.broadcast %cst_251 : f32 to vector<8x1xf32>
    %472 = arith.divf %470, %471 : vector<8x1xf32>
    %473 = vector.broadcast %465 : vector<8x1xf32> to vector<8x32xf32>
    %474 = arith.subf %457, %473 : vector<8x32xf32>
    %cst_252 = arith.constant 9.99999974E-6 : f32
    %475 = vector.broadcast %cst_252 : f32 to vector<8x1xf32>
    %476 = arith.addf %472, %475 : vector<8x1xf32>
    %477 = math.rsqrt %476 : vector<8x1xf32>
    %478 = vector.broadcast %477 : vector<8x1xf32> to vector<8x32xf32>
    %479 = arith.mulf %474, %478 : vector<8x32xf32>
    %480 = vector.broadcast %459 : vector<1x32xf32> to vector<8x32xf32>
    %481 = arith.mulf %479, %480 : vector<8x32xf32>
    %482 = vector.broadcast %461 : vector<1x32xf32> to vector<8x32xf32>
    %483 = arith.addf %481, %482 : vector<8x32xf32>
    %c1_253 = arith.constant 1 : index
    %c0_254 = arith.constant 0 : index
    %c0_255 = arith.constant 0 : index
    %484 = vector.load %arg27[%c1_253, %c0_254, %c0_255] : memref<3x32x1xf32, #tpu.memory_space<vmem>>, vector<1x32x1xf32>
    %485 = vector.shape_cast %484 : vector<1x32x1xf32> to vector<32x1xf32>
    %cst_256 = arith.constant dense<0.000000e+00> : vector<8x1xf32>
    %486 = tpu.matmul %483, %485, %cst_256 {dimension_numbers = #tpu.dot_dimension_numbers<[1], [0], [0], [1], [0, 0, 1, 1], [], []>} : vector<8x32xf32>, vector<32x1xf32>, vector<8x1xf32> -> vector<8x1xf32>
    %c1_257 = arith.constant 1 : index
    %c0_258 = arith.constant 0 : index
    %c0_259 = arith.constant 0 : index
    %487 = vector.load %arg26[%c1_257, %c0_258, %c0_259] : memref<3x1x1xf32, #tpu.memory_space<vmem>>, vector<1x1x1xf32>
    %488 = vector.shape_cast %487 : vector<1x1x1xf32> to vector<1x1xf32>
    %489 = vector.broadcast %488 : vector<1x1xf32> to vector<8x1xf32>
    %490 = arith.addf %486, %489 : vector<8x1xf32>
    %491 = arith.mulf %490, %5 : vector<8x1xf32>
    %cst_260 = arith.constant 1.000000e+00 : f32
    %492 = vector.broadcast %cst_260 : f32 to vector<8x1xf32>
    %493 = arith.mulf %491, %492 : vector<8x1xf32>
    %c0_261 = arith.constant 0 : index
    %c0_262 = arith.constant 0 : index
    %c0_263 = arith.constant 0 : index
    %494 = vector.load %arg4[%c0_261, %c0_262, %c0_263] : memref<2x1x31xf32, #tpu.memory_space<vmem>>, vector<1x1x31xf32>
    %495 = vector.shape_cast %494 : vector<1x1x31xf32> to vector<1x31xf32>
    %c0_264 = arith.constant 0 : index
    %c0_265 = arith.constant 0 : index
    %c0_266 = arith.constant 0 : index
    %496 = vector.load %arg21[%c0_264, %c0_265, %c0_266] : memref<2x32x32xf32, #tpu.memory_space<vmem>>, vector<1x32x32xf32>
    %497 = vector.shape_cast %496 : vector<1x32x32xf32> to vector<32x32xf32>
    %498 = vector.broadcast %495 : vector<1x31xf32> to vector<8x31xf32>
    %499 = vector.broadcast %493 : vector<8x1xf32> to vector<8x31xf32>
    %500 = arith.cmpf olt, %498, %499 : vector<8x31xf32>
    %501 = arith.extui %500 : vector<8x31xi1> to vector<8x31xi32>
    %cst_267 = arith.constant dense<0> : vector<8xi32>
    %502 = vector.multi_reduction <add>, %501, %cst_267 [1] : vector<8x31xi32> to vector<8xi32>
    %503 = vector.shape_cast %502 : vector<8xi32> to vector<8x1xi32>
    %504 = tpu.iota {dimensions = array<i32: 1>} : vector<8x32xi32>
    %505 = vector.broadcast %503 : vector<8x1xi32> to vector<8x32xi32>
    %506 = arith.cmpi eq, %505, %504 : vector<8x32xi32>
    %507 = arith.extui %506 : vector<8x32xi1> to vector<8x32xi32>
    %508 = arith.sitofp %507 : vector<8x32xi32> to vector<8x32xf32>
    %cst_268 = arith.constant dense<0.000000e+00> : vector<8x32xf32>
    %509 = tpu.matmul %508, %497, %cst_268 {dimension_numbers = #tpu.dot_dimension_numbers<[1], [0], [0], [1], [0, 0, 1, 1], [], []>} : vector<8x32xf32>, vector<32x32xf32>, vector<8x32xf32> -> vector<8x32xf32>
    %510 = arith.addf %307, %509 : vector<8x32xf32>
    %c2 = arith.constant 2 : index
    %c0_269 = arith.constant 0 : index
    %c0_270 = arith.constant 0 : index
    %511 = vector.load %arg23[%c2, %c0_269, %c0_270] : memref<3x96x32xf32, #tpu.memory_space<vmem>>, vector<1x96x32xf32>
    %512 = vector.shape_cast %511 : vector<1x96x32xf32> to vector<96x32xf32>
    %c2_271 = arith.constant 2 : index
    %c0_272 = arith.constant 0 : index
    %c0_273 = arith.constant 0 : index
    %513 = vector.load %arg22[%c2_271, %c0_272, %c0_273] : memref<3x1x32xf32, #tpu.memory_space<vmem>>, vector<1x1x32xf32>
    %514 = vector.shape_cast %513 : vector<1x1x32xf32> to vector<1x32xf32>
    %cst_274 = arith.constant 0.000000e+00 : f32
    %515 = vector.broadcast %cst_274 : f32 to vector<1x32xf32>
    %516 = vector.extract_strided_slice %510 {offsets = [0, 0], sizes = [7, 32], strides = [1, 1]} : vector<8x32xf32> to vector<7x32xf32>
    %517 = tpu.concatenate %515, %516 in 0 : vector<1x32xf32>, vector<7x32xf32> -> vector<8x32xf32>
    %cst_275 = arith.constant 0.000000e+00 : f32
    %518 = vector.broadcast %cst_275 : f32 to vector<1x32xf32>
    %519 = vector.extract_strided_slice %510 {offsets = [1, 0], sizes = [7, 32], strides = [1, 1]} : vector<8x32xf32> to vector<7x32xf32>
    %520 = tpu.concatenate %519, %518 in 0 : vector<7x32xf32>, vector<1x32xf32> -> vector<8x32xf32>
    %521 = tpu.concatenate %517, %510, %520 in 1 : vector<8x32xf32>, vector<8x32xf32>, vector<8x32xf32> -> vector<8x96xf32>
    %cst_276 = arith.constant dense<0.000000e+00> : vector<8x32xf32>
    %522 = tpu.matmul %521, %512, %cst_276 {dimension_numbers = #tpu.dot_dimension_numbers<[1], [0], [0], [1], [0, 0, 1, 1], [], []>} : vector<8x96xf32>, vector<96x32xf32>, vector<8x32xf32> -> vector<8x32xf32>
    %523 = vector.broadcast %514 : vector<1x32xf32> to vector<8x32xf32>
    %524 = arith.addf %522, %523 : vector<8x32xf32>
    %cst_277 = arith.constant 0.000000e+00 : f32
    %525 = vector.broadcast %cst_277 : f32 to vector<8x32xf32>
    %526 = arith.maximumf %524, %525 : vector<8x32xf32>
    %c2_278 = arith.constant 2 : index
    %c0_279 = arith.constant 0 : index
    %c0_280 = arith.constant 0 : index
    %527 = vector.load %arg29[%c2_278, %c0_279, %c0_280] : memref<3x1x32xf32, #tpu.memory_space<vmem>>, vector<1x1x32xf32>
    %528 = vector.shape_cast %527 : vector<1x1x32xf32> to vector<1x32xf32>
    %c2_281 = arith.constant 2 : index
    %c0_282 = arith.constant 0 : index
    %c0_283 = arith.constant 0 : index
    %529 = vector.load %arg28[%c2_281, %c0_282, %c0_283] : memref<3x1x32xf32, #tpu.memory_space<vmem>>, vector<1x1x32xf32>
    %530 = vector.shape_cast %529 : vector<1x1x32xf32> to vector<1x32xf32>
    %cst_284 = arith.constant dense<0.000000e+00> : vector<8xf32>
    %531 = vector.multi_reduction <add>, %526, %cst_284 [1] : vector<8x32xf32> to vector<8xf32>
    %532 = vector.shape_cast %531 : vector<8xf32> to vector<8x1xf32>
    %cst_285 = arith.constant 3.200000e+01 : f32
    %533 = vector.broadcast %cst_285 : f32 to vector<8x1xf32>
    %534 = arith.divf %532, %533 : vector<8x1xf32>
    %535 = vector.broadcast %534 : vector<8x1xf32> to vector<8x32xf32>
    %536 = arith.subf %526, %535 : vector<8x32xf32>
    %537 = arith.mulf %536, %536 : vector<8x32xf32>
    %cst_286 = arith.constant dense<0.000000e+00> : vector<8xf32>
    %538 = vector.multi_reduction <add>, %537, %cst_286 [1] : vector<8x32xf32> to vector<8xf32>
    %539 = vector.shape_cast %538 : vector<8xf32> to vector<8x1xf32>
    %cst_287 = arith.constant 3.200000e+01 : f32
    %540 = vector.broadcast %cst_287 : f32 to vector<8x1xf32>
    %541 = arith.divf %539, %540 : vector<8x1xf32>
    %542 = vector.broadcast %534 : vector<8x1xf32> to vector<8x32xf32>
    %543 = arith.subf %526, %542 : vector<8x32xf32>
    %cst_288 = arith.constant 9.99999974E-6 : f32
    %544 = vector.broadcast %cst_288 : f32 to vector<8x1xf32>
    %545 = arith.addf %541, %544 : vector<8x1xf32>
    %546 = math.rsqrt %545 : vector<8x1xf32>
    %547 = vector.broadcast %546 : vector<8x1xf32> to vector<8x32xf32>
    %548 = arith.mulf %543, %547 : vector<8x32xf32>
    %549 = vector.broadcast %528 : vector<1x32xf32> to vector<8x32xf32>
    %550 = arith.mulf %548, %549 : vector<8x32xf32>
    %551 = vector.broadcast %530 : vector<1x32xf32> to vector<8x32xf32>
    %552 = arith.addf %550, %551 : vector<8x32xf32>
    %c2_289 = arith.constant 2 : index
    %c0_290 = arith.constant 0 : index
    %c0_291 = arith.constant 0 : index
    %553 = vector.load %arg25[%c2_289, %c0_290, %c0_291] : memref<3x96x32xf32, #tpu.memory_space<vmem>>, vector<1x96x32xf32>
    %554 = vector.shape_cast %553 : vector<1x96x32xf32> to vector<96x32xf32>
    %c2_292 = arith.constant 2 : index
    %c0_293 = arith.constant 0 : index
    %c0_294 = arith.constant 0 : index
    %555 = vector.load %arg24[%c2_292, %c0_293, %c0_294] : memref<3x1x32xf32, #tpu.memory_space<vmem>>, vector<1x1x32xf32>
    %556 = vector.shape_cast %555 : vector<1x1x32xf32> to vector<1x32xf32>
    %cst_295 = arith.constant 0.000000e+00 : f32
    %557 = vector.broadcast %cst_295 : f32 to vector<1x32xf32>
    %558 = vector.extract_strided_slice %552 {offsets = [0, 0], sizes = [7, 32], strides = [1, 1]} : vector<8x32xf32> to vector<7x32xf32>
    %559 = tpu.concatenate %557, %558 in 0 : vector<1x32xf32>, vector<7x32xf32> -> vector<8x32xf32>
    %cst_296 = arith.constant 0.000000e+00 : f32
    %560 = vector.broadcast %cst_296 : f32 to vector<1x32xf32>
    %561 = vector.extract_strided_slice %552 {offsets = [1, 0], sizes = [7, 32], strides = [1, 1]} : vector<8x32xf32> to vector<7x32xf32>
    %562 = tpu.concatenate %561, %560 in 0 : vector<7x32xf32>, vector<1x32xf32> -> vector<8x32xf32>
    %563 = tpu.concatenate %559, %552, %562 in 1 : vector<8x32xf32>, vector<8x32xf32>, vector<8x32xf32> -> vector<8x96xf32>
    %cst_297 = arith.constant dense<0.000000e+00> : vector<8x32xf32>
    %564 = tpu.matmul %563, %554, %cst_297 {dimension_numbers = #tpu.dot_dimension_numbers<[1], [0], [0], [1], [0, 0, 1, 1], [], []>} : vector<8x96xf32>, vector<96x32xf32>, vector<8x32xf32> -> vector<8x32xf32>
    %565 = vector.broadcast %556 : vector<1x32xf32> to vector<8x32xf32>
    %566 = arith.addf %564, %565 : vector<8x32xf32>
    %cst_298 = arith.constant 0.000000e+00 : f32
    %567 = vector.broadcast %cst_298 : f32 to vector<8x32xf32>
    %568 = arith.maximumf %566, %567 : vector<8x32xf32>
    %c2_299 = arith.constant 2 : index
    %c0_300 = arith.constant 0 : index
    %c0_301 = arith.constant 0 : index
    %569 = vector.load %arg31[%c2_299, %c0_300, %c0_301] : memref<3x1x32xf32, #tpu.memory_space<vmem>>, vector<1x1x32xf32>
    %570 = vector.shape_cast %569 : vector<1x1x32xf32> to vector<1x32xf32>
    %c2_302 = arith.constant 2 : index
    %c0_303 = arith.constant 0 : index
    %c0_304 = arith.constant 0 : index
    %571 = vector.load %arg30[%c2_302, %c0_303, %c0_304] : memref<3x1x32xf32, #tpu.memory_space<vmem>>, vector<1x1x32xf32>
    %572 = vector.shape_cast %571 : vector<1x1x32xf32> to vector<1x32xf32>
    %cst_305 = arith.constant dense<0.000000e+00> : vector<8xf32>
    %573 = vector.multi_reduction <add>, %568, %cst_305 [1] : vector<8x32xf32> to vector<8xf32>
    %574 = vector.shape_cast %573 : vector<8xf32> to vector<8x1xf32>
    %cst_306 = arith.constant 3.200000e+01 : f32
    %575 = vector.broadcast %cst_306 : f32 to vector<8x1xf32>
    %576 = arith.divf %574, %575 : vector<8x1xf32>
    %577 = vector.broadcast %576 : vector<8x1xf32> to vector<8x32xf32>
    %578 = arith.subf %568, %577 : vector<8x32xf32>
    %579 = arith.mulf %578, %578 : vector<8x32xf32>
    %cst_307 = arith.constant dense<0.000000e+00> : vector<8xf32>
    %580 = vector.multi_reduction <add>, %579, %cst_307 [1] : vector<8x32xf32> to vector<8xf32>
    %581 = vector.shape_cast %580 : vector<8xf32> to vector<8x1xf32>
    %cst_308 = arith.constant 3.200000e+01 : f32
    %582 = vector.broadcast %cst_308 : f32 to vector<8x1xf32>
    %583 = arith.divf %581, %582 : vector<8x1xf32>
    %584 = vector.broadcast %576 : vector<8x1xf32> to vector<8x32xf32>
    %585 = arith.subf %568, %584 : vector<8x32xf32>
    %cst_309 = arith.constant 9.99999974E-6 : f32
    %586 = vector.broadcast %cst_309 : f32 to vector<8x1xf32>
    %587 = arith.addf %583, %586 : vector<8x1xf32>
    %588 = math.rsqrt %587 : vector<8x1xf32>
    %589 = vector.broadcast %588 : vector<8x1xf32> to vector<8x32xf32>
    %590 = arith.mulf %585, %589 : vector<8x32xf32>
    %591 = vector.broadcast %570 : vector<1x32xf32> to vector<8x32xf32>
    %592 = arith.mulf %590, %591 : vector<8x32xf32>
    %593 = vector.broadcast %572 : vector<1x32xf32> to vector<8x32xf32>
    %594 = arith.addf %592, %593 : vector<8x32xf32>
    %c2_310 = arith.constant 2 : index
    %c0_311 = arith.constant 0 : index
    %c0_312 = arith.constant 0 : index
    %595 = vector.load %arg27[%c2_310, %c0_311, %c0_312] : memref<3x32x1xf32, #tpu.memory_space<vmem>>, vector<1x32x1xf32>
    %596 = vector.shape_cast %595 : vector<1x32x1xf32> to vector<32x1xf32>
    %cst_313 = arith.constant dense<0.000000e+00> : vector<8x1xf32>
    %597 = tpu.matmul %594, %596, %cst_313 {dimension_numbers = #tpu.dot_dimension_numbers<[1], [0], [0], [1], [0, 0, 1, 1], [], []>} : vector<8x32xf32>, vector<32x1xf32>, vector<8x1xf32> -> vector<8x1xf32>
    %c2_314 = arith.constant 2 : index
    %c0_315 = arith.constant 0 : index
    %c0_316 = arith.constant 0 : index
    %598 = vector.load %arg26[%c2_314, %c0_315, %c0_316] : memref<3x1x1xf32, #tpu.memory_space<vmem>>, vector<1x1x1xf32>
    %599 = vector.shape_cast %598 : vector<1x1x1xf32> to vector<1x1xf32>
    %600 = vector.broadcast %599 : vector<1x1xf32> to vector<8x1xf32>
    %601 = arith.addf %597, %600 : vector<8x1xf32>
    %602 = arith.mulf %601, %5 : vector<8x1xf32>
    %cst_317 = arith.constant 1.000000e+00 : f32
    %603 = vector.broadcast %cst_317 : f32 to vector<8x1xf32>
    %604 = arith.mulf %602, %603 : vector<8x1xf32>
    %c1_318 = arith.constant 1 : index
    %c0_319 = arith.constant 0 : index
    %c0_320 = arith.constant 0 : index
    %605 = vector.load %arg4[%c1_318, %c0_319, %c0_320] : memref<2x1x31xf32, #tpu.memory_space<vmem>>, vector<1x1x31xf32>
    %606 = vector.shape_cast %605 : vector<1x1x31xf32> to vector<1x31xf32>
    %c1_321 = arith.constant 1 : index
    %c0_322 = arith.constant 0 : index
    %c0_323 = arith.constant 0 : index
    %607 = vector.load %arg21[%c1_321, %c0_322, %c0_323] : memref<2x32x32xf32, #tpu.memory_space<vmem>>, vector<1x32x32xf32>
    %608 = vector.shape_cast %607 : vector<1x32x32xf32> to vector<32x32xf32>
    %609 = vector.broadcast %606 : vector<1x31xf32> to vector<8x31xf32>
    %610 = vector.broadcast %604 : vector<8x1xf32> to vector<8x31xf32>
    %611 = arith.cmpf olt, %609, %610 : vector<8x31xf32>
    %612 = arith.extui %611 : vector<8x31xi1> to vector<8x31xi32>
    %cst_324 = arith.constant dense<0> : vector<8xi32>
    %613 = vector.multi_reduction <add>, %612, %cst_324 [1] : vector<8x31xi32> to vector<8xi32>
    %614 = vector.shape_cast %613 : vector<8xi32> to vector<8x1xi32>
    %615 = tpu.iota {dimensions = array<i32: 1>} : vector<8x32xi32>
    %616 = vector.broadcast %614 : vector<8x1xi32> to vector<8x32xi32>
    %617 = arith.cmpi eq, %616, %615 : vector<8x32xi32>
    %618 = arith.extui %617 : vector<8x32xi1> to vector<8x32xi32>
    %619 = arith.sitofp %618 : vector<8x32xi32> to vector<8x32xf32>
    %cst_325 = arith.constant dense<0.000000e+00> : vector<8x32xf32>
    %620 = tpu.matmul %619, %608, %cst_325 {dimension_numbers = #tpu.dot_dimension_numbers<[1], [0], [0], [1], [0, 0, 1, 1], [], []>} : vector<8x32xf32>, vector<32x32xf32>, vector<8x32xf32> -> vector<8x32xf32>
    %621 = arith.addf %510, %620 : vector<8x32xf32>
    %c0_326 = arith.constant 0 : index
    %c0_327 = arith.constant 0 : index
    %c0_328 = arith.constant 0 : index
    %622 = vector.load %arg32[%c0_326, %c0_327, %c0_328] : memref<1x8x32xf32, #tpu.memory_space<vmem>>, vector<1x8x32xf32>
    %623 = vector.shape_cast %622 : vector<1x8x32xf32> to vector<8x32xf32>
    %624 = vector.shape_cast %621 : vector<8x32xf32> to vector<1x8x32xf32>
    tpu.vector_store %arg32[%c0_326, %c0_327, %c0_328], %624 {strides = array<i32>} : memref<1x8x32xf32, #tpu.memory_space<vmem>>, vector<1x8x32xf32>,
    %c0_329 = arith.constant 0 : index
    %c0_330 = arith.constant 0 : index
    %c0_331 = arith.constant 0 : index
    %625 = vector.load %arg33[%c0_329, %c0_330, %c0_331] : memref<1x8x1xf32, #tpu.memory_space<vmem>>, vector<1x8x1xf32>
    %626 = vector.shape_cast %625 : vector<1x8x1xf32> to vector<8x1xf32>
    %627 = vector.shape_cast %399 : vector<8x1xf32> to vector<1x8x1xf32>
    tpu.vector_store %arg33[%c0_329, %c0_330, %c0_331], %627 {strides = array<i32>} : memref<1x8x1xf32, #tpu.memory_space<vmem>>, vector<1x8x1xf32>,
    %c0_332 = arith.constant 0 : index
    %c0_333 = arith.constant 0 : index
    %c0_334 = arith.constant 0 : index
    %628 = vector.load %arg34[%c0_332, %c0_333, %c0_334] : memref<1x8x1xf32, #tpu.memory_space<vmem>>, vector<1x8x1xf32>
    %629 = vector.shape_cast %628 : vector<1x8x1xf32> to vector<8x1xf32>
    %630 = vector.shape_cast %493 : vector<8x1xf32> to vector<1x8x1xf32>
    tpu.vector_store %arg34[%c0_332, %c0_333, %c0_334], %630 {strides = array<i32>} : memref<1x8x1xf32, #tpu.memory_space<vmem>>, vector<1x8x1xf32>,
    %c0_335 = arith.constant 0 : index
    %c0_336 = arith.constant 0 : index
    %c0_337 = arith.constant 0 : index
    %631 = vector.load %arg35[%c0_335, %c0_336, %c0_337] : memref<1x8x1xf32, #tpu.memory_space<vmem>>, vector<1x8x1xf32>
    %632 = vector.shape_cast %631 : vector<1x8x1xf32> to vector<8x1xf32>
    %633 = vector.shape_cast %604 : vector<8x1xf32> to vector<1x8x1xf32>
    tpu.vector_store %arg35[%c0_335, %c0_336, %c0_337], %633 {strides = array<i32>} : memref<1x8x1xf32, #tpu.memory_space<vmem>>, vector<1x8x1xf32>,
    return
  }
  func.func @transform_0(%arg0: i32) -> (i32, i32, i32) {
    %c0_i32 = arith.constant 0 : i32
    %c0_i32_0 = arith.constant 0 : i32
    %c0_i32_1 = arith.constant 0 : i32
    return %arg0, %c0_i32, %c0_i32_0 : i32, i32, i32
  }
  func.func @transform_1(%arg0: i32) -> (i32, i32, i32) {
    %c0_i32 = arith.constant 0 : i32
    %c0_i32_0 = arith.constant 0 : i32
    %c0_i32_1 = arith.constant 0 : i32
    return %arg0, %c0_i32, %c0_i32_0 : i32, i32, i32
  }
  func.func @transform_2(%arg0: i32) -> (i32, i32, i32) {
    %c0_i32 = arith.constant 0 : i32
    %c0_i32_0 = arith.constant 0 : i32
    %c0_i32_1 = arith.constant 0 : i32
    return %arg0, %c0_i32, %c0_i32_0 : i32, i32, i32
  }
  func.func @transform_3(%arg0: i32) -> (i32, i32, i32) {
    %c0_i32 = arith.constant 0 : i32
    %c0_i32_0 = arith.constant 0 : i32
    %c0_i32_1 = arith.constant 0 : i32
    %c0_i32_2 = arith.constant 0 : i32
    return %c0_i32, %c0_i32_0, %c0_i32_1 : i32, i32, i32
  }
  func.func @transform_4(%arg0: i32) -> (i32, i32, i32) {
    %c0_i32 = arith.constant 0 : i32
    %c0_i32_0 = arith.constant 0 : i32
    %c0_i32_1 = arith.constant 0 : i32
    %c0_i32_2 = arith.constant 0 : i32
    return %c0_i32, %c0_i32_0, %c0_i32_1 : i32, i32, i32
  }
  func.func @transform_5(%arg0: i32) -> (i32, i32, i32) {
    %c0_i32 = arith.constant 0 : i32
    %c0_i32_0 = arith.constant 0 : i32
    %c0_i32_1 = arith.constant 0 : i32
    %c0_i32_2 = arith.constant 0 : i32
    return %c0_i32, %c0_i32_0, %c0_i32_1 : i32, i32, i32
  }
  func.func @transform_6(%arg0: i32) -> (i32, i32, i32) {
    %c0_i32 = arith.constant 0 : i32
    %c0_i32_0 = arith.constant 0 : i32
    %c0_i32_1 = arith.constant 0 : i32
    %c0_i32_2 = arith.constant 0 : i32
    return %c0_i32, %c0_i32_0, %c0_i32_1 : i32, i32, i32
  }
  func.func @transform_7(%arg0: i32) -> (i32, i32, i32) {
    %c0_i32 = arith.constant 0 : i32
    %c0_i32_0 = arith.constant 0 : i32
    %c0_i32_1 = arith.constant 0 : i32
    %c0_i32_2 = arith.constant 0 : i32
    return %c0_i32, %c0_i32_0, %c0_i32_1 : i32, i32, i32
  }
  func.func @transform_8(%arg0: i32) -> (i32, i32, i32) {
    %c0_i32 = arith.constant 0 : i32
    %c0_i32_0 = arith.constant 0 : i32
    %c0_i32_1 = arith.constant 0 : i32
    %c0_i32_2 = arith.constant 0 : i32
    return %c0_i32, %c0_i32_0, %c0_i32_1 : i32, i32, i32
  }
  func.func @transform_9(%arg0: i32) -> (i32, i32, i32) {
    %c0_i32 = arith.constant 0 : i32
    %c0_i32_0 = arith.constant 0 : i32
    %c0_i32_1 = arith.constant 0 : i32
    %c0_i32_2 = arith.constant 0 : i32
    return %c0_i32, %c0_i32_0, %c0_i32_1 : i32, i32, i32
  }
  func.func @transform_10(%arg0: i32) -> (i32, i32, i32) {
    %c0_i32 = arith.constant 0 : i32
    %c0_i32_0 = arith.constant 0 : i32
    %c0_i32_1 = arith.constant 0 : i32
    %c0_i32_2 = arith.constant 0 : i32
    return %c0_i32, %c0_i32_0, %c0_i32_1 : i32, i32, i32
  }
  func.func @transform_11(%arg0: i32) -> (i32, i32, i32) {
    %c0_i32 = arith.constant 0 : i32
    %c0_i32_0 = arith.constant 0 : i32
    %c0_i32_1 = arith.constant 0 : i32
    %c0_i32_2 = arith.constant 0 : i32
    return %c0_i32, %c0_i32_0, %c0_i32_1 : i32, i32, i32
  }
  func.func @transform_12(%arg0: i32) -> (i32, i32, i32) {
    %c0_i32 = arith.constant 0 : i32
    %c0_i32_0 = arith.constant 0 : i32
    %c0_i32_1 = arith.constant 0 : i32
    %c0_i32_2 = arith.constant 0 : i32
    return %c0_i32, %c0_i32_0, %c0_i32_1 : i32, i32, i32
  }
  func.func @transform_13(%arg0: i32) -> (i32, i32, i32) {
    %c0_i32 = arith.constant 0 : i32
    %c0_i32_0 = arith.constant 0 : i32
    %c0_i32_1 = arith.constant 0 : i32
    %c0_i32_2 = arith.constant 0 : i32
    return %c0_i32, %c0_i32_0, %c0_i32_1 : i32, i32, i32
  }
  func.func @transform_14(%arg0: i32) -> (i32, i32, i32) {
    %c0_i32 = arith.constant 0 : i32
    %c0_i32_0 = arith.constant 0 : i32
    %c0_i32_1 = arith.constant 0 : i32
    %c0_i32_2 = arith.constant 0 : i32
    return %c0_i32, %c0_i32_0, %c0_i32_1 : i32, i32, i32
  }
  func.func @transform_15(%arg0: i32) -> (i32, i32, i32) {
    %c0_i32 = arith.constant 0 : i32
    %c0_i32_0 = arith.constant 0 : i32
    %c0_i32_1 = arith.constant 0 : i32
    %c0_i32_2 = arith.constant 0 : i32
    return %c0_i32, %c0_i32_0, %c0_i32_1 : i32, i32, i32
  }
  func.func @transform_16(%arg0: i32) -> (i32, i32, i32) {
    %c0_i32 = arith.constant 0 : i32
    %c0_i32_0 = arith.constant 0 : i32
    %c0_i32_1 = arith.constant 0 : i32
    %c0_i32_2 = arith.constant 0 : i32
    return %c0_i32, %c0_i32_0, %c0_i32_1 : i32, i32, i32
  }
  func.func @transform_17(%arg0: i32) -> (i32, i32, i32) {
    %c0_i32 = arith.constant 0 : i32
    %c0_i32_0 = arith.constant 0 : i32
    %c0_i32_1 = arith.constant 0 : i32
    %c0_i32_2 = arith.constant 0 : i32
    return %c0_i32, %c0_i32_0, %c0_i32_1 : i32, i32, i32
  }
  func.func @transform_18(%arg0: i32) -> (i32, i32, i32) {
    %c0_i32 = arith.constant 0 : i32
    %c0_i32_0 = arith.constant 0 : i32
    %c0_i32_1 = arith.constant 0 : i32
    %c0_i32_2 = arith.constant 0 : i32
    return %c0_i32, %c0_i32_0, %c0_i32_1 : i32, i32, i32
  }
  func.func @transform_19(%arg0: i32) -> (i32, i32, i32) {
    %c0_i32 = arith.constant 0 : i32
    %c0_i32_0 = arith.constant 0 : i32
    %c0_i32_1 = arith.constant 0 : i32
    %c0_i32_2 = arith.constant 0 : i32
    return %c0_i32, %c0_i32_0, %c0_i32_1 : i32, i32, i32
  }
  func.func @transform_20(%arg0: i32) -> (i32, i32, i32) {
    %c0_i32 = arith.constant 0 : i32
    %c0_i32_0 = arith.constant 0 : i32
    %c0_i32_1 = arith.constant 0 : i32
    %c0_i32_2 = arith.constant 0 : i32
    return %c0_i32, %c0_i32_0, %c0_i32_1 : i32, i32, i32
  }
  func.func @transform_21(%arg0: i32) -> (i32, i32, i32) {
    %c0_i32 = arith.constant 0 : i32
    %c0_i32_0 = arith.constant 0 : i32
    %c0_i32_1 = arith.constant 0 : i32
    %c0_i32_2 = arith.constant 0 : i32
    return %c0_i32, %c0_i32_0, %c0_i32_1 : i32, i32, i32
  }
  func.func @transform_22(%arg0: i32) -> (i32, i32, i32) {
    %c0_i32 = arith.constant 0 : i32
    %c0_i32_0 = arith.constant 0 : i32
    %c0_i32_1 = arith.constant 0 : i32
    %c0_i32_2 = arith.constant 0 : i32
    return %c0_i32, %c0_i32_0, %c0_i32_1 : i32, i32, i32
  }
  func.func @transform_23(%arg0: i32) -> (i32, i32, i32) {
    %c0_i32 = arith.constant 0 : i32
    %c0_i32_0 = arith.constant 0 : i32
    %c0_i32_1 = arith.constant 0 : i32
    %c0_i32_2 = arith.constant 0 : i32
    return %c0_i32, %c0_i32_0, %c0_i32_1 : i32, i32, i32
  }
  func.func @transform_24(%arg0: i32) -> (i32, i32, i32) {
    %c0_i32 = arith.constant 0 : i32
    %c0_i32_0 = arith.constant 0 : i32
    %c0_i32_1 = arith.constant 0 : i32
    %c0_i32_2 = arith.constant 0 : i32
    return %c0_i32, %c0_i32_0, %c0_i32_1 : i32, i32, i32
  }
  func.func @transform_25(%arg0: i32) -> (i32, i32, i32) {
    %c0_i32 = arith.constant 0 : i32
    %c0_i32_0 = arith.constant 0 : i32
    %c0_i32_1 = arith.constant 0 : i32
    %c0_i32_2 = arith.constant 0 : i32
    return %c0_i32, %c0_i32_0, %c0_i32_1 : i32, i32, i32
  }
  func.func @transform_26(%arg0: i32) -> (i32, i32, i32) {
    %c0_i32 = arith.constant 0 : i32
    %c0_i32_0 = arith.constant 0 : i32
    %c0_i32_1 = arith.constant 0 : i32
    %c0_i32_2 = arith.constant 0 : i32
    return %c0_i32, %c0_i32_0, %c0_i32_1 : i32, i32, i32
  }
  func.func @transform_27(%arg0: i32) -> (i32, i32, i32) {
    %c0_i32 = arith.constant 0 : i32
    %c0_i32_0 = arith.constant 0 : i32
    %c0_i32_1 = arith.constant 0 : i32
    %c0_i32_2 = arith.constant 0 : i32
    return %c0_i32, %c0_i32_0, %c0_i32_1 : i32, i32, i32
  }
  func.func @transform_28(%arg0: i32) -> (i32, i32, i32) {
    %c0_i32 = arith.constant 0 : i32
    %c0_i32_0 = arith.constant 0 : i32
    %c0_i32_1 = arith.constant 0 : i32
    %c0_i32_2 = arith.constant 0 : i32
    return %c0_i32, %c0_i32_0, %c0_i32_1 : i32, i32, i32
  }
  func.func @transform_29(%arg0: i32) -> (i32, i32, i32) {
    %c0_i32 = arith.constant 0 : i32
    %c0_i32_0 = arith.constant 0 : i32
    %c0_i32_1 = arith.constant 0 : i32
    %c0_i32_2 = arith.constant 0 : i32
    return %c0_i32, %c0_i32_0, %c0_i32_1 : i32, i32, i32
  }
  func.func @transform_30(%arg0: i32) -> (i32, i32, i32) {
    %c0_i32 = arith.constant 0 : i32
    %c0_i32_0 = arith.constant 0 : i32
    %c0_i32_1 = arith.constant 0 : i32
    %c0_i32_2 = arith.constant 0 : i32
    return %c0_i32, %c0_i32_0, %c0_i32_1 : i32, i32, i32
  }
  func.func @transform_31(%arg0: i32) -> (i32, i32, i32) {
    %c0_i32 = arith.constant 0 : i32
    %c0_i32_0 = arith.constant 0 : i32
    %c0_i32_1 = arith.constant 0 : i32
    return %arg0, %c0_i32, %c0_i32_0 : i32, i32, i32
  }
  func.func @transform_32(%arg0: i32) -> (i32, i32, i32) {
    %c0_i32 = arith.constant 0 : i32
    %c0_i32_0 = arith.constant 0 : i32
    %c0_i32_1 = arith.constant 0 : i32
    return %arg0, %c0_i32, %c0_i32_0 : i32, i32, i32
  }
  func.func @transform_33(%arg0: i32) -> (i32, i32, i32) {
    %c0_i32 = arith.constant 0 : i32
    %c0_i32_0 = arith.constant 0 : i32
    %c0_i32_1 = arith.constant 0 : i32
    return %arg0, %c0_i32, %c0_i32_0 : i32, i32, i32
  }
  func.func @transform_34(%arg0: i32) -> (i32, i32, i32) {
    %c0_i32 = arith.constant 0 : i32
    %c0_i32_0 = arith.constant 0 : i32
    %c0_i32_1 = arith.constant 0 : i32
    return %arg0, %c0_i32, %c0_i32_0 : i32, i32, i32
  }
}

module attributes {stable_mosaic.version = 11 : i64} {
  func.func @_stage2_kernel(%arg0: i32, %arg1: memref<1x32x32xf32, #tpu.memory_space<vmem>>, %arg2: memref<1x1x32xf32, #tpu.memory_space<vmem>>, %arg3: memref<1x32x1xf32, #tpu.memory_space<vmem>>, %arg4: memref<2x1x32xf32, #tpu.memory_space<vmem>>, %arg5: memref<2x1x32xf32, #tpu.memory_space<vmem>>, %arg6: memref<2x1x32xf32, #tpu.memory_space<vmem>>, %arg7: memref<2x1x32xf32, #tpu.memory_space<vmem>>, %arg8: memref<2x1x64xf32, #tpu.memory_space<vmem>>, %arg9: memref<2x96x64xf32, #tpu.memory_space<vmem>>, %arg10: memref<2x1x32xf32, #tpu.memory_space<vmem>>, %arg11: memref<2x64x32xf32, #tpu.memory_space<vmem>>, %arg12: memref<2x1x32xf32, #tpu.memory_space<vmem>>, %arg13: memref<2x1x32xf32, #tpu.memory_space<vmem>>, %arg14: memref<2x1x32xf32, #tpu.memory_space<vmem>>, %arg15: memref<2x1x32xf32, #tpu.memory_space<vmem>>, %arg16: memref<2x32x32xf32, #tpu.memory_space<vmem>>, %arg17: memref<2x32x32xf32, #tpu.memory_space<vmem>>, %arg18: memref<2x32x32xf32, #tpu.memory_space<vmem>>, %arg19: memref<2x32x32xf32, #tpu.memory_space<vmem>>, %arg20: memref<1x16xf32, #tpu.memory_space<vmem>>, %arg21: memref<32x16xf32, #tpu.memory_space<vmem>>, %arg22: memref<1x32xf32, #tpu.memory_space<vmem>>, %arg23: memref<1x32xf32, #tpu.memory_space<vmem>>, %arg24: memref<1x16xf32, #tpu.memory_space<vmem>>, %arg25: memref<80x32xf32, #tpu.memory_space<vmem>>, %arg26: memref<160x32xf32, #tpu.memory_space<vmem>>, %arg27: memref<160x16xf32, #tpu.memory_space<vmem>>, %arg28: memref<1x32x16xf32, #tpu.memory_space<vmem>>, %arg29: memref<1x32x16xf32, #tpu.memory_space<vmem>>) attributes {dimension_semantics = [#tpu.dimension_semantics<parallel>], iteration_bounds = array<i64: 2>, scalar_prefetch = 0 : i64, scratch_operands = 0 : i64, tpu.core_type = #tpu.core_type<tc>, window_params = [{transform_indices = @transform_0, window_bounds = array<i64: 1, 32, 32>}, {transform_indices = @transform_1, window_bounds = array<i64: 1, 1, 32>}, {transform_indices = @transform_2, window_bounds = array<i64: 1, 32, 1>}, {pipeline_mode = #tpu.pipeline_mode<synchronous>, transform_indices = @transform_3, window_bounds = array<i64: 2, 1, 32>}, {pipeline_mode = #tpu.pipeline_mode<synchronous>, transform_indices = @transform_4, window_bounds = array<i64: 2, 1, 32>}, {pipeline_mode = #tpu.pipeline_mode<synchronous>, transform_indices = @transform_5, window_bounds = array<i64: 2, 1, 32>}, {pipeline_mode = #tpu.pipeline_mode<synchronous>, transform_indices = @transform_6, window_bounds = array<i64: 2, 1, 32>}, {pipeline_mode = #tpu.pipeline_mode<synchronous>, transform_indices = @transform_7, window_bounds = array<i64: 2, 1, 64>}, {pipeline_mode = #tpu.pipeline_mode<synchronous>, transform_indices = @transform_8, window_bounds = array<i64: 2, 96, 64>}, {pipeline_mode = #tpu.pipeline_mode<synchronous>, transform_indices = @transform_9, window_bounds = array<i64: 2, 1, 32>}, {pipeline_mode = #tpu.pipeline_mode<synchronous>, transform_indices = @transform_10, window_bounds = array<i64: 2, 64, 32>}, {pipeline_mode = #tpu.pipeline_mode<synchronous>, transform_indices = @transform_11, window_bounds = array<i64: 2, 1, 32>}, {pipeline_mode = #tpu.pipeline_mode<synchronous>, transform_indices = @transform_12, window_bounds = array<i64: 2, 1, 32>}, {pipeline_mode = #tpu.pipeline_mode<synchronous>, transform_indices = @transform_13, window_bounds = array<i64: 2, 1, 32>}, {pipeline_mode = #tpu.pipeline_mode<synchronous>, transform_indices = @transform_14, window_bounds = array<i64: 2, 1, 32>}, {pipeline_mode = #tpu.pipeline_mode<synchronous>, transform_indices = @transform_15, window_bounds = array<i64: 2, 32, 32>}, {pipeline_mode = #tpu.pipeline_mode<synchronous>, transform_indices = @transform_16, window_bounds = array<i64: 2, 32, 32>}, {pipeline_mode = #tpu.pipeline_mode<synchronous>, transform_indices = @transform_17, window_bounds = array<i64: 2, 32, 32>}, {pipeline_mode = #tpu.pipeline_mode<synchronous>, transform_indices = @transform_18, window_bounds = array<i64: 2, 32, 32>}, {pipeline_mode = #tpu.pipeline_mode<synchronous>, transform_indices = @transform_19, window_bounds = array<i64: 1, 16>}, {pipeline_mode = #tpu.pipeline_mode<synchronous>, transform_indices = @transform_20, window_bounds = array<i64: 32, 16>}, {pipeline_mode = #tpu.pipeline_mode<synchronous>, transform_indices = @transform_21, window_bounds = array<i64: 1, 32>}, {pipeline_mode = #tpu.pipeline_mode<synchronous>, transform_indices = @transform_22, window_bounds = array<i64: 1, 32>}, {pipeline_mode = #tpu.pipeline_mode<synchronous>, transform_indices = @transform_23, window_bounds = array<i64: 1, 16>}, {pipeline_mode = #tpu.pipeline_mode<synchronous>, transform_indices = @transform_24, window_bounds = array<i64: 80, 32>}, {pipeline_mode = #tpu.pipeline_mode<synchronous>, transform_indices = @transform_25, window_bounds = array<i64: 160, 32>}, {pipeline_mode = #tpu.pipeline_mode<synchronous>, transform_indices = @transform_26, window_bounds = array<i64: 160, 16>}, {transform_indices = @transform_27, window_bounds = array<i64: 1, 32, 16>}, {transform_indices = @transform_28, window_bounds = array<i64: 1, 32, 16>}]} {
    %c0 = arith.constant 0 : index
    %c0_0 = arith.constant 0 : index
    %c0_1 = arith.constant 0 : index
    %0 = vector.load %arg1[%c0, %c0_0, %c0_1] : memref<1x32x32xf32, #tpu.memory_space<vmem>>, vector<1x32x32xf32>
    %1 = vector.shape_cast %0 : vector<1x32x32xf32> to vector<32x32xf32>
    %c0_2 = arith.constant 0 : index
    %c0_3 = arith.constant 0 : index
    %c0_4 = arith.constant 0 : index
    %2 = vector.load %arg2[%c0_2, %c0_3, %c0_4] : memref<1x1x32xf32, #tpu.memory_space<vmem>>, vector<1x1x32xf32>
    %3 = vector.shape_cast %2 : vector<1x1x32xf32> to vector<1x32xf32>
    %c0_5 = arith.constant 0 : index
    %c0_6 = arith.constant 0 : index
    %c0_7 = arith.constant 0 : index
    %4 = vector.load %arg3[%c0_5, %c0_6, %c0_7] : memref<1x32x1xf32, #tpu.memory_space<vmem>>, vector<1x32x1xf32>
    %5 = vector.shape_cast %4 : vector<1x32x1xf32> to vector<32x1xf32>
    %c0_8 = arith.constant 0 : index
    %c0_9 = arith.constant 0 : index
    %c0_10 = arith.constant 0 : index
    %6 = vector.load %arg18[%c0_8, %c0_9, %c0_10] : memref<2x32x32xf32, #tpu.memory_space<vmem>>, vector<1x32x32xf32>
    %7 = vector.shape_cast %6 : vector<1x32x32xf32> to vector<32x32xf32>
    %cst = arith.constant dense<0.000000e+00> : vector<32x32xf32>
    %8 = tpu.matmul %1, %7, %cst {dimension_numbers = #tpu.dot_dimension_numbers<[1], [0], [0], [1], [0, 0, 1, 1], [], []>} : vector<32x32xf32>, vector<32x32xf32>, vector<32x32xf32> -> vector<32x32xf32>
    %c0_11 = arith.constant 0 : index
    %c0_12 = arith.constant 0 : index
    %c0_13 = arith.constant 0 : index
    %9 = vector.load %arg6[%c0_11, %c0_12, %c0_13] : memref<2x1x32xf32, #tpu.memory_space<vmem>>, vector<1x1x32xf32>
    %10 = vector.shape_cast %9 : vector<1x1x32xf32> to vector<1x32xf32>
    %11 = vector.broadcast %10 : vector<1x32xf32> to vector<32x32xf32>
    %12 = arith.addf %8, %11 : vector<32x32xf32>
    %c0_14 = arith.constant 0 : index
    %c0_15 = arith.constant 0 : index
    %c0_16 = arith.constant 0 : index
    %13 = vector.load %arg16[%c0_14, %c0_15, %c0_16] : memref<2x32x32xf32, #tpu.memory_space<vmem>>, vector<1x32x32xf32>
    %14 = vector.shape_cast %13 : vector<1x32x32xf32> to vector<32x32xf32>
    %cst_17 = arith.constant dense<0.000000e+00> : vector<32x32xf32>
    %15 = tpu.matmul %1, %14, %cst_17 {dimension_numbers = #tpu.dot_dimension_numbers<[1], [0], [0], [1], [0, 0, 1, 1], [], []>} : vector<32x32xf32>, vector<32x32xf32>, vector<32x32xf32> -> vector<32x32xf32>
    %c0_18 = arith.constant 0 : index
    %c0_19 = arith.constant 0 : index
    %c0_20 = arith.constant 0 : index
    %16 = vector.load %arg4[%c0_18, %c0_19, %c0_20] : memref<2x1x32xf32, #tpu.memory_space<vmem>>, vector<1x1x32xf32>
    %17 = vector.shape_cast %16 : vector<1x1x32xf32> to vector<1x32xf32>
    %18 = vector.broadcast %17 : vector<1x32xf32> to vector<32x32xf32>
    %19 = arith.addf %15, %18 : vector<32x32xf32>
    %c0_21 = arith.constant 0 : index
    %c0_22 = arith.constant 0 : index
    %c0_23 = arith.constant 0 : index
    %20 = vector.load %arg19[%c0_21, %c0_22, %c0_23] : memref<2x32x32xf32, #tpu.memory_space<vmem>>, vector<1x32x32xf32>
    %21 = vector.shape_cast %20 : vector<1x32x32xf32> to vector<32x32xf32>
    %cst_24 = arith.constant dense<0.000000e+00> : vector<32x32xf32>
    %22 = tpu.matmul %1, %21, %cst_24 {dimension_numbers = #tpu.dot_dimension_numbers<[1], [0], [0], [1], [0, 0, 1, 1], [], []>} : vector<32x32xf32>, vector<32x32xf32>, vector<32x32xf32> -> vector<32x32xf32>
    %c0_25 = arith.constant 0 : index
    %c0_26 = arith.constant 0 : index
    %c0_27 = arith.constant 0 : index
    %23 = vector.load %arg7[%c0_25, %c0_26, %c0_27] : memref<2x1x32xf32, #tpu.memory_space<vmem>>, vector<1x1x32xf32>
    %24 = vector.shape_cast %23 : vector<1x1x32xf32> to vector<1x32xf32>
    %25 = vector.broadcast %24 : vector<1x32xf32> to vector<32x32xf32>
    %26 = arith.addf %22, %25 : vector<32x32xf32>
    %c0_28 = arith.constant 0 : index
    %c0_29 = arith.constant 0 : index
    %c0_30 = arith.constant 0 : index
    %27 = vector.load %arg17[%c0_28, %c0_29, %c0_30] : memref<2x32x32xf32, #tpu.memory_space<vmem>>, vector<1x32x32xf32>
    %28 = vector.shape_cast %27 : vector<1x32x32xf32> to vector<32x32xf32>
    %c0_31 = arith.constant 0 : index
    %c0_32 = arith.constant 0 : index
    %c0_33 = arith.constant 0 : index
    %29 = vector.load %arg5[%c0_31, %c0_32, %c0_33] : memref<2x1x32xf32, #tpu.memory_space<vmem>>, vector<1x1x32xf32>
    %30 = vector.shape_cast %29 : vector<1x1x32xf32> to vector<1x32xf32>
    %31 = vector.extract_strided_slice %12 {offsets = [0, 0], sizes = [32, 16], strides = [1, 1]} : vector<32x32xf32> to vector<32x16xf32>
    %32 = vector.extract_strided_slice %19 {offsets = [0, 0], sizes = [32, 16], strides = [1, 1]} : vector<32x32xf32> to vector<32x16xf32>
    %33 = vector.extract_strided_slice %26 {offsets = [0, 0], sizes = [32, 16], strides = [1, 1]} : vector<32x32xf32> to vector<32x16xf32>
    "tpu.trace_start"() <{level = 10 : i32, message = "td,sd->ts"}> : () -> ()
    %cst_34 = arith.constant dense<0.000000e+00> : vector<32x32xf32>
    %34 = tpu.matmul %31, %32, %cst_34 {dimension_numbers = #tpu.dot_dimension_numbers<[1], [1], [0], [0], [0, 0, 1, 0], [], []>} : vector<32x16xf32>, vector<32x16xf32>, vector<32x32xf32> -> vector<32x32xf32>
    "tpu.trace_stop"() : () -> ()
    %cst_35 = arith.constant 2.500000e-01 : f32
    %35 = vector.broadcast %cst_35 : f32 to vector<32x32xf32>
    %36 = arith.mulf %34, %35 : vector<32x32xf32>
    %37 = vector.broadcast %3 : vector<1x32xf32> to vector<32x32xf32>
    %38 = arith.addf %36, %37 : vector<32x32xf32>
    %cst_36 = arith.constant dense<0xFF800000> : vector<32xf32>
    %39 = vector.multi_reduction <maximumf>, %38, %cst_36 [1] : vector<32x32xf32> to vector<32xf32>
    %40 = vector.shape_cast %39 : vector<32xf32> to vector<32x1xf32>
    %41 = vector.broadcast %40 : vector<32x1xf32> to vector<32x32xf32>
    %42 = arith.subf %38, %41 : vector<32x32xf32>
    %43 = math.exp %42 : vector<32x32xf32>
    %cst_37 = arith.constant dense<0.000000e+00> : vector<32xf32>
    %44 = vector.multi_reduction <add>, %43, %cst_37 [1] : vector<32x32xf32> to vector<32xf32>
    %45 = vector.shape_cast %44 : vector<32xf32> to vector<32x1xf32>
    %46 = tpu.reciprocal %45 {approx = true} : vector<32x1xf32> -> vector<32x1xf32>
    %47 = vector.broadcast %46 : vector<32x1xf32> to vector<32x32xf32>
    %48 = arith.mulf %43, %47 : vector<32x32xf32>
    %cst_38 = arith.constant dense<0.000000e+00> : vector<32x16xf32>
    %49 = tpu.matmul %48, %33, %cst_38 {dimension_numbers = #tpu.dot_dimension_numbers<[1], [0], [0], [1], [0, 0, 1, 1], [], []>} : vector<32x32xf32>, vector<32x16xf32>, vector<32x16xf32> -> vector<32x16xf32>
    %50 = vector.extract_strided_slice %28 {offsets = [0, 0], sizes = [16, 32], strides = [1, 1]} : vector<32x32xf32> to vector<16x32xf32>
    %cst_39 = arith.constant dense<0.000000e+00> : vector<32x32xf32>
    %51 = tpu.matmul %49, %50, %cst_39 {dimension_numbers = #tpu.dot_dimension_numbers<[1], [0], [0], [1], [0, 0, 1, 1], [], []>} : vector<32x16xf32>, vector<16x32xf32>, vector<32x32xf32> -> vector<32x32xf32>
    %52 = vector.broadcast %30 : vector<1x32xf32> to vector<32x32xf32>
    %53 = arith.addf %52, %51 : vector<32x32xf32>
    %54 = vector.extract_strided_slice %12 {offsets = [0, 16], sizes = [32, 16], strides = [1, 1]} : vector<32x32xf32> to vector<32x16xf32>
    %55 = vector.extract_strided_slice %19 {offsets = [0, 16], sizes = [32, 16], strides = [1, 1]} : vector<32x32xf32> to vector<32x16xf32>
    %56 = vector.extract_strided_slice %26 {offsets = [0, 16], sizes = [32, 16], strides = [1, 1]} : vector<32x32xf32> to vector<32x16xf32>
    "tpu.trace_start"() <{level = 10 : i32, message = "td,sd->ts"}> : () -> ()
    %cst_40 = arith.constant dense<0.000000e+00> : vector<32x32xf32>
    %57 = tpu.matmul %54, %55, %cst_40 {dimension_numbers = #tpu.dot_dimension_numbers<[1], [1], [0], [0], [0, 0, 1, 0], [], []>} : vector<32x16xf32>, vector<32x16xf32>, vector<32x32xf32> -> vector<32x32xf32>
    "tpu.trace_stop"() : () -> ()
    %cst_41 = arith.constant 2.500000e-01 : f32
    %58 = vector.broadcast %cst_41 : f32 to vector<32x32xf32>
    %59 = arith.mulf %57, %58 : vector<32x32xf32>
    %60 = vector.broadcast %3 : vector<1x32xf32> to vector<32x32xf32>
    %61 = arith.addf %59, %60 : vector<32x32xf32>
    %cst_42 = arith.constant dense<0xFF800000> : vector<32xf32>
    %62 = vector.multi_reduction <maximumf>, %61, %cst_42 [1] : vector<32x32xf32> to vector<32xf32>
    %63 = vector.shape_cast %62 : vector<32xf32> to vector<32x1xf32>
    %64 = vector.broadcast %63 : vector<32x1xf32> to vector<32x32xf32>
    %65 = arith.subf %61, %64 : vector<32x32xf32>
    %66 = math.exp %65 : vector<32x32xf32>
    %cst_43 = arith.constant dense<0.000000e+00> : vector<32xf32>
    %67 = vector.multi_reduction <add>, %66, %cst_43 [1] : vector<32x32xf32> to vector<32xf32>
    %68 = vector.shape_cast %67 : vector<32xf32> to vector<32x1xf32>
    %69 = tpu.reciprocal %68 {approx = true} : vector<32x1xf32> -> vector<32x1xf32>
    %70 = vector.broadcast %69 : vector<32x1xf32> to vector<32x32xf32>
    %71 = arith.mulf %66, %70 : vector<32x32xf32>
    %cst_44 = arith.constant dense<0.000000e+00> : vector<32x16xf32>
    %72 = tpu.matmul %71, %56, %cst_44 {dimension_numbers = #tpu.dot_dimension_numbers<[1], [0], [0], [1], [0, 0, 1, 1], [], []>} : vector<32x32xf32>, vector<32x16xf32>, vector<32x16xf32> -> vector<32x16xf32>
    %73 = vector.extract_strided_slice %28 {offsets = [16, 0], sizes = [16, 32], strides = [1, 1]} : vector<32x32xf32> to vector<16x32xf32>
    %cst_45 = arith.constant dense<0.000000e+00> : vector<32x32xf32>
    %74 = tpu.matmul %72, %73, %cst_45 {dimension_numbers = #tpu.dot_dimension_numbers<[1], [0], [0], [1], [0, 0, 1, 1], [], []>} : vector<32x16xf32>, vector<16x32xf32>, vector<32x32xf32> -> vector<32x32xf32>
    %75 = arith.addf %53, %74 : vector<32x32xf32>
    %76 = arith.addf %75, %1 : vector<32x32xf32>
    %c0_46 = arith.constant 0 : index
    %c0_47 = arith.constant 0 : index
    %c0_48 = arith.constant 0 : index
    %77 = vector.load %arg13[%c0_46, %c0_47, %c0_48] : memref<2x1x32xf32, #tpu.memory_space<vmem>>, vector<1x1x32xf32>
    %78 = vector.shape_cast %77 : vector<1x1x32xf32> to vector<1x32xf32>
    %c0_49 = arith.constant 0 : index
    %c0_50 = arith.constant 0 : index
    %c0_51 = arith.constant 0 : index
    %79 = vector.load %arg12[%c0_49, %c0_50, %c0_51] : memref<2x1x32xf32, #tpu.memory_space<vmem>>, vector<1x1x32xf32>
    %80 = vector.shape_cast %79 : vector<1x1x32xf32> to vector<1x32xf32>
    %cst_52 = arith.constant dense<0.000000e+00> : vector<32xf32>
    %81 = vector.multi_reduction <add>, %76, %cst_52 [1] : vector<32x32xf32> to vector<32xf32>
    %82 = vector.shape_cast %81 : vector<32xf32> to vector<32x1xf32>
    %cst_53 = arith.constant 3.200000e+01 : f32
    %83 = vector.broadcast %cst_53 : f32 to vector<32x1xf32>
    %84 = arith.divf %82, %83 : vector<32x1xf32>
    %85 = vector.broadcast %84 : vector<32x1xf32> to vector<32x32xf32>
    %86 = arith.subf %76, %85 : vector<32x32xf32>
    %87 = arith.mulf %86, %86 : vector<32x32xf32>
    %cst_54 = arith.constant dense<0.000000e+00> : vector<32xf32>
    %88 = vector.multi_reduction <add>, %87, %cst_54 [1] : vector<32x32xf32> to vector<32xf32>
    %89 = vector.shape_cast %88 : vector<32xf32> to vector<32x1xf32>
    %cst_55 = arith.constant 3.200000e+01 : f32
    %90 = vector.broadcast %cst_55 : f32 to vector<32x1xf32>
    %91 = arith.divf %89, %90 : vector<32x1xf32>
    %92 = vector.broadcast %84 : vector<32x1xf32> to vector<32x32xf32>
    %93 = arith.subf %76, %92 : vector<32x32xf32>
    %cst_56 = arith.constant 9.99999974E-6 : f32
    %94 = vector.broadcast %cst_56 : f32 to vector<32x1xf32>
    %95 = arith.addf %91, %94 : vector<32x1xf32>
    %96 = math.rsqrt %95 : vector<32x1xf32>
    %97 = vector.broadcast %96 : vector<32x1xf32> to vector<32x32xf32>
    %98 = arith.mulf %93, %97 : vector<32x32xf32>
    %99 = vector.broadcast %78 : vector<1x32xf32> to vector<32x32xf32>
    %100 = arith.mulf %98, %99 : vector<32x32xf32>
    %101 = vector.broadcast %80 : vector<1x32xf32> to vector<32x32xf32>
    %102 = arith.addf %100, %101 : vector<32x32xf32>
    %103 = vector.broadcast %5 : vector<32x1xf32> to vector<32x32xf32>
    %104 = arith.mulf %102, %103 : vector<32x32xf32>
    %c0_57 = arith.constant 0 : index
    %c0_58 = arith.constant 0 : index
    %c0_59 = arith.constant 0 : index
    %105 = vector.load %arg9[%c0_57, %c0_58, %c0_59] : memref<2x96x64xf32, #tpu.memory_space<vmem>>, vector<1x96x64xf32>
    %106 = vector.shape_cast %105 : vector<1x96x64xf32> to vector<96x64xf32>
    %c0_60 = arith.constant 0 : index
    %c0_61 = arith.constant 0 : index
    %c0_62 = arith.constant 0 : index
    %107 = vector.load %arg8[%c0_60, %c0_61, %c0_62] : memref<2x1x64xf32, #tpu.memory_space<vmem>>, vector<1x1x64xf32>
    %108 = vector.shape_cast %107 : vector<1x1x64xf32> to vector<1x64xf32>
    %cst_63 = arith.constant 0.000000e+00 : f32
    %109 = vector.broadcast %cst_63 : f32 to vector<1x32xf32>
    %110 = vector.extract_strided_slice %104 {offsets = [0, 0], sizes = [31, 32], strides = [1, 1]} : vector<32x32xf32> to vector<31x32xf32>
    %111 = tpu.concatenate %109, %110 in 0 : vector<1x32xf32>, vector<31x32xf32> -> vector<32x32xf32>
    %cst_64 = arith.constant 0.000000e+00 : f32
    %112 = vector.broadcast %cst_64 : f32 to vector<1x32xf32>
    %113 = vector.extract_strided_slice %104 {offsets = [1, 0], sizes = [31, 32], strides = [1, 1]} : vector<32x32xf32> to vector<31x32xf32>
    %114 = tpu.concatenate %113, %112 in 0 : vector<31x32xf32>, vector<1x32xf32> -> vector<32x32xf32>
    %115 = tpu.concatenate %111, %104, %114 in 1 : vector<32x32xf32>, vector<32x32xf32>, vector<32x32xf32> -> vector<32x96xf32>
    %cst_65 = arith.constant dense<0.000000e+00> : vector<32x64xf32>
    %116 = tpu.matmul %115, %106, %cst_65 {dimension_numbers = #tpu.dot_dimension_numbers<[1], [0], [0], [1], [0, 0, 1, 1], [], []>} : vector<32x96xf32>, vector<96x64xf32>, vector<32x64xf32> -> vector<32x64xf32>
    %117 = vector.broadcast %108 : vector<1x64xf32> to vector<32x64xf32>
    %118 = arith.addf %116, %117 : vector<32x64xf32>
    %cst_66 = arith.constant 0.000000e+00 : f32
    %119 = vector.broadcast %cst_66 : f32 to vector<32x64xf32>
    %120 = arith.maximumf %118, %119 : vector<32x64xf32>
    %c0_67 = arith.constant 0 : index
    %c0_68 = arith.constant 0 : index
    %c0_69 = arith.constant 0 : index
    %121 = vector.load %arg11[%c0_67, %c0_68, %c0_69] : memref<2x64x32xf32, #tpu.memory_space<vmem>>, vector<1x64x32xf32>
    %122 = vector.shape_cast %121 : vector<1x64x32xf32> to vector<64x32xf32>
    %c0_70 = arith.constant 0 : index
    %c0_71 = arith.constant 0 : index
    %c0_72 = arith.constant 0 : index
    %123 = vector.load %arg10[%c0_70, %c0_71, %c0_72] : memref<2x1x32xf32, #tpu.memory_space<vmem>>, vector<1x1x32xf32>
    %124 = vector.shape_cast %123 : vector<1x1x32xf32> to vector<1x32xf32>
    %cst_73 = arith.constant dense<0.000000e+00> : vector<32x32xf32>
    %125 = tpu.matmul %120, %122, %cst_73 {dimension_numbers = #tpu.dot_dimension_numbers<[1], [0], [0], [1], [0, 0, 1, 1], [], []>} : vector<32x64xf32>, vector<64x32xf32>, vector<32x32xf32> -> vector<32x32xf32>
    %126 = vector.broadcast %124 : vector<1x32xf32> to vector<32x32xf32>
    %127 = arith.addf %125, %126 : vector<32x32xf32>
    %128 = arith.addf %127, %104 : vector<32x32xf32>
    %c0_74 = arith.constant 0 : index
    %c0_75 = arith.constant 0 : index
    %c0_76 = arith.constant 0 : index
    %129 = vector.load %arg15[%c0_74, %c0_75, %c0_76] : memref<2x1x32xf32, #tpu.memory_space<vmem>>, vector<1x1x32xf32>
    %130 = vector.shape_cast %129 : vector<1x1x32xf32> to vector<1x32xf32>
    %c0_77 = arith.constant 0 : index
    %c0_78 = arith.constant 0 : index
    %c0_79 = arith.constant 0 : index
    %131 = vector.load %arg14[%c0_77, %c0_78, %c0_79] : memref<2x1x32xf32, #tpu.memory_space<vmem>>, vector<1x1x32xf32>
    %132 = vector.shape_cast %131 : vector<1x1x32xf32> to vector<1x32xf32>
    %cst_80 = arith.constant dense<0.000000e+00> : vector<32xf32>
    %133 = vector.multi_reduction <add>, %128, %cst_80 [1] : vector<32x32xf32> to vector<32xf32>
    %134 = vector.shape_cast %133 : vector<32xf32> to vector<32x1xf32>
    %cst_81 = arith.constant 3.200000e+01 : f32
    %135 = vector.broadcast %cst_81 : f32 to vector<32x1xf32>
    %136 = arith.divf %134, %135 : vector<32x1xf32>
    %137 = vector.broadcast %136 : vector<32x1xf32> to vector<32x32xf32>
    %138 = arith.subf %128, %137 : vector<32x32xf32>
    %139 = arith.mulf %138, %138 : vector<32x32xf32>
    %cst_82 = arith.constant dense<0.000000e+00> : vector<32xf32>
    %140 = vector.multi_reduction <add>, %139, %cst_82 [1] : vector<32x32xf32> to vector<32xf32>
    %141 = vector.shape_cast %140 : vector<32xf32> to vector<32x1xf32>
    %cst_83 = arith.constant 3.200000e+01 : f32
    %142 = vector.broadcast %cst_83 : f32 to vector<32x1xf32>
    %143 = arith.divf %141, %142 : vector<32x1xf32>
    %144 = vector.broadcast %136 : vector<32x1xf32> to vector<32x32xf32>
    %145 = arith.subf %128, %144 : vector<32x32xf32>
    %cst_84 = arith.constant 9.99999974E-6 : f32
    %146 = vector.broadcast %cst_84 : f32 to vector<32x1xf32>
    %147 = arith.addf %143, %146 : vector<32x1xf32>
    %148 = math.rsqrt %147 : vector<32x1xf32>
    %149 = vector.broadcast %148 : vector<32x1xf32> to vector<32x32xf32>
    %150 = arith.mulf %145, %149 : vector<32x32xf32>
    %151 = vector.broadcast %130 : vector<1x32xf32> to vector<32x32xf32>
    %152 = arith.mulf %150, %151 : vector<32x32xf32>
    %153 = vector.broadcast %132 : vector<1x32xf32> to vector<32x32xf32>
    %154 = arith.addf %152, %153 : vector<32x32xf32>
    %155 = vector.broadcast %5 : vector<32x1xf32> to vector<32x32xf32>
    %156 = arith.mulf %154, %155 : vector<32x32xf32>
    %c1 = arith.constant 1 : index
    %c0_85 = arith.constant 0 : index
    %c0_86 = arith.constant 0 : index
    %157 = vector.load %arg18[%c1, %c0_85, %c0_86] : memref<2x32x32xf32, #tpu.memory_space<vmem>>, vector<1x32x32xf32>
    %158 = vector.shape_cast %157 : vector<1x32x32xf32> to vector<32x32xf32>
    %cst_87 = arith.constant dense<0.000000e+00> : vector<32x32xf32>
    %159 = tpu.matmul %156, %158, %cst_87 {dimension_numbers = #tpu.dot_dimension_numbers<[1], [0], [0], [1], [0, 0, 1, 1], [], []>} : vector<32x32xf32>, vector<32x32xf32>, vector<32x32xf32> -> vector<32x32xf32>
    %c1_88 = arith.constant 1 : index
    %c0_89 = arith.constant 0 : index
    %c0_90 = arith.constant 0 : index
    %160 = vector.load %arg6[%c1_88, %c0_89, %c0_90] : memref<2x1x32xf32, #tpu.memory_space<vmem>>, vector<1x1x32xf32>
    %161 = vector.shape_cast %160 : vector<1x1x32xf32> to vector<1x32xf32>
    %162 = vector.broadcast %161 : vector<1x32xf32> to vector<32x32xf32>
    %163 = arith.addf %159, %162 : vector<32x32xf32>
    %c1_91 = arith.constant 1 : index
    %c0_92 = arith.constant 0 : index
    %c0_93 = arith.constant 0 : index
    %164 = vector.load %arg16[%c1_91, %c0_92, %c0_93] : memref<2x32x32xf32, #tpu.memory_space<vmem>>, vector<1x32x32xf32>
    %165 = vector.shape_cast %164 : vector<1x32x32xf32> to vector<32x32xf32>
    %cst_94 = arith.constant dense<0.000000e+00> : vector<32x32xf32>
    %166 = tpu.matmul %156, %165, %cst_94 {dimension_numbers = #tpu.dot_dimension_numbers<[1], [0], [0], [1], [0, 0, 1, 1], [], []>} : vector<32x32xf32>, vector<32x32xf32>, vector<32x32xf32> -> vector<32x32xf32>
    %c1_95 = arith.constant 1 : index
    %c0_96 = arith.constant 0 : index
    %c0_97 = arith.constant 0 : index
    %167 = vector.load %arg4[%c1_95, %c0_96, %c0_97] : memref<2x1x32xf32, #tpu.memory_space<vmem>>, vector<1x1x32xf32>
    %168 = vector.shape_cast %167 : vector<1x1x32xf32> to vector<1x32xf32>
    %169 = vector.broadcast %168 : vector<1x32xf32> to vector<32x32xf32>
    %170 = arith.addf %166, %169 : vector<32x32xf32>
    %c1_98 = arith.constant 1 : index
    %c0_99 = arith.constant 0 : index
    %c0_100 = arith.constant 0 : index
    %171 = vector.load %arg19[%c1_98, %c0_99, %c0_100] : memref<2x32x32xf32, #tpu.memory_space<vmem>>, vector<1x32x32xf32>
    %172 = vector.shape_cast %171 : vector<1x32x32xf32> to vector<32x32xf32>
    %cst_101 = arith.constant dense<0.000000e+00> : vector<32x32xf32>
    %173 = tpu.matmul %156, %172, %cst_101 {dimension_numbers = #tpu.dot_dimension_numbers<[1], [0], [0], [1], [0, 0, 1, 1], [], []>} : vector<32x32xf32>, vector<32x32xf32>, vector<32x32xf32> -> vector<32x32xf32>
    %c1_102 = arith.constant 1 : index
    %c0_103 = arith.constant 0 : index
    %c0_104 = arith.constant 0 : index
    %174 = vector.load %arg7[%c1_102, %c0_103, %c0_104] : memref<2x1x32xf32, #tpu.memory_space<vmem>>, vector<1x1x32xf32>
    %175 = vector.shape_cast %174 : vector<1x1x32xf32> to vector<1x32xf32>
    %176 = vector.broadcast %175 : vector<1x32xf32> to vector<32x32xf32>
    %177 = arith.addf %173, %176 : vector<32x32xf32>
    %c1_105 = arith.constant 1 : index
    %c0_106 = arith.constant 0 : index
    %c0_107 = arith.constant 0 : index
    %178 = vector.load %arg17[%c1_105, %c0_106, %c0_107] : memref<2x32x32xf32, #tpu.memory_space<vmem>>, vector<1x32x32xf32>
    %179 = vector.shape_cast %178 : vector<1x32x32xf32> to vector<32x32xf32>
    %c1_108 = arith.constant 1 : index
    %c0_109 = arith.constant 0 : index
    %c0_110 = arith.constant 0 : index
    %180 = vector.load %arg5[%c1_108, %c0_109, %c0_110] : memref<2x1x32xf32, #tpu.memory_space<vmem>>, vector<1x1x32xf32>
    %181 = vector.shape_cast %180 : vector<1x1x32xf32> to vector<1x32xf32>
    %182 = vector.extract_strided_slice %163 {offsets = [0, 0], sizes = [32, 16], strides = [1, 1]} : vector<32x32xf32> to vector<32x16xf32>
    %183 = vector.extract_strided_slice %170 {offsets = [0, 0], sizes = [32, 16], strides = [1, 1]} : vector<32x32xf32> to vector<32x16xf32>
    %184 = vector.extract_strided_slice %177 {offsets = [0, 0], sizes = [32, 16], strides = [1, 1]} : vector<32x32xf32> to vector<32x16xf32>
    "tpu.trace_start"() <{level = 10 : i32, message = "td,sd->ts"}> : () -> ()
    %cst_111 = arith.constant dense<0.000000e+00> : vector<32x32xf32>
    %185 = tpu.matmul %182, %183, %cst_111 {dimension_numbers = #tpu.dot_dimension_numbers<[1], [1], [0], [0], [0, 0, 1, 0], [], []>} : vector<32x16xf32>, vector<32x16xf32>, vector<32x32xf32> -> vector<32x32xf32>
    "tpu.trace_stop"() : () -> ()
    %cst_112 = arith.constant 2.500000e-01 : f32
    %186 = vector.broadcast %cst_112 : f32 to vector<32x32xf32>
    %187 = arith.mulf %185, %186 : vector<32x32xf32>
    %188 = vector.broadcast %3 : vector<1x32xf32> to vector<32x32xf32>
    %189 = arith.addf %187, %188 : vector<32x32xf32>
    %cst_113 = arith.constant dense<0xFF800000> : vector<32xf32>
    %190 = vector.multi_reduction <maximumf>, %189, %cst_113 [1] : vector<32x32xf32> to vector<32xf32>
    %191 = vector.shape_cast %190 : vector<32xf32> to vector<32x1xf32>
    %192 = vector.broadcast %191 : vector<32x1xf32> to vector<32x32xf32>
    %193 = arith.subf %189, %192 : vector<32x32xf32>
    %194 = math.exp %193 : vector<32x32xf32>
    %cst_114 = arith.constant dense<0.000000e+00> : vector<32xf32>
    %195 = vector.multi_reduction <add>, %194, %cst_114 [1] : vector<32x32xf32> to vector<32xf32>
    %196 = vector.shape_cast %195 : vector<32xf32> to vector<32x1xf32>
    %197 = tpu.reciprocal %196 {approx = true} : vector<32x1xf32> -> vector<32x1xf32>
    %198 = vector.broadcast %197 : vector<32x1xf32> to vector<32x32xf32>
    %199 = arith.mulf %194, %198 : vector<32x32xf32>
    %cst_115 = arith.constant dense<0.000000e+00> : vector<32x16xf32>
    %200 = tpu.matmul %199, %184, %cst_115 {dimension_numbers = #tpu.dot_dimension_numbers<[1], [0], [0], [1], [0, 0, 1, 1], [], []>} : vector<32x32xf32>, vector<32x16xf32>, vector<32x16xf32> -> vector<32x16xf32>
    %201 = vector.extract_strided_slice %179 {offsets = [0, 0], sizes = [16, 32], strides = [1, 1]} : vector<32x32xf32> to vector<16x32xf32>
    %cst_116 = arith.constant dense<0.000000e+00> : vector<32x32xf32>
    %202 = tpu.matmul %200, %201, %cst_116 {dimension_numbers = #tpu.dot_dimension_numbers<[1], [0], [0], [1], [0, 0, 1, 1], [], []>} : vector<32x16xf32>, vector<16x32xf32>, vector<32x32xf32> -> vector<32x32xf32>
    %203 = vector.broadcast %181 : vector<1x32xf32> to vector<32x32xf32>
    %204 = arith.addf %203, %202 : vector<32x32xf32>
    %205 = vector.extract_strided_slice %163 {offsets = [0, 16], sizes = [32, 16], strides = [1, 1]} : vector<32x32xf32> to vector<32x16xf32>
    %206 = vector.extract_strided_slice %170 {offsets = [0, 16], sizes = [32, 16], strides = [1, 1]} : vector<32x32xf32> to vector<32x16xf32>
    %207 = vector.extract_strided_slice %177 {offsets = [0, 16], sizes = [32, 16], strides = [1, 1]} : vector<32x32xf32> to vector<32x16xf32>
    "tpu.trace_start"() <{level = 10 : i32, message = "td,sd->ts"}> : () -> ()
    %cst_117 = arith.constant dense<0.000000e+00> : vector<32x32xf32>
    %208 = tpu.matmul %205, %206, %cst_117 {dimension_numbers = #tpu.dot_dimension_numbers<[1], [1], [0], [0], [0, 0, 1, 0], [], []>} : vector<32x16xf32>, vector<32x16xf32>, vector<32x32xf32> -> vector<32x32xf32>
    "tpu.trace_stop"() : () -> ()
    %cst_118 = arith.constant 2.500000e-01 : f32
    %209 = vector.broadcast %cst_118 : f32 to vector<32x32xf32>
    %210 = arith.mulf %208, %209 : vector<32x32xf32>
    %211 = vector.broadcast %3 : vector<1x32xf32> to vector<32x32xf32>
    %212 = arith.addf %210, %211 : vector<32x32xf32>
    %cst_119 = arith.constant dense<0xFF800000> : vector<32xf32>
    %213 = vector.multi_reduction <maximumf>, %212, %cst_119 [1] : vector<32x32xf32> to vector<32xf32>
    %214 = vector.shape_cast %213 : vector<32xf32> to vector<32x1xf32>
    %215 = vector.broadcast %214 : vector<32x1xf32> to vector<32x32xf32>
    %216 = arith.subf %212, %215 : vector<32x32xf32>
    %217 = math.exp %216 : vector<32x32xf32>
    %cst_120 = arith.constant dense<0.000000e+00> : vector<32xf32>
    %218 = vector.multi_reduction <add>, %217, %cst_120 [1] : vector<32x32xf32> to vector<32xf32>
    %219 = vector.shape_cast %218 : vector<32xf32> to vector<32x1xf32>
    %220 = tpu.reciprocal %219 {approx = true} : vector<32x1xf32> -> vector<32x1xf32>
    %221 = vector.broadcast %220 : vector<32x1xf32> to vector<32x32xf32>
    %222 = arith.mulf %217, %221 : vector<32x32xf32>
    %cst_121 = arith.constant dense<0.000000e+00> : vector<32x16xf32>
    %223 = tpu.matmul %222, %207, %cst_121 {dimension_numbers = #tpu.dot_dimension_numbers<[1], [0], [0], [1], [0, 0, 1, 1], [], []>} : vector<32x32xf32>, vector<32x16xf32>, vector<32x16xf32> -> vector<32x16xf32>
    %224 = vector.extract_strided_slice %179 {offsets = [16, 0], sizes = [16, 32], strides = [1, 1]} : vector<32x32xf32> to vector<16x32xf32>
    %cst_122 = arith.constant dense<0.000000e+00> : vector<32x32xf32>
    %225 = tpu.matmul %223, %224, %cst_122 {dimension_numbers = #tpu.dot_dimension_numbers<[1], [0], [0], [1], [0, 0, 1, 1], [], []>} : vector<32x16xf32>, vector<16x32xf32>, vector<32x32xf32> -> vector<32x32xf32>
    %226 = arith.addf %204, %225 : vector<32x32xf32>
    %227 = arith.addf %226, %156 : vector<32x32xf32>
    %c1_123 = arith.constant 1 : index
    %c0_124 = arith.constant 0 : index
    %c0_125 = arith.constant 0 : index
    %228 = vector.load %arg13[%c1_123, %c0_124, %c0_125] : memref<2x1x32xf32, #tpu.memory_space<vmem>>, vector<1x1x32xf32>
    %229 = vector.shape_cast %228 : vector<1x1x32xf32> to vector<1x32xf32>
    %c1_126 = arith.constant 1 : index
    %c0_127 = arith.constant 0 : index
    %c0_128 = arith.constant 0 : index
    %230 = vector.load %arg12[%c1_126, %c0_127, %c0_128] : memref<2x1x32xf32, #tpu.memory_space<vmem>>, vector<1x1x32xf32>
    %231 = vector.shape_cast %230 : vector<1x1x32xf32> to vector<1x32xf32>
    %cst_129 = arith.constant dense<0.000000e+00> : vector<32xf32>
    %232 = vector.multi_reduction <add>, %227, %cst_129 [1] : vector<32x32xf32> to vector<32xf32>
    %233 = vector.shape_cast %232 : vector<32xf32> to vector<32x1xf32>
    %cst_130 = arith.constant 3.200000e+01 : f32
    %234 = vector.broadcast %cst_130 : f32 to vector<32x1xf32>
    %235 = arith.divf %233, %234 : vector<32x1xf32>
    %236 = vector.broadcast %235 : vector<32x1xf32> to vector<32x32xf32>
    %237 = arith.subf %227, %236 : vector<32x32xf32>
    %238 = arith.mulf %237, %237 : vector<32x32xf32>
    %cst_131 = arith.constant dense<0.000000e+00> : vector<32xf32>
    %239 = vector.multi_reduction <add>, %238, %cst_131 [1] : vector<32x32xf32> to vector<32xf32>
    %240 = vector.shape_cast %239 : vector<32xf32> to vector<32x1xf32>
    %cst_132 = arith.constant 3.200000e+01 : f32
    %241 = vector.broadcast %cst_132 : f32 to vector<32x1xf32>
    %242 = arith.divf %240, %241 : vector<32x1xf32>
    %243 = vector.broadcast %235 : vector<32x1xf32> to vector<32x32xf32>
    %244 = arith.subf %227, %243 : vector<32x32xf32>
    %cst_133 = arith.constant 9.99999974E-6 : f32
    %245 = vector.broadcast %cst_133 : f32 to vector<32x1xf32>
    %246 = arith.addf %242, %245 : vector<32x1xf32>
    %247 = math.rsqrt %246 : vector<32x1xf32>
    %248 = vector.broadcast %247 : vector<32x1xf32> to vector<32x32xf32>
    %249 = arith.mulf %244, %248 : vector<32x32xf32>
    %250 = vector.broadcast %229 : vector<1x32xf32> to vector<32x32xf32>
    %251 = arith.mulf %249, %250 : vector<32x32xf32>
    %252 = vector.broadcast %231 : vector<1x32xf32> to vector<32x32xf32>
    %253 = arith.addf %251, %252 : vector<32x32xf32>
    %254 = vector.broadcast %5 : vector<32x1xf32> to vector<32x32xf32>
    %255 = arith.mulf %253, %254 : vector<32x32xf32>
    %c1_134 = arith.constant 1 : index
    %c0_135 = arith.constant 0 : index
    %c0_136 = arith.constant 0 : index
    %256 = vector.load %arg9[%c1_134, %c0_135, %c0_136] : memref<2x96x64xf32, #tpu.memory_space<vmem>>, vector<1x96x64xf32>
    %257 = vector.shape_cast %256 : vector<1x96x64xf32> to vector<96x64xf32>
    %c1_137 = arith.constant 1 : index
    %c0_138 = arith.constant 0 : index
    %c0_139 = arith.constant 0 : index
    %258 = vector.load %arg8[%c1_137, %c0_138, %c0_139] : memref<2x1x64xf32, #tpu.memory_space<vmem>>, vector<1x1x64xf32>
    %259 = vector.shape_cast %258 : vector<1x1x64xf32> to vector<1x64xf32>
    %cst_140 = arith.constant 0.000000e+00 : f32
    %260 = vector.broadcast %cst_140 : f32 to vector<1x32xf32>
    %261 = vector.extract_strided_slice %255 {offsets = [0, 0], sizes = [31, 32], strides = [1, 1]} : vector<32x32xf32> to vector<31x32xf32>
    %262 = tpu.concatenate %260, %261 in 0 : vector<1x32xf32>, vector<31x32xf32> -> vector<32x32xf32>
    %cst_141 = arith.constant 0.000000e+00 : f32
    %263 = vector.broadcast %cst_141 : f32 to vector<1x32xf32>
    %264 = vector.extract_strided_slice %255 {offsets = [1, 0], sizes = [31, 32], strides = [1, 1]} : vector<32x32xf32> to vector<31x32xf32>
    %265 = tpu.concatenate %264, %263 in 0 : vector<31x32xf32>, vector<1x32xf32> -> vector<32x32xf32>
    %266 = tpu.concatenate %262, %255, %265 in 1 : vector<32x32xf32>, vector<32x32xf32>, vector<32x32xf32> -> vector<32x96xf32>
    %cst_142 = arith.constant dense<0.000000e+00> : vector<32x64xf32>
    %267 = tpu.matmul %266, %257, %cst_142 {dimension_numbers = #tpu.dot_dimension_numbers<[1], [0], [0], [1], [0, 0, 1, 1], [], []>} : vector<32x96xf32>, vector<96x64xf32>, vector<32x64xf32> -> vector<32x64xf32>
    %268 = vector.broadcast %259 : vector<1x64xf32> to vector<32x64xf32>
    %269 = arith.addf %267, %268 : vector<32x64xf32>
    %cst_143 = arith.constant 0.000000e+00 : f32
    %270 = vector.broadcast %cst_143 : f32 to vector<32x64xf32>
    %271 = arith.maximumf %269, %270 : vector<32x64xf32>
    %c1_144 = arith.constant 1 : index
    %c0_145 = arith.constant 0 : index
    %c0_146 = arith.constant 0 : index
    %272 = vector.load %arg11[%c1_144, %c0_145, %c0_146] : memref<2x64x32xf32, #tpu.memory_space<vmem>>, vector<1x64x32xf32>
    %273 = vector.shape_cast %272 : vector<1x64x32xf32> to vector<64x32xf32>
    %c1_147 = arith.constant 1 : index
    %c0_148 = arith.constant 0 : index
    %c0_149 = arith.constant 0 : index
    %274 = vector.load %arg10[%c1_147, %c0_148, %c0_149] : memref<2x1x32xf32, #tpu.memory_space<vmem>>, vector<1x1x32xf32>
    %275 = vector.shape_cast %274 : vector<1x1x32xf32> to vector<1x32xf32>
    %cst_150 = arith.constant dense<0.000000e+00> : vector<32x32xf32>
    %276 = tpu.matmul %271, %273, %cst_150 {dimension_numbers = #tpu.dot_dimension_numbers<[1], [0], [0], [1], [0, 0, 1, 1], [], []>} : vector<32x64xf32>, vector<64x32xf32>, vector<32x32xf32> -> vector<32x32xf32>
    %277 = vector.broadcast %275 : vector<1x32xf32> to vector<32x32xf32>
    %278 = arith.addf %276, %277 : vector<32x32xf32>
    %279 = arith.addf %278, %255 : vector<32x32xf32>
    %c1_151 = arith.constant 1 : index
    %c0_152 = arith.constant 0 : index
    %c0_153 = arith.constant 0 : index
    %280 = vector.load %arg15[%c1_151, %c0_152, %c0_153] : memref<2x1x32xf32, #tpu.memory_space<vmem>>, vector<1x1x32xf32>
    %281 = vector.shape_cast %280 : vector<1x1x32xf32> to vector<1x32xf32>
    %c1_154 = arith.constant 1 : index
    %c0_155 = arith.constant 0 : index
    %c0_156 = arith.constant 0 : index
    %282 = vector.load %arg14[%c1_154, %c0_155, %c0_156] : memref<2x1x32xf32, #tpu.memory_space<vmem>>, vector<1x1x32xf32>
    %283 = vector.shape_cast %282 : vector<1x1x32xf32> to vector<1x32xf32>
    %cst_157 = arith.constant dense<0.000000e+00> : vector<32xf32>
    %284 = vector.multi_reduction <add>, %279, %cst_157 [1] : vector<32x32xf32> to vector<32xf32>
    %285 = vector.shape_cast %284 : vector<32xf32> to vector<32x1xf32>
    %cst_158 = arith.constant 3.200000e+01 : f32
    %286 = vector.broadcast %cst_158 : f32 to vector<32x1xf32>
    %287 = arith.divf %285, %286 : vector<32x1xf32>
    %288 = vector.broadcast %287 : vector<32x1xf32> to vector<32x32xf32>
    %289 = arith.subf %279, %288 : vector<32x32xf32>
    %290 = arith.mulf %289, %289 : vector<32x32xf32>
    %cst_159 = arith.constant dense<0.000000e+00> : vector<32xf32>
    %291 = vector.multi_reduction <add>, %290, %cst_159 [1] : vector<32x32xf32> to vector<32xf32>
    %292 = vector.shape_cast %291 : vector<32xf32> to vector<32x1xf32>
    %cst_160 = arith.constant 3.200000e+01 : f32
    %293 = vector.broadcast %cst_160 : f32 to vector<32x1xf32>
    %294 = arith.divf %292, %293 : vector<32x1xf32>
    %295 = vector.broadcast %287 : vector<32x1xf32> to vector<32x32xf32>
    %296 = arith.subf %279, %295 : vector<32x32xf32>
    %cst_161 = arith.constant 9.99999974E-6 : f32
    %297 = vector.broadcast %cst_161 : f32 to vector<32x1xf32>
    %298 = arith.addf %294, %297 : vector<32x1xf32>
    %299 = math.rsqrt %298 : vector<32x1xf32>
    %300 = vector.broadcast %299 : vector<32x1xf32> to vector<32x32xf32>
    %301 = arith.mulf %296, %300 : vector<32x32xf32>
    %302 = vector.broadcast %281 : vector<1x32xf32> to vector<32x32xf32>
    %303 = arith.mulf %301, %302 : vector<32x32xf32>
    %304 = vector.broadcast %283 : vector<1x32xf32> to vector<32x32xf32>
    %305 = arith.addf %303, %304 : vector<32x32xf32>
    %306 = vector.broadcast %5 : vector<32x1xf32> to vector<32x32xf32>
    %307 = arith.mulf %305, %306 : vector<32x32xf32>
    %c0_162 = arith.constant 0 : index
    %c0_163 = arith.constant 0 : index
    %308 = vector.load %arg21[%c0_162, %c0_163] : memref<32x16xf32, #tpu.memory_space<vmem>>, vector<32x16xf32>
    %cst_164 = arith.constant dense<0.000000e+00> : vector<32x16xf32>
    %309 = tpu.matmul %307, %308, %cst_164 {dimension_numbers = #tpu.dot_dimension_numbers<[1], [0], [0], [1], [0, 0, 1, 1], [], []>} : vector<32x32xf32>, vector<32x16xf32>, vector<32x16xf32> -> vector<32x16xf32>
    %c0_165 = arith.constant 0 : index
    %c0_166 = arith.constant 0 : index
    %310 = vector.load %arg20[%c0_165, %c0_166] : memref<1x16xf32, #tpu.memory_space<vmem>>, vector<1x16xf32>
    %311 = vector.broadcast %310 : vector<1x16xf32> to vector<32x16xf32>
    %312 = arith.addf %309, %311 : vector<32x16xf32>
    %c0_167 = arith.constant 0 : index
    %c0_168 = arith.constant 0 : index
    %313 = vector.load %arg25[%c0_167, %c0_168] : memref<80x32xf32, #tpu.memory_space<vmem>>, vector<80x32xf32>
    %c0_169 = arith.constant 0 : index
    %c0_170 = arith.constant 0 : index
    %314 = vector.load %arg22[%c0_169, %c0_170] : memref<1x32xf32, #tpu.memory_space<vmem>>, vector<1x32xf32>
    %cst_171 = arith.constant 0.000000e+00 : f32
    %315 = vector.broadcast %cst_171 : f32 to vector<2x16xf32>
    %316 = vector.extract_strided_slice %312 {offsets = [0, 0], sizes = [30, 16], strides = [1, 1]} : vector<32x16xf32> to vector<30x16xf32>
    %317 = tpu.concatenate %315, %316 in 0 : vector<2x16xf32>, vector<30x16xf32> -> vector<32x16xf32>
    %cst_172 = arith.constant 0.000000e+00 : f32
    %318 = vector.broadcast %cst_172 : f32 to vector<1x16xf32>
    %319 = vector.extract_strided_slice %312 {offsets = [0, 0], sizes = [31, 16], strides = [1, 1]} : vector<32x16xf32> to vector<31x16xf32>
    %320 = tpu.concatenate %318, %319 in 0 : vector<1x16xf32>, vector<31x16xf32> -> vector<32x16xf32>
    %cst_173 = arith.constant 0.000000e+00 : f32
    %321 = vector.broadcast %cst_173 : f32 to vector<1x16xf32>
    %322 = vector.extract_strided_slice %312 {offsets = [1, 0], sizes = [31, 16], strides = [1, 1]} : vector<32x16xf32> to vector<31x16xf32>
    %323 = tpu.concatenate %322, %321 in 0 : vector<31x16xf32>, vector<1x16xf32> -> vector<32x16xf32>
    %cst_174 = arith.constant 0.000000e+00 : f32
    %324 = vector.broadcast %cst_174 : f32 to vector<2x16xf32>
    %325 = vector.extract_strided_slice %312 {offsets = [2, 0], sizes = [30, 16], strides = [1, 1]} : vector<32x16xf32> to vector<30x16xf32>
    %326 = tpu.concatenate %325, %324 in 0 : vector<30x16xf32>, vector<2x16xf32> -> vector<32x16xf32>
    %327 = tpu.concatenate %317, %320, %312, %323, %326 in 1 : vector<32x16xf32>, vector<32x16xf32>, vector<32x16xf32>, vector<32x16xf32>, vector<32x16xf32> -> vector<32x80xf32>
    %cst_175 = arith.constant dense<0.000000e+00> : vector<32x32xf32>
    %328 = tpu.matmul %327, %313, %cst_175 {dimension_numbers = #tpu.dot_dimension_numbers<[1], [0], [0], [1], [0, 0, 1, 1], [], []>} : vector<32x80xf32>, vector<80x32xf32>, vector<32x32xf32> -> vector<32x32xf32>
    %329 = vector.broadcast %314 : vector<1x32xf32> to vector<32x32xf32>
    %330 = arith.addf %328, %329 : vector<32x32xf32>
    %331 = math.tanh %330 : vector<32x32xf32>
    %c0_176 = arith.constant 0 : index
    %c0_177 = arith.constant 0 : index
    %332 = vector.load %arg26[%c0_176, %c0_177] : memref<160x32xf32, #tpu.memory_space<vmem>>, vector<160x32xf32>
    %c0_178 = arith.constant 0 : index
    %c0_179 = arith.constant 0 : index
    %333 = vector.load %arg23[%c0_178, %c0_179] : memref<1x32xf32, #tpu.memory_space<vmem>>, vector<1x32xf32>
    %cst_180 = arith.constant 0.000000e+00 : f32
    %334 = vector.broadcast %cst_180 : f32 to vector<2x32xf32>
    %335 = vector.extract_strided_slice %331 {offsets = [0, 0], sizes = [30, 32], strides = [1, 1]} : vector<32x32xf32> to vector<30x32xf32>
    %336 = tpu.concatenate %334, %335 in 0 : vector<2x32xf32>, vector<30x32xf32> -> vector<32x32xf32>
    %cst_181 = arith.constant 0.000000e+00 : f32
    %337 = vector.broadcast %cst_181 : f32 to vector<1x32xf32>
    %338 = vector.extract_strided_slice %331 {offsets = [0, 0], sizes = [31, 32], strides = [1, 1]} : vector<32x32xf32> to vector<31x32xf32>
    %339 = tpu.concatenate %337, %338 in 0 : vector<1x32xf32>, vector<31x32xf32> -> vector<32x32xf32>
    %cst_182 = arith.constant 0.000000e+00 : f32
    %340 = vector.broadcast %cst_182 : f32 to vector<1x32xf32>
    %341 = vector.extract_strided_slice %331 {offsets = [1, 0], sizes = [31, 32], strides = [1, 1]} : vector<32x32xf32> to vector<31x32xf32>
    %342 = tpu.concatenate %341, %340 in 0 : vector<31x32xf32>, vector<1x32xf32> -> vector<32x32xf32>
    %cst_183 = arith.constant 0.000000e+00 : f32
    %343 = vector.broadcast %cst_183 : f32 to vector<2x32xf32>
    %344 = vector.extract_strided_slice %331 {offsets = [2, 0], sizes = [30, 32], strides = [1, 1]} : vector<32x32xf32> to vector<30x32xf32>
    %345 = tpu.concatenate %344, %343 in 0 : vector<30x32xf32>, vector<2x32xf32> -> vector<32x32xf32>
    %346 = tpu.concatenate %336, %339, %331, %342, %345 in 1 : vector<32x32xf32>, vector<32x32xf32>, vector<32x32xf32>, vector<32x32xf32>, vector<32x32xf32> -> vector<32x160xf32>
    %cst_184 = arith.constant dense<0.000000e+00> : vector<32x32xf32>
    %347 = tpu.matmul %346, %332, %cst_184 {dimension_numbers = #tpu.dot_dimension_numbers<[1], [0], [0], [1], [0, 0, 1, 1], [], []>} : vector<32x160xf32>, vector<160x32xf32>, vector<32x32xf32> -> vector<32x32xf32>
    %348 = vector.broadcast %333 : vector<1x32xf32> to vector<32x32xf32>
    %349 = arith.addf %347, %348 : vector<32x32xf32>
    %350 = math.tanh %349 : vector<32x32xf32>
    %c0_185 = arith.constant 0 : index
    %c0_186 = arith.constant 0 : index
    %351 = vector.load %arg27[%c0_185, %c0_186] : memref<160x16xf32, #tpu.memory_space<vmem>>, vector<160x16xf32>
    %c0_187 = arith.constant 0 : index
    %c0_188 = arith.constant 0 : index
    %352 = vector.load %arg24[%c0_187, %c0_188] : memref<1x16xf32, #tpu.memory_space<vmem>>, vector<1x16xf32>
    %cst_189 = arith.constant 0.000000e+00 : f32
    %353 = vector.broadcast %cst_189 : f32 to vector<2x32xf32>
    %354 = vector.extract_strided_slice %350 {offsets = [0, 0], sizes = [30, 32], strides = [1, 1]} : vector<32x32xf32> to vector<30x32xf32>
    %355 = tpu.concatenate %353, %354 in 0 : vector<2x32xf32>, vector<30x32xf32> -> vector<32x32xf32>
    %cst_190 = arith.constant 0.000000e+00 : f32
    %356 = vector.broadcast %cst_190 : f32 to vector<1x32xf32>
    %357 = vector.extract_strided_slice %350 {offsets = [0, 0], sizes = [31, 32], strides = [1, 1]} : vector<32x32xf32> to vector<31x32xf32>
    %358 = tpu.concatenate %356, %357 in 0 : vector<1x32xf32>, vector<31x32xf32> -> vector<32x32xf32>
    %cst_191 = arith.constant 0.000000e+00 : f32
    %359 = vector.broadcast %cst_191 : f32 to vector<1x32xf32>
    %360 = vector.extract_strided_slice %350 {offsets = [1, 0], sizes = [31, 32], strides = [1, 1]} : vector<32x32xf32> to vector<31x32xf32>
    %361 = tpu.concatenate %360, %359 in 0 : vector<31x32xf32>, vector<1x32xf32> -> vector<32x32xf32>
    %cst_192 = arith.constant 0.000000e+00 : f32
    %362 = vector.broadcast %cst_192 : f32 to vector<2x32xf32>
    %363 = vector.extract_strided_slice %350 {offsets = [2, 0], sizes = [30, 32], strides = [1, 1]} : vector<32x32xf32> to vector<30x32xf32>
    %364 = tpu.concatenate %363, %362 in 0 : vector<30x32xf32>, vector<2x32xf32> -> vector<32x32xf32>
    %365 = tpu.concatenate %355, %358, %350, %361, %364 in 1 : vector<32x32xf32>, vector<32x32xf32>, vector<32x32xf32>, vector<32x32xf32>, vector<32x32xf32> -> vector<32x160xf32>
    %cst_193 = arith.constant dense<0.000000e+00> : vector<32x16xf32>
    %366 = tpu.matmul %365, %351, %cst_193 {dimension_numbers = #tpu.dot_dimension_numbers<[1], [0], [0], [1], [0, 0, 1, 1], [], []>} : vector<32x160xf32>, vector<160x16xf32>, vector<32x16xf32> -> vector<32x16xf32>
    %367 = vector.broadcast %352 : vector<1x16xf32> to vector<32x16xf32>
    %368 = arith.addf %366, %367 : vector<32x16xf32>
    %c0_194 = arith.constant 0 : index
    %c0_195 = arith.constant 0 : index
    %c0_196 = arith.constant 0 : index
    %369 = vector.load %arg28[%c0_194, %c0_195, %c0_196] : memref<1x32x16xf32, #tpu.memory_space<vmem>>, vector<1x32x16xf32>
    %370 = vector.shape_cast %369 : vector<1x32x16xf32> to vector<32x16xf32>
    %371 = vector.shape_cast %312 : vector<32x16xf32> to vector<1x32x16xf32>
    tpu.vector_store %arg28[%c0_194, %c0_195, %c0_196], %371 {strides = array<i32>} : memref<1x32x16xf32, #tpu.memory_space<vmem>>, vector<1x32x16xf32>,
    %372 = arith.addf %368, %312 : vector<32x16xf32>
    %c0_197 = arith.constant 0 : index
    %c0_198 = arith.constant 0 : index
    %c0_199 = arith.constant 0 : index
    %373 = vector.load %arg29[%c0_197, %c0_198, %c0_199] : memref<1x32x16xf32, #tpu.memory_space<vmem>>, vector<1x32x16xf32>
    %374 = vector.shape_cast %373 : vector<1x32x16xf32> to vector<32x16xf32>
    %375 = vector.shape_cast %372 : vector<32x16xf32> to vector<1x32x16xf32>
    tpu.vector_store %arg29[%c0_197, %c0_198, %c0_199], %375 {strides = array<i32>} : memref<1x32x16xf32, #tpu.memory_space<vmem>>, vector<1x32x16xf32>,
    return
  }
  func.func @transform_0(%arg0: i32) -> (i32, i32, i32) {
    %c0_i32 = arith.constant 0 : i32
    %c0_i32_0 = arith.constant 0 : i32
    %c0_i32_1 = arith.constant 0 : i32
    return %arg0, %c0_i32, %c0_i32_0 : i32, i32, i32
  }
  func.func @transform_1(%arg0: i32) -> (i32, i32, i32) {
    %c0_i32 = arith.constant 0 : i32
    %c0_i32_0 = arith.constant 0 : i32
    %c0_i32_1 = arith.constant 0 : i32
    return %arg0, %c0_i32, %c0_i32_0 : i32, i32, i32
  }
  func.func @transform_2(%arg0: i32) -> (i32, i32, i32) {
    %c0_i32 = arith.constant 0 : i32
    %c0_i32_0 = arith.constant 0 : i32
    %c0_i32_1 = arith.constant 0 : i32
    return %arg0, %c0_i32, %c0_i32_0 : i32, i32, i32
  }
  func.func @transform_3(%arg0: i32) -> (i32, i32, i32) {
    %c0_i32 = arith.constant 0 : i32
    %c0_i32_0 = arith.constant 0 : i32
    %c0_i32_1 = arith.constant 0 : i32
    %c0_i32_2 = arith.constant 0 : i32
    return %c0_i32, %c0_i32_0, %c0_i32_1 : i32, i32, i32
  }
  func.func @transform_4(%arg0: i32) -> (i32, i32, i32) {
    %c0_i32 = arith.constant 0 : i32
    %c0_i32_0 = arith.constant 0 : i32
    %c0_i32_1 = arith.constant 0 : i32
    %c0_i32_2 = arith.constant 0 : i32
    return %c0_i32, %c0_i32_0, %c0_i32_1 : i32, i32, i32
  }
  func.func @transform_5(%arg0: i32) -> (i32, i32, i32) {
    %c0_i32 = arith.constant 0 : i32
    %c0_i32_0 = arith.constant 0 : i32
    %c0_i32_1 = arith.constant 0 : i32
    %c0_i32_2 = arith.constant 0 : i32
    return %c0_i32, %c0_i32_0, %c0_i32_1 : i32, i32, i32
  }
  func.func @transform_6(%arg0: i32) -> (i32, i32, i32) {
    %c0_i32 = arith.constant 0 : i32
    %c0_i32_0 = arith.constant 0 : i32
    %c0_i32_1 = arith.constant 0 : i32
    %c0_i32_2 = arith.constant 0 : i32
    return %c0_i32, %c0_i32_0, %c0_i32_1 : i32, i32, i32
  }
  func.func @transform_7(%arg0: i32) -> (i32, i32, i32) {
    %c0_i32 = arith.constant 0 : i32
    %c0_i32_0 = arith.constant 0 : i32
    %c0_i32_1 = arith.constant 0 : i32
    %c0_i32_2 = arith.constant 0 : i32
    return %c0_i32, %c0_i32_0, %c0_i32_1 : i32, i32, i32
  }
  func.func @transform_8(%arg0: i32) -> (i32, i32, i32) {
    %c0_i32 = arith.constant 0 : i32
    %c0_i32_0 = arith.constant 0 : i32
    %c0_i32_1 = arith.constant 0 : i32
    %c0_i32_2 = arith.constant 0 : i32
    return %c0_i32, %c0_i32_0, %c0_i32_1 : i32, i32, i32
  }
  func.func @transform_9(%arg0: i32) -> (i32, i32, i32) {
    %c0_i32 = arith.constant 0 : i32
    %c0_i32_0 = arith.constant 0 : i32
    %c0_i32_1 = arith.constant 0 : i32
    %c0_i32_2 = arith.constant 0 : i32
    return %c0_i32, %c0_i32_0, %c0_i32_1 : i32, i32, i32
  }
  func.func @transform_10(%arg0: i32) -> (i32, i32, i32) {
    %c0_i32 = arith.constant 0 : i32
    %c0_i32_0 = arith.constant 0 : i32
    %c0_i32_1 = arith.constant 0 : i32
    %c0_i32_2 = arith.constant 0 : i32
    return %c0_i32, %c0_i32_0, %c0_i32_1 : i32, i32, i32
  }
  func.func @transform_11(%arg0: i32) -> (i32, i32, i32) {
    %c0_i32 = arith.constant 0 : i32
    %c0_i32_0 = arith.constant 0 : i32
    %c0_i32_1 = arith.constant 0 : i32
    %c0_i32_2 = arith.constant 0 : i32
    return %c0_i32, %c0_i32_0, %c0_i32_1 : i32, i32, i32
  }
  func.func @transform_12(%arg0: i32) -> (i32, i32, i32) {
    %c0_i32 = arith.constant 0 : i32
    %c0_i32_0 = arith.constant 0 : i32
    %c0_i32_1 = arith.constant 0 : i32
    %c0_i32_2 = arith.constant 0 : i32
    return %c0_i32, %c0_i32_0, %c0_i32_1 : i32, i32, i32
  }
  func.func @transform_13(%arg0: i32) -> (i32, i32, i32) {
    %c0_i32 = arith.constant 0 : i32
    %c0_i32_0 = arith.constant 0 : i32
    %c0_i32_1 = arith.constant 0 : i32
    %c0_i32_2 = arith.constant 0 : i32
    return %c0_i32, %c0_i32_0, %c0_i32_1 : i32, i32, i32
  }
  func.func @transform_14(%arg0: i32) -> (i32, i32, i32) {
    %c0_i32 = arith.constant 0 : i32
    %c0_i32_0 = arith.constant 0 : i32
    %c0_i32_1 = arith.constant 0 : i32
    %c0_i32_2 = arith.constant 0 : i32
    return %c0_i32, %c0_i32_0, %c0_i32_1 : i32, i32, i32
  }
  func.func @transform_15(%arg0: i32) -> (i32, i32, i32) {
    %c0_i32 = arith.constant 0 : i32
    %c0_i32_0 = arith.constant 0 : i32
    %c0_i32_1 = arith.constant 0 : i32
    %c0_i32_2 = arith.constant 0 : i32
    return %c0_i32, %c0_i32_0, %c0_i32_1 : i32, i32, i32
  }
  func.func @transform_16(%arg0: i32) -> (i32, i32, i32) {
    %c0_i32 = arith.constant 0 : i32
    %c0_i32_0 = arith.constant 0 : i32
    %c0_i32_1 = arith.constant 0 : i32
    %c0_i32_2 = arith.constant 0 : i32
    return %c0_i32, %c0_i32_0, %c0_i32_1 : i32, i32, i32
  }
  func.func @transform_17(%arg0: i32) -> (i32, i32, i32) {
    %c0_i32 = arith.constant 0 : i32
    %c0_i32_0 = arith.constant 0 : i32
    %c0_i32_1 = arith.constant 0 : i32
    %c0_i32_2 = arith.constant 0 : i32
    return %c0_i32, %c0_i32_0, %c0_i32_1 : i32, i32, i32
  }
  func.func @transform_18(%arg0: i32) -> (i32, i32, i32) {
    %c0_i32 = arith.constant 0 : i32
    %c0_i32_0 = arith.constant 0 : i32
    %c0_i32_1 = arith.constant 0 : i32
    %c0_i32_2 = arith.constant 0 : i32
    return %c0_i32, %c0_i32_0, %c0_i32_1 : i32, i32, i32
  }
  func.func @transform_19(%arg0: i32) -> (i32, i32) {
    %c0_i32 = arith.constant 0 : i32
    %c0_i32_0 = arith.constant 0 : i32
    %c0_i32_1 = arith.constant 0 : i32
    return %c0_i32, %c0_i32_0 : i32, i32
  }
  func.func @transform_20(%arg0: i32) -> (i32, i32) {
    %c0_i32 = arith.constant 0 : i32
    %c0_i32_0 = arith.constant 0 : i32
    %c0_i32_1 = arith.constant 0 : i32
    return %c0_i32, %c0_i32_0 : i32, i32
  }
  func.func @transform_21(%arg0: i32) -> (i32, i32) {
    %c0_i32 = arith.constant 0 : i32
    %c0_i32_0 = arith.constant 0 : i32
    %c0_i32_1 = arith.constant 0 : i32
    return %c0_i32, %c0_i32_0 : i32, i32
  }
  func.func @transform_22(%arg0: i32) -> (i32, i32) {
    %c0_i32 = arith.constant 0 : i32
    %c0_i32_0 = arith.constant 0 : i32
    %c0_i32_1 = arith.constant 0 : i32
    return %c0_i32, %c0_i32_0 : i32, i32
  }
  func.func @transform_23(%arg0: i32) -> (i32, i32) {
    %c0_i32 = arith.constant 0 : i32
    %c0_i32_0 = arith.constant 0 : i32
    %c0_i32_1 = arith.constant 0 : i32
    return %c0_i32, %c0_i32_0 : i32, i32
  }
  func.func @transform_24(%arg0: i32) -> (i32, i32) {
    %c0_i32 = arith.constant 0 : i32
    %c0_i32_0 = arith.constant 0 : i32
    %c0_i32_1 = arith.constant 0 : i32
    return %c0_i32, %c0_i32_0 : i32, i32
  }
  func.func @transform_25(%arg0: i32) -> (i32, i32) {
    %c0_i32 = arith.constant 0 : i32
    %c0_i32_0 = arith.constant 0 : i32
    %c0_i32_1 = arith.constant 0 : i32
    return %c0_i32, %c0_i32_0 : i32, i32
  }
  func.func @transform_26(%arg0: i32) -> (i32, i32) {
    %c0_i32 = arith.constant 0 : i32
    %c0_i32_0 = arith.constant 0 : i32
    %c0_i32_1 = arith.constant 0 : i32
    return %c0_i32, %c0_i32_0 : i32, i32
  }
  func.func @transform_27(%arg0: i32) -> (i32, i32, i32) {
    %c0_i32 = arith.constant 0 : i32
    %c0_i32_0 = arith.constant 0 : i32
    %c0_i32_1 = arith.constant 0 : i32
    return %arg0, %c0_i32, %c0_i32_0 : i32, i32, i32
  }
  func.func @transform_28(%arg0: i32) -> (i32, i32, i32) {
    %c0_i32 = arith.constant 0 : i32
    %c0_i32_0 = arith.constant 0 : i32
    %c0_i32_1 = arith.constant 0 : i32
    return %arg0, %c0_i32, %c0_i32_0 : i32, i32, i32
  }
}

</mosaic_0001>

<llo_original>
// kernel: fastspeech2_forward.2
$region0: #{fastspeech2_forward.2}
  #allocation0 [shape = 'u32[]', space=smem, size = 0x4, offset = 0x4, fixed_abs, tag = 'smem constant byte address 0x4 - core index']
  #allocation1 [shape = 'u32[72,128]{1,0:T(1,128)}', space=vmem, size = 0x9000, scoped, tag = 'internal scratch']
  %s0 = inlined_call_operand.smem [shape: u32[35], index: -1, kind: input, shape index: {}]
  %s1 = sld [smem:[%s0]]
  %s2 = scalar_lea.smem %s0, 1
  %s3 = sld [smem:[%s2]]
  %s4 = scalar_lea.smem %s0, 2
  %s5 = sld [smem:[%s4]]
  %s6 = scalar_lea.smem %s0, 3
  %s7 = sld [smem:[%s6]]
  %s8 = scalar_lea.smem %s0, 4
  %s9 = sld [smem:[%s8]]
  %s10 = scalar_lea.smem %s0, 5
  %s11 = sld [smem:[%s10]]
  %s12 = scalar_lea.smem %s0, 6
  %s13 = sld [smem:[%s12]]
  %s14 = scalar_lea.smem %s0, 7
  %s15 = sld [smem:[%s14]]
  %s16 = scalar_lea.smem %s0, 8
  %s17 = sld [smem:[%s16]]
  %s18 = scalar_lea.smem %s0, 9
  %s19 = sld [smem:[%s18]]
  %s20 = scalar_lea.smem %s0, 10
  %s21 = sld [smem:[%s20]]
  %s22 = scalar_lea.smem %s0, 11
  %s23 = sld [smem:[%s22]]
  %s24 = scalar_lea.smem %s0, 12
  %s25 = sld [smem:[%s24]]
  %s26 = scalar_lea.smem %s0, 13
  %s27 = sld [smem:[%s26]]
  %s28 = scalar_lea.smem %s0, 14
  %s29 = sld [smem:[%s28]]
  %s30 = scalar_lea.smem %s0, 15
  %s31 = sld [smem:[%s30]]
  %s32 = scalar_lea.smem %s0, 16
  %s33 = sld [smem:[%s32]]
  %s34 = scalar_lea.smem %s0, 17
  %s35 = sld [smem:[%s34]]
  %s36 = scalar_lea.smem %s0, 18
  %s37 = sld [smem:[%s36]]
  %s38 = scalar_lea.smem %s0, 19
  %s39 = sld [smem:[%s38]]
  %s40 = scalar_lea.smem %s0, 20
  %s41 = sld [smem:[%s40]]
  %s42 = scalar_lea.smem %s0, 21
  %s43 = sld [smem:[%s42]]
  %s44 = scalar_lea.smem %s0, 22
  %s45 = sld [smem:[%s44]]
  %s46 = scalar_lea.smem %s0, 23
  %s47 = sld [smem:[%s46]]
  %s48 = scalar_lea.smem %s0, 24
  %s49 = sld [smem:[%s48]]
  %s50 = scalar_lea.smem %s0, 25
  %s51 = sld [smem:[%s50]]
  %s52 = scalar_lea.smem %s0, 26
  %s53 = sld [smem:[%s52]]
  %s54 = scalar_lea.smem %s0, 27
  %s55 = sld [smem:[%s54]]
  %s56 = scalar_lea.smem %s0, 28
  %s57 = sld [smem:[%s56]]
  %s58 = scalar_lea.smem %s0, 29
  %s59 = sld [smem:[%s58]]
  %s60 = scalar_lea.smem %s0, 30
  %s61 = sld [smem:[%s60]]
  %s62 = scalar_lea.smem %s0, 31
  %s63 = sld [smem:[%s62]]
  %s64 = scalar_lea.smem %s0, 32
  %s65 = sld [smem:[%s64]]
  %s66 = scalar_lea.smem %s0, 33
  %s67 = sld [smem:[%s66]]
  %s68 = scalar_lea.smem %s0, 34
  %s69 = sld [smem:[%s68]]
  %70 = xla_tuple %s63, %s65, %s67, %s69
  %s71 = sld [smem:[#allocation0]]
  $region181: #{fastspeech2_forward.2} parent=0
    _
  %s73 = ssub.s32 1, %s71
  %s74 = scalar_select 0, %s73, %s71
  loop: start=0, step=1, limit=4
  $region2: #{fastspeech2_forward.2} parent=0 // loop_pre_header
    _
  $region3: #{fastspeech2_forward.2} parent=0 // loop_header
    %s76 = sphi 0, %s80
    %p77 = scmp.ge.s32.totalorder %s76, 4
    %s86 = sphi 0, %s88
    %s89 = sphi 0, %s86
    %s90 = sphi 0, %s89
    %s106 = sphi 0, %s90
    %s112 = sphi 0, %s114
    %s115 = sphi 0, %s112
    %s116 = sphi 0, %s115
    %s132 = sphi 0, %s116
    %s138 = sphi 0, %s140
    %s141 = sphi 0, %s138
    %s142 = sphi 0, %s141
    %s158 = sphi 0, %s142
    %s162 = sphi 0, %s162
    %s164 = sphi 0, %s162
    %s165 = sphi 0, %s164
    %s179 = sphi 0, %s165
    %s183 = sphi 0, %s183
    %s185 = sphi 0, %s183
    %s186 = sphi 0, %s185
    %s200 = sphi 0, %s186
    %s204 = sphi 0, %s204
    %s206 = sphi 0, %s204
    %s207 = sphi 0, %s206
    %s221 = sphi 0, %s207
    %s225 = sphi 0, %s225
    %s227 = sphi 0, %s225
    %s228 = sphi 0, %s227
    %s242 = sphi 0, %s228
    %s246 = sphi 0, %s246
    %s248 = sphi 0, %s246
    %s249 = sphi 0, %s248
    %s263 = sphi 0, %s249
    %s267 = sphi 0, %s267
    %s269 = sphi 0, %s267
    %s270 = sphi 0, %s269
    %s284 = sphi 0, %s270
    %s288 = sphi 0, %s288
    %s290 = sphi 0, %s288
    %s291 = sphi 0, %s290
    %s305 = sphi 0, %s291
    %s309 = sphi 0, %s309
    %s311 = sphi 0, %s309
    %s312 = sphi 0, %s311
    %s326 = sphi 0, %s312
    %s330 = sphi 0, %s330
    %s332 = sphi 0, %s330
    %s333 = sphi 0, %s332
    %s347 = sphi 0, %s333
    %s351 = sphi 0, %s351
    %s353 = sphi 0, %s351
    %s354 = sphi 0, %s353
    %s368 = sphi 0, %s354
    %s372 = sphi 0, %s372
    %s374 = sphi 0, %s372
    %s375 = sphi 0, %s374
    %s389 = sphi 0, %s375
    %s393 = sphi 0, %s393
    %s395 = sphi 0, %s393
    %s396 = sphi 0, %s395
    %s410 = sphi 0, %s396
    %s414 = sphi 0, %s414
    %s416 = sphi 0, %s414
    %s417 = sphi 0, %s416
    %s431 = sphi 0, %s417
    %s435 = sphi 0, %s435
    %s437 = sphi 0, %s435
    %s438 = sphi 0, %s437
    %s452 = sphi 0, %s438
    %s456 = sphi 0, %s456
    %s458 = sphi 0, %s456
    %s459 = sphi 0, %s458
    %s473 = sphi 0, %s459
    %s477 = sphi 0, %s477
    %s479 = sphi 0, %s477
    %s480 = sphi 0, %s479
    %s494 = sphi 0, %s480
    %s498 = sphi 0, %s498
    %s500 = sphi 0, %s498
    %s501 = sphi 0, %s500
    %s515 = sphi 0, %s501
    %s519 = sphi 0, %s519
    %s521 = sphi 0, %s519
    %s522 = sphi 0, %s521
    %s536 = sphi 0, %s522
    %s540 = sphi 0, %s540
    %s542 = sphi 0, %s540
    %s543 = sphi 0, %s542
    %s557 = sphi 0, %s543
    %s561 = sphi 0, %s561
    %s563 = sphi 0, %s561
    %s564 = sphi 0, %s563
    %s578 = sphi 0, %s564
    %s582 = sphi 0, %s582
    %s584 = sphi 0, %s582
    %s585 = sphi 0, %s584
    %s599 = sphi 0, %s585
    %s603 = sphi 0, %s603
    %s605 = sphi 0, %s603
    %s606 = sphi 0, %s605
    %s620 = sphi 0, %s606
    %s624 = sphi 0, %s624
    %s626 = sphi 0, %s624
    %s627 = sphi 0, %s626
    %s641 = sphi 0, %s627
    %s645 = sphi 0, %s645
    %s647 = sphi 0, %s645
    %s648 = sphi 0, %s647
    %s662 = sphi 0, %s648
    %s666 = sphi 0, %s666
    %s668 = sphi 0, %s666
    %s669 = sphi 0, %s668
    %s683 = sphi 0, %s669
    %s687 = sphi 0, %s687
    %s689 = sphi 0, %s687
    %s690 = sphi 0, %s689
    %s704 = sphi 0, %s690
    %s708 = sphi 0, %s708
    %s710 = sphi 0, %s708
    %s711 = sphi 0, %s710
    %s725 = sphi 0, %s711
    %s729 = sphi 0, %s729
    %s731 = sphi 0, %s729
    %s732 = sphi 0, %s731
    %s746 = sphi 0, %s732
    %s752 = sphi 0, %s754
    %s755 = sphi 0, %s752
    %s756 = sphi 0, %s755
    %s772 = sphi 0, %s756
    %s778 = sphi 0, %s780
    %s781 = sphi 0, %s778
    %s782 = sphi 0, %s781
    %s798 = sphi 0, %s782
    %s804 = sphi 0, %s806
    %s807 = sphi 0, %s804
    %s808 = sphi 0, %s807
    %s824 = sphi 0, %s808
    %s830 = sphi 0, %s832
    %s833 = sphi 0, %s830
    %s834 = sphi 0, %s833
    %s850 = sphi 0, %s834
  $region4: #{fastspeech2_forward.2} parent=0 // loop_header_branch
    %79 = sbr.rel (%p77) target = $region8
  $region5: #{fastspeech2_forward.2} parent=0 // loop_body
    %s81 = ssub.s32 %s76, 1
    %s82 = ssub.s32 %s76, 2
    %s83 = sadd.s32 %s76, 1
    %s84 = ssub.s32 %s76, %s83
    %p85 = scmp.eq.s32.totalorder %s84, 0
    %s87 = sadd.s32 %s86, 1
    %s88 = scalar_select %p85, %s86, %s87
    %p91 = pneg %p85
    %p92 = scmp.eq.s32.totalorder %s76, 1
    %p93 = por %p91, %p92
    %p94 = scmp.ne.s32.totalorder %s86, %s89
    %p95 = scmp.eq.s32.totalorder %s76, 0
    %p96 = por %p94, %p95
    %p97 = scmp.ne.s32.totalorder %s86, %s89
    %p98 = scmp.eq.s32.totalorder %s81, 1
    %p99 = por %p97, %p98
    %p100 = scmp.ne.s32.totalorder %s89, %s90
    %p101 = scmp.eq.s32.totalorder %s81, 0
    %p102 = por %p100, %p101
    %p103 = scmp.ne.s32.totalorder %s89, %s90
    %p104 = scmp.eq.s32.totalorder %s82, 1
    %p105 = por %p103, %p104
    %p107 = scmp.ne.s32.totalorder %s90, %s106
    %p108 = scmp.eq.s32.totalorder %s82, 0
    %p109 = por %p107, %p108
    %s110 = ssub.s32 %s76, %s83
    %p111 = scmp.eq.s32.totalorder %s110, 0
    %s113 = sadd.s32 %s112, 1
    %s114 = scalar_select %p111, %s112, %s113
    %p117 = pneg %p111
    %p118 = scmp.eq.s32.totalorder %s76, 1
    %p119 = por %p117, %p118
    %p120 = scmp.ne.s32.totalorder %s112, %s115
    %p121 = scmp.eq.s32.totalorder %s76, 0
    %p122 = por %p120, %p121
    %p123 = scmp.ne.s32.totalorder %s112, %s115
    %p124 = scmp.eq.s32.totalorder %s81, 1
    %p125 = por %p123, %p124
    %p126 = scmp.ne.s32.totalorder %s115, %s116
    %p127 = scmp.eq.s32.totalorder %s81, 0
    %p128 = por %p126, %p127
    %p129 = scmp.ne.s32.totalorder %s115, %s116
    %p130 = scmp.eq.s32.totalorder %s82, 1
    %p131 = por %p129, %p130
    %p133 = scmp.ne.s32.totalorder %s116, %s132
    %p134 = scmp.eq.s32.totalorder %s82, 0
    %p135 = por %p133, %p134
    %s136 = ssub.s32 %s76, %s83
    %p137 = scmp.eq.s32.totalorder %s136, 0
    %s139 = sadd.s32 %s138, 1
    %s140 = scalar_select %p137, %s138, %s139
    %p143 = pneg %p137
    %p144 = scmp.eq.s32.totalorder %s76, 1
    %p145 = por %p143, %p144
    %p146 = scmp.ne.s32.totalorder %s138, %s141
    %p147 = scmp.eq.s32.totalorder %s76, 0
    %p148 = por %p146, %p147
    %p149 = scmp.ne.s32.totalorder %s138, %s141
    %p150 = scmp.eq.s32.totalorder %s81, 1
    %p151 = por %p149, %p150
    %p152 = scmp.ne.s32.totalorder %s141, %s142
    %p153 = scmp.eq.s32.totalorder %s81, 0
    %p154 = por %p152, %p153
    %p155 = scmp.ne.s32.totalorder %s141, %s142
    %p156 = scmp.eq.s32.totalorder %s82, 1
    %p157 = por %p155, %p156
    %p159 = scmp.ne.s32.totalorder %s142, %s158
    %p160 = scmp.eq.s32.totalorder %s82, 0
    %p161 = por %p159, %p160
    %s163 = sadd.s32 %s162, 1
    %p166 = scmp.eq.s32.totalorder %s76, 1
    %p167 = scmp.ne.s32.totalorder %s162, %s164
    %p168 = scmp.eq.s32.totalorder %s76, 0
    %p169 = por %p167, %p168
    %p170 = scmp.ne.s32.totalorder %s162, %s164
    %p171 = scmp.eq.s32.totalorder %s81, 1
    %p172 = por %p170, %p171
    %p173 = scmp.ne.s32.totalorder %s164, %s165
    %p174 = scmp.eq.s32.totalorder %s81, 0
    %p175 = por %p173, %p174
    %p176 = scmp.ne.s32.totalorder %s164, %s165
    %p177 = scmp.eq.s32.totalorder %s82, 1
    %p178 = por %p176, %p177
    %p180 = scmp.ne.s32.totalorder %s165, %s179
    %p181 = scmp.eq.s32.totalorder %s82, 0
    %p182 = por %p180, %p181
    %s184 = sadd.s32 %s183, 1
    %p187 = scmp.eq.s32.totalorder %s76, 1
    %p188 = scmp.ne.s32.totalorder %s183, %s185
    %p189 = scmp.eq.s32.totalorder %s76, 0
    %p190 = por %p188, %p189
    %p191 = scmp.ne.s32.totalorder %s183, %s185
    %p192 = scmp.eq.s32.totalorder %s81, 1
    %p193 = por %p191, %p192
    %p194 = scmp.ne.s32.totalorder %s185, %s186
    %p195 = scmp.eq.s32.totalorder %s81, 0
    %p196 = por %p194, %p195
    %p197 = scmp.ne.s32.totalorder %s185, %s186
    %p198 = scmp.eq.s32.totalorder %s82, 1
    %p199 = por %p197, %p198
    %p201 = scmp.ne.s32.totalorder %s186, %s200
    %p202 = scmp.eq.s32.totalorder %s82, 0
    %p203 = por %p201, %p202
    %s205 = sadd.s32 %s204, 1
    %p208 = scmp.eq.s32.totalorder %s76, 1
    %p209 = scmp.ne.s32.totalorder %s204, %s206
    %p210 = scmp.eq.s32.totalorder %s76, 0
    %p211 = por %p209, %p210
    %p212 = scmp.ne.s32.totalorder %s204, %s206
    %p213 = scmp.eq.s32.totalorder %s81, 1
    %p214 = por %p212, %p213
    %p215 = scmp.ne.s32.totalorder %s206, %s207
    %p216 = scmp.eq.s32.totalorder %s81, 0
    %p217 = por %p215, %p216
    %p218 = scmp.ne.s32.totalorder %s206, %s207
    %p219 = scmp.eq.s32.totalorder %s82, 1
    %p220 = por %p218, %p219
    %p222 = scmp.ne.s32.totalorder %s207, %s221
    %p223 = scmp.eq.s32.totalorder %s82, 0
    %p224 = por %p222, %p223
    %s226 = sadd.s32 %s225, 1
    %p229 = scmp.eq.s32.totalorder %s76, 1
    %p230 = scmp.ne.s32.totalorder %s225, %s227
    %p231 = scmp.eq.s32.totalorder %s76, 0
    %p232 = por %p230, %p231
    %p233 = scmp.ne.s32.totalorder %s225, %s227
    %p234 = scmp.eq.s32.totalorder %s81, 1
    %p235 = por %p233, %p234
    %p236 = scmp.ne.s32.totalorder %s227, %s228
    %p237 = scmp.eq.s32.totalorder %s81, 0
    %p238 = por %p236, %p237
    %p239 = scmp.ne.s32.totalorder %s227, %s228
    %p240 = scmp.eq.s32.totalorder %s82, 1
    %p241 = por %p239, %p240
    %p243 = scmp.ne.s32.totalorder %s228, %s242
    %p244 = scmp.eq.s32.totalorder %s82, 0
    %p245 = por %p243, %p244
    %s247 = sadd.s32 %s246, 1
    %p250 = scmp.eq.s32.totalorder %s76, 1
    %p251 = scmp.ne.s32.totalorder %s246, %s248
    %p252 = scmp.eq.s32.totalorder %s76, 0
    %p253 = por %p251, %p252
    %p254 = scmp.ne.s32.totalorder %s246, %s248
    %p255 = scmp.eq.s32.totalorder %s81, 1
    %p256 = por %p254, %p255
    %p257 = scmp.ne.s32.totalorder %s248, %s249
    %p258 = scmp.eq.s32.totalorder %s81, 0
    %p259 = por %p257, %p258
    %p260 = scmp.ne.s32.totalorder %s248, %s249
    %p261 = scmp.eq.s32.totalorder %s82, 1
    %p262 = por %p260, %p261
    %p264 = scmp.ne.s32.totalorder %s249, %s263
    %p265 = scmp.eq.s32.totalorder %s82, 0
    %p266 = por %p264, %p265
    %s268 = sadd.s32 %s267, 1
    %p271 = scmp.eq.s32.totalorder %s76, 1
    %p272 = scmp.ne.s32.totalorder %s267, %s269
    %p273 = scmp.eq.s32.totalorder %s76, 0
    %p274 = por %p272, %p273
    %p275 = scmp.ne.s32.totalorder %s267, %s269
    %p276 = scmp.eq.s32.totalorder %s81, 1
    %p277 = por %p275, %p276
    %p278 = scmp.ne.s32.totalorder %s269, %s270
    %p279 = scmp.eq.s32.totalorder %s81, 0
    %p280 = por %p278, %p279
    %p281 = scmp.ne.s32.totalorder %s269, %s270
    %p282 = scmp.eq.s32.totalorder %s82, 1
    %p283 = por %p281, %p282
    %p285 = scmp.ne.s32.totalorder %s270, %s284
    %p286 = scmp.eq.s32.totalorder %s82, 0
    %p287 = por %p285, %p286
    %s289 = sadd.s32 %s288, 1
    %p292 = scmp.eq.s32.totalorder %s76, 1
    %p293 = scmp.ne.s32.totalorder %s288, %s290
    %p294 = scmp.eq.s32.totalorder %s76, 0
    %p295 = por %p293, %p294
    %p296 = scmp.ne.s32.totalorder %s288, %s290
    %p297 = scmp.eq.s32.totalorder %s81, 1
    %p298 = por %p296, %p297
    %p299 = scmp.ne.s32.totalorder %s290, %s291
    %p300 = scmp.eq.s32.totalorder %s81, 0
    %p301 = por %p299, %p300
    %p302 = scmp.ne.s32.totalorder %s290, %s291
    %p303 = scmp.eq.s32.totalorder %s82, 1
    %p304 = por %p302, %p303
    %p306 = scmp.ne.s32.totalorder %s291, %s305
    %p307 = scmp.eq.s32.totalorder %s82, 0
    %p308 = por %p306, %p307
    %s310 = sadd.s32 %s309, 1
    %p313 = scmp.eq.s32.totalorder %s76, 1
    %p314 = scmp.ne.s32.totalorder %s309, %s311
    %p315 = scmp.eq.s32.totalorder %s76, 0
    %p316 = por %p314, %p315
    %p317 = scmp.ne.s32.totalorder %s309, %s311
    %p318 = scmp.eq.s32.totalorder %s81, 1
    %p319 = por %p317, %p318
    %p320 = scmp.ne.s32.totalorder %s311, %s312
    %p321 = scmp.eq.s32.totalorder %s81, 0
    %p322 = por %p320, %p321
    %p323 = scmp.ne.s32.totalorder %s311, %s312
    %p324 = scmp.eq.s32.totalorder %s82, 1
    %p325 = por %p323, %p324
    %p327 = scmp.ne.s32.totalorder %s312, %s326
    %p328 = scmp.eq.s32.totalorder %s82, 0
    %p329 = por %p327, %p328
    %s331 = sadd.s32 %s330, 1
    %p334 = scmp.eq.s32.totalorder %s76, 1
    %p335 = scmp.ne.s32.totalorder %s330, %s332
    %p336 = scmp.eq.s32.totalorder %s76, 0
    %p337 = por %p335, %p336
    %p338 = scmp.ne.s32.totalorder %s330, %s332
    %p339 = scmp.eq.s32.totalorder %s81, 1
    %p340 = por %p338, %p339
    %p341 = scmp.ne.s32.totalorder %s332, %s333
    %p342 = scmp.eq.s32.totalorder %s81, 0
    %p343 = por %p341, %p342
    %p344 = scmp.ne.s32.totalorder %s332, %s333
    %p345 = scmp.eq.s32.totalorder %s82, 1
    %p346 = por %p344, %p345
    %p348 = scmp.ne.s32.totalorder %s333, %s347
    %p349 = scmp.eq.s32.totalorder %s82, 0
    %p350 = por %p348, %p349
    %s352 = sadd.s32 %s351, 1
    %p355 = scmp.eq.s32.totalorder %s76, 1
    %p356 = scmp.ne.s32.totalorder %s351, %s353
    %p357 = scmp.eq.s32.totalorder %s76, 0
    %p358 = por %p356, %p357
    %p359 = scmp.ne.s32.totalorder %s351, %s353
    %p360 = scmp.eq.s32.totalorder %s81, 1
    %p361 = por %p359, %p360
    %p362 = scmp.ne.s32.totalorder %s353, %s354
    %p363 = scmp.eq.s32.totalorder %s81, 0
    %p364 = por %p362, %p363
    %p365 = scmp.ne.s32.totalorder %s353, %s354
    %p366 = scmp.eq.s32.totalorder %s82, 1
    %p367 = por %p365, %p366
    %p369 = scmp.ne.s32.totalorder %s354, %s368
    %p370 = scmp.eq.s32.totalorder %s82, 0
    %p371 = por %p369, %p370
    %s373 = sadd.s32 %s372, 1
    %p376 = scmp.eq.s32.totalorder %s76, 1
    %p377 = scmp.ne.s32.totalorder %s372, %s374
    %p378 = scmp.eq.s32.totalorder %s76, 0
    %p379 = por %p377, %p378
    %p380 = scmp.ne.s32.totalorder %s372, %s374
    %p381 = scmp.eq.s32.totalorder %s81, 1
    %p382 = por %p380, %p381
    %p383 = scmp.ne.s32.totalorder %s374, %s375
    %p384 = scmp.eq.s32.totalorder %s81, 0
    %p385 = por %p383, %p384
    %p386 = scmp.ne.s32.totalorder %s374, %s375
    %p387 = scmp.eq.s32.totalorder %s82, 1
    %p388 = por %p386, %p387
    %p390 = scmp.ne.s32.totalorder %s375, %s389
    %p391 = scmp.eq.s32.totalorder %s82, 0
    %p392 = por %p390, %p391
    %s394 = sadd.s32 %s393, 1
    %p397 = scmp.eq.s32.totalorder %s76, 1
    %p398 = scmp.ne.s32.totalorder %s393, %s395
    %p399 = scmp.eq.s32.totalorder %s76, 0
    %p400 = por %p398, %p399
    %p401 = scmp.ne.s32.totalorder %s393, %s395
    %p402 = scmp.eq.s32.totalorder %s81, 1
    %p403 = por %p401, %p402
    %p404 = scmp.ne.s32.totalorder %s395, %s396
    %p405 = scmp.eq.s32.totalorder %s81, 0
    %p406 = por %p404, %p405
    %p407 = scmp.ne.s32.totalorder %s395, %s396
    %p408 = scmp.eq.s32.totalorder %s82, 1
    %p409 = por %p407, %p408
    %p411 = scmp.ne.s32.totalorder %s396, %s410
    %p412 = scmp.eq.s32.totalorder %s82, 0
    %p413 = por %p411, %p412
    %s415 = sadd.s32 %s414, 1
    %p418 = scmp.eq.s32.totalorder %s76, 1
    %p419 = scmp.ne.s32.totalorder %s414, %s416
    %p420 = scmp.eq.s32.totalorder %s76, 0
    %p421 = por %p419, %p420
    %p422 = scmp.ne.s32.totalorder %s414, %s416
    %p423 = scmp.eq.s32.totalorder %s81, 1
    %p424 = por %p422, %p423
    %p425 = scmp.ne.s32.totalorder %s416, %s417
    %p426 = scmp.eq.s32.totalorder %s81, 0
    %p427 = por %p425, %p426
    %p428 = scmp.ne.s32.totalorder %s416, %s417
    %p429 = scmp.eq.s32.totalorder %s82, 1
    %p430 = por %p428, %p429
    %p432 = scmp.ne.s32.totalorder %s417, %s431
    %p433 = scmp.eq.s32.totalorder %s82, 0
    %p434 = por %p432, %p433
    %s436 = sadd.s32 %s435, 1
    %p439 = scmp.eq.s32.totalorder %s76, 1
    %p440 = scmp.ne.s32.totalorder %s435, %s437
    %p441 = scmp.eq.s32.totalorder %s76, 0
    %p442 = por %p440, %p441
    %p443 = scmp.ne.s32.totalorder %s435, %s437
    %p444 = scmp.eq.s32.totalorder %s81, 1
    %p445 = por %p443, %p444
    %p446 = scmp.ne.s32.totalorder %s437, %s438
    %p447 = scmp.eq.s32.totalorder %s81, 0
    %p448 = por %p446, %p447
    %p449 = scmp.ne.s32.totalorder %s437, %s438
    %p450 = scmp.eq.s32.totalorder %s82, 1
    %p451 = por %p449, %p450
    %p453 = scmp.ne.s32.totalorder %s438, %s452
    %p454 = scmp.eq.s32.totalorder %s82, 0
    %p455 = por %p453, %p454
    %s457 = sadd.s32 %s456, 1
    %p460 = scmp.eq.s32.totalorder %s76, 1
    %p461 = scmp.ne.s32.totalorder %s456, %s458
    %p462 = scmp.eq.s32.totalorder %s76, 0
    %p463 = por %p461, %p462
    %p464 = scmp.ne.s32.totalorder %s456, %s458
    %p465 = scmp.eq.s32.totalorder %s81, 1
    %p466 = por %p464, %p465
    %p467 = scmp.ne.s32.totalorder %s458, %s459
    %p468 = scmp.eq.s32.totalorder %s81, 0
    %p469 = por %p467, %p468
    %p470 = scmp.ne.s32.totalorder %s458, %s459
    %p471 = scmp.eq.s32.totalorder %s82, 1
    %p472 = por %p470, %p471
    %p474 = scmp.ne.s32.totalorder %s459, %s473
    %p475 = scmp.eq.s32.totalorder %s82, 0
    %p476 = por %p474, %p475
    %s478 = sadd.s32 %s477, 1
    %p481 = scmp.eq.s32.totalorder %s76, 1
    %p482 = scmp.ne.s32.totalorder %s477, %s479
    %p483 = scmp.eq.s32.totalorder %s76, 0
    %p484 = por %p482, %p483
    %p485 = scmp.ne.s32.totalorder %s477, %s479
    %p486 = scmp.eq.s32.totalorder %s81, 1
    %p487 = por %p485, %p486
    %p488 = scmp.ne.s32.totalorder %s479, %s480
    %p489 = scmp.eq.s32.totalorder %s81, 0
    %p490 = por %p488, %p489
    %p491 = scmp.ne.s32.totalorder %s479, %s480
    %p492 = scmp.eq.s32.totalorder %s82, 1
    %p493 = por %p491, %p492
    %p495 = scmp.ne.s32.totalorder %s480, %s494
    %p496 = scmp.eq.s32.totalorder %s82, 0
    %p497 = por %p495, %p496
    %s499 = sadd.s32 %s498, 1
    %p502 = scmp.eq.s32.totalorder %s76, 1
    %p503 = scmp.ne.s32.totalorder %s498, %s500
    %p504 = scmp.eq.s32.totalorder %s76, 0
    %p505 = por %p503, %p504
    %p506 = scmp.ne.s32.totalorder %s498, %s500
    %p507 = scmp.eq.s32.totalorder %s81, 1
    %p508 = por %p506, %p507
    %p509 = scmp.ne.s32.totalorder %s500, %s501
    %p510 = scmp.eq.s32.totalorder %s81, 0
    %p511 = por %p509, %p510
    %p512 = scmp.ne.s32.totalorder %s500, %s501
    %p513 = scmp.eq.s32.totalorder %s82, 1
    %p514 = por %p512, %p513
    %p516 = scmp.ne.s32.totalorder %s501, %s515
    %p517 = scmp.eq.s32.totalorder %s82, 0
    %p518 = por %p516, %p517
    %s520 = sadd.s32 %s519, 1
    %p523 = scmp.eq.s32.totalorder %s76, 1
    %p524 = scmp.ne.s32.totalorder %s519, %s521
    %p525 = scmp.eq.s32.totalorder %s76, 0
    %p526 = por %p524, %p525
    %p527 = scmp.ne.s32.totalorder %s519, %s521
    %p528 = scmp.eq.s32.totalorder %s81, 1
    %p529 = por %p527, %p528
    %p530 = scmp.ne.s32.totalorder %s521, %s522
    %p531 = scmp.eq.s32.totalorder %s81, 0
    %p532 = por %p530, %p531
    %p533 = scmp.ne.s32.totalorder %s521, %s522
    %p534 = scmp.eq.s32.totalorder %s82, 1
    %p535 = por %p533, %p534
    %p537 = scmp.ne.s32.totalorder %s522, %s536
    %p538 = scmp.eq.s32.totalorder %s82, 0
    %p539 = por %p537, %p538
    %s541 = sadd.s32 %s540, 1
    %p544 = scmp.eq.s32.totalorder %s76, 1
    %p545 = scmp.ne.s32.totalorder %s540, %s542
    %p546 = scmp.eq.s32.totalorder %s76, 0
    %p547 = por %p545, %p546
    %p548 = scmp.ne.s32.totalorder %s540, %s542
    %p549 = scmp.eq.s32.totalorder %s81, 1
    %p550 = por %p548, %p549
    %p551 = scmp.ne.s32.totalorder %s542, %s543
    %p552 = scmp.eq.s32.totalorder %s81, 0
    %p553 = por %p551, %p552
    %p554 = scmp.ne.s32.totalorder %s542, %s543
    %p555 = scmp.eq.s32.totalorder %s82, 1
    %p556 = por %p554, %p555
    %p558 = scmp.ne.s32.totalorder %s543, %s557
    %p559 = scmp.eq.s32.totalorder %s82, 0
    %p560 = por %p558, %p559
    %s562 = sadd.s32 %s561, 1
    %p565 = scmp.eq.s32.totalorder %s76, 1
    %p566 = scmp.ne.s32.totalorder %s561, %s563
    %p567 = scmp.eq.s32.totalorder %s76, 0
    %p568 = por %p566, %p567
    %p569 = scmp.ne.s32.totalorder %s561, %s563
    %p570 = scmp.eq.s32.totalorder %s81, 1
    %p571 = por %p569, %p570
    %p572 = scmp.ne.s32.totalorder %s563, %s564
    %p573 = scmp.eq.s32.totalorder %s81, 0
    %p574 = por %p572, %p573
    %p575 = scmp.ne.s32.totalorder %s563, %s564
    %p576 = scmp.eq.s32.totalorder %s82, 1
    %p577 = por %p575, %p576
    %p579 = scmp.ne.s32.totalorder %s564, %s578
    %p580 = scmp.eq.s32.totalorder %s82, 0
    %p581 = por %p579, %p580
    %s583 = sadd.s32 %s582, 1
    %p586 = scmp.eq.s32.totalorder %s76, 1
    %p587 = scmp.ne.s32.totalorder %s582, %s584
    %p588 = scmp.eq.s32.totalorder %s76, 0
    %p589 = por %p587, %p588
    %p590 = scmp.ne.s32.totalorder %s582, %s584
    %p591 = scmp.eq.s32.totalorder %s81, 1
    %p592 = por %p590, %p591
    %p593 = scmp.ne.s32.totalorder %s584, %s585
    %p594 = scmp.eq.s32.totalorder %s81, 0
    %p595 = por %p593, %p594
    %p596 = scmp.ne.s32.totalorder %s584, %s585
    %p597 = scmp.eq.s32.totalorder %s82, 1
    %p598 = por %p596, %p597
    %p600 = scmp.ne.s32.totalorder %s585, %s599
    %p601 = scmp.eq.s32.totalorder %s82, 0
    %p602 = por %p600, %p601
    %s604 = sadd.s32 %s603, 1
    %p607 = scmp.eq.s32.totalorder %s76, 1
    %p608 = scmp.ne.s32.totalorder %s603, %s605
    %p609 = scmp.eq.s32.totalorder %s76, 0
    %p610 = por %p608, %p609
    %p611 = scmp.ne.s32.totalorder %s603, %s605
    %p612 = scmp.eq.s32.totalorder %s81, 1
    %p613 = por %p611, %p612
    %p614 = scmp.ne.s32.totalorder %s605, %s606
    %p615 = scmp.eq.s32.totalorder %s81, 0
    %p616 = por %p614, %p615
    %p617 = scmp.ne.s32.totalorder %s605, %s606
    %p618 = scmp.eq.s32.totalorder %s82, 1
    %p619 = por %p617, %p618
    %p621 = scmp.ne.s32.totalorder %s606, %s620
    %p622 = scmp.eq.s32.totalorder %s82, 0
    %p623 = por %p621, %p622
    %s625 = sadd.s32 %s624, 1
    %p628 = scmp.eq.s32.totalorder %s76, 1
    %p629 = scmp.ne.s32.totalorder %s624, %s626
    %p630 = scmp.eq.s32.totalorder %s76, 0
    %p631 = por %p629, %p630
    %p632 = scmp.ne.s32.totalorder %s624, %s626
    %p633 = scmp.eq.s32.totalorder %s81, 1
    %p634 = por %p632, %p633
    %p635 = scmp.ne.s32.totalorder %s626, %s627
    %p636 = scmp.eq.s32.totalorder %s81, 0
    %p637 = por %p635, %p636
    %p638 = scmp.ne.s32.totalorder %s626, %s627
    %p639 = scmp.eq.s32.totalorder %s82, 1
    %p640 = por %p638, %p639
    %p642 = scmp.ne.s32.totalorder %s627, %s641
    %p643 = scmp.eq.s32.totalorder %s82, 0
    %p644 = por %p642, %p643
    %s646 = sadd.s32 %s645, 1
    %p649 = scmp.eq.s32.totalorder %s76, 1
    %p650 = scmp.ne.s32.totalorder %s645, %s647
    %p651 = scmp.eq.s32.totalorder %s76, 0
    %p652 = por %p650, %p651
    %p653 = scmp.ne.s32.totalorder %s645, %s647
    %p654 = scmp.eq.s32.totalorder %s81, 1
    %p655 = por %p653, %p654
    %p656 = scmp.ne.s32.totalorder %s647, %s648
    %p657 = scmp.eq.s32.totalorder %s81, 0
    %p658 = por %p656, %p657
    %p659 = scmp.ne.s32.totalorder %s647, %s648
    %p660 = scmp.eq.s32.totalorder %s82, 1
    %p661 = por %p659, %p660
    %p663 = scmp.ne.s32.totalorder %s648, %s662
    %p664 = scmp.eq.s32.totalorder %s82, 0
    %p665 = por %p663, %p664
    %s667 = sadd.s32 %s666, 1
    %p670 = scmp.eq.s32.totalorder %s76, 1
    %p671 = scmp.ne.s32.totalorder %s666, %s668
    %p672 = scmp.eq.s32.totalorder %s76, 0
    %p673 = por %p671, %p672
    %p674 = scmp.ne.s32.totalorder %s666, %s668
    %p675 = scmp.eq.s32.totalorder %s81, 1
    %p676 = por %p674, %p675
    %p677 = scmp.ne.s32.totalorder %s668, %s669
    %p678 = scmp.eq.s32.totalorder %s81, 0
    %p679 = por %p677, %p678
    %p680 = scmp.ne.s32.totalorder %s668, %s669
    %p681 = scmp.eq.s32.totalorder %s82, 1
    %p682 = por %p680, %p681
    %p684 = scmp.ne.s32.totalorder %s669, %s683
    %p685 = scmp.eq.s32.totalorder %s82, 0
    %p686 = por %p684, %p685
    %s688 = sadd.s32 %s687, 1
    %p691 = scmp.eq.s32.totalorder %s76, 1
    %p692 = scmp.ne.s32.totalorder %s687, %s689
    %p693 = scmp.eq.s32.totalorder %s76, 0
    %p694 = por %p692, %p693
    %p695 = scmp.ne.s32.totalorder %s687, %s689
    %p696 = scmp.eq.s32.totalorder %s81, 1
    %p697 = por %p695, %p696
    %p698 = scmp.ne.s32.totalorder %s689, %s690
    %p699 = scmp.eq.s32.totalorder %s81, 0
    %p700 = por %p698, %p699
    %p701 = scmp.ne.s32.totalorder %s689, %s690
    %p702 = scmp.eq.s32.totalorder %s82, 1
    %p703 = por %p701, %p702
    %p705 = scmp.ne.s32.totalorder %s690, %s704
    %p706 = scmp.eq.s32.totalorder %s82, 0
    %p707 = por %p705, %p706
    %s709 = sadd.s32 %s708, 1
    %p712 = scmp.eq.s32.totalorder %s76, 1
    %p713 = scmp.ne.s32.totalorder %s708, %s710
    %p714 = scmp.eq.s32.totalorder %s76, 0
    %p715 = por %p713, %p714
    %p716 = scmp.ne.s32.totalorder %s708, %s710
    %p717 = scmp.eq.s32.totalorder %s81, 1
    %p718 = por %p716, %p717
    %p719 = scmp.ne.s32.totalorder %s710, %s711
    %p720 = scmp.eq.s32.totalorder %s81, 0
    %p721 = por %p719, %p720
    %p722 = scmp.ne.s32.totalorder %s710, %s711
    %p723 = scmp.eq.s32.totalorder %s82, 1
    %p724 = por %p722, %p723
    %p726 = scmp.ne.s32.totalorder %s711, %s725
    %p727 = scmp.eq.s32.totalorder %s82, 0
    %p728 = por %p726, %p727
    %s730 = sadd.s32 %s729, 1
    %p733 = scmp.eq.s32.totalorder %s76, 1
    %p734 = scmp.ne.s32.totalorder %s729, %s731
    %p735 = scmp.eq.s32.totalorder %s76, 0
    %p736 = por %p734, %p735
    %p737 = scmp.ne.s32.totalorder %s729, %s731
    %p738 = scmp.eq.s32.totalorder %s81, 1
    %p739 = por %p737, %p738
    %p740 = scmp.ne.s32.totalorder %s731, %s732
    %p741 = scmp.eq.s32.totalorder %s81, 0
    %p742 = por %p740, %p741
    %p743 = scmp.ne.s32.totalorder %s731, %s732
    %p744 = scmp.eq.s32.totalorder %s82, 1
    %p745 = por %p743, %p744
    %p747 = scmp.ne.s32.totalorder %s732, %s746
    %p748 = scmp.eq.s32.totalorder %s82, 0
    %p749 = por %p747, %p748
    %s750 = ssub.s32 %s76, %s83
    %p751 = scmp.eq.s32.totalorder %s750, 0
    %s753 = sadd.s32 %s752, 1
    %s754 = scalar_select %p751, %s752, %s753
    %p757 = pneg %p751
    %p758 = scmp.eq.s32.totalorder %s76, 1
    %p759 = por %p757, %p758
    %p760 = scmp.ne.s32.totalorder %s752, %s755
    %p761 = scmp.eq.s32.totalorder %s76, 0
    %p762 = por %p760, %p761
    %p763 = scmp.ne.s32.totalorder %s752, %s755
    %p764 = scmp.eq.s32.totalorder %s81, 1
    %p765 = por %p763, %p764
    %p766 = scmp.ne.s32.totalorder %s755, %s756
    %p767 = scmp.eq.s32.totalorder %s81, 0
    %p768 = por %p766, %p767
    %p769 = scmp.ne.s32.totalorder %s755, %s756
    %p770 = scmp.eq.s32.totalorder %s82, 1
    %p771 = por %p769, %p770
    %p773 = scmp.ne.s32.totalorder %s756, %s772
    %p774 = scmp.eq.s32.totalorder %s82, 0
    %p775 = por %p773, %p774
    %s776 = ssub.s32 %s76, %s83
    %p777 = scmp.eq.s32.totalorder %s776, 0
    %s779 = sadd.s32 %s778, 1
    %s780 = scalar_select %p777, %s778, %s779
    %p783 = pneg %p777
    %p784 = scmp.eq.s32.totalorder %s76, 1
    %p785 = por %p783, %p784
    %p786 = scmp.ne.s32.totalorder %s778, %s781
    %p787 = scmp.eq.s32.totalorder %s76, 0
    %p788 = por %p786, %p787
    %p789 = scmp.ne.s32.totalorder %s778, %s781
    %p790 = scmp.eq.s32.totalorder %s81, 1
    %p791 = por %p789, %p790
    %p792 = scmp.ne.s32.totalorder %s781, %s782
    %p793 = scmp.eq.s32.totalorder %s81, 0
    %p794 = por %p792, %p793
    %p795 = scmp.ne.s32.totalorder %s781, %s782
    %p796 = scmp.eq.s32.totalorder %s82, 1
    %p797 = por %p795, %p796
    %p799 = scmp.ne.s32.totalorder %s782, %s798
    %p800 = scmp.eq.s32.totalorder %s82, 0
    %p801 = por %p799, %p800
    %s802 = ssub.s32 %s76, %s83
    %p803 = scmp.eq.s32.totalorder %s802, 0
    %s805 = sadd.s32 %s804, 1
    %s806 = scalar_select %p803, %s804, %s805
    %p809 = pneg %p803
    %p810 = scmp.eq.s32.totalorder %s76, 1
    %p811 = por %p809, %p810
    %p812 = scmp.ne.s32.totalorder %s804, %s807
    %p813 = scmp.eq.s32.totalorder %s76, 0
    %p814 = por %p812, %p813
    %p815 = scmp.ne.s32.totalorder %s804, %s807
    %p816 = scmp.eq.s32.totalorder %s81, 1
    %p817 = por %p815, %p816
    %p818 = scmp.ne.s32.totalorder %s807, %s808
    %p819 = scmp.eq.s32.totalorder %s81, 0
    %p820 = por %p818, %p819
    %p821 = scmp.ne.s32.totalorder %s807, %s808
    %p822 = scmp.eq.s32.totalorder %s82, 1
    %p823 = por %p821, %p822
    %p825 = scmp.ne.s32.totalorder %s808, %s824
    %p826 = scmp.eq.s32.totalorder %s82, 0
    %p827 = por %p825, %p826
    %s828 = ssub.s32 %s76, %s83
    %p829 = scmp.eq.s32.totalorder %s828, 0
    %s831 = sadd.s32 %s830, 1
    %s832 = scalar_select %p829, %s830, %s831
    %p835 = pneg %p829
    %p836 = scmp.eq.s32.totalorder %s76, 1
    %p837 = por %p835, %p836
    %p838 = scmp.ne.s32.totalorder %s830, %s833
    %p839 = scmp.eq.s32.totalorder %s76, 0
    %p840 = por %p838, %p839
    %p841 = scmp.ne.s32.totalorder %s830, %s833
    %p842 = scmp.eq.s32.totalorder %s81, 1
    %p843 = por %p841, %p842
    %p844 = scmp.ne.s32.totalorder %s833, %s834
    %p845 = scmp.eq.s32.totalorder %s81, 0
    %p846 = por %p844, %p845
    %p847 = scmp.ne.s32.totalorder %s833, %s834
    %p848 = scmp.eq.s32.totalorder %s82, 1
    %p849 = por %p847, %p848
    %p851 = scmp.ne.s32.totalorder %s834, %s850
    %p852 = scmp.eq.s32.totalorder %s82, 0
    %p853 = por %p851, %p852
    %p854 = scmp.le.s32.totalorder 1, %s76
    %p855 = scmp.lt.s32.totalorder %s76, 3
    %p856 = pnand %p854, %p855
    %p857 = pneg %p856
    // Predicated region
    $region9: #{fastspeech2_forward.2} parent=5 // pred_check
      _
    $region10: #{fastspeech2_forward.2} parent=5 // pred_check_branch
      %859 = sbr.rel (%p856) target = $region12
    $region11: #{fastspeech2_forward.2} parent=5 // pred_region
      %s860 = ssub.s32 %s76, 1
      // Predicated region
      $region13: #{fastspeech2_forward.2} parent=11 // pred_check
        %p861 = pneg %p175
      $region14: #{fastspeech2_forward.2} parent=11 // pred_check_branch
        %863 = sbr.rel (%p861) target = $region16
      $region15: #{fastspeech2_forward.2} parent=11 // pred_region
        _
      $region16: #{fastspeech2_forward.2} parent=11 // pred_fallthru
        _
      // Predicated region
      $region17: #{fastspeech2_forward.2} parent=11 // pred_check
        %p864 = pneg %p196
      $region18: #{fastspeech2_forward.2} parent=11 // pred_check_branch
        %866 = sbr.rel (%p864) target = $region20
      $region19: #{fastspeech2_forward.2} parent=11 // pred_region
        _
      $region20: #{fastspeech2_forward.2} parent=11 // pred_fallthru
        _
      // Predicated region
      $region21: #{fastspeech2_forward.2} parent=11 // pred_check
        %p867 = pneg %p217
      $region22: #{fastspeech2_forward.2} parent=11 // pred_check_branch
        %869 = sbr.rel (%p867) target = $region24
      $region23: #{fastspeech2_forward.2} parent=11 // pred_region
        _
      $region24: #{fastspeech2_forward.2} parent=11 // pred_fallthru
        _
      // Predicated region
      $region25: #{fastspeech2_forward.2} parent=11 // pred_check
        %p870 = pneg %p238
      $region26: #{fastspeech2_forward.2} parent=11 // pred_check_branch
        %872 = sbr.rel (%p870) target = $region28
      $region27: #{fastspeech2_forward.2} parent=11 // pred_region
        _
      $region28: #{fastspeech2_forward.2} parent=11 // pred_fallthru
        _
      // Predicated region
      $region29: #{fastspeech2_forward.2} parent=11 // pred_check
        %p873 = pneg %p259
      $region30: #{fastspeech2_forward.2} parent=11 // pred_check_branch
        %875 = sbr.rel (%p873) target = $region32
      $region31: #{fastspeech2_forward.2} parent=11 // pred_region
        _
      $region32: #{fastspeech2_forward.2} parent=11 // pred_fallthru
        _
      // Predicated region
      $region33: #{fastspeech2_forward.2} parent=11 // pred_check
        %p876 = pneg %p280
      $region34: #{fastspeech2_forward.2} parent=11 // pred_check_branch
        %878 = sbr.rel (%p876) target = $region36
      $region35: #{fastspeech2_forward.2} parent=11 // pred_region
        _
      $region36: #{fastspeech2_forward.2} parent=11 // pred_fallthru
        _
      // Predicated region
      $region37: #{fastspeech2_forward.2} parent=11 // pred_check
        %p879 = pneg %p301
      $region38: #{fastspeech2_forward.2} parent=11 // pred_check_branch
        %881 = sbr.rel (%p879) target = $region40
      $region39: #{fastspeech2_forward.2} parent=11 // pred_region
        _
      $region40: #{fastspeech2_forward.2} parent=11 // pred_fallthru
        _
      // Predicated region
      $region41: #{fastspeech2_forward.2} parent=11 // pred_check
        %p882 = pneg %p322
      $region42: #{fastspeech2_forward.2} parent=11 // pred_check_branch
        %884 = sbr.rel (%p882) target = $region44
      $region43: #{fastspeech2_forward.2} parent=11 // pred_region
        _
      $region44: #{fastspeech2_forward.2} parent=11 // pred_fallthru
        _
      // Predicated region
      $region45: #{fastspeech2_forward.2} parent=11 // pred_check
        %p885 = pneg %p343
      $region46: #{fastspeech2_forward.2} parent=11 // pred_check_branch
        %887 = sbr.rel (%p885) target = $region48
      $region47: #{fastspeech2_forward.2} parent=11 // pred_region
        _
      $region48: #{fastspeech2_forward.2} parent=11 // pred_fallthru
        _
      // Predicated region
      $region49: #{fastspeech2_forward.2} parent=11 // pred_check
        %p888 = pneg %p364
      $region50: #{fastspeech2_forward.2} parent=11 // pred_check_branch
        %890 = sbr.rel (%p888) target = $region52
      $region51: #{fastspeech2_forward.2} parent=11 // pred_region
        _
      $region52: #{fastspeech2_forward.2} parent=11 // pred_fallthru
        _
      // Predicated region
      $region53: #{fastspeech2_forward.2} parent=11 // pred_check
        %p891 = pneg %p385
      $region54: #{fastspeech2_forward.2} parent=11 // pred_check_branch
        %893 = sbr.rel (%p891) target = $region56
      $region55: #{fastspeech2_forward.2} parent=11 // pred_region
        _
      $region56: #{fastspeech2_forward.2} parent=11 // pred_fallthru
        _
      // Predicated region
      $region57: #{fastspeech2_forward.2} parent=11 // pred_check
        %p894 = pneg %p406
      $region58: #{fastspeech2_forward.2} parent=11 // pred_check_branch
        %896 = sbr.rel (%p894) target = $region60
      $region59: #{fastspeech2_forward.2} parent=11 // pred_region
        _
      $region60: #{fastspeech2_forward.2} parent=11 // pred_fallthru
        _
      // Predicated region
      $region61: #{fastspeech2_forward.2} parent=11 // pred_check
        %p897 = pneg %p427
      $region62: #{fastspeech2_forward.2} parent=11 // pred_check_branch
        %899 = sbr.rel (%p897) target = $region64
      $region63: #{fastspeech2_forward.2} parent=11 // pred_region
        _
      $region64: #{fastspeech2_forward.2} parent=11 // pred_fallthru
        _
      // Predicated region
      $region65: #{fastspeech2_forward.2} parent=11 // pred_check
        %p900 = pneg %p448
      $region66: #{fastspeech2_forward.2} parent=11 // pred_check_branch
        %902 = sbr.rel (%p900) target = $region68
      $region67: #{fastspeech2_forward.2} parent=11 // pred_region
        _
      $region68: #{fastspeech2_forward.2} parent=11 // pred_fallthru
        _
      // Predicated region
      $region69: #{fastspeech2_forward.2} parent=11 // pred_check
        %p903 = pneg %p469
      $region70: #{fastspeech2_forward.2} parent=11 // pred_check_branch
        %905 = sbr.rel (%p903) target = $region72
      $region71: #{fastspeech2_forward.2} parent=11 // pred_region
        _
      $region72: #{fastspeech2_forward.2} parent=11 // pred_fallthru
        _
      // Predicated region
      $region73: #{fastspeech2_forward.2} parent=11 // pred_check
        %p906 = pneg %p490
      $region74: #{fastspeech2_forward.2} parent=11 // pred_check_branch
        %908 = sbr.rel (%p906) target = $region76
      $region75: #{fastspeech2_forward.2} parent=11 // pred_region
        _
      $region76: #{fastspeech2_forward.2} parent=11 // pred_fallthru
        _
      // Predicated region
      $region77: #{fastspeech2_forward.2} parent=11 // pred_check
        %p909 = pneg %p511
      $region78: #{fastspeech2_forward.2} parent=11 // pred_check_branch
        %911 = sbr.rel (%p909) target = $region80
      $region79: #{fastspeech2_forward.2} parent=11 // pred_region
        _
      $region80: #{fastspeech2_forward.2} parent=11 // pred_fallthru
        _
      // Predicated region
      $region81: #{fastspeech2_forward.2} parent=11 // pred_check
        %p912 = pneg %p532
      $region82: #{fastspeech2_forward.2} parent=11 // pred_check_branch
        %914 = sbr.rel (%p912) target = $region84
      $region83: #{fastspeech2_forward.2} parent=11 // pred_region
        _
      $region84: #{fastspeech2_forward.2} parent=11 // pred_fallthru
        _
      // Predicated region
      $region85: #{fastspeech2_forward.2} parent=11 // pred_check
        %p915 = pneg %p553
      $region86: #{fastspeech2_forward.2} parent=11 // pred_check_branch
        %917 = sbr.rel (%p915) target = $region88
      $region87: #{fastspeech2_forward.2} parent=11 // pred_region
        _
      $region88: #{fastspeech2_forward.2} parent=11 // pred_fallthru
        _
      // Predicated region
      $region89: #{fastspeech2_forward.2} parent=11 // pred_check
        %p918 = pneg %p574
      $region90: #{fastspeech2_forward.2} parent=11 // pred_check_branch
        %920 = sbr.rel (%p918) target = $region92
      $region91: #{fastspeech2_forward.2} parent=11 // pred_region
        _
      $region92: #{fastspeech2_forward.2} parent=11 // pred_fallthru
        _
      // Predicated region
      $region93: #{fastspeech2_forward.2} parent=11 // pred_check
        %p921 = pneg %p595
      $region94: #{fastspeech2_forward.2} parent=11 // pred_check_branch
        %923 = sbr.rel (%p921) target = $region96
      $region95: #{fastspeech2_forward.2} parent=11 // pred_region
        _
      $region96: #{fastspeech2_forward.2} parent=11 // pred_fallthru
        _
      // Predicated region
      $region97: #{fastspeech2_forward.2} parent=11 // pred_check
        %p924 = pneg %p616
      $region98: #{fastspeech2_forward.2} parent=11 // pred_check_branch
        %926 = sbr.rel (%p924) target = $region100
      $region99: #{fastspeech2_forward.2} parent=11 // pred_region
        _
      $region100: #{fastspeech2_forward.2} parent=11 // pred_fallthru
        _
      // Predicated region
      $region101: #{fastspeech2_forward.2} parent=11 // pred_check
        %p927 = pneg %p637
      $region102: #{fastspeech2_forward.2} parent=11 // pred_check_branch
        %929 = sbr.rel (%p927) target = $region104
      $region103: #{fastspeech2_forward.2} parent=11 // pred_region
        _
      $region104: #{fastspeech2_forward.2} parent=11 // pred_fallthru
        _
      // Predicated region
      $region105: #{fastspeech2_forward.2} parent=11 // pred_check
        %p930 = pneg %p658
      $region106: #{fastspeech2_forward.2} parent=11 // pred_check_branch
        %932 = sbr.rel (%p930) target = $region108
      $region107: #{fastspeech2_forward.2} parent=11 // pred_region
        _
      $region108: #{fastspeech2_forward.2} parent=11 // pred_fallthru
        _
      // Predicated region
      $region109: #{fastspeech2_forward.2} parent=11 // pred_check
        %p933 = pneg %p679
      $region110: #{fastspeech2_forward.2} parent=11 // pred_check_branch
        %935 = sbr.rel (%p933) target = $region112
      $region111: #{fastspeech2_forward.2} parent=11 // pred_region
        _
      $region112: #{fastspeech2_forward.2} parent=11 // pred_fallthru
        _
      // Predicated region
      $region113: #{fastspeech2_forward.2} parent=11 // pred_check
        %p936 = pneg %p700
      $region114: #{fastspeech2_forward.2} parent=11 // pred_check_branch
        %938 = sbr.rel (%p936) target = $region116
      $region115: #{fastspeech2_forward.2} parent=11 // pred_region
        _
      $region116: #{fastspeech2_forward.2} parent=11 // pred_fallthru
        _
      // Predicated region
      $region117: #{fastspeech2_forward.2} parent=11 // pred_check
        %p939 = pneg %p721
      $region118: #{fastspeech2_forward.2} parent=11 // pred_check_branch
        %941 = sbr.rel (%p939) target = $region120
      $region119: #{fastspeech2_forward.2} parent=11 // pred_region
        _
      $region120: #{fastspeech2_forward.2} parent=11 // pred_fallthru
        _
      // Predicated region
      $region121: #{fastspeech2_forward.2} parent=11 // pred_check
        %p942 = pneg %p742
      $region122: #{fastspeech2_forward.2} parent=11 // pred_check_branch
        %944 = sbr.rel (%p942) target = $region124
      $region123: #{fastspeech2_forward.2} parent=11 // pred_region
        _
      $region124: #{fastspeech2_forward.2} parent=11 // pred_fallthru
        _
    $region12: #{fastspeech2_forward.2} parent=5 // pred_fallthru
      _
    %p945 = scmp.lt.s32.totalorder %s76, 2
    // Predicated region
    $region125: #{fastspeech2_forward.2} parent=5 // pred_check
      %p946 = pneg %p945
    $region126: #{fastspeech2_forward.2} parent=5 // pred_check_branch
      %948 = sbr.rel (%p946) target = $region128
    $region127: #{fastspeech2_forward.2} parent=5 // pred_region
      // Predicated region
      $region129: #{fastspeech2_forward.2} parent=127 // pred_check
        %p949 = pneg %p96
      $region130: #{fastspeech2_forward.2} parent=127 // pred_check_branch
        %951 = sbr.rel (%p949) target = $region132
      $region131: #{fastspeech2_forward.2} parent=127 // pred_region
        %p952 = scmp.lt.s32.totalorder %s76, 1
        %s953 = scalar_select %p952, %s76, 1
        %s954 = smul.addr %s953, 8
        %s955 = scalar_lea.vmem %s1, %s954
      $region132: #{fastspeech2_forward.2} parent=127 // pred_fallthru
        _
      // Predicated region
      $region133: #{fastspeech2_forward.2} parent=127 // pred_check
        %p956 = pneg %p122
      $region134: #{fastspeech2_forward.2} parent=127 // pred_check_branch
        %958 = sbr.rel (%p956) target = $region136
      $region135: #{fastspeech2_forward.2} parent=127 // pred_region
        %p959 = scmp.lt.s32.totalorder %s76, 1
        %s960 = scalar_select %p959, %s76, 1
        %s961 = scalar_lea.vmem %s3, %s960
      $region136: #{fastspeech2_forward.2} parent=127 // pred_fallthru
        _
      // Predicated region
      $region137: #{fastspeech2_forward.2} parent=127 // pred_check
        %p962 = pneg %p148
      $region138: #{fastspeech2_forward.2} parent=127 // pred_check_branch
        %964 = sbr.rel (%p962) target = $region140
      $region139: #{fastspeech2_forward.2} parent=127 // pred_region
        %p965 = scmp.lt.s32.totalorder %s76, 1
        %s966 = scalar_select %p965, %s76, 1
        %s967 = smul.addr %s966, 8
        %s968 = scalar_lea.vmem %s5, %s967
      $region140: #{fastspeech2_forward.2} parent=127 // pred_fallthru
        _
    $region128: #{fastspeech2_forward.2} parent=5 // pred_fallthru
      _
    %p969 = scmp.le.s32.totalorder 1, %s76
    %p970 = scmp.lt.s32.totalorder %s76, 3
    %p971 = pnand %p969, %p970
    %p972 = pneg %p971
    // Predicated region
    $region141: #{fastspeech2_forward.2} parent=5 // pred_check
      _
    $region142: #{fastspeech2_forward.2} parent=5 // pred_check_branch
      %974 = sbr.rel (%p971) target = $region144
    $region143: #{fastspeech2_forward.2} parent=5 // pred_region
      %s975 = ssub.s32 %s76, 1
      %p976 = scmp.lt.s32.totalorder %s81, 1
      %s977 = scalar_select %p976, %s81, 1
      %s978 = smul.addr %s977, 8
      %s979 = scalar_lea.vmem %s1, %s978
      %p980 = pneg %p102
      %p981 = pneg %p99
      %p982 = scmp.lt.s32.totalorder %s81, 1
      %s983 = scalar_select %p982, %s81, 1
      %s984 = scalar_lea.vmem %s3, %s983
      %p985 = pneg %p128
      %p986 = pneg %p125
      %p987 = scmp.lt.s32.totalorder %s81, 1
      %s988 = scalar_select %p987, %s81, 1
      %s989 = smul.addr %s988, 8
      %s990 = scalar_lea.vmem %s5, %s989
      %p991 = pneg %p154
      %p992 = pneg %p151
      %p993 = pneg %p175
      %p994 = pneg %p172
      %p995 = pneg %p196
      %p996 = pneg %p193
      %p997 = pneg %p217
      %p998 = pneg %p214
      %p999 = pneg %p238
      %p1000 = pneg %p235
      %p1001 = pneg %p259
      %p1002 = pneg %p256
      %p1003 = pneg %p280
      %p1004 = pneg %p277
      %p1005 = pneg %p301
      %p1006 = pneg %p298
      %p1007 = pneg %p322
      %p1008 = pneg %p319
      %p1009 = pneg %p343
      %p1010 = pneg %p340
      %p1011 = pneg %p364
      %p1012 = pneg %p361
      %p1013 = pneg %p385
      %p1014 = pneg %p382
      %p1015 = pneg %p406
      %p1016 = pneg %p403
      %p1017 = pneg %p427
      %p1018 = pneg %p424
      %p1019 = pneg %p448
      %p1020 = pneg %p445
      %p1021 = pneg %p469
      %p1022 = pneg %p466
      %p1023 = pneg %p490
      %p1024 = pneg %p487
      %p1025 = pneg %p511
      %p1026 = pneg %p508
      %p1027 = pneg %p532
      %p1028 = pneg %p529
      %p1029 = pneg %p553
      %p1030 = pneg %p550
      %p1031 = pneg %p574
      %p1032 = pneg %p571
      %p1033 = pneg %p595
      %p1034 = pneg %p592
      %p1035 = pneg %p616
      %p1036 = pneg %p613
      %p1037 = pneg %p637
      %p1038 = pneg %p634
      %p1039 = pneg %p658
      %p1040 = pneg %p655
      %p1041 = pneg %p679
      %p1042 = pneg %p676
      %p1043 = pneg %p700
      %p1044 = pneg %p697
      %p1045 = pneg %p721
      %p1046 = pneg %p718
      %p1047 = pneg %p742
      %p1048 = pneg %p739
      %p1049 = pneg %p768
      %p1050 = pneg %p765
      %p1051 = scmp.lt.s32.totalorder %s81, 1
      %s1052 = scalar_select %p1051, %s81, 1
      %s1053 = smul.addr %s1052, 8
      %s1054 = scalar_lea.vmem %s63, %s1053
      %p1055 = pneg %p794
      %p1056 = pneg %p791
      %p1057 = scmp.lt.s32.totalorder %s81, 1
      %s1058 = scalar_select %p1057, %s81, 1
      %s1059 = smul.addr %s1058, 8
      %s1060 = scalar_lea.vmem %s65, %s1059
      %p1061 = pneg %p820
      %p1062 = pneg %p817
      %p1063 = scmp.lt.s32.totalorder %s81, 1
      %s1064 = scalar_select %p1063, %s81, 1
      %s1065 = smul.addr %s1064, 8
      %s1066 = scalar_lea.vmem %s67, %s1065
      %p1067 = pneg %p846
      %p1068 = pneg %p843
      %p1069 = scmp.lt.s32.totalorder %s81, 1
      %s1070 = scalar_select %p1069, %s81, 1
      %s1071 = smul.addr %s1070, 8
      %s1072 = scalar_lea.vmem %s69, %s1071
      %p1073 = scmp.lt.s32.totalorder %s81, 1
      %s1074 = scalar_select %p1073, %s81, 1
      %s1075 = smul.addr %s1074, 8
      %s1076 = scalar_lea.vmem %s1, %s1075
      %p1077 = scmp.lt.s32.totalorder %s81, 1
      %s1078 = scalar_select %p1077, %s81, 1
      %s1079 = scalar_lea.vmem %s3, %s1078
      %p1080 = scmp.lt.s32.totalorder %s81, 1
      %s1081 = scalar_select %p1080, %s81, 1
      %s1082 = smul.addr %s1081, 8
      %s1083 = scalar_lea.vmem %s5, %s1082
      %p1084 = scmp.lt.s32.totalorder %s81, 1
      %s1085 = scalar_select %p1084, %s81, 1
      %s1086 = smul.addr %s1085, 8
      %s1087 = scalar_lea.vmem %s63, %s1086
      %p1088 = scmp.lt.s32.totalorder %s81, 1
      %s1089 = scalar_select %p1088, %s81, 1
      %s1090 = smul.addr %s1089, 8
      %s1091 = scalar_lea.vmem %s65, %s1090
      %p1092 = scmp.lt.s32.totalorder %s81, 1
      %s1093 = scalar_select %p1092, %s81, 1
      %s1094 = smul.addr %s1093, 8
      %s1095 = scalar_lea.vmem %s67, %s1094
      %p1096 = scmp.lt.s32.totalorder %s81, 1
      %s1097 = scalar_select %p1096, %s81, 1
      %s1098 = smul.addr %s1097, 8
      %s1099 = scalar_lea.vmem %s69, %s1098
      %v1100 = vld [vmem:[%s1076] sm:$0xff]
      %v1101 = vld [vmem:[%s1079] sm:$0x1]
      %v1102 = vld [vmem:[%s1083] sm:$0xff]
      %v1103 = vld [vmem:[%s37] sm:$0xff]
      %v1104 = vld [vmem:[%s37 + $0x8] sm:$0xff]
      %v1105 = vld [vmem:[%s37 + $0x10] sm:$0xff]
      %v1106 = vld [vmem:[%s37 + $0x18] sm:$0xff]
      %v1107 = vld [vmem:[%s13] sm:$0x1]
      %v1109 = vperm.slane %v1107, 0
      %vm1111 = vcmask 261120
      %v1113 = vsel %vm1111, %v1100, 0
      %1115 = vmatpush.msra.mxu0 0.0
      %1116 = vmatpush.msra.mxu0 0.0
      %1117 = vmatpush.msra.mxu0 0.0
      %1118 = vmatpush.msra.mxu0 0.0
      %1119 = vmatpush.msra.mxu0 0.0
      %1120 = vmatpush.msra.mxu0 0.0
      %1121 = vmatpush.msra.mxu0 0.0
      %1122 = vmatpush.msra.mxu0 0.0
      %1123 = vmatpush.msra.mxu0 0.0
      %1124 = vmatpush.msra.mxu0 0.0
      %1125 = vmatpush.msra.mxu0 0.0
      %1126 = vmatpush.msra.mxu0 0.0
      %1127 = vmatpush.msra.mxu0 %v1106
      %1128 = vmatpush.msra.mxu0 %v1105
      %1129 = vmatpush.msra.mxu0 %v1104
      %1130 = vmatpush.msra.mxu0 %v1103
      %1131 = vmatmul.f32.gmra.mxu0 %v1113
      %v1132 = vpop.f32.mrf.mxu0
      %v1133 = vadd.f32 %v1109, %v1132
      %1134 = vdwg.mxu0
      %v1135 = vld [vmem:[%s33] sm:$0xff]
      %v1136 = vld [vmem:[%s33 + $0x8] sm:$0xff]
      %v1137 = vld [vmem:[%s33 + $0x10] sm:$0xff]
      %v1138 = vld [vmem:[%s33 + $0x18] sm:$0xff]
      %v1139 = vld [vmem:[%s9] sm:$0x1]
      %v1141 = vperm.slane %v1139, 0
      %1143 = vmatpush.msra.mxu0 0.0
      %1144 = vmatpush.msra.mxu0 0.0
      %1145 = vmatpush.msra.mxu0 0.0
      %1146 = vmatpush.msra.mxu0 0.0
      %1147 = vmatpush.msra.mxu0 0.0
      %1148 = vmatpush.msra.mxu0 0.0
      %1149 = vmatpush.msra.mxu0 0.0
      %1150 = vmatpush.msra.mxu0 0.0
      %1151 = vmatpush.msra.mxu0 0.0
      %1152 = vmatpush.msra.mxu0 0.0
      %1153 = vmatpush.msra.mxu0 0.0
      %1154 = vmatpush.msra.mxu0 0.0
      %1155 = vmatpush.msra.mxu0 %v1138
      %1156 = vmatpush.msra.mxu0 %v1137
      %1157 = vmatpush.msra.mxu0 %v1136
      %1158 = vmatpush.msra.mxu0 %v1135
      %1159 = vmatmul.f32.gmra.mxu0 %v1113
      %v1160 = vpop.f32.mrf.mxu0
      %v1161 = vadd.f32 %v1141, %v1160
      %1162 = vdwg.mxu0
      %v1163 = vld [vmem:[%s39] sm:$0xff]
      %v1164 = vld [vmem:[%s39 + $0x8] sm:$0xff]
      %v1165 = vld [vmem:[%s39 + $0x10] sm:$0xff]
      %v1166 = vld [vmem:[%s39 + $0x18] sm:$0xff]
      %v1167 = vld [vmem:[%s15] sm:$0x1]
      %v1169 = vperm.slane %v1167, 0
      %1171 = vmatpush.msra.mxu0 0.0
      %1172 = vmatpush.msra.mxu0 0.0
      %1173 = vmatpush.msra.mxu0 0.0
      %1174 = vmatpush.msra.mxu0 0.0
      %1175 = vmatpush.msra.mxu0 0.0
      %1176 = vmatpush.msra.mxu0 0.0
      %1177 = vmatpush.msra.mxu0 0.0
      %1178 = vmatpush.msra.mxu0 0.0
      %1179 = vmatpush.msra.mxu0 0.0
      %1180 = vmatpush.msra.mxu0 0.0
      %1181 = vmatpush.msra.mxu0 0.0
      %1182 = vmatpush.msra.mxu0 0.0
      %1183 = vmatpush.msra.mxu0 %v1166
      %1184 = vmatpush.msra.mxu0 %v1165
      %1185 = vmatpush.msra.mxu0 %v1164
      %1186 = vmatpush.msra.mxu0 %v1163
      %1187 = vmatmul.f32.gmra.mxu0 %v1113
      %v1188 = vpop.f32.mrf.mxu0
      %v1189 = vadd.f32 %v1169, %v1188
      %1190 = vdwg.mxu0
      %v1191 = vld [vmem:[%s35] sm:$0xff]
      %v1192 = vld [vmem:[%s35 + $0x8] sm:$0xff]
      %v1193 = vld [vmem:[%s35 + $0x10] sm:$0xff]
      %v1194 = vld [vmem:[%s35 + $0x18] sm:$0xff]
      %v1195 = vld [vmem:[%s11] sm:$0x1]
      %vm1196 = vcmask 130048
      %v1198 = vsel %vm1196, %v1133, 0
      %v1201 = vsel %vm1196, %v1161, 0
      %1203 = vmatpush.xpose.msra.mxu0 0.0
      %1204 = vmatpush.xpose.msra.mxu0 0.0
      %1205 = vmatpush.xpose.msra.mxu0 0.0
      %1206 = vmatpush.xpose.msra.mxu0 0.0
      %1207 = vmatpush.xpose.msra.mxu0 0.0
      %1208 = vmatpush.xpose.msra.mxu0 0.0
      %1209 = vmatpush.xpose.msra.mxu0 0.0
      %1210 = vmatpush.xpose.msra.mxu0 0.0
      %1211 = vmatpush.xpose.msra.mxu0 0.0
      %1212 = vmatpush.xpose.msra.mxu0 0.0
      %1213 = vmatpush.xpose.msra.mxu0 0.0
      %1214 = vmatpush.xpose.msra.mxu0 0.0
      %1215 = vmatpush.xpose.msra.mxu0 0.0
      %1216 = vmatpush.xpose.msra.mxu0 0.0
      %1217 = vmatpush.xpose.msra.mxu0 0.0
      %1218 = vmatpush.xpose.msra.mxu0 %v1201
      %1219 = vmatmul.f32.gmra.mxu0 %v1198
      %v1220 = vpop.f32.mrf.mxu0
      %v1221 = vadd.f32 0.0, %v1220
      %1222 = vdwg.mxu0
      %v1223 = vmul.f32 %v1221, 0.25
      %v1225 = vperm.slane %v1101, 0
      %v1227 = vadd.f32 %v1223, %v1225
      %vm1228 = vcmask 64512
      %v1229 = vsel %vm1228, %v1227, -inf
      %1230 = vmax.xlane.f32.xlu0 %v1229
      %v1231 = vpop.xlane.xlu0 %1230
      %v1232 = vsub.f32 %v1227, %v1231
      %v1233 = vmul.f32 %v1232, 1.442695
      %v1234 = vpow.pop %v1233
      %v1235 = vsel %vm1228, %v1234, 0.0
      %1236 = vadd.xlane.f32.xlu0 %v1235
      %v1237 = vpop.xlane.xlu0 %1236
      %v1238 = vrcp.pop %v1237
      %v1239 = vmul.f32 %v1234, %v1238
      %v1241 = vsel %vm1228, %v1239, 0
      %1243 = vmatpush.msra.mxu0 0.0
      %1244 = vmatpush.msra.mxu0 0.0
      %1245 = vmatpush.msra.mxu0 0.0
      %1246 = vmatpush.msra.mxu0 0.0
      %1247 = vmatpush.msra.mxu0 0.0
      %1248 = vmatpush.msra.mxu0 0.0
      %1249 = vmatpush.msra.mxu0 0.0
      %1250 = vmatpush.msra.mxu0 0.0
      %1251 = vmatpush.msra.mxu0 0.0
      %1252 = vmatpush.msra.mxu0 0.0
      %1253 = vmatpush.msra.mxu0 0.0
      %1254 = vmatpush.msra.mxu0 0.0
      %1255 = vmatpush.msra.mxu0 0.0
      %1256 = vmatpush.msra.mxu0 0.0
      %1257 = vmatpush.msra.mxu0 0.0
      %1258 = vmatpush.msra.mxu0 %v1189
      %1259 = vmatmul.f32.gmra.mxu0 %v1241
      %v1260 = vpop.f32.mrf.mxu0
      %v1261 = vadd.f32 0.0, %v1260
      %1262 = vdwg.mxu0
      %v1264 = vsel %vm1196, %v1261, 0
      %1266 = vmatpush.msra.mxu0 0.0
      %1267 = vmatpush.msra.mxu0 0.0
      %1268 = vmatpush.msra.mxu0 0.0
      %1269 = vmatpush.msra.mxu0 0.0
      %1270 = vmatpush.msra.mxu0 0.0
      %1271 = vmatpush.msra.mxu0 0.0
      %1272 = vmatpush.msra.mxu0 0.0
      %1273 = vmatpush.msra.mxu0 0.0
      %1274 = vmatpush.msra.mxu0 0.0
      %1275 = vmatpush.msra.mxu0 0.0
      %1276 = vmatpush.msra.mxu0 0.0
      %1277 = vmatpush.msra.mxu0 0.0
      %1278 = vmatpush.msra.mxu0 0.0
      %1279 = vmatpush.msra.mxu0 0.0
      %1280 = vmatpush.msra.mxu0 %v1192
      %1281 = vmatpush.msra.mxu0 %v1191
      %1282 = vmatmul.f32.gmra.mxu0 %v1264
      %v1283 = vpop.f32.mrf.mxu0
      %v1284 = vadd.f32 0.0, %v1283
      %1285 = vdwg.mxu0
      %v1287 = vperm.slane %v1195, 0
      %v1289 = vadd.f32 %v1287, %v1284
      %1290 = vrot.lane.b32.xlu0 %v1133, 112
      %v1291 = vpop.permute.xlu0 %1290
      %1292 = vrot.lane.b32.xlu0 %v1161, 112
      %v1293 = vpop.permute.xlu0 %1292
      %v1294 = vsel %vm1196, %v1291, 0
      %v1296 = vsel %vm1196, %v1293, 0
      %1298 = vmatpush.xpose.msra.mxu0 0.0
      %1299 = vmatpush.xpose.msra.mxu0 0.0
      %1300 = vmatpush.xpose.msra.mxu0 0.0
      %1301 = vmatpush.xpose.msra.mxu0 0.0
      %1302 = vmatpush.xpose.msra.mxu0 0.0
      %1303 = vmatpush.xpose.msra.mxu0 0.0
      %1304 = vmatpush.xpose.msra.mxu0 0.0
      %1305 = vmatpush.xpose.msra.mxu0 0.0
      %1306 = vmatpush.xpose.msra.mxu0 0.0
      %1307 = vmatpush.xpose.msra.mxu0 0.0
      %1308 = vmatpush.xpose.msra.mxu0 0.0
      %1309 = vmatpush.xpose.msra.mxu0 0.0
      %1310 = vmatpush.xpose.msra.mxu0 0.0
      %1311 = vmatpush.xpose.msra.mxu0 0.0
      %1312 = vmatpush.xpose.msra.mxu0 0.0
      %1313 = vmatpush.xpose.msra.mxu0 %v1296
      %1314 = vmatmul.f32.gmra.mxu0 %v1294
      %v1315 = vpop.f32.mrf.mxu0
      %v1316 = vadd.f32 0.0, %v1315
      %1317 = vdwg.mxu0
      %v1318 = vmul.f32 %v1316, 0.25
      %v1319 = vadd.f32 %v1318, %v1225
      %v1320 = vsel %vm1228, %v1319, -inf
      %1321 = vmax.xlane.f32.xlu0 %v1320
      %v1322 = vpop.xlane.xlu0 %1321
      %v1323 = vsub.f32 %v1319, %v1322
      %v1324 = vmul.f32 %v1323, 1.442695
      %v1325 = vpow.pop %v1324
      %v1326 = vsel %vm1228, %v1325, 0.0
      %1327 = vadd.xlane.f32.xlu0 %v1326
      %v1328 = vpop.xlane.xlu0 %1327
      %v1329 = vrcp.pop %v1328
      %v1330 = vmul.f32 %v1325, %v1329
      %1332 = vrot.lane.b32.xlu0 %v1189, 112
      %v1333 = vpop.permute.xlu0 %1332
      %v1336 = vsel %vm1228, %v1330, 0
      %1338 = vmatpush.msra.mxu0 0.0
      %1339 = vmatpush.msra.mxu0 0.0
      %1340 = vmatpush.msra.mxu0 0.0
      %1341 = vmatpush.msra.mxu0 0.0
      %1342 = vmatpush.msra.mxu0 0.0
      %1343 = vmatpush.msra.mxu0 0.0
      %1344 = vmatpush.msra.mxu0 0.0
      %1345 = vmatpush.msra.mxu0 0.0
      %1346 = vmatpush.msra.mxu0 0.0
      %1347 = vmatpush.msra.mxu0 0.0
      %1348 = vmatpush.msra.mxu0 0.0
      %1349 = vmatpush.msra.mxu0 0.0
      %1350 = vmatpush.msra.mxu0 0.0
      %1351 = vmatpush.msra.mxu0 0.0
      %1352 = vmatpush.msra.mxu0 0.0
      %1353 = vmatpush.msra.mxu0 %v1333
      %1354 = vmatmul.f32.gmra.mxu0 %v1336
      %v1355 = vpop.f32.mrf.mxu0
      %v1356 = vadd.f32 0.0, %v1355
      %1357 = vdwg.mxu0
      %v1359 = vsel %vm1196, %v1356, 0
      %1361 = vmatpush.msra.mxu0 0.0
      %1362 = vmatpush.msra.mxu0 0.0
      %1363 = vmatpush.msra.mxu0 0.0
      %1364 = vmatpush.msra.mxu0 0.0
      %1365 = vmatpush.msra.mxu0 0.0
      %1366 = vmatpush.msra.mxu0 0.0
      %1367 = vmatpush.msra.mxu0 0.0
      %1368 = vmatpush.msra.mxu0 0.0
      %1369 = vmatpush.msra.mxu0 0.0
      %1370 = vmatpush.msra.mxu0 0.0
      %1371 = vmatpush.msra.mxu0 0.0
      %1372 = vmatpush.msra.mxu0 0.0
      %1373 = vmatpush.msra.mxu0 0.0
      %1374 = vmatpush.msra.mxu0 0.0
      %1375 = vmatpush.msra.mxu0 %v1194
      %1376 = vmatpush.msra.mxu0 %v1193
      %1377 = vmatmul.f32.gmra.mxu0 %v1359
      %v1378 = vpop.f32.mrf.mxu0
      %v1379 = vadd.f32 0.0, %v1378
      %1380 = vdwg.mxu0
      %v1381 = vadd.f32 %v1289, %v1379
      %v1382 = vadd.f32 %v1381, %v1100
      %v1383 = vld [vmem:[%s27] sm:$0x1]
      %v1384 = vld [vmem:[%s25] sm:$0x1]
      %v1385 = vsel %vm1111, %v1382, 0.0
      %1386 = vadd.xlane.f32.xlu0 %v1385
      %v1387 = vpop.xlane.xlu0 %1386
      %v1388 = vrcp.pop 32.0
      %v1389 = vmul.f32 32.0, %v1388
      %v1390 = vsub.f32 1.0, %v1389
      %v1391 = vmul.f32 %v1388, %v1390
      %v1392 = vadd.f32 %v1388, %v1391
      %vm1393 = vweird.f32 %v1388
      %v1394 = vsel %vm1393, %v1388, %v1392
      %v1395 = vmul.f32 %v1387, %v1394
      %v1396 = vsub.f32 %v1382, %v1395
      %v1397 = vmul.f32 %v1396, %v1396
      %v1398 = vsel %vm1111, %v1397, 0.0
      %1399 = vadd.xlane.f32.xlu0 %v1398
      %v1400 = vpop.xlane.xlu0 %1399
      %v1401 = vmul.f32 %v1400, %v1394
      %v1402 = vadd.f32 %v1401, 1e-05
      %v1403 = vrsqrt.pop %v1402
      %v1404 = vmul.f32 %v1403, %v1402
      %v1405 = vmul.f32 %v1404, %v1403
      %v1406 = vmul.f32 0.5, %v1405
      %v1407 = vsub.f32 1.5, %v1406
      %v1408 = vmul.f32 %v1403, %v1407
      %vm1409 = vweird.f32 %v1402
      %vm1410 = vweird.f32 %v1403
      %vm1411 = vmor %vm1409, %vm1410
      %v1412 = vsel %vm1411, %v1403, %v1408
      %v1413 = vmul.f32 %v1396, %v1412
      %v1415 = vperm.slane %v1383, 0
      %v1417 = vmul.f32 %v1413, %v1415
      %v1419 = vperm.slane %v1384, 0
      %v1421 = vadd.f32 %v1417, %v1419
      %1423 = vset.pattern.permute.xlu0 0
      %1424 = vperm.xlu0 %1423, %v1102
      %v1425 = vpop.permute.xlu0 %1424
      %v1427 = vmul.f32 %v1421, %v1425
      %v1428 = vld [vmem:[%s19] sm:$0xff]
      %v1429 = vld [vmem:[%s19 + $0x8] sm:$0xff]
      %v1430 = vld [vmem:[%s19 + $0x10] sm:$0xff]
      %v1431 = vld [vmem:[%s19 + $0x18] sm:$0xff]
      %v1432 = vld [vmem:[%s19 + $0x20] sm:$0xff]
      %v1433 = vld [vmem:[%s19 + $0x28] sm:$0xff]
      %v1434 = vld [vmem:[%s19 + $0x30] sm:$0xff]
      %v1435 = vld [vmem:[%s19 + $0x38] sm:$0xff]
      %v1436 = vld [vmem:[%s19 + $0x40] sm:$0xff]
      %v1437 = vld [vmem:[%s19 + $0x48] sm:$0xff]
      %v1438 = vld [vmem:[%s19 + $0x50] sm:$0xff]
      %v1439 = vld [vmem:[%s19 + $0x58] sm:$0xff]
      %v1440 = vld [vmem:[%s17] sm:$0x1]
      %v1442 = vrot.slane %v1427, 7
      %vm1444 = vcmask 1040384
      %v1445 = vsel %vm1444, 0.0, %v1442
      %v1446 = vrot.slane %v1427, 1
      %vm1448 = vcmask 1046528
      %v1449 = vsel %vm1448, %v1446, 0.0
      %1450 = vrot.lane.b32.xlu0 %v1427, 32
      %v1451 = vpop.permute.xlu0 %1450
      %1454 = vrot.lane.b32.xlu0 %v1449, 64
      %v1455 = vpop.permute.xlu0 %1454
      %v1457 = vsel %vm1111, %v1445, %v1451
      %vm1458 = vcmask 523264
      %v1459 = vsel %vm1458, %v1457, %v1455
      %v1461 = vperm.slane %v1440, 0
      %vm1463 = vcmask 785408
      %v1465 = vsel %vm1463, %v1459, 0
      %1467 = vmatpush.msra.mxu0 0.0
      %1468 = vmatpush.msra.mxu0 0.0
      %1469 = vmatpush.msra.mxu0 0.0
      %1470 = vmatpush.msra.mxu0 0.0
      %1471 = vmatpush.msra.mxu0 %v1439
      %1472 = vmatpush.msra.mxu0 %v1438
      %1473 = vmatpush.msra.mxu0 %v1437
      %1474 = vmatpush.msra.mxu0 %v1436
      %1475 = vmatpush.msra.mxu0 %v1435
      %1476 = vmatpush.msra.mxu0 %v1434
      %1477 = vmatpush.msra.mxu0 %v1433
      %1478 = vmatpush.msra.mxu0 %v1432
      %1479 = vmatpush.msra.mxu0 %v1431
      %1480 = vmatpush.msra.mxu0 %v1430
      %1481 = vmatpush.msra.mxu0 %v1429
      %1482 = vmatpush.msra.mxu0 %v1428
      %1483 = vmatmul.f32.gmra.mxu0 %v1465
      %v1484 = vpop.f32.mrf.mxu0
      %v1485 = vadd.f32 %v1461, %v1484
      %1486 = vdwg.mxu0
      %v1487 = vmax.f32 %v1485, 0.0
      %v1488 = vld [vmem:[%s23] sm:$0xff]
      %v1489 = vld [vmem:[%s23 + $0x8] sm:$0xff]
      %v1490 = vld [vmem:[%s23 + $0x10] sm:$0xff]
      %v1491 = vld [vmem:[%s23 + $0x18] sm:$0xff]
      %v1492 = vld [vmem:[%s23 + $0x20] sm:$0xff]
      %v1493 = vld [vmem:[%s23 + $0x28] sm:$0xff]
      %v1494 = vld [vmem:[%s23 + $0x30] sm:$0xff]
      %v1495 = vld [vmem:[%s23 + $0x38] sm:$0xff]
      %v1496 = vld [vmem:[%s21] sm:$0x1]
      %v1498 = vperm.slane %v1496, 0
      %v1501 = vsel %vm1458, %v1487, 0
      %1503 = vmatpush.msra.mxu0 0.0
      %1504 = vmatpush.msra.mxu0 0.0
      %1505 = vmatpush.msra.mxu0 0.0
      %1506 = vmatpush.msra.mxu0 0.0
      %1507 = vmatpush.msra.mxu0 0.0
      %1508 = vmatpush.msra.mxu0 0.0
      %1509 = vmatpush.msra.mxu0 0.0
      %1510 = vmatpush.msra.mxu0 0.0
      %1511 = vmatpush.msra.mxu0 %v1495
      %1512 = vmatpush.msra.mxu0 %v1494
      %1513 = vmatpush.msra.mxu0 %v1493
      %1514 = vmatpush.msra.mxu0 %v1492
      %1515 = vmatpush.msra.mxu0 %v1491
      %1516 = vmatpush.msra.mxu0 %v1490
      %1517 = vmatpush.msra.mxu0 %v1489
      %1518 = vmatpush.msra.mxu0 %v1488
      %1519 = vmatmul.f32.gmra.mxu0 %v1501
      %v1520 = vpop.f32.mrf.mxu0
      %v1521 = vadd.f32 %v1498, %v1520
      %1522 = vdwg.mxu0
      %v1523 = vadd.f32 %v1521, %v1427
      %v1524 = vld [vmem:[%s31] sm:$0x1]
      %v1525 = vld [vmem:[%s29] sm:$0x1]
      %v1526 = vsel %vm1111, %v1523, 0.0
      %1527 = vadd.xlane.f32.xlu0 %v1526
      %v1528 = vpop.xlane.xlu0 %1527
      %v1529 = vmul.f32 %v1528, %v1394
      %v1530 = vsub.f32 %v1523, %v1529
      %v1531 = vmul.f32 %v1530, %v1530
      %v1532 = vsel %vm1111, %v1531, 0.0
      %1533 = vadd.xlane.f32.xlu0 %v1532
      %v1534 = vpop.xlane.xlu0 %1533
      %v1535 = vmul.f32 %v1534, %v1394
      %v1536 = vadd.f32 %v1535, 1e-05
      %v1537 = vrsqrt.pop %v1536
      %v1538 = vmul.f32 %v1537, %v1536
      %v1539 = vmul.f32 %v1538, %v1537
      %v1540 = vmul.f32 0.5, %v1539
      %v1541 = vsub.f32 1.5, %v1540
      %v1542 = vmul.f32 %v1537, %v1541
      %vm1543 = vweird.f32 %v1536
      %vm1544 = vweird.f32 %v1537
      %vm1545 = vmor %vm1543, %vm1544
      %v1546 = vsel %vm1545, %v1537, %v1542
      %v1547 = vmul.f32 %v1530, %v1546
      %v1549 = vperm.slane %v1524, 0
      %v1551 = vmul.f32 %v1547, %v1549
      %v1553 = vperm.slane %v1525, 0
      %v1555 = vadd.f32 %v1551, %v1553
      %v1556 = vmul.f32 %v1555, %v1425
      %s1557 = scalar_lea.vmem %s37, 32
      %v1558 = vld [vmem:[%s1557] sm:$0xff]
      %v1559 = vld [vmem:[%s1557 + $0x8] sm:$0xff]
      %v1560 = vld [vmem:[%s1557 + $0x10] sm:$0xff]
      %v1561 = vld [vmem:[%s1557 + $0x18] sm:$0xff]
      %s1562 = scalar_lea.vmem %s13, 1
      %v1563 = vld [vmem:[%s1562] sm:$0x1]
      %v1565 = vperm.slane %v1563, 0
      %v1568 = vsel %vm1111, %v1556, 0
      %1570 = vmatpush.msra.mxu0 0.0
      %1571 = vmatpush.msra.mxu0 0.0
      %1572 = vmatpush.msra.mxu0 0.0
      %1573 = vmatpush.msra.mxu0 0.0
      %1574 = vmatpush.msra.mxu0 0.0
      %1575 = vmatpush.msra.mxu0 0.0
      %1576 = vmatpush.msra.mxu0 0.0
      %1577 = vmatpush.msra.mxu0 0.0
      %1578 = vmatpush.msra.mxu0 0.0
      %1579 = vmatpush.msra.mxu0 0.0
      %1580 = vmatpush.msra.mxu0 0.0
      %1581 = vmatpush.msra.mxu0 0.0
      %1582 = vmatpush.msra.mxu0 %v1561
      %1583 = vmatpush.msra.mxu0 %v1560
      %1584 = vmatpush.msra.mxu0 %v1559
      %1585 = vmatpush.msra.mxu0 %v1558
      %1586 = vmatmul.f32.gmra.mxu0 %v1568
      %v1587 = vpop.f32.mrf.mxu0
      %v1588 = vadd.f32 %v1565, %v1587
      %1589 = vdwg.mxu0
      %s1590 = scalar_lea.vmem %s33, 32
      %v1591 = vld [vmem:[%s1590] sm:$0xff]
      %v1592 = vld [vmem:[%s1590 + $0x8] sm:$0xff]
      %v1593 = vld [vmem:[%s1590 + $0x10] sm:$0xff]
      %v1594 = vld [vmem:[%s1590 + $0x18] sm:$0xff]
      %s1595 = scalar_lea.vmem %s9, 1
      %v1596 = vld [vmem:[%s1595] sm:$0x1]
      %v1598 = vperm.slane %v1596, 0
      %1600 = vmatpush.msra.mxu0 0.0
      %1601 = vmatpush.msra.mxu0 0.0
      %1602 = vmatpush.msra.mxu0 0.0
      %1603 = vmatpush.msra.mxu0 0.0
      %1604 = vmatpush.msra.mxu0 0.0
      %1605 = vmatpush.msra.mxu0 0.0
      %1606 = vmatpush.msra.mxu0 0.0
      %1607 = vmatpush.msra.mxu0 0.0
      %1608 = vmatpush.msra.mxu0 0.0
      %1609 = vmatpush.msra.mxu0 0.0
      %1610 = vmatpush.msra.mxu0 0.0
      %1611 = vmatpush.msra.mxu0 0.0
      %1612 = vmatpush.msra.mxu0 %v1594
      %1613 = vmatpush.msra.mxu0 %v1593
      %1614 = vmatpush.msra.mxu0 %v1592
      %1615 = vmatpush.msra.mxu0 %v1591
      %1616 = vmatmul.f32.gmra.mxu0 %v1568
      %v1617 = vpop.f32.mrf.mxu0
      %v1618 = vadd.f32 %v1598, %v1617
      %1619 = vdwg.mxu0
      %s1620 = scalar_lea.vmem %s39, 32
      %v1621 = vld [vmem:[%s1620] sm:$0xff]
      %v1622 = vld [vmem:[%s1620 + $0x8] sm:$0xff]
      %v1623 = vld [vmem:[%s1620 + $0x10] sm:$0xff]
      %v1624 = vld [vmem:[%s1620 + $0x18] sm:$0xff]
      %s1625 = scalar_lea.vmem %s15, 1
      %v1626 = vld [vmem:[%s1625] sm:$0x1]
      %v1628 = vperm.slane %v1626, 0
      %1630 = vmatpush.msra.mxu0 0.0
      %1631 = vmatpush.msra.mxu0 0.0
      %1632 = vmatpush.msra.mxu0 0.0
      %1633 = vmatpush.msra.mxu0 0.0
      %1634 = vmatpush.msra.mxu0 0.0
      %1635 = vmatpush.msra.mxu0 0.0
      %1636 = vmatpush.msra.mxu0 0.0
      %1637 = vmatpush.msra.mxu0 0.0
      %1638 = vmatpush.msra.mxu0 0.0
      %1639 = vmatpush.msra.mxu0 0.0
      %1640 = vmatpush.msra.mxu0 0.0
      %1641 = vmatpush.msra.mxu0 0.0
      %1642 = vmatpush.msra.mxu0 %v1624
      %1643 = vmatpush.msra.mxu0 %v1623
      %1644 = vmatpush.msra.mxu0 %v1622
      %1645 = vmatpush.msra.mxu0 %v1621
      %1646 = vmatmul.f32.gmra.mxu0 %v1568
      %v1647 = vpop.f32.mrf.mxu0
      %v1648 = vadd.f32 %v1628, %v1647
      %1649 = vdwg.mxu0
      %s1650 = scalar_lea.vmem %s35, 32
      %v1651 = vld [vmem:[%s1650] sm:$0xff]
      %v1652 = vld [vmem:[%s1650 + $0x8] sm:$0xff]
      %v1653 = vld [vmem:[%s1650 + $0x10] sm:$0xff]
      %v1654 = vld [vmem:[%s1650 + $0x18] sm:$0xff]
      %s1655 = scalar_lea.vmem %s11, 1
      %v1656 = vld [vmem:[%s1655] sm:$0x1]
      %v1658 = vsel %vm1196, %v1588, 0
      %v1661 = vsel %vm1196, %v1618, 0
      %1663 = vmatpush.xpose.msra.mxu0 0.0
      %1664 = vmatpush.xpose.msra.mxu0 0.0
      %1665 = vmatpush.xpose.msra.mxu0 0.0
      %1666 = vmatpush.xpose.msra.mxu0 0.0
      %1667 = vmatpush.xpose.msra.mxu0 0.0
      %1668 = vmatpush.xpose.msra.mxu0 0.0
      %1669 = vmatpush.xpose.msra.mxu0 0.0
      %1670 = vmatpush.xpose.msra.mxu0 0.0
      %1671 = vmatpush.xpose.msra.mxu0 0.0
      %1672 = vmatpush.xpose.msra.mxu0 0.0
      %1673 = vmatpush.xpose.msra.mxu0 0.0
      %1674 = vmatpush.xpose.msra.mxu0 0.0
      %1675 = vmatpush.xpose.msra.mxu0 0.0
      %1676 = vmatpush.xpose.msra.mxu0 0.0
      %1677 = vmatpush.xpose.msra.mxu0 0.0
      %1678 = vmatpush.xpose.msra.mxu0 %v1661
      %1679 = vmatmul.f32.gmra.mxu0 %v1658
      %v1680 = vpop.f32.mrf.mxu0
      %v1681 = vadd.f32 0.0, %v1680
      %1682 = vdwg.mxu0
      %v1683 = vmul.f32 %v1681, 0.25
      %v1684 = vadd.f32 %v1683, %v1225
      %v1685 = vsel %vm1228, %v1684, -inf
      %1686 = vmax.xlane.f32.xlu0 %v1685
      %v1687 = vpop.xlane.xlu0 %1686
      %v1688 = vsub.f32 %v1684, %v1687
      %v1689 = vmul.f32 %v1688, 1.442695
      %v1690 = vpow.pop %v1689
      %v1691 = vsel %vm1228, %v1690, 0.0
      %1692 = vadd.xlane.f32.xlu0 %v1691
      %v1693 = vpop.xlane.xlu0 %1692
      %v1694 = vrcp.pop %v1693
      %v1695 = vmul.f32 %v1690, %v1694
      %v1697 = vsel %vm1228, %v1695, 0
      %1699 = vmatpush.msra.mxu0 0.0
      %1700 = vmatpush.msra.mxu0 0.0
      %1701 = vmatpush.msra.mxu0 0.0
      %1702 = vmatpush.msra.mxu0 0.0
      %1703 = vmatpush.msra.mxu0 0.0
      %1704 = vmatpush.msra.mxu0 0.0
      %1705 = vmatpush.msra.mxu0 0.0
      %1706 = vmatpush.msra.mxu0 0.0
      %1707 = vmatpush.msra.mxu0 0.0
      %1708 = vmatpush.msra.mxu0 0.0
      %1709 = vmatpush.msra.mxu0 0.0
      %1710 = vmatpush.msra.mxu0 0.0
      %1711 = vmatpush.msra.mxu0 0.0
      %1712 = vmatpush.msra.mxu0 0.0
      %1713 = vmatpush.msra.mxu0 0.0
      %1714 = vmatpush.msra.mxu0 %v1648
      %1715 = vmatmul.f32.gmra.mxu0 %v1697
      %v1716 = vpop.f32.mrf.mxu0
      %v1717 = vadd.f32 0.0, %v1716
      %1718 = vdwg.mxu0
      %v1720 = vsel %vm1196, %v1717, 0
      %1722 = vmatpush.msra.mxu0 0.0
      %1723 = vmatpush.msra.mxu0 0.0
      %1724 = vmatpush.msra.mxu0 0.0
      %1725 = vmatpush.msra.mxu0 0.0
      %1726 = vmatpush.msra.mxu0 0.0
      %1727 = vmatpush.msra.mxu0 0.0
      %1728 = vmatpush.msra.mxu0 0.0
      %1729 = vmatpush.msra.mxu0 0.0
      %1730 = vmatpush.msra.mxu0 0.0
      %1731 = vmatpush.msra.mxu0 0.0
      %1732 = vmatpush.msra.mxu0 0.0
      %1733 = vmatpush.msra.mxu0 0.0
      %1734 = vmatpush.msra.mxu0 0.0
      %1735 = vmatpush.msra.mxu0 0.0
      %1736 = vmatpush.msra.mxu0 %v1652
      %1737 = vmatpush.msra.mxu0 %v1651
      %1738 = vmatmul.f32.gmra.mxu0 %v1720
      %v1739 = vpop.f32.mrf.mxu0
      %v1740 = vadd.f32 0.0, %v1739
      %1741 = vdwg.mxu0
      %v1743 = vperm.slane %v1656, 0
      %v1745 = vadd.f32 %v1743, %v1740
      %1746 = vrot.lane.b32.xlu0 %v1588, 112
      %v1747 = vpop.permute.xlu0 %1746
      %1748 = vrot.lane.b32.xlu0 %v1618, 112
      %v1749 = vpop.permute.xlu0 %1748
      %v1750 = vsel %vm1196, %v1747, 0
      %v1752 = vsel %vm1196, %v1749, 0
      %1754 = vmatpush.xpose.msra.mxu0 0.0
      %1755 = vmatpush.xpose.msra.mxu0 0.0
      %1756 = vmatpush.xpose.msra.mxu0 0.0
      %1757 = vmatpush.xpose.msra.mxu0 0.0
      %1758 = vmatpush.xpose.msra.mxu0 0.0
      %1759 = vmatpush.xpose.msra.mxu0 0.0
      %1760 = vmatpush.xpose.msra.mxu0 0.0
      %1761 = vmatpush.xpose.msra.mxu0 0.0
      %1762 = vmatpush.xpose.msra.mxu0 0.0
      %1763 = vmatpush.xpose.msra.mxu0 0.0
      %1764 = vmatpush.xpose.msra.mxu0 0.0
      %1765 = vmatpush.xpose.msra.mxu0 0.0
      %1766 = vmatpush.xpose.msra.mxu0 0.0
      %1767 = vmatpush.xpose.msra.mxu0 0.0
      %1768 = vmatpush.xpose.msra.mxu0 0.0
      %1769 = vmatpush.xpose.msra.mxu0 %v1752
      %1770 = vmatmul.f32.gmra.mxu0 %v1750
      %v1771 = vpop.f32.mrf.mxu0
      %v1772 = vadd.f32 0.0, %v1771
      %1773 = vdwg.mxu0
      %v1774 = vmul.f32 %v1772, 0.25
      %v1775 = vadd.f32 %v1774, %v1225
      %v1776 = vsel %vm1228, %v1775, -inf
      %1777 = vmax.xlane.f32.xlu0 %v1776
      %v1778 = vpop.xlane.xlu0 %1777
      %v1779 = vsub.f32 %v1775, %v1778
      %v1780 = vmul.f32 %v1779, 1.442695
      %v1781 = vpow.pop %v1780
      %v1782 = vsel %vm1228, %v1781, 0.0
      %1783 = vadd.xlane.f32.xlu0 %v1782
      %v1784 = vpop.xlane.xlu0 %1783
      %v1785 = vrcp.pop %v1784
      %v1786 = vmul.f32 %v1781, %v1785
      %1788 = vrot.lane.b32.xlu0 %v1648, 112
      %v1789 = vpop.permute.xlu0 %1788
      %v1792 = vsel %vm1228, %v1786, 0
      %1794 = vmatpush.msra.mxu0 0.0
      %1795 = vmatpush.msra.mxu0 0.0
      %1796 = vmatpush.msra.mxu0 0.0
      %1797 = vmatpush.msra.mxu0 0.0
      %1798 = vmatpush.msra.mxu0 0.0
      %1799 = vmatpush.msra.mxu0 0.0
      %1800 = vmatpush.msra.mxu0 0.0
      %1801 = vmatpush.msra.mxu0 0.0
      %1802 = vmatpush.msra.mxu0 0.0
      %1803 = vmatpush.msra.mxu0 0.0
      %1804 = vmatpush.msra.mxu0 0.0
      %1805 = vmatpush.msra.mxu0 0.0
      %1806 = vmatpush.msra.mxu0 0.0
      %1807 = vmatpush.msra.mxu0 0.0
      %1808 = vmatpush.msra.mxu0 0.0
      %1809 = vmatpush.msra.mxu0 %v1789
      %1810 = vmatmul.f32.gmra.mxu0 %v1792
      %v1811 = vpop.f32.mrf.mxu0
      %v1812 = vadd.f32 0.0, %v1811
      %1813 = vdwg.mxu0
      %v1815 = vsel %vm1196, %v1812, 0
      %1817 = vmatpush.msra.mxu0 0.0
      %1818 = vmatpush.msra.mxu0 0.0
      %1819 = vmatpush.msra.mxu0 0.0
      %1820 = vmatpush.msra.mxu0 0.0
      %1821 = vmatpush.msra.mxu0 0.0
      %1822 = vmatpush.msra.mxu0 0.0
      %1823 = vmatpush.msra.mxu0 0.0
      %1824 = vmatpush.msra.mxu0 0.0
      %1825 = vmatpush.msra.mxu0 0.0
      %1826 = vmatpush.msra.mxu0 0.0
      %1827 = vmatpush.msra.mxu0 0.0
      %1828 = vmatpush.msra.mxu0 0.0
      %1829 = vmatpush.msra.mxu0 0.0
      %1830 = vmatpush.msra.mxu0 0.0
      %1831 = vmatpush.msra.mxu0 %v1654
      %1832 = vmatpush.msra.mxu0 %v1653
      %1833 = vmatmul.f32.gmra.mxu0 %v1815
      %v1834 = vpop.f32.mrf.mxu0
      %v1835 = vadd.f32 0.0, %v1834
      %1836 = vdwg.mxu0
      %v1837 = vadd.f32 %v1745, %v1835
      %v1838 = vadd.f32 %v1837, %v1556
      %s1839 = scalar_lea.vmem %s27, 1
      %v1840 = vld [vmem:[%s1839] sm:$0x1]
      %s1841 = scalar_lea.vmem %s25, 1
      %v1842 = vld [vmem:[%s1841] sm:$0x1]
      %v1843 = vsel %vm1111, %v1838, 0.0
      %1844 = vadd.xlane.f32.xlu0 %v1843
      %v1845 = vpop.xlane.xlu0 %1844
      %v1846 = vmul.f32 %v1845, %v1394
      %v1847 = vsub.f32 %v1838, %v1846
      %v1848 = vmul.f32 %v1847, %v1847
      %v1849 = vsel %vm1111, %v1848, 0.0
      %1850 = vadd.xlane.f32.xlu0 %v1849
      %v1851 = vpop.xlane.xlu0 %1850
      %v1852 = vmul.f32 %v1851, %v1394
      %v1853 = vadd.f32 %v1852, 1e-05
      %v1854 = vrsqrt.pop %v1853
      %v1855 = vmul.f32 %v1854, %v1853
      %v1856 = vmul.f32 %v1855, %v1854
      %v1857 = vmul.f32 0.5, %v1856
      %v1858 = vsub.f32 1.5, %v1857
      %v1859 = vmul.f32 %v1854, %v1858
      %vm1860 = vweird.f32 %v1853
      %vm1861 = vweird.f32 %v1854
      %vm1862 = vmor %vm1860, %vm1861
      %v1863 = vsel %vm1862, %v1854, %v1859
      %v1864 = vmul.f32 %v1847, %v1863
      %v1866 = vperm.slane %v1840, 0
      %v1868 = vmul.f32 %v1864, %v1866
      %v1870 = vperm.slane %v1842, 0
      %v1872 = vadd.f32 %v1868, %v1870
      %v1873 = vmul.f32 %v1872, %v1425
      %s1874 = scalar_lea.vmem %s19, 96
      %v1875 = vld [vmem:[%s1874] sm:$0xff]
      %v1876 = vld [vmem:[%s1874 + $0x8] sm:$0xff]
      %v1877 = vld [vmem:[%s1874 + $0x10] sm:$0xff]
      %v1878 = vld [vmem:[%s1874 + $0x18] sm:$0xff]
      %v1879 = vld [vmem:[%s1874 + $0x20] sm:$0xff]
      %v1880 = vld [vmem:[%s1874 + $0x28] sm:$0xff]
      %v1881 = vld [vmem:[%s1874 + $0x30] sm:$0xff]
      %v1882 = vld [vmem:[%s1874 + $0x38] sm:$0xff]
      %v1883 = vld [vmem:[%s1874 + $0x40] sm:$0xff]
      %v1884 = vld [vmem:[%s1874 + $0x48] sm:$0xff]
      %v1885 = vld [vmem:[%s1874 + $0x50] sm:$0xff]
      %v1886 = vld [vmem:[%s1874 + $0x58] sm:$0xff]
      %s1887 = scalar_lea.vmem %s17, 1
      %v1888 = vld [vmem:[%s1887] sm:$0x1]
      %v1890 = vrot.slane %v1873, 7
      %v1892 = vsel %vm1444, 0.0, %v1890
      %v1893 = vrot.slane %v1873, 1
      %v1895 = vsel %vm1448, %v1893, 0.0
      %1896 = vrot.lane.b32.xlu0 %v1873, 32
      %v1897 = vpop.permute.xlu0 %1896
      %1900 = vrot.lane.b32.xlu0 %v1895, 64
      %v1901 = vpop.permute.xlu0 %1900
      %v1903 = vsel %vm1111, %v1892, %v1897
      %v1904 = vsel %vm1458, %v1903, %v1901
      %v1906 = vperm.slane %v1888, 0
      %v1909 = vsel %vm1463, %v1904, 0
      %1911 = vmatpush.msra.mxu0 0.0
      %1912 = vmatpush.msra.mxu0 0.0
      %1913 = vmatpush.msra.mxu0 0.0
      %1914 = vmatpush.msra.mxu0 0.0
      %1915 = vmatpush.msra.mxu0 %v1886
      %1916 = vmatpush.msra.mxu0 %v1885
      %1917 = vmatpush.msra.mxu0 %v1884
      %1918 = vmatpush.msra.mxu0 %v1883
      %1919 = vmatpush.msra.mxu0 %v1882
      %1920 = vmatpush.msra.mxu0 %v1881
      %1921 = vmatpush.msra.mxu0 %v1880
      %1922 = vmatpush.msra.mxu0 %v1879
      %1923 = vmatpush.msra.mxu0 %v1878
      %1924 = vmatpush.msra.mxu0 %v1877
      %1925 = vmatpush.msra.mxu0 %v1876
      %1926 = vmatpush.msra.mxu0 %v1875
      %1927 = vmatmul.f32.gmra.mxu0 %v1909
      %v1928 = vpop.f32.mrf.mxu0
      %v1929 = vadd.f32 %v1906, %v1928
      %1930 = vdwg.mxu0
      %v1931 = vmax.f32 %v1929, 0.0
      %s1932 = scalar_lea.vmem %s23, 64
      %v1933 = vld [vmem:[%s1932] sm:$0xff]
      %v1934 = vld [vmem:[%s1932 + $0x8] sm:$0xff]
      %v1935 = vld [vmem:[%s1932 + $0x10] sm:$0xff]
      %v1936 = vld [vmem:[%s1932 + $0x18] sm:$0xff]
      %v1937 = vld [vmem:[%s1932 + $0x20] sm:$0xff]
      %v1938 = vld [vmem:[%s1932 + $0x28] sm:$0xff]
      %v1939 = vld [vmem:[%s1932 + $0x30] sm:$0xff]
      %v1940 = vld [vmem:[%s1932 + $0x38] sm:$0xff]
      %s1941 = scalar_lea.vmem %s21, 1
      %v1942 = vld [vmem:[%s1941] sm:$0x1]
      %v1944 = vperm.slane %v1942, 0
      %v1947 = vsel %vm1458, %v1931, 0
      %1949 = vmatpush.msra.mxu0 0.0
      %1950 = vmatpush.msra.mxu0 0.0
      %1951 = vmatpush.msra.mxu0 0.0
      %1952 = vmatpush.msra.mxu0 0.0
      %1953 = vmatpush.msra.mxu0 0.0
      %1954 = vmatpush.msra.mxu0 0.0
      %1955 = vmatpush.msra.mxu0 0.0
      %1956 = vmatpush.msra.mxu0 0.0
      %1957 = vmatpush.msra.mxu0 %v1940
      %1958 = vmatpush.msra.mxu0 %v1939
      %1959 = vmatpush.msra.mxu0 %v1938
      %1960 = vmatpush.msra.mxu0 %v1937
      %1961 = vmatpush.msra.mxu0 %v1936
      %1962 = vmatpush.msra.mxu0 %v1935
      %1963 = vmatpush.msra.mxu0 %v1934
      %1964 = vmatpush.msra.mxu0 %v1933
      %1965 = vmatmul.f32.gmra.mxu0 %v1947
      %v1966 = vpop.f32.mrf.mxu0
      %v1967 = vadd.f32 %v1944, %v1966
      %1968 = vdwg.mxu0
      %v1969 = vadd.f32 %v1967, %v1873
      %s1970 = scalar_lea.vmem %s31, 1
      %v1971 = vld [vmem:[%s1970] sm:$0x1]
      %s1972 = scalar_lea.vmem %s29, 1
      %v1973 = vld [vmem:[%s1972] sm:$0x1]
      %v1974 = vsel %vm1111, %v1969, 0.0
      %1975 = vadd.xlane.f32.xlu0 %v1974
      %v1976 = vpop.xlane.xlu0 %1975
      %v1977 = vmul.f32 %v1976, %v1394
      %v1978 = vsub.f32 %v1969, %v1977
      %v1979 = vmul.f32 %v1978, %v1978
      %v1980 = vsel %vm1111, %v1979, 0.0
      %1981 = vadd.xlane.f32.xlu0 %v1980
      %v1982 = vpop.xlane.xlu0 %1981
      %v1983 = vmul.f32 %v1982, %v1394
      %v1984 = vadd.f32 %v1983, 1e-05
      %v1985 = vrsqrt.pop %v1984
      %v1986 = vmul.f32 %v1985, %v1984
      %v1987 = vmul.f32 %v1986, %v1985
      %v1988 = vmul.f32 0.5, %v1987
      %v1989 = vsub.f32 1.5, %v1988
      %v1990 = vmul.f32 %v1985, %v1989
      %vm1991 = vweird.f32 %v1984
      %vm1992 = vweird.f32 %v1985
      %vm1993 = vmor %vm1991, %vm1992
      %v1994 = vsel %vm1993, %v1985, %v1990
      %v1995 = vmul.f32 %v1978, %v1994
      %v1997 = vperm.slane %v1971, 0
      %v1999 = vmul.f32 %v1995, %v1997
      %v2001 = vperm.slane %v1973, 0
      %v2003 = vadd.f32 %v1999, %v2001
      %v2004 = vmul.f32 %v2003, %v1425
      %v2005 = vld [vmem:[%s45] sm:$0xff]
      %v2006 = vld [vmem:[%s45 + $0x8] sm:$0xff]
      %v2007 = vld [vmem:[%s45 + $0x10] sm:$0xff]
      %v2008 = vld [vmem:[%s45 + $0x18] sm:$0xff]
      %v2009 = vld [vmem:[%s45 + $0x20] sm:$0xff]
      %v2010 = vld [vmem:[%s45 + $0x28] sm:$0xff]
      %v2011 = vld [vmem:[%s45 + $0x30] sm:$0xff]
      %v2012 = vld [vmem:[%s45 + $0x38] sm:$0xff]
      %v2013 = vld [vmem:[%s45 + $0x40] sm:$0xff]
      %v2014 = vld [vmem:[%s45 + $0x48] sm:$0xff]
      %v2015 = vld [vmem:[%s45 + $0x50] sm:$0xff]
      %v2016 = vld [vmem:[%s45 + $0x58] sm:$0xff]
      %v2017 = vld [vmem:[%s43] sm:$0x1]
      %v2019 = vrot.slane %v2004, 7
      %v2021 = vsel %vm1444, 0.0, %v2019
      %v2022 = vrot.slane %v2004, 1
      %v2024 = vsel %vm1448, %v2022, 0.0
      %2025 = vrot.lane.b32.xlu0 %v2004, 32
      %v2026 = vpop.permute.xlu0 %2025
      %2029 = vrot.lane.b32.xlu0 %v2024, 64
      %v2030 = vpop.permute.xlu0 %2029
      %v2032 = vsel %vm1111, %v2021, %v2026
      %v2033 = vsel %vm1458, %v2032, %v2030
      %v2035 = vperm.slane %v2017, 0
      %v2038 = vsel %vm1463, %v2033, 0
      %2040 = vmatpush.msra.mxu0 0.0
      %2041 = vmatpush.msra.mxu0 0.0
      %2042 = vmatpush.msra.mxu0 0.0
      %2043 = vmatpush.msra.mxu0 0.0
      %2044 = vmatpush.msra.mxu0 %v2016
      %2045 = vmatpush.msra.mxu0 %v2015
      %2046 = vmatpush.msra.mxu0 %v2014
      %2047 = vmatpush.msra.mxu0 %v2013
      %2048 = vmatpush.msra.mxu0 %v2012
      %2049 = vmatpush.msra.mxu0 %v2011
      %2050 = vmatpush.msra.mxu0 %v2010
      %2051 = vmatpush.msra.mxu0 %v2009
      %2052 = vmatpush.msra.mxu0 %v2008
      %2053 = vmatpush.msra.mxu0 %v2007
      %2054 = vmatpush.msra.mxu0 %v2006
      %2055 = vmatpush.msra.mxu0 %v2005
      %2056 = vmatmul.f32.gmra.mxu0 %v2038
      %v2057 = vpop.f32.mrf.mxu0
      %v2058 = vadd.f32 %v2035, %v2057
      %2059 = vdwg.mxu0
      %v2060 = vmax.f32 %v2058, 0.0
      %v2061 = vld [vmem:[%s57] sm:$0x1]
      %v2062 = vld [vmem:[%s55] sm:$0x1]
      %v2063 = vsel %vm1111, %v2060, 0.0
      %2064 = vadd.xlane.f32.xlu0 %v2063
      %v2065 = vpop.xlane.xlu0 %2064
      %v2066 = vmul.f32 %v2065, %v1394
      %v2067 = vsub.f32 %v2060, %v2066
      %v2068 = vmul.f32 %v2067, %v2067
      %v2069 = vsel %vm1111, %v2068, 0.0
      %2070 = vadd.xlane.f32.xlu0 %v2069
      %v2071 = vpop.xlane.xlu0 %2070
      %v2072 = vmul.f32 %v2071, %v1394
      %v2073 = vadd.f32 %v2072, 1e-05
      %v2074 = vrsqrt.pop %v2073
      %v2075 = vmul.f32 %v2074, %v2073
      %v2076 = vmul.f32 %v2075, %v2074
      %v2077 = vmul.f32 0.5, %v2076
      %v2078 = vsub.f32 1.5, %v2077
      %v2079 = vmul.f32 %v2074, %v2078
      %vm2080 = vweird.f32 %v2073
      %vm2081 = vweird.f32 %v2074
      %vm2082 = vmor %vm2080, %vm2081
      %v2083 = vsel %vm2082, %v2074, %v2079
      %v2084 = vmul.f32 %v2067, %v2083
      %v2086 = vperm.slane %v2061, 0
      %v2088 = vmul.f32 %v2084, %v2086
      %v2090 = vperm.slane %v2062, 0
      %v2092 = vadd.f32 %v2088, %v2090
      %v2093 = vld [vmem:[%s49] sm:$0xff]
      %v2094 = vld [vmem:[%s49 + $0x8] sm:$0xff]
      %v2095 = vld [vmem:[%s49 + $0x10] sm:$0xff]
      %v2096 = vld [vmem:[%s49 + $0x18] sm:$0xff]
      %v2097 = vld [vmem:[%s49 + $0x20] sm:$0xff]
      %v2098 = vld [vmem:[%s49 + $0x28] sm:$0xff]
      %v2099 = vld [vmem:[%s49 + $0x30] sm:$0xff]
      %v2100 = vld [vmem:[%s49 + $0x38] sm:$0xff]
      %v2101 = vld [vmem:[%s49 + $0x40] sm:$0xff]
      %v2102 = vld [vmem:[%s49 + $0x48] sm:$0xff]
      %v2103 = vld [vmem:[%s49 + $0x50] sm:$0xff]
      %v2104 = vld [vmem:[%s49 + $0x58] sm:$0xff]
      %v2105 = vld [vmem:[%s47] sm:$0x1]
      %v2107 = vrot.slane %v2092, 7
      %v2109 = vsel %vm1444, 0.0, %v2107
      %v2110 = vrot.slane %v2092, 1
      %v2112 = vsel %vm1448, %v2110, 0.0
      %2113 = vrot.lane.b32.xlu0 %v2092, 32
      %v2114 = vpop.permute.xlu0 %2113
      %2117 = vrot.lane.b32.xlu0 %v2112, 64
      %v2118 = vpop.permute.xlu0 %2117
      %v2120 = vsel %vm1111, %v2109, %v2114
      %v2121 = vsel %vm1458, %v2120, %v2118
      %v2123 = vperm.slane %v2105, 0
      %v2126 = vsel %vm1463, %v2121, 0
      %2128 = vmatpush.msra.mxu0 0.0
      %2129 = vmatpush.msra.mxu0 0.0
      %2130 = vmatpush.msra.mxu0 0.0
      %2131 = vmatpush.msra.mxu0 0.0
      %2132 = vmatpush.msra.mxu0 %v2104
      %2133 = vmatpush.msra.mxu0 %v2103
      %2134 = vmatpush.msra.mxu0 %v2102
      %2135 = vmatpush.msra.mxu0 %v2101
      %2136 = vmatpush.msra.mxu0 %v2100
      %2137 = vmatpush.msra.mxu0 %v2099
      %2138 = vmatpush.msra.mxu0 %v2098
      %2139 = vmatpush.msra.mxu0 %v2097
      %2140 = vmatpush.msra.mxu0 %v2096
      %2141 = vmatpush.msra.mxu0 %v2095
      %2142 = vmatpush.msra.mxu0 %v2094
      %2143 = vmatpush.msra.mxu0 %v2093
      %2144 = vmatmul.f32.gmra.mxu0 %v2126
      %v2145 = vpop.f32.mrf.mxu0
      %v2146 = vadd.f32 %v2123, %v2145
      %2147 = vdwg.mxu0
      %v2148 = vmax.f32 %v2146, 0.0
      %v2149 = vld [vmem:[%s61] sm:$0x1]
      %v2150 = vld [vmem:[%s59] sm:$0x1]
      %v2151 = vsel %vm1111, %v2148, 0.0
      %2152 = vadd.xlane.f32.xlu0 %v2151
      %v2153 = vpop.xlane.xlu0 %2152
      %v2154 = vmul.f32 %v2153, %v1394
      %v2155 = vsub.f32 %v2148, %v2154
      %v2156 = vmul.f32 %v2155, %v2155
      %v2157 = vsel %vm1111, %v2156, 0.0
      %2158 = vadd.xlane.f32.xlu0 %v2157
      %v2159 = vpop.xlane.xlu0 %2158
      %v2160 = vmul.f32 %v2159, %v1394
      %v2161 = vadd.f32 %v2160, 1e-05
      %v2162 = vrsqrt.pop %v2161
      %v2163 = vmul.f32 %v2162, %v2161
      %v2164 = vmul.f32 %v2163, %v2162
      %v2165 = vmul.f32 0.5, %v2164
      %v2166 = vsub.f32 1.5, %v2165
      %v2167 = vmul.f32 %v2162, %v2166
      %vm2168 = vweird.f32 %v2161
      %vm2169 = vweird.f32 %v2162
      %vm2170 = vmor %vm2168, %vm2169
      %v2171 = vsel %vm2170, %v2162, %v2167
      %v2172 = vmul.f32 %v2155, %v2171
      %v2174 = vperm.slane %v2149, 0
      %v2176 = vmul.f32 %v2172, %v2174
      %v2178 = vperm.slane %v2150, 0
      %v2180 = vadd.f32 %v2176, %v2178
      %v2181 = vld [vmem:[%s53] sm:$0xff]
      %v2182 = vld [vmem:[%s53 + $0x8] sm:$0xff]
      %v2183 = vld [vmem:[%s53 + $0x10] sm:$0xff]
      %v2184 = vld [vmem:[%s53 + $0x18] sm:$0xff]
      %v2185 = vld [vmem:[%s51] sm:$0x1]
      %v2187 = vperm.slane %v2185, 0
      %v2190 = vsel %vm1111, %v2180, 0
      %2192 = vmatpush.msra.mxu0 0.0
      %2193 = vmatpush.msra.mxu0 0.0
      %2194 = vmatpush.msra.mxu0 0.0
      %2195 = vmatpush.msra.mxu0 0.0
      %2196 = vmatpush.msra.mxu0 0.0
      %2197 = vmatpush.msra.mxu0 0.0
      %2198 = vmatpush.msra.mxu0 0.0
      %2199 = vmatpush.msra.mxu0 0.0
      %2200 = vmatpush.msra.mxu0 0.0
      %2201 = vmatpush.msra.mxu0 0.0
      %2202 = vmatpush.msra.mxu0 0.0
      %2203 = vmatpush.msra.mxu0 0.0
      %2204 = vmatpush.msra.mxu0 %v2184
      %2205 = vmatpush.msra.mxu0 %v2183
      %2206 = vmatpush.msra.mxu0 %v2182
      %2207 = vmatpush.msra.mxu0 %v2181
      %2208 = vmatmul.f32.gmra.mxu0 %v2190
      %v2209 = vpop.f32.mrf.mxu0
      %v2210 = vadd.f32 %v2187, %v2209
      %2211 = vdwg.mxu0
      %v2212 = vmul.f32 %v2210, %v1102
      %s2213 = scalar_lea.vmem %s45, 96
      %v2214 = vld [vmem:[%s2213] sm:$0xff]
      %v2215 = vld [vmem:[%s2213 + $0x8] sm:$0xff]
      %v2216 = vld [vmem:[%s2213 + $0x10] sm:$0xff]
      %v2217 = vld [vmem:[%s2213 + $0x18] sm:$0xff]
      %v2218 = vld [vmem:[%s2213 + $0x20] sm:$0xff]
      %v2219 = vld [vmem:[%s2213 + $0x28] sm:$0xff]
      %v2220 = vld [vmem:[%s2213 + $0x30] sm:$0xff]
      %v2221 = vld [vmem:[%s2213 + $0x38] sm:$0xff]
      %v2222 = vld [vmem:[%s2213 + $0x40] sm:$0xff]
      %v2223 = vld [vmem:[%s2213 + $0x48] sm:$0xff]
      %v2224 = vld [vmem:[%s2213 + $0x50] sm:$0xff]
      %v2225 = vld [vmem:[%s2213 + $0x58] sm:$0xff]
      %s2226 = scalar_lea.vmem %s43, 1
      %v2227 = vld [vmem:[%s2226] sm:$0x1]
      %v2229 = vperm.slane %v2227, 0
      %2231 = vmatpush.msra.mxu0 0.0
      %2232 = vmatpush.msra.mxu0 0.0
      %2233 = vmatpush.msra.mxu0 0.0
      %2234 = vmatpush.msra.mxu0 0.0
      %2235 = vmatpush.msra.mxu0 %v2225
      %2236 = vmatpush.msra.mxu0 %v2224
      %2237 = vmatpush.msra.mxu0 %v2223
      %2238 = vmatpush.msra.mxu0 %v2222
      %2239 = vmatpush.msra.mxu0 %v2221
      %2240 = vmatpush.msra.mxu0 %v2220
      %2241 = vmatpush.msra.mxu0 %v2219
      %2242 = vmatpush.msra.mxu0 %v2218
      %2243 = vmatpush.msra.mxu0 %v2217
      %2244 = vmatpush.msra.mxu0 %v2216
      %2245 = vmatpush.msra.mxu0 %v2215
      %2246 = vmatpush.msra.mxu0 %v2214
      %2247 = vmatmul.f32.gmra.mxu0 %v2038
      %v2248 = vpop.f32.mrf.mxu0
      %v2249 = vadd.f32 %v2229, %v2248
      %2250 = vdwg.mxu0
      %v2251 = vmax.f32 %v2249, 0.0
      %s2252 = scalar_lea.vmem %s57, 1
      %v2253 = vld [vmem:[%s2252] sm:$0x1]
      %s2254 = scalar_lea.vmem %s55, 1
      %v2255 = vld [vmem:[%s2254] sm:$0x1]
      %v2256 = vsel %vm1111, %v2251, 0.0
      %2257 = vadd.xlane.f32.xlu0 %v2256
      %v2258 = vpop.xlane.xlu0 %2257
      %v2259 = vmul.f32 %v2258, %v1394
      %v2260 = vsub.f32 %v2251, %v2259
      %v2261 = vmul.f32 %v2260, %v2260
      %v2262 = vsel %vm1111, %v2261, 0.0
      %2263 = vadd.xlane.f32.xlu0 %v2262
      %v2264 = vpop.xlane.xlu0 %2263
      %v2265 = vmul.f32 %v2264, %v1394
      %v2266 = vadd.f32 %v2265, 1e-05
      %v2267 = vrsqrt.pop %v2266
      %v2268 = vmul.f32 %v2267, %v2266
      %v2269 = vmul.f32 %v2268, %v2267
      %v2270 = vmul.f32 0.5, %v2269
      %v2271 = vsub.f32 1.5, %v2270
      %v2272 = vmul.f32 %v2267, %v2271
      %vm2273 = vweird.f32 %v2266
      %vm2274 = vweird.f32 %v2267
      %vm2275 = vmor %vm2273, %vm2274
      %v2276 = vsel %vm2275, %v2267, %v2272
      %v2277 = vmul.f32 %v2260, %v2276
      %v2279 = vperm.slane %v2253, 0
      %v2281 = vmul.f32 %v2277, %v2279
      %v2283 = vperm.slane %v2255, 0
      %v2285 = vadd.f32 %v2281, %v2283
      %s2286 = scalar_lea.vmem %s49, 96
      %v2287 = vld [vmem:[%s2286] sm:$0xff]
      %v2288 = vld [vmem:[%s2286 + $0x8] sm:$0xff]
      %v2289 = vld [vmem:[%s2286 + $0x10] sm:$0xff]
      %v2290 = vld [vmem:[%s2286 + $0x18] sm:$0xff]
      %v2291 = vld [vmem:[%s2286 + $0x20] sm:$0xff]
      %v2292 = vld [vmem:[%s2286 + $0x28] sm:$0xff]
      %v2293 = vld [vmem:[%s2286 + $0x30] sm:$0xff]
      %v2294 = vld [vmem:[%s2286 + $0x38] sm:$0xff]
      %v2295 = vld [vmem:[%s2286 + $0x40] sm:$0xff]
      %v2296 = vld [vmem:[%s2286 + $0x48] sm:$0xff]
      %v2297 = vld [vmem:[%s2286 + $0x50] sm:$0xff]
      %v2298 = vld [vmem:[%s2286 + $0x58] sm:$0xff]
      %s2299 = scalar_lea.vmem %s47, 1
      %v2300 = vld [vmem:[%s2299] sm:$0x1]
      %v2302 = vrot.slane %v2285, 7
      %v2304 = vsel %vm1444, 0.0, %v2302
      %v2305 = vrot.slane %v2285, 1
      %v2307 = vsel %vm1448, %v2305, 0.0
      %2308 = vrot.lane.b32.xlu0 %v2285, 32
      %v2309 = vpop.permute.xlu0 %2308
      %2312 = vrot.lane.b32.xlu0 %v2307, 64
      %v2313 = vpop.permute.xlu0 %2312
      %v2315 = vsel %vm1111, %v2304, %v2309
      %v2316 = vsel %vm1458, %v2315, %v2313
      %v2318 = vperm.slane %v2300, 0
      %v2321 = vsel %vm1463, %v2316, 0
      %2323 = vmatpush.msra.mxu0 0.0
      %2324 = vmatpush.msra.mxu0 0.0
      %2325 = vmatpush.msra.mxu0 0.0
      %2326 = vmatpush.msra.mxu0 0.0
      %2327 = vmatpush.msra.mxu0 %v2298
      %2328 = vmatpush.msra.mxu0 %v2297
      %2329 = vmatpush.msra.mxu0 %v2296
      %2330 = vmatpush.msra.mxu0 %v2295
      %2331 = vmatpush.msra.mxu0 %v2294
      %2332 = vmatpush.msra.mxu0 %v2293
      %2333 = vmatpush.msra.mxu0 %v2292
      %2334 = vmatpush.msra.mxu0 %v2291
      %2335 = vmatpush.msra.mxu0 %v2290
      %2336 = vmatpush.msra.mxu0 %v2289
      %2337 = vmatpush.msra.mxu0 %v2288
      %2338 = vmatpush.msra.mxu0 %v2287
      %2339 = vmatmul.f32.gmra.mxu0 %v2321
      %v2340 = vpop.f32.mrf.mxu0
      %v2341 = vadd.f32 %v2318, %v2340
      %2342 = vdwg.mxu0
      %v2343 = vmax.f32 %v2341, 0.0
      %s2344 = scalar_lea.vmem %s61, 1
      %v2345 = vld [vmem:[%s2344] sm:$0x1]
      %s2346 = scalar_lea.vmem %s59, 1
      %v2347 = vld [vmem:[%s2346] sm:$0x1]
      %v2348 = vsel %vm1111, %v2343, 0.0
      %2349 = vadd.xlane.f32.xlu0 %v2348
      %v2350 = vpop.xlane.xlu0 %2349
      %v2351 = vmul.f32 %v2350, %v1394
      %v2352 = vsub.f32 %v2343, %v2351
      %v2353 = vmul.f32 %v2352, %v2352
      %v2354 = vsel %vm1111, %v2353, 0.0
      %2355 = vadd.xlane.f32.xlu0 %v2354
      %v2356 = vpop.xlane.xlu0 %2355
      %v2357 = vmul.f32 %v2356, %v1394
      %v2358 = vadd.f32 %v2357, 1e-05
      %v2359 = vrsqrt.pop %v2358
      %v2360 = vmul.f32 %v2359, %v2358
      %v2361 = vmul.f32 %v2360, %v2359
      %v2362 = vmul.f32 0.5, %v2361
      %v2363 = vsub.f32 1.5, %v2362
      %v2364 = vmul.f32 %v2359, %v2363
      %vm2365 = vweird.f32 %v2358
      %vm2366 = vweird.f32 %v2359
      %vm2367 = vmor %vm2365, %vm2366
      %v2368 = vsel %vm2367, %v2359, %v2364
      %v2369 = vmul.f32 %v2352, %v2368
      %v2371 = vperm.slane %v2345, 0
      %v2373 = vmul.f32 %v2369, %v2371
      %v2375 = vperm.slane %v2347, 0
      %v2377 = vadd.f32 %v2373, %v2375
      %s2378 = scalar_lea.vmem %s53, 32
      %v2379 = vld [vmem:[%s2378] sm:$0xff]
      %v2380 = vld [vmem:[%s2378 + $0x8] sm:$0xff]
      %v2381 = vld [vmem:[%s2378 + $0x10] sm:$0xff]
      %v2382 = vld [vmem:[%s2378 + $0x18] sm:$0xff]
      %s2383 = scalar_lea.vmem %s51, 1
      %v2384 = vld [vmem:[%s2383] sm:$0x1]
      %v2386 = vperm.slane %v2384, 0
      %v2389 = vsel %vm1111, %v2377, 0
      %2391 = vmatpush.msra.mxu0 0.0
      %2392 = vmatpush.msra.mxu0 0.0
      %2393 = vmatpush.msra.mxu0 0.0
      %2394 = vmatpush.msra.mxu0 0.0
      %2395 = vmatpush.msra.mxu0 0.0
      %2396 = vmatpush.msra.mxu0 0.0
      %2397 = vmatpush.msra.mxu0 0.0
      %2398 = vmatpush.msra.mxu0 0.0
      %2399 = vmatpush.msra.mxu0 0.0
      %2400 = vmatpush.msra.mxu0 0.0
      %2401 = vmatpush.msra.mxu0 0.0
      %2402 = vmatpush.msra.mxu0 0.0
      %2403 = vmatpush.msra.mxu0 %v2382
      %2404 = vmatpush.msra.mxu0 %v2381
      %2405 = vmatpush.msra.mxu0 %v2380
      %2406 = vmatpush.msra.mxu0 %v2379
      %2407 = vmatmul.f32.gmra.mxu0 %v2389
      %v2408 = vpop.f32.mrf.mxu0
      %v2409 = vadd.f32 %v2386, %v2408
      %2410 = vdwg.mxu0
      %v2411 = vmul.f32 %v2409, %v1102
      %v2412 = vld [vmem:[%s7] sm:$0x1]
      %v2413 = vld [vmem:[%s41] sm:$0xff]
      %v2414 = vld [vmem:[%s41 + $0x8] sm:$0xff]
      %v2415 = vld [vmem:[%s41 + $0x10] sm:$0xff]
      %v2416 = vld [vmem:[%s41 + $0x18] sm:$0xff]
      %v2418 = vperm.slane %v2412, 0
      %2421 = vset.pattern.permute.xlu0 0
      %2422 = vperm.xlu0 %2421, %v2411
      %v2423 = vpop.permute.xlu0 %2422
      %vm2425 = vcmp.lt.f32.partialorder %v2418, %v2423
      %v2426 = vsel %vm2425, 1, 0
      %vm2427 = vcmask 252928
      %v2428 = vsel %vm2427, %v2426, 0
      %v2429 = vand.u32 %v2428, 65535
      %v2430 = vshrl.u32 %v2428, 16
      %v2431 = vcvt.s32.f32 %v2429
      %v2432 = vcvt.s32.f32 %v2430
      %2433 = vadd.xlane.f32.xlu0 %v2431
      %v2434 = vpop.xlane.xlu0 %2433
      %2435 = vadd.xlane.f32.xlu0 %v2432
      %v2436 = vpop.xlane.xlu0 %2435
      %v2437 = vcvt.f32.s32 %v2434
      %v2438 = vcvt.f32.s32 %v2436
      %v2439 = vshll.u32 %v2438, 16
      %v2440 = vadd.s32 %v2439, %v2437
      %v2441 = vlaneseq
      %v2442 = vand.u32 %v2441, 127
      %vm2443 = vcmp.eq.s32.totalorder %v2440, %v2442
      %v2444 = vsel %vm2443, 1, 0
      %v2445 = vcvt.s32.f32 %v2444
      %v2447 = vsel %vm1111, %v2445, 0
      %2449 = vmatpush.msra.mxu0 0.0
      %2450 = vmatpush.msra.mxu0 0.0
      %2451 = vmatpush.msra.mxu0 0.0
      %2452 = vmatpush.msra.mxu0 0.0
      %2453 = vmatpush.msra.mxu0 0.0
      %2454 = vmatpush.msra.mxu0 0.0
      %2455 = vmatpush.msra.mxu0 0.0
      %2456 = vmatpush.msra.mxu0 0.0
      %2457 = vmatpush.msra.mxu0 0.0
      %2458 = vmatpush.msra.mxu0 0.0
      %2459 = vmatpush.msra.mxu0 0.0
      %2460 = vmatpush.msra.mxu0 0.0
      %2461 = vmatpush.msra.mxu0 %v2416
      %2462 = vmatpush.msra.mxu0 %v2415
      %2463 = vmatpush.msra.mxu0 %v2414
      %2464 = vmatpush.msra.mxu0 %v2413
      %2465 = vmatmul.f32.gmra.mxu0 %v2447
      %v2466 = vpop.f32.mrf.mxu0
      %v2467 = vadd.f32 0.0, %v2466
      %2468 = vdwg.mxu0
      %v2469 = vadd.f32 %v2004, %v2467
      %s2470 = scalar_lea.vmem %s45, 192
      %v2471 = vld [vmem:[%s2470] sm:$0xff]
      %v2472 = vld [vmem:[%s2470 + $0x8] sm:$0xff]
      %v2473 = vld [vmem:[%s2470 + $0x10] sm:$0xff]
      %v2474 = vld [vmem:[%s2470 + $0x18] sm:$0xff]
      %v2475 = vld [vmem:[%s2470 + $0x20] sm:$0xff]
      %v2476 = vld [vmem:[%s2470 + $0x28] sm:$0xff]
      %v2477 = vld [vmem:[%s2470 + $0x30] sm:$0xff]
      %v2478 = vld [vmem:[%s2470 + $0x38] sm:$0xff]
      %v2479 = vld [vmem:[%s2470 + $0x40] sm:$0xff]
      %v2480 = vld [vmem:[%s2470 + $0x48] sm:$0xff]
      %v2481 = vld [vmem:[%s2470 + $0x50] sm:$0xff]
      %v2482 = vld [vmem:[%s2470 + $0x58] sm:$0xff]
      %s2483 = scalar_lea.vmem %s43, 2
      %v2484 = vld [vmem:[%s2483] sm:$0x1]
      %v2486 = vrot.slane %v2469, 7
      %v2488 = vsel %vm1444, 0.0, %v2486
      %v2489 = vrot.slane %v2469, 1
      %v2491 = vsel %vm1448, %v2489, 0.0
      %2492 = vrot.lane.b32.xlu0 %v2469, 32
      %v2493 = vpop.permute.xlu0 %2492
      %2496 = vrot.lane.b32.xlu0 %v2491, 64
      %v2497 = vpop.permute.xlu0 %2496
      %v2499 = vsel %vm1111, %v2488, %v2493
      %v2500 = vsel %vm1458, %v2499, %v2497
      %v2502 = vperm.slane %v2484, 0
      %v2505 = vsel %vm1463, %v2500, 0
      %2507 = vmatpush.msra.mxu0 0.0
      %2508 = vmatpush.msra.mxu0 0.0
      %2509 = vmatpush.msra.mxu0 0.0
      %2510 = vmatpush.msra.mxu0 0.0
      %2511 = vmatpush.msra.mxu0 %v2482
      %2512 = vmatpush.msra.mxu0 %v2481
      %2513 = vmatpush.msra.mxu0 %v2480
      %2514 = vmatpush.msra.mxu0 %v2479
      %2515 = vmatpush.msra.mxu0 %v2478
      %2516 = vmatpush.msra.mxu0 %v2477
      %2517 = vmatpush.msra.mxu0 %v2476
      %2518 = vmatpush.msra.mxu0 %v2475
      %2519 = vmatpush.msra.mxu0 %v2474
      %2520 = vmatpush.msra.mxu0 %v2473
      %2521 = vmatpush.msra.mxu0 %v2472
      %2522 = vmatpush.msra.mxu0 %v2471
      %2523 = vmatmul.f32.gmra.mxu0 %v2505
      %v2524 = vpop.f32.mrf.mxu0
      %v2525 = vadd.f32 %v2502, %v2524
      %2526 = vdwg.mxu0
      %v2527 = vmax.f32 %v2525, 0.0
      %s2528 = scalar_lea.vmem %s57, 2
      %v2529 = vld [vmem:[%s2528] sm:$0x1]
      %s2530 = scalar_lea.vmem %s55, 2
      %v2531 = vld [vmem:[%s2530] sm:$0x1]
      %v2532 = vsel %vm1111, %v2527, 0.0
      %2533 = vadd.xlane.f32.xlu0 %v2532
      %v2534 = vpop.xlane.xlu0 %2533
      %v2535 = vmul.f32 %v2534, %v1394
      %v2536 = vsub.f32 %v2527, %v2535
      %v2537 = vmul.f32 %v2536, %v2536
      %v2538 = vsel %vm1111, %v2537, 0.0
      %2539 = vadd.xlane.f32.xlu0 %v2538
      %v2540 = vpop.xlane.xlu0 %2539
      %v2541 = vmul.f32 %v2540, %v1394
      %v2542 = vadd.f32 %v2541, 1e-05
      %v2543 = vrsqrt.pop %v2542
      %v2544 = vmul.f32 %v2543, %v2542
      %v2545 = vmul.f32 %v2544, %v2543
      %v2546 = vmul.f32 0.5, %v2545
      %v2547 = vsub.f32 1.5, %v2546
      %v2548 = vmul.f32 %v2543, %v2547
      %vm2549 = vweird.f32 %v2542
      %vm2550 = vweird.f32 %v2543
      %vm2551 = vmor %vm2549, %vm2550
      %v2552 = vsel %vm2551, %v2543, %v2548
      %v2553 = vmul.f32 %v2536, %v2552
      %v2555 = vperm.slane %v2529, 0
      %v2557 = vmul.f32 %v2553, %v2555
      %v2559 = vperm.slane %v2531, 0
      %v2561 = vadd.f32 %v2557, %v2559
      %s2562 = scalar_lea.vmem %s49, 192
      %v2563 = vld [vmem:[%s2562] sm:$0xff]
      %v2564 = vld [vmem:[%s2562 + $0x8] sm:$0xff]
      %v2565 = vld [vmem:[%s2562 + $0x10] sm:$0xff]
      %v2566 = vld [vmem:[%s2562 + $0x18] sm:$0xff]
      %v2567 = vld [vmem:[%s2562 + $0x20] sm:$0xff]
      %v2568 = vld [vmem:[%s2562 + $0x28] sm:$0xff]
      %v2569 = vld [vmem:[%s2562 + $0x30] sm:$0xff]
      %v2570 = vld [vmem:[%s2562 + $0x38] sm:$0xff]
      %v2571 = vld [vmem:[%s2562 + $0x40] sm:$0xff]
      %v2572 = vld [vmem:[%s2562 + $0x48] sm:$0xff]
      %v2573 = vld [vmem:[%s2562 + $0x50] sm:$0xff]
      %v2574 = vld [vmem:[%s2562 + $0x58] sm:$0xff]
      %s2575 = scalar_lea.vmem %s47, 2
      %v2576 = vld [vmem:[%s2575] sm:$0x1]
      %v2578 = vrot.slane %v2561, 7
      %v2580 = vsel %vm1444, 0.0, %v2578
      %v2581 = vrot.slane %v2561, 1
      %v2583 = vsel %vm1448, %v2581, 0.0
      %2584 = vrot.lane.b32.xlu0 %v2561, 32
      %v2585 = vpop.permute.xlu0 %2584
      %2588 = vrot.lane.b32.xlu0 %v2583, 64
      %v2589 = vpop.permute.xlu0 %2588
      %v2591 = vsel %vm1111, %v2580, %v2585
      %v2592 = vsel %vm1458, %v2591, %v2589
      %v2594 = vperm.slane %v2576, 0
      %v2597 = vsel %vm1463, %v2592, 0
      %2599 = vmatpush.msra.mxu0 0.0
      %2600 = vmatpush.msra.mxu0 0.0
      %2601 = vmatpush.msra.mxu0 0.0
      %2602 = vmatpush.msra.mxu0 0.0
      %2603 = vmatpush.msra.mxu0 %v2574
      %2604 = vmatpush.msra.mxu0 %v2573
      %2605 = vmatpush.msra.mxu0 %v2572
      %2606 = vmatpush.msra.mxu0 %v2571
      %2607 = vmatpush.msra.mxu0 %v2570
      %2608 = vmatpush.msra.mxu0 %v2569
      %2609 = vmatpush.msra.mxu0 %v2568
      %2610 = vmatpush.msra.mxu0 %v2567
      %2611 = vmatpush.msra.mxu0 %v2566
      %2612 = vmatpush.msra.mxu0 %v2565
      %2613 = vmatpush.msra.mxu0 %v2564
      %2614 = vmatpush.msra.mxu0 %v2563
      %2615 = vmatmul.f32.gmra.mxu0 %v2597
      %v2616 = vpop.f32.mrf.mxu0
      %v2617 = vadd.f32 %v2594, %v2616
      %2618 = vdwg.mxu0
      %v2619 = vmax.f32 %v2617, 0.0
      %s2620 = scalar_lea.vmem %s61, 2
      %v2621 = vld [vmem:[%s2620] sm:$0x1]
      %s2622 = scalar_lea.vmem %s59, 2
      %v2623 = vld [vmem:[%s2622] sm:$0x1]
      %v2624 = vsel %vm1111, %v2619, 0.0
      %2625 = vadd.xlane.f32.xlu0 %v2624
      %v2626 = vpop.xlane.xlu0 %2625
      %v2627 = vmul.f32 %v2626, %v1394
      %v2628 = vsub.f32 %v2619, %v2627
      %v2629 = vmul.f32 %v2628, %v2628
      %v2630 = vsel %vm1111, %v2629, 0.0
      %2631 = vadd.xlane.f32.xlu0 %v2630
      %v2632 = vpop.xlane.xlu0 %2631
      %v2633 = vmul.f32 %v2632, %v1394
      %v2634 = vadd.f32 %v2633, 1e-05
      %v2635 = vrsqrt.pop %v2634
      %v2636 = vmul.f32 %v2635, %v2634
      %v2637 = vmul.f32 %v2636, %v2635
      %v2638 = vmul.f32 0.5, %v2637
      %v2639 = vsub.f32 1.5, %v2638
      %v2640 = vmul.f32 %v2635, %v2639
      %vm2641 = vweird.f32 %v2634
      %vm2642 = vweird.f32 %v2635
      %vm2643 = vmor %vm2641, %vm2642
      %v2644 = vsel %vm2643, %v2635, %v2640
      %v2645 = vmul.f32 %v2628, %v2644
      %v2647 = vperm.slane %v2621, 0
      %v2649 = vmul.f32 %v2645, %v2647
      %v2651 = vperm.slane %v2623, 0
      %v2653 = vadd.f32 %v2649, %v2651
      %s2654 = scalar_lea.vmem %s53, 64
      %v2655 = vld [vmem:[%s2654] sm:$0xff]
      %v2656 = vld [vmem:[%s2654 + $0x8] sm:$0xff]
      %v2657 = vld [vmem:[%s2654 + $0x10] sm:$0xff]
      %v2658 = vld [vmem:[%s2654 + $0x18] sm:$0xff]
      %s2659 = scalar_lea.vmem %s51, 2
      %v2660 = vld [vmem:[%s2659] sm:$0x1]
      %v2662 = vperm.slane %v2660, 0
      %v2665 = vsel %vm1111, %v2653, 0
      %2667 = vmatpush.msra.mxu0 0.0
      %2668 = vmatpush.msra.mxu0 0.0
      %2669 = vmatpush.msra.mxu0 0.0
      %2670 = vmatpush.msra.mxu0 0.0
      %2671 = vmatpush.msra.mxu0 0.0
      %2672 = vmatpush.msra.mxu0 0.0
      %2673 = vmatpush.msra.mxu0 0.0
      %2674 = vmatpush.msra.mxu0 0.0
      %2675 = vmatpush.msra.mxu0 0.0
      %2676 = vmatpush.msra.mxu0 0.0
      %2677 = vmatpush.msra.mxu0 0.0
      %2678 = vmatpush.msra.mxu0 0.0
      %2679 = vmatpush.msra.mxu0 %v2658
      %2680 = vmatpush.msra.mxu0 %v2657
      %2681 = vmatpush.msra.mxu0 %v2656
      %2682 = vmatpush.msra.mxu0 %v2655
      %2683 = vmatmul.f32.gmra.mxu0 %v2665
      %v2684 = vpop.f32.mrf.mxu0
      %v2685 = vadd.f32 %v2662, %v2684
      %2686 = vdwg.mxu0
      %v2687 = vmul.f32 %v2685, %v1102
      %s2688 = scalar_lea.vmem %s7, 1
      %v2689 = vld [vmem:[%s2688] sm:$0x1]
      %s2690 = scalar_lea.vmem %s41, 32
      %v2691 = vld [vmem:[%s2690] sm:$0xff]
      %v2692 = vld [vmem:[%s2690 + $0x8] sm:$0xff]
      %v2693 = vld [vmem:[%s2690 + $0x10] sm:$0xff]
      %v2694 = vld [vmem:[%s2690 + $0x18] sm:$0xff]
      %v2696 = vperm.slane %v2689, 0
      %2699 = vset.pattern.permute.xlu0 0
      %2700 = vperm.xlu0 %2699, %v2687
      %v2701 = vpop.permute.xlu0 %2700
      %vm2703 = vcmp.lt.f32.partialorder %v2696, %v2701
      %v2704 = vsel %vm2703, 1, 0
      %v2705 = vsel %vm2427, %v2704, 0
      %v2706 = vand.u32 %v2705, 65535
      %v2707 = vshrl.u32 %v2705, 16
      %v2708 = vcvt.s32.f32 %v2706
      %v2709 = vcvt.s32.f32 %v2707
      %2710 = vadd.xlane.f32.xlu0 %v2708
      %v2711 = vpop.xlane.xlu0 %2710
      %2712 = vadd.xlane.f32.xlu0 %v2709
      %v2713 = vpop.xlane.xlu0 %2712
      %v2714 = vcvt.f32.s32 %v2711
      %v2715 = vcvt.f32.s32 %v2713
      %v2716 = vshll.u32 %v2715, 16
      %v2717 = vadd.s32 %v2716, %v2714
      %vm2718 = vcmp.eq.s32.totalorder %v2717, %v2442
      %v2719 = vsel %vm2718, 1, 0
      %v2720 = vcvt.s32.f32 %v2719
      %v2722 = vsel %vm1111, %v2720, 0
      %2724 = vmatpush.msra.mxu0 0.0
      %2725 = vmatpush.msra.mxu0 0.0
      %2726 = vmatpush.msra.mxu0 0.0
      %2727 = vmatpush.msra.mxu0 0.0
      %2728 = vmatpush.msra.mxu0 0.0
      %2729 = vmatpush.msra.mxu0 0.0
      %2730 = vmatpush.msra.mxu0 0.0
      %2731 = vmatpush.msra.mxu0 0.0
      %2732 = vmatpush.msra.mxu0 0.0
      %2733 = vmatpush.msra.mxu0 0.0
      %2734 = vmatpush.msra.mxu0 0.0
      %2735 = vmatpush.msra.mxu0 0.0
      %2736 = vmatpush.msra.mxu0 %v2694
      %2737 = vmatpush.msra.mxu0 %v2693
      %2738 = vmatpush.msra.mxu0 %v2692
      %2739 = vmatpush.msra.mxu0 %v2691
      %2740 = vmatmul.f32.gmra.mxu0 %v2722
      %v2741 = vpop.f32.mrf.mxu0
      %v2742 = vadd.f32 0.0, %v2741
      %2743 = vdwg.mxu0
      %v2744 = vadd.f32 %v2469, %v2742
      %2745 = vst.msk [vmem:[%s1087] sm:$0xff] %vm1111, %v2744
      %vm2746 = vcmask 7168
      %2747 = vst.msk [vmem:[%s1091] sm:$0xff] %vm2746, %v2212
      %2748 = vst.msk [vmem:[%s1095] sm:$0xff] %vm2746, %v2411
      %2749 = vst.msk [vmem:[%s1099] sm:$0xff] %vm2746, %v2687
      %p2750 = scmp.lt.s32.totalorder %s81, 1
      %s2751 = scalar_select %p2750, %s81, 1
      %s2752 = smul.addr %s2751, 8
      %s2753 = scalar_lea.vmem %s63, %s2752
      %p2754 = scmp.lt.s32.totalorder %s81, 1
      %s2755 = scalar_select %p2754, %s81, 1
      %s2756 = smul.addr %s2755, 8
      %s2757 = scalar_lea.vmem %s65, %s2756
      %p2758 = scmp.lt.s32.totalorder %s81, 1
      %s2759 = scalar_select %p2758, %s81, 1
      %s2760 = smul.addr %s2759, 8
      %s2761 = scalar_lea.vmem %s67, %s2760
      %p2762 = scmp.lt.s32.totalorder %s81, 1
      %s2763 = scalar_select %p2762, %s81, 1
      %s2764 = smul.addr %s2763, 8
      %s2765 = scalar_lea.vmem %s69, %s2764
      // Predicated region
      $region145: #{fastspeech2_forward.2} parent=143 // pred_check
        %p2766 = pneg %p765
      $region146: #{fastspeech2_forward.2} parent=143 // pred_check_branch
        %2768 = sbr.rel (%p2766) target = $region148
      $region147: #{fastspeech2_forward.2} parent=143 // pred_region
        _
      $region148: #{fastspeech2_forward.2} parent=143 // pred_fallthru
        _
      // Predicated region
      $region149: #{fastspeech2_forward.2} parent=143 // pred_check
        %p2769 = pneg %p791
      $region150: #{fastspeech2_forward.2} parent=143 // pred_check_branch
        %2771 = sbr.rel (%p2769) target = $region152
      $region151: #{fastspeech2_forward.2} parent=143 // pred_region
        _
      $region152: #{fastspeech2_forward.2} parent=143 // pred_fallthru
        _
      // Predicated region
      $region153: #{fastspeech2_forward.2} parent=143 // pred_check
        %p2772 = pneg %p817
      $region154: #{fastspeech2_forward.2} parent=143 // pred_check_branch
        %2774 = sbr.rel (%p2772) target = $region156
      $region155: #{fastspeech2_forward.2} parent=143 // pred_region
        _
      $region156: #{fastspeech2_forward.2} parent=143 // pred_fallthru
        _
      // Predicated region
      $region157: #{fastspeech2_forward.2} parent=143 // pred_check
        %p2775 = pneg %p843
      $region158: #{fastspeech2_forward.2} parent=143 // pred_check_branch
        %2777 = sbr.rel (%p2775) target = $region160
      $region159: #{fastspeech2_forward.2} parent=143 // pred_region
        _
      $region160: #{fastspeech2_forward.2} parent=143 // pred_fallthru
        _
    $region144: #{fastspeech2_forward.2} parent=5 // pred_fallthru
      _
    %p2778 = scmp.le.s32.totalorder 2, %s76
    // Predicated region
    $region161: #{fastspeech2_forward.2} parent=5 // pred_check
      %p2779 = pneg %p2778
    $region162: #{fastspeech2_forward.2} parent=5 // pred_check_branch
      %2781 = sbr.rel (%p2779) target = $region164
    $region163: #{fastspeech2_forward.2} parent=5 // pred_region
      %s2782 = ssub.s32 %s76, 2
      // Predicated region
      $region165: #{fastspeech2_forward.2} parent=163 // pred_check
        %p2783 = pneg %p771
      $region166: #{fastspeech2_forward.2} parent=163 // pred_check_branch
        %2785 = sbr.rel (%p2783) target = $region168
      $region167: #{fastspeech2_forward.2} parent=163 // pred_region
        %p2786 = scmp.lt.s32.totalorder %s82, 1
        %s2787 = scalar_select %p2786, %s82, 1
        %s2788 = smul.addr %s2787, 8
        %s2789 = scalar_lea.vmem %s63, %s2788
      $region168: #{fastspeech2_forward.2} parent=163 // pred_fallthru
        _
      // Predicated region
      $region169: #{fastspeech2_forward.2} parent=163 // pred_check
        %p2790 = pneg %p797
      $region170: #{fastspeech2_forward.2} parent=163 // pred_check_branch
        %2792 = sbr.rel (%p2790) target = $region172
      $region171: #{fastspeech2_forward.2} parent=163 // pred_region
        %p2793 = scmp.lt.s32.totalorder %s82, 1
        %s2794 = scalar_select %p2793, %s82, 1
        %s2795 = smul.addr %s2794, 8
        %s2796 = scalar_lea.vmem %s65, %s2795
      $region172: #{fastspeech2_forward.2} parent=163 // pred_fallthru
        _
      // Predicated region
      $region173: #{fastspeech2_forward.2} parent=163 // pred_check
        %p2797 = pneg %p823
      $region174: #{fastspeech2_forward.2} parent=163 // pred_check_branch
        %2799 = sbr.rel (%p2797) target = $region176
      $region175: #{fastspeech2_forward.2} parent=163 // pred_region
        %p2800 = scmp.lt.s32.totalorder %s82, 1
        %s2801 = scalar_select %p2800, %s82, 1
        %s2802 = smul.addr %s2801, 8
        %s2803 = scalar_lea.vmem %s67, %s2802
      $region176: #{fastspeech2_forward.2} parent=163 // pred_fallthru
        _
      // Predicated region
      $region177: #{fastspeech2_forward.2} parent=163 // pred_check
        %p2804 = pneg %p849
      $region178: #{fastspeech2_forward.2} parent=163 // pred_check_branch
        %2806 = sbr.rel (%p2804) target = $region180
      $region179: #{fastspeech2_forward.2} parent=163 // pred_region
        %p2807 = scmp.lt.s32.totalorder %s82, 1
        %s2808 = scalar_select %p2807, %s82, 1
        %s2809 = smul.addr %s2808, 8
        %s2810 = scalar_lea.vmem %s69, %s2809
      $region180: #{fastspeech2_forward.2} parent=163 // pred_fallthru
        _
    $region164: #{fastspeech2_forward.2} parent=5 // pred_fallthru
      _
  $region6: #{fastspeech2_forward.2} parent=0 // loop_footer
    %s80 = sadd.s32 1, %s76
  $region7: #{fastspeech2_forward.2} parent=0 // loop_footer_branch
    %75 = sbr.rel target = $region3
  $region8: #{fastspeech2_forward.2} parent=0 // loop_exit
    _

// kernel: fastspeech2_forward.3
$region0: #{fastspeech2_forward.3}
  #allocation0 [shape = 'u32[]', space=smem, size = 0x4, offset = 0x4, fixed_abs, tag = 'smem constant byte address 0x4 - core index']
  #allocation1 [shape = 'u32[72,128]{1,0:T(1,128)}', space=vmem, size = 0x9000, scoped, tag = 'internal scratch']
  %s0 = inlined_call_operand.vmem [shape: f32[2,32,32], index: 0, kind: input, shape index: {}]
  %s1 = inlined_call_operand.vmem [shape: f32[2,1,32], index: 1, kind: input, shape index: {}]
  %s2 = inlined_call_operand.vmem [shape: f32[2,32,1], index: 2, kind: input, shape index: {}]
  %s3 = inlined_call_operand.vmem [shape: f32[2,1,32], index: 3, kind: input, shape index: {}]
  %s4 = inlined_call_operand.vmem [shape: f32[2,1,32], index: 4, kind: input, shape index: {}]
  %s5 = inlined_call_operand.vmem [shape: f32[2,1,32], index: 5, kind: input, shape index: {}]
  %s6 = inlined_call_operand.vmem [shape: f32[2,1,32], index: 6, kind: input, shape index: {}]
  %s7 = inlined_call_operand.vmem [shape: f32[2,1,64], index: 7, kind: input, shape index: {}]
  %s8 = inlined_call_operand.vmem [shape: f32[2,96,64], index: 8, kind: input, shape index: {}]
  %s9 = inlined_call_operand.vmem [shape: f32[2,1,32], index: 9, kind: input, shape index: {}]
  %s10 = inlined_call_operand.vmem [shape: f32[2,64,32], index: 10, kind: input, shape index: {}]
  %s11 = inlined_call_operand.vmem [shape: f32[2,1,32], index: 11, kind: input, shape index: {}]
  %s12 = inlined_call_operand.vmem [shape: f32[2,1,32], index: 12, kind: input, shape index: {}]
  %s13 = inlined_call_operand.vmem [shape: f32[2,1,32], index: 13, kind: input, shape index: {}]
  %s14 = inlined_call_operand.vmem [shape: f32[2,1,32], index: 14, kind: input, shape index: {}]
  %s15 = inlined_call_operand.vmem [shape: f32[2,32,32], index: 15, kind: input, shape index: {}]
  %s16 = inlined_call_operand.vmem [shape: f32[2,32,32], index: 16, kind: input, shape index: {}]
  %s17 = inlined_call_operand.vmem [shape: f32[2,32,32], index: 17, kind: input, shape index: {}]
  %s18 = inlined_call_operand.vmem [shape: f32[2,32,32], index: 18, kind: input, shape index: {}]
  %s19 = inlined_call_operand.vmem [shape: f32[1,16], index: 19, kind: input, shape index: {}]
  %s20 = inlined_call_operand.vmem [shape: f32[32,16], index: 20, kind: input, shape index: {}]
  %s21 = inlined_call_operand.vmem [shape: f32[1,32], index: 21, kind: input, shape index: {}]
  %s22 = inlined_call_operand.vmem [shape: f32[1,32], index: 22, kind: input, shape index: {}]
  %s23 = inlined_call_operand.vmem [shape: f32[1,16], index: 23, kind: input, shape index: {}]
  %s24 = inlined_call_operand.vmem [shape: f32[80,32], index: 24, kind: input, shape index: {}]
  %s25 = inlined_call_operand.vmem [shape: f32[160,32], index: 25, kind: input, shape index: {}]
  %s26 = inlined_call_operand.vmem [shape: f32[160,16], index: 26, kind: input, shape index: {}]
  %s27 = inlined_call_operand.vmem [shape: f32[2,32,16], index: 27, kind: output, shape index: {0}]
  %s28 = inlined_call_operand.vmem [shape: f32[2,32,16], index: 28, kind: output, shape index: {1}]
  %29 = xla_tuple %s27, %s28
  %s30 = sld [smem:[#allocation0]]
  $region149: #{fastspeech2_forward.3} parent=0
    _
  %s32 = ssub.s32 1, %s30
  %s33 = scalar_select 0, %s32, %s30
  loop: start=0, step=1, limit=4
  $region2: #{fastspeech2_forward.3} parent=0 // loop_pre_header
    _
  $region3: #{fastspeech2_forward.3} parent=0 // loop_header
    %s35 = sphi 0, %s39
    %p36 = scmp.ge.s32.totalorder %s35, 4
    %s45 = sphi 0, %s47
    %s48 = sphi 0, %s45
    %s49 = sphi 0, %s48
    %s65 = sphi 0, %s49
    %s71 = sphi 0, %s73
    %s74 = sphi 0, %s71
    %s75 = sphi 0, %s74
    %s91 = sphi 0, %s75
    %s97 = sphi 0, %s99
    %s100 = sphi 0, %s97
    %s101 = sphi 0, %s100
    %s117 = sphi 0, %s101
    %s121 = sphi 0, %s121
    %s123 = sphi 0, %s121
    %s124 = sphi 0, %s123
    %s138 = sphi 0, %s124
    %s142 = sphi 0, %s142
    %s144 = sphi 0, %s142
    %s145 = sphi 0, %s144
    %s159 = sphi 0, %s145
    %s163 = sphi 0, %s163
    %s165 = sphi 0, %s163
    %s166 = sphi 0, %s165
    %s180 = sphi 0, %s166
    %s184 = sphi 0, %s184
    %s186 = sphi 0, %s184
    %s187 = sphi 0, %s186
    %s201 = sphi 0, %s187
    %s205 = sphi 0, %s205
    %s207 = sphi 0, %s205
    %s208 = sphi 0, %s207
    %s222 = sphi 0, %s208
    %s226 = sphi 0, %s226
    %s228 = sphi 0, %s226
    %s229 = sphi 0, %s228
    %s243 = sphi 0, %s229
    %s247 = sphi 0, %s247
    %s249 = sphi 0, %s247
    %s250 = sphi 0, %s249
    %s264 = sphi 0, %s250
    %s268 = sphi 0, %s268
    %s270 = sphi 0, %s268
    %s271 = sphi 0, %s270
    %s285 = sphi 0, %s271
    %s289 = sphi 0, %s289
    %s291 = sphi 0, %s289
    %s292 = sphi 0, %s291
    %s306 = sphi 0, %s292
    %s310 = sphi 0, %s310
    %s312 = sphi 0, %s310
    %s313 = sphi 0, %s312
    %s327 = sphi 0, %s313
    %s331 = sphi 0, %s331
    %s333 = sphi 0, %s331
    %s334 = sphi 0, %s333
    %s348 = sphi 0, %s334
    %s352 = sphi 0, %s352
    %s354 = sphi 0, %s352
    %s355 = sphi 0, %s354
    %s369 = sphi 0, %s355
    %s373 = sphi 0, %s373
    %s375 = sphi 0, %s373
    %s376 = sphi 0, %s375
    %s390 = sphi 0, %s376
    %s394 = sphi 0, %s394
    %s396 = sphi 0, %s394
    %s397 = sphi 0, %s396
    %s411 = sphi 0, %s397
    %s415 = sphi 0, %s415
    %s417 = sphi 0, %s415
    %s418 = sphi 0, %s417
    %s432 = sphi 0, %s418
    %s436 = sphi 0, %s436
    %s438 = sphi 0, %s436
    %s439 = sphi 0, %s438
    %s453 = sphi 0, %s439
    %s457 = sphi 0, %s457
    %s459 = sphi 0, %s457
    %s460 = sphi 0, %s459
    %s474 = sphi 0, %s460
    %s478 = sphi 0, %s478
    %s480 = sphi 0, %s478
    %s481 = sphi 0, %s480
    %s495 = sphi 0, %s481
    %s499 = sphi 0, %s499
    %s501 = sphi 0, %s499
    %s502 = sphi 0, %s501
    %s516 = sphi 0, %s502
    %s520 = sphi 0, %s520
    %s522 = sphi 0, %s520
    %s523 = sphi 0, %s522
    %s537 = sphi 0, %s523
    %s541 = sphi 0, %s541
    %s543 = sphi 0, %s541
    %s544 = sphi 0, %s543
    %s558 = sphi 0, %s544
    %s562 = sphi 0, %s562
    %s564 = sphi 0, %s562
    %s565 = sphi 0, %s564
    %s579 = sphi 0, %s565
    %s583 = sphi 0, %s583
    %s585 = sphi 0, %s583
    %s586 = sphi 0, %s585
    %s600 = sphi 0, %s586
    %s604 = sphi 0, %s604
    %s606 = sphi 0, %s604
    %s607 = sphi 0, %s606
    %s621 = sphi 0, %s607
    %s627 = sphi 0, %s629
    %s630 = sphi 0, %s627
    %s631 = sphi 0, %s630
    %s647 = sphi 0, %s631
    %s653 = sphi 0, %s655
    %s656 = sphi 0, %s653
    %s657 = sphi 0, %s656
    %s673 = sphi 0, %s657
  $region4: #{fastspeech2_forward.3} parent=0 // loop_header_branch
    %38 = sbr.rel (%p36) target = $region8
  $region5: #{fastspeech2_forward.3} parent=0 // loop_body
    %s40 = ssub.s32 %s35, 1
    %s41 = ssub.s32 %s35, 2
    %s42 = sadd.s32 %s35, 1
    %s43 = ssub.s32 %s35, %s42
    %p44 = scmp.eq.s32.totalorder %s43, 0
    %s46 = sadd.s32 %s45, 1
    %s47 = scalar_select %p44, %s45, %s46
    %p50 = pneg %p44
    %p51 = scmp.eq.s32.totalorder %s35, 1
    %p52 = por %p50, %p51
    %p53 = scmp.ne.s32.totalorder %s45, %s48
    %p54 = scmp.eq.s32.totalorder %s35, 0
    %p55 = por %p53, %p54
    %p56 = scmp.ne.s32.totalorder %s45, %s48
    %p57 = scmp.eq.s32.totalorder %s40, 1
    %p58 = por %p56, %p57
    %p59 = scmp.ne.s32.totalorder %s48, %s49
    %p60 = scmp.eq.s32.totalorder %s40, 0
    %p61 = por %p59, %p60
    %p62 = scmp.ne.s32.totalorder %s48, %s49
    %p63 = scmp.eq.s32.totalorder %s41, 1
    %p64 = por %p62, %p63
    %p66 = scmp.ne.s32.totalorder %s49, %s65
    %p67 = scmp.eq.s32.totalorder %s41, 0
    %p68 = por %p66, %p67
    %s69 = ssub.s32 %s35, %s42
    %p70 = scmp.eq.s32.totalorder %s69, 0
    %s72 = sadd.s32 %s71, 1
    %s73 = scalar_select %p70, %s71, %s72
    %p76 = pneg %p70
    %p77 = scmp.eq.s32.totalorder %s35, 1
    %p78 = por %p76, %p77
    %p79 = scmp.ne.s32.totalorder %s71, %s74
    %p80 = scmp.eq.s32.totalorder %s35, 0
    %p81 = por %p79, %p80
    %p82 = scmp.ne.s32.totalorder %s71, %s74
    %p83 = scmp.eq.s32.totalorder %s40, 1
    %p84 = por %p82, %p83
    %p85 = scmp.ne.s32.totalorder %s74, %s75
    %p86 = scmp.eq.s32.totalorder %s40, 0
    %p87 = por %p85, %p86
    %p88 = scmp.ne.s32.totalorder %s74, %s75
    %p89 = scmp.eq.s32.totalorder %s41, 1
    %p90 = por %p88, %p89
    %p92 = scmp.ne.s32.totalorder %s75, %s91
    %p93 = scmp.eq.s32.totalorder %s41, 0
    %p94 = por %p92, %p93
    %s95 = ssub.s32 %s35, %s42
    %p96 = scmp.eq.s32.totalorder %s95, 0
    %s98 = sadd.s32 %s97, 1
    %s99 = scalar_select %p96, %s97, %s98
    %p102 = pneg %p96
    %p103 = scmp.eq.s32.totalorder %s35, 1
    %p104 = por %p102, %p103
    %p105 = scmp.ne.s32.totalorder %s97, %s100
    %p106 = scmp.eq.s32.totalorder %s35, 0
    %p107 = por %p105, %p106
    %p108 = scmp.ne.s32.totalorder %s97, %s100
    %p109 = scmp.eq.s32.totalorder %s40, 1
    %p110 = por %p108, %p109
    %p111 = scmp.ne.s32.totalorder %s100, %s101
    %p112 = scmp.eq.s32.totalorder %s40, 0
    %p113 = por %p111, %p112
    %p114 = scmp.ne.s32.totalorder %s100, %s101
    %p115 = scmp.eq.s32.totalorder %s41, 1
    %p116 = por %p114, %p115
    %p118 = scmp.ne.s32.totalorder %s101, %s117
    %p119 = scmp.eq.s32.totalorder %s41, 0
    %p120 = por %p118, %p119
    %s122 = sadd.s32 %s121, 1
    %p125 = scmp.eq.s32.totalorder %s35, 1
    %p126 = scmp.ne.s32.totalorder %s121, %s123
    %p127 = scmp.eq.s32.totalorder %s35, 0
    %p128 = por %p126, %p127
    %p129 = scmp.ne.s32.totalorder %s121, %s123
    %p130 = scmp.eq.s32.totalorder %s40, 1
    %p131 = por %p129, %p130
    %p132 = scmp.ne.s32.totalorder %s123, %s124
    %p133 = scmp.eq.s32.totalorder %s40, 0
    %p134 = por %p132, %p133
    %p135 = scmp.ne.s32.totalorder %s123, %s124
    %p136 = scmp.eq.s32.totalorder %s41, 1
    %p137 = por %p135, %p136
    %p139 = scmp.ne.s32.totalorder %s124, %s138
    %p140 = scmp.eq.s32.totalorder %s41, 0
    %p141 = por %p139, %p140
    %s143 = sadd.s32 %s142, 1
    %p146 = scmp.eq.s32.totalorder %s35, 1
    %p147 = scmp.ne.s32.totalorder %s142, %s144
    %p148 = scmp.eq.s32.totalorder %s35, 0
    %p149 = por %p147, %p148
    %p150 = scmp.ne.s32.totalorder %s142, %s144
    %p151 = scmp.eq.s32.totalorder %s40, 1
    %p152 = por %p150, %p151
    %p153 = scmp.ne.s32.totalorder %s144, %s145
    %p154 = scmp.eq.s32.totalorder %s40, 0
    %p155 = por %p153, %p154
    %p156 = scmp.ne.s32.totalorder %s144, %s145
    %p157 = scmp.eq.s32.totalorder %s41, 1
    %p158 = por %p156, %p157
    %p160 = scmp.ne.s32.totalorder %s145, %s159
    %p161 = scmp.eq.s32.totalorder %s41, 0
    %p162 = por %p160, %p161
    %s164 = sadd.s32 %s163, 1
    %p167 = scmp.eq.s32.totalorder %s35, 1
    %p168 = scmp.ne.s32.totalorder %s163, %s165
    %p169 = scmp.eq.s32.totalorder %s35, 0
    %p170 = por %p168, %p169
    %p171 = scmp.ne.s32.totalorder %s163, %s165
    %p172 = scmp.eq.s32.totalorder %s40, 1
    %p173 = por %p171, %p172
    %p174 = scmp.ne.s32.totalorder %s165, %s166
    %p175 = scmp.eq.s32.totalorder %s40, 0
    %p176 = por %p174, %p175
    %p177 = scmp.ne.s32.totalorder %s165, %s166
    %p178 = scmp.eq.s32.totalorder %s41, 1
    %p179 = por %p177, %p178
    %p181 = scmp.ne.s32.totalorder %s166, %s180
    %p182 = scmp.eq.s32.totalorder %s41, 0
    %p183 = por %p181, %p182
    %s185 = sadd.s32 %s184, 1
    %p188 = scmp.eq.s32.totalorder %s35, 1
    %p189 = scmp.ne.s32.totalorder %s184, %s186
    %p190 = scmp.eq.s32.totalorder %s35, 0
    %p191 = por %p189, %p190
    %p192 = scmp.ne.s32.totalorder %s184, %s186
    %p193 = scmp.eq.s32.totalorder %s40, 1
    %p194 = por %p192, %p193
    %p195 = scmp.ne.s32.totalorder %s186, %s187
    %p196 = scmp.eq.s32.totalorder %s40, 0
    %p197 = por %p195, %p196
    %p198 = scmp.ne.s32.totalorder %s186, %s187
    %p199 = scmp.eq.s32.totalorder %s41, 1
    %p200 = por %p198, %p199
    %p202 = scmp.ne.s32.totalorder %s187, %s201
    %p203 = scmp.eq.s32.totalorder %s41, 0
    %p204 = por %p202, %p203
    %s206 = sadd.s32 %s205, 1
    %p209 = scmp.eq.s32.totalorder %s35, 1
    %p210 = scmp.ne.s32.totalorder %s205, %s207
    %p211 = scmp.eq.s32.totalorder %s35, 0
    %p212 = por %p210, %p211
    %p213 = scmp.ne.s32.totalorder %s205, %s207
    %p214 = scmp.eq.s32.totalorder %s40, 1
    %p215 = por %p213, %p214
    %p216 = scmp.ne.s32.totalorder %s207, %s208
    %p217 = scmp.eq.s32.totalorder %s40, 0
    %p218 = por %p216, %p217
    %p219 = scmp.ne.s32.totalorder %s207, %s208
    %p220 = scmp.eq.s32.totalorder %s41, 1
    %p221 = por %p219, %p220
    %p223 = scmp.ne.s32.totalorder %s208, %s222
    %p224 = scmp.eq.s32.totalorder %s41, 0
    %p225 = por %p223, %p224
    %s227 = sadd.s32 %s226, 1
    %p230 = scmp.eq.s32.totalorder %s35, 1
    %p231 = scmp.ne.s32.totalorder %s226, %s228
    %p232 = scmp.eq.s32.totalorder %s35, 0
    %p233 = por %p231, %p232
    %p234 = scmp.ne.s32.totalorder %s226, %s228
    %p235 = scmp.eq.s32.totalorder %s40, 1
    %p236 = por %p234, %p235
    %p237 = scmp.ne.s32.totalorder %s228, %s229
    %p238 = scmp.eq.s32.totalorder %s40, 0
    %p239 = por %p237, %p238
    %p240 = scmp.ne.s32.totalorder %s228, %s229
    %p241 = scmp.eq.s32.totalorder %s41, 1
    %p242 = por %p240, %p241
    %p244 = scmp.ne.s32.totalorder %s229, %s243
    %p245 = scmp.eq.s32.totalorder %s41, 0
    %p246 = por %p244, %p245
    %s248 = sadd.s32 %s247, 1
    %p251 = scmp.eq.s32.totalorder %s35, 1
    %p252 = scmp.ne.s32.totalorder %s247, %s249
    %p253 = scmp.eq.s32.totalorder %s35, 0
    %p254 = por %p252, %p253
    %p255 = scmp.ne.s32.totalorder %s247, %s249
    %p256 = scmp.eq.s32.totalorder %s40, 1
    %p257 = por %p255, %p256
    %p258 = scmp.ne.s32.totalorder %s249, %s250
    %p259 = scmp.eq.s32.totalorder %s40, 0
    %p260 = por %p258, %p259
    %p261 = scmp.ne.s32.totalorder %s249, %s250
    %p262 = scmp.eq.s32.totalorder %s41, 1
    %p263 = por %p261, %p262
    %p265 = scmp.ne.s32.totalorder %s250, %s264
    %p266 = scmp.eq.s32.totalorder %s41, 0
    %p267 = por %p265, %p266
    %s269 = sadd.s32 %s268, 1
    %p272 = scmp.eq.s32.totalorder %s35, 1
    %p273 = scmp.ne.s32.totalorder %s268, %s270
    %p274 = scmp.eq.s32.totalorder %s35, 0
    %p275 = por %p273, %p274
    %p276 = scmp.ne.s32.totalorder %s268, %s270
    %p277 = scmp.eq.s32.totalorder %s40, 1
    %p278 = por %p276, %p277
    %p279 = scmp.ne.s32.totalorder %s270, %s271
    %p280 = scmp.eq.s32.totalorder %s40, 0
    %p281 = por %p279, %p280
    %p282 = scmp.ne.s32.totalorder %s270, %s271
    %p283 = scmp.eq.s32.totalorder %s41, 1
    %p284 = por %p282, %p283
    %p286 = scmp.ne.s32.totalorder %s271, %s285
    %p287 = scmp.eq.s32.totalorder %s41, 0
    %p288 = por %p286, %p287
    %s290 = sadd.s32 %s289, 1
    %p293 = scmp.eq.s32.totalorder %s35, 1
    %p294 = scmp.ne.s32.totalorder %s289, %s291
    %p295 = scmp.eq.s32.totalorder %s35, 0
    %p296 = por %p294, %p295
    %p297 = scmp.ne.s32.totalorder %s289, %s291
    %p298 = scmp.eq.s32.totalorder %s40, 1
    %p299 = por %p297, %p298
    %p300 = scmp.ne.s32.totalorder %s291, %s292
    %p301 = scmp.eq.s32.totalorder %s40, 0
    %p302 = por %p300, %p301
    %p303 = scmp.ne.s32.totalorder %s291, %s292
    %p304 = scmp.eq.s32.totalorder %s41, 1
    %p305 = por %p303, %p304
    %p307 = scmp.ne.s32.totalorder %s292, %s306
    %p308 = scmp.eq.s32.totalorder %s41, 0
    %p309 = por %p307, %p308
    %s311 = sadd.s32 %s310, 1
    %p314 = scmp.eq.s32.totalorder %s35, 1
    %p315 = scmp.ne.s32.totalorder %s310, %s312
    %p316 = scmp.eq.s32.totalorder %s35, 0
    %p317 = por %p315, %p316
    %p318 = scmp.ne.s32.totalorder %s310, %s312
    %p319 = scmp.eq.s32.totalorder %s40, 1
    %p320 = por %p318, %p319
    %p321 = scmp.ne.s32.totalorder %s312, %s313
    %p322 = scmp.eq.s32.totalorder %s40, 0
    %p323 = por %p321, %p322
    %p324 = scmp.ne.s32.totalorder %s312, %s313
    %p325 = scmp.eq.s32.totalorder %s41, 1
    %p326 = por %p324, %p325
    %p328 = scmp.ne.s32.totalorder %s313, %s327
    %p329 = scmp.eq.s32.totalorder %s41, 0
    %p330 = por %p328, %p329
    %s332 = sadd.s32 %s331, 1
    %p335 = scmp.eq.s32.totalorder %s35, 1
    %p336 = scmp.ne.s32.totalorder %s331, %s333
    %p337 = scmp.eq.s32.totalorder %s35, 0
    %p338 = por %p336, %p337
    %p339 = scmp.ne.s32.totalorder %s331, %s333
    %p340 = scmp.eq.s32.totalorder %s40, 1
    %p341 = por %p339, %p340
    %p342 = scmp.ne.s32.totalorder %s333, %s334
    %p343 = scmp.eq.s32.totalorder %s40, 0
    %p344 = por %p342, %p343
    %p345 = scmp.ne.s32.totalorder %s333, %s334
    %p346 = scmp.eq.s32.totalorder %s41, 1
    %p347 = por %p345, %p346
    %p349 = scmp.ne.s32.totalorder %s334, %s348
    %p350 = scmp.eq.s32.totalorder %s41, 0
    %p351 = por %p349, %p350
    %s353 = sadd.s32 %s352, 1
    %p356 = scmp.eq.s32.totalorder %s35, 1
    %p357 = scmp.ne.s32.totalorder %s352, %s354
    %p358 = scmp.eq.s32.totalorder %s35, 0
    %p359 = por %p357, %p358
    %p360 = scmp.ne.s32.totalorder %s352, %s354
    %p361 = scmp.eq.s32.totalorder %s40, 1
    %p362 = por %p360, %p361
    %p363 = scmp.ne.s32.totalorder %s354, %s355
    %p364 = scmp.eq.s32.totalorder %s40, 0
    %p365 = por %p363, %p364
    %p366 = scmp.ne.s32.totalorder %s354, %s355
    %p367 = scmp.eq.s32.totalorder %s41, 1
    %p368 = por %p366, %p367
    %p370 = scmp.ne.s32.totalorder %s355, %s369
    %p371 = scmp.eq.s32.totalorder %s41, 0
    %p372 = por %p370, %p371
    %s374 = sadd.s32 %s373, 1
    %p377 = scmp.eq.s32.totalorder %s35, 1
    %p378 = scmp.ne.s32.totalorder %s373, %s375
    %p379 = scmp.eq.s32.totalorder %s35, 0
    %p380 = por %p378, %p379
    %p381 = scmp.ne.s32.totalorder %s373, %s375
    %p382 = scmp.eq.s32.totalorder %s40, 1
    %p383 = por %p381, %p382
    %p384 = scmp.ne.s32.totalorder %s375, %s376
    %p385 = scmp.eq.s32.totalorder %s40, 0
    %p386 = por %p384, %p385
    %p387 = scmp.ne.s32.totalorder %s375, %s376
    %p388 = scmp.eq.s32.totalorder %s41, 1
    %p389 = por %p387, %p388
    %p391 = scmp.ne.s32.totalorder %s376, %s390
    %p392 = scmp.eq.s32.totalorder %s41, 0
    %p393 = por %p391, %p392
    %s395 = sadd.s32 %s394, 1
    %p398 = scmp.eq.s32.totalorder %s35, 1
    %p399 = scmp.ne.s32.totalorder %s394, %s396
    %p400 = scmp.eq.s32.totalorder %s35, 0
    %p401 = por %p399, %p400
    %p402 = scmp.ne.s32.totalorder %s394, %s396
    %p403 = scmp.eq.s32.totalorder %s40, 1
    %p404 = por %p402, %p403
    %p405 = scmp.ne.s32.totalorder %s396, %s397
    %p406 = scmp.eq.s32.totalorder %s40, 0
    %p407 = por %p405, %p406
    %p408 = scmp.ne.s32.totalorder %s396, %s397
    %p409 = scmp.eq.s32.totalorder %s41, 1
    %p410 = por %p408, %p409
    %p412 = scmp.ne.s32.totalorder %s397, %s411
    %p413 = scmp.eq.s32.totalorder %s41, 0
    %p414 = por %p412, %p413
    %s416 = sadd.s32 %s415, 1
    %p419 = scmp.eq.s32.totalorder %s35, 1
    %p420 = scmp.ne.s32.totalorder %s415, %s417
    %p421 = scmp.eq.s32.totalorder %s35, 0
    %p422 = por %p420, %p421
    %p423 = scmp.ne.s32.totalorder %s415, %s417
    %p424 = scmp.eq.s32.totalorder %s40, 1
    %p425 = por %p423, %p424
    %p426 = scmp.ne.s32.totalorder %s417, %s418
    %p427 = scmp.eq.s32.totalorder %s40, 0
    %p428 = por %p426, %p427
    %p429 = scmp.ne.s32.totalorder %s417, %s418
    %p430 = scmp.eq.s32.totalorder %s41, 1
    %p431 = por %p429, %p430
    %p433 = scmp.ne.s32.totalorder %s418, %s432
    %p434 = scmp.eq.s32.totalorder %s41, 0
    %p435 = por %p433, %p434
    %s437 = sadd.s32 %s436, 1
    %p440 = scmp.eq.s32.totalorder %s35, 1
    %p441 = scmp.ne.s32.totalorder %s436, %s438
    %p442 = scmp.eq.s32.totalorder %s35, 0
    %p443 = por %p441, %p442
    %p444 = scmp.ne.s32.totalorder %s436, %s438
    %p445 = scmp.eq.s32.totalorder %s40, 1
    %p446 = por %p444, %p445
    %p447 = scmp.ne.s32.totalorder %s438, %s439
    %p448 = scmp.eq.s32.totalorder %s40, 0
    %p449 = por %p447, %p448
    %p450 = scmp.ne.s32.totalorder %s438, %s439
    %p451 = scmp.eq.s32.totalorder %s41, 1
    %p452 = por %p450, %p451
    %p454 = scmp.ne.s32.totalorder %s439, %s453
    %p455 = scmp.eq.s32.totalorder %s41, 0
    %p456 = por %p454, %p455
    %s458 = sadd.s32 %s457, 1
    %p461 = scmp.eq.s32.totalorder %s35, 1
    %p462 = scmp.ne.s32.totalorder %s457, %s459
    %p463 = scmp.eq.s32.totalorder %s35, 0
    %p464 = por %p462, %p463
    %p465 = scmp.ne.s32.totalorder %s457, %s459
    %p466 = scmp.eq.s32.totalorder %s40, 1
    %p467 = por %p465, %p466
    %p468 = scmp.ne.s32.totalorder %s459, %s460
    %p469 = scmp.eq.s32.totalorder %s40, 0
    %p470 = por %p468, %p469
    %p471 = scmp.ne.s32.totalorder %s459, %s460
    %p472 = scmp.eq.s32.totalorder %s41, 1
    %p473 = por %p471, %p472
    %p475 = scmp.ne.s32.totalorder %s460, %s474
    %p476 = scmp.eq.s32.totalorder %s41, 0
    %p477 = por %p475, %p476
    %s479 = sadd.s32 %s478, 1
    %p482 = scmp.eq.s32.totalorder %s35, 1
    %p483 = scmp.ne.s32.totalorder %s478, %s480
    %p484 = scmp.eq.s32.totalorder %s35, 0
    %p485 = por %p483, %p484
    %p486 = scmp.ne.s32.totalorder %s478, %s480
    %p487 = scmp.eq.s32.totalorder %s40, 1
    %p488 = por %p486, %p487
    %p489 = scmp.ne.s32.totalorder %s480, %s481
    %p490 = scmp.eq.s32.totalorder %s40, 0
    %p491 = por %p489, %p490
    %p492 = scmp.ne.s32.totalorder %s480, %s481
    %p493 = scmp.eq.s32.totalorder %s41, 1
    %p494 = por %p492, %p493
    %p496 = scmp.ne.s32.totalorder %s481, %s495
    %p497 = scmp.eq.s32.totalorder %s41, 0
    %p498 = por %p496, %p497
    %s500 = sadd.s32 %s499, 1
    %p503 = scmp.eq.s32.totalorder %s35, 1
    %p504 = scmp.ne.s32.totalorder %s499, %s501
    %p505 = scmp.eq.s32.totalorder %s35, 0
    %p506 = por %p504, %p505
    %p507 = scmp.ne.s32.totalorder %s499, %s501
    %p508 = scmp.eq.s32.totalorder %s40, 1
    %p509 = por %p507, %p508
    %p510 = scmp.ne.s32.totalorder %s501, %s502
    %p511 = scmp.eq.s32.totalorder %s40, 0
    %p512 = por %p510, %p511
    %p513 = scmp.ne.s32.totalorder %s501, %s502
    %p514 = scmp.eq.s32.totalorder %s41, 1
    %p515 = por %p513, %p514
    %p517 = scmp.ne.s32.totalorder %s502, %s516
    %p518 = scmp.eq.s32.totalorder %s41, 0
    %p519 = por %p517, %p518
    %s521 = sadd.s32 %s520, 1
    %p524 = scmp.eq.s32.totalorder %s35, 1
    %p525 = scmp.ne.s32.totalorder %s520, %s522
    %p526 = scmp.eq.s32.totalorder %s35, 0
    %p527 = por %p525, %p526
    %p528 = scmp.ne.s32.totalorder %s520, %s522
    %p529 = scmp.eq.s32.totalorder %s40, 1
    %p530 = por %p528, %p529
    %p531 = scmp.ne.s32.totalorder %s522, %s523
    %p532 = scmp.eq.s32.totalorder %s40, 0
    %p533 = por %p531, %p532
    %p534 = scmp.ne.s32.totalorder %s522, %s523
    %p535 = scmp.eq.s32.totalorder %s41, 1
    %p536 = por %p534, %p535
    %p538 = scmp.ne.s32.totalorder %s523, %s537
    %p539 = scmp.eq.s32.totalorder %s41, 0
    %p540 = por %p538, %p539
    %s542 = sadd.s32 %s541, 1
    %p545 = scmp.eq.s32.totalorder %s35, 1
    %p546 = scmp.ne.s32.totalorder %s541, %s543
    %p547 = scmp.eq.s32.totalorder %s35, 0
    %p548 = por %p546, %p547
    %p549 = scmp.ne.s32.totalorder %s541, %s543
    %p550 = scmp.eq.s32.totalorder %s40, 1
    %p551 = por %p549, %p550
    %p552 = scmp.ne.s32.totalorder %s543, %s544
    %p553 = scmp.eq.s32.totalorder %s40, 0
    %p554 = por %p552, %p553
    %p555 = scmp.ne.s32.totalorder %s543, %s544
    %p556 = scmp.eq.s32.totalorder %s41, 1
    %p557 = por %p555, %p556
    %p559 = scmp.ne.s32.totalorder %s544, %s558
    %p560 = scmp.eq.s32.totalorder %s41, 0
    %p561 = por %p559, %p560
    %s563 = sadd.s32 %s562, 1
    %p566 = scmp.eq.s32.totalorder %s35, 1
    %p567 = scmp.ne.s32.totalorder %s562, %s564
    %p568 = scmp.eq.s32.totalorder %s35, 0
    %p569 = por %p567, %p568
    %p570 = scmp.ne.s32.totalorder %s562, %s564
    %p571 = scmp.eq.s32.totalorder %s40, 1
    %p572 = por %p570, %p571
    %p573 = scmp.ne.s32.totalorder %s564, %s565
    %p574 = scmp.eq.s32.totalorder %s40, 0
    %p575 = por %p573, %p574
    %p576 = scmp.ne.s32.totalorder %s564, %s565
    %p577 = scmp.eq.s32.totalorder %s41, 1
    %p578 = por %p576, %p577
    %p580 = scmp.ne.s32.totalorder %s565, %s579
    %p581 = scmp.eq.s32.totalorder %s41, 0
    %p582 = por %p580, %p581
    %s584 = sadd.s32 %s583, 1
    %p587 = scmp.eq.s32.totalorder %s35, 1
    %p588 = scmp.ne.s32.totalorder %s583, %s585
    %p589 = scmp.eq.s32.totalorder %s35, 0
    %p590 = por %p588, %p589
    %p591 = scmp.ne.s32.totalorder %s583, %s585
    %p592 = scmp.eq.s32.totalorder %s40, 1
    %p593 = por %p591, %p592
    %p594 = scmp.ne.s32.totalorder %s585, %s586
    %p595 = scmp.eq.s32.totalorder %s40, 0
    %p596 = por %p594, %p595
    %p597 = scmp.ne.s32.totalorder %s585, %s586
    %p598 = scmp.eq.s32.totalorder %s41, 1
    %p599 = por %p597, %p598
    %p601 = scmp.ne.s32.totalorder %s586, %s600
    %p602 = scmp.eq.s32.totalorder %s41, 0
    %p603 = por %p601, %p602
    %s605 = sadd.s32 %s604, 1
    %p608 = scmp.eq.s32.totalorder %s35, 1
    %p609 = scmp.ne.s32.totalorder %s604, %s606
    %p610 = scmp.eq.s32.totalorder %s35, 0
    %p611 = por %p609, %p610
    %p612 = scmp.ne.s32.totalorder %s604, %s606
    %p613 = scmp.eq.s32.totalorder %s40, 1
    %p614 = por %p612, %p613
    %p615 = scmp.ne.s32.totalorder %s606, %s607
    %p616 = scmp.eq.s32.totalorder %s40, 0
    %p617 = por %p615, %p616
    %p618 = scmp.ne.s32.totalorder %s606, %s607
    %p619 = scmp.eq.s32.totalorder %s41, 1
    %p620 = por %p618, %p619
    %p622 = scmp.ne.s32.totalorder %s607, %s621
    %p623 = scmp.eq.s32.totalorder %s41, 0
    %p624 = por %p622, %p623
    %s625 = ssub.s32 %s35, %s42
    %p626 = scmp.eq.s32.totalorder %s625, 0
    %s628 = sadd.s32 %s627, 1
    %s629 = scalar_select %p626, %s627, %s628
    %p632 = pneg %p626
    %p633 = scmp.eq.s32.totalorder %s35, 1
    %p634 = por %p632, %p633
    %p635 = scmp.ne.s32.totalorder %s627, %s630
    %p636 = scmp.eq.s32.totalorder %s35, 0
    %p637 = por %p635, %p636
    %p638 = scmp.ne.s32.totalorder %s627, %s630
    %p639 = scmp.eq.s32.totalorder %s40, 1
    %p640 = por %p638, %p639
    %p641 = scmp.ne.s32.totalorder %s630, %s631
    %p642 = scmp.eq.s32.totalorder %s40, 0
    %p643 = por %p641, %p642
    %p644 = scmp.ne.s32.totalorder %s630, %s631
    %p645 = scmp.eq.s32.totalorder %s41, 1
    %p646 = por %p644, %p645
    %p648 = scmp.ne.s32.totalorder %s631, %s647
    %p649 = scmp.eq.s32.totalorder %s41, 0
    %p650 = por %p648, %p649
    %s651 = ssub.s32 %s35, %s42
    %p652 = scmp.eq.s32.totalorder %s651, 0
    %s654 = sadd.s32 %s653, 1
    %s655 = scalar_select %p652, %s653, %s654
    %p658 = pneg %p652
    %p659 = scmp.eq.s32.totalorder %s35, 1
    %p660 = por %p658, %p659
    %p661 = scmp.ne.s32.totalorder %s653, %s656
    %p662 = scmp.eq.s32.totalorder %s35, 0
    %p663 = por %p661, %p662
    %p664 = scmp.ne.s32.totalorder %s653, %s656
    %p665 = scmp.eq.s32.totalorder %s40, 1
    %p666 = por %p664, %p665
    %p667 = scmp.ne.s32.totalorder %s656, %s657
    %p668 = scmp.eq.s32.totalorder %s40, 0
    %p669 = por %p667, %p668
    %p670 = scmp.ne.s32.totalorder %s656, %s657
    %p671 = scmp.eq.s32.totalorder %s41, 1
    %p672 = por %p670, %p671
    %p674 = scmp.ne.s32.totalorder %s657, %s673
    %p675 = scmp.eq.s32.totalorder %s41, 0
    %p676 = por %p674, %p675
    %p677 = scmp.le.s32.totalorder 1, %s35
    %p678 = scmp.lt.s32.totalorder %s35, 3
    %p679 = pnand %p677, %p678
    %p680 = pneg %p679
    // Predicated region
    $region9: #{fastspeech2_forward.3} parent=5 // pred_check
      _
    $region10: #{fastspeech2_forward.3} parent=5 // pred_check_branch
      %682 = sbr.rel (%p679) target = $region12
    $region11: #{fastspeech2_forward.3} parent=5 // pred_region
      %s683 = ssub.s32 %s35, 1
      // Predicated region
      $region13: #{fastspeech2_forward.3} parent=11 // pred_check
        %p684 = pneg %p134
      $region14: #{fastspeech2_forward.3} parent=11 // pred_check_branch
        %686 = sbr.rel (%p684) target = $region16
      $region15: #{fastspeech2_forward.3} parent=11 // pred_region
        _
      $region16: #{fastspeech2_forward.3} parent=11 // pred_fallthru
        _
      // Predicated region
      $region17: #{fastspeech2_forward.3} parent=11 // pred_check
        %p687 = pneg %p155
      $region18: #{fastspeech2_forward.3} parent=11 // pred_check_branch
        %689 = sbr.rel (%p687) target = $region20
      $region19: #{fastspeech2_forward.3} parent=11 // pred_region
        _
      $region20: #{fastspeech2_forward.3} parent=11 // pred_fallthru
        _
      // Predicated region
      $region21: #{fastspeech2_forward.3} parent=11 // pred_check
        %p690 = pneg %p176
      $region22: #{fastspeech2_forward.3} parent=11 // pred_check_branch
        %692 = sbr.rel (%p690) target = $region24
      $region23: #{fastspeech2_forward.3} parent=11 // pred_region
        _
      $region24: #{fastspeech2_forward.3} parent=11 // pred_fallthru
        _
      // Predicated region
      $region25: #{fastspeech2_forward.3} parent=11 // pred_check
        %p693 = pneg %p197
      $region26: #{fastspeech2_forward.3} parent=11 // pred_check_branch
        %695 = sbr.rel (%p693) target = $region28
      $region27: #{fastspeech2_forward.3} parent=11 // pred_region
        _
      $region28: #{fastspeech2_forward.3} parent=11 // pred_fallthru
        _
      // Predicated region
      $region29: #{fastspeech2_forward.3} parent=11 // pred_check
        %p696 = pneg %p218
      $region30: #{fastspeech2_forward.3} parent=11 // pred_check_branch
        %698 = sbr.rel (%p696) target = $region32
      $region31: #{fastspeech2_forward.3} parent=11 // pred_region
        _
      $region32: #{fastspeech2_forward.3} parent=11 // pred_fallthru
        _
      // Predicated region
      $region33: #{fastspeech2_forward.3} parent=11 // pred_check
        %p699 = pneg %p239
      $region34: #{fastspeech2_forward.3} parent=11 // pred_check_branch
        %701 = sbr.rel (%p699) target = $region36
      $region35: #{fastspeech2_forward.3} parent=11 // pred_region
        _
      $region36: #{fastspeech2_forward.3} parent=11 // pred_fallthru
        _
      // Predicated region
      $region37: #{fastspeech2_forward.3} parent=11 // pred_check
        %p702 = pneg %p260
      $region38: #{fastspeech2_forward.3} parent=11 // pred_check_branch
        %704 = sbr.rel (%p702) target = $region40
      $region39: #{fastspeech2_forward.3} parent=11 // pred_region
        _
      $region40: #{fastspeech2_forward.3} parent=11 // pred_fallthru
        _
      // Predicated region
      $region41: #{fastspeech2_forward.3} parent=11 // pred_check
        %p705 = pneg %p281
      $region42: #{fastspeech2_forward.3} parent=11 // pred_check_branch
        %707 = sbr.rel (%p705) target = $region44
      $region43: #{fastspeech2_forward.3} parent=11 // pred_region
        _
      $region44: #{fastspeech2_forward.3} parent=11 // pred_fallthru
        _
      // Predicated region
      $region45: #{fastspeech2_forward.3} parent=11 // pred_check
        %p708 = pneg %p302
      $region46: #{fastspeech2_forward.3} parent=11 // pred_check_branch
        %710 = sbr.rel (%p708) target = $region48
      $region47: #{fastspeech2_forward.3} parent=11 // pred_region
        _
      $region48: #{fastspeech2_forward.3} parent=11 // pred_fallthru
        _
      // Predicated region
      $region49: #{fastspeech2_forward.3} parent=11 // pred_check
        %p711 = pneg %p323
      $region50: #{fastspeech2_forward.3} parent=11 // pred_check_branch
        %713 = sbr.rel (%p711) target = $region52
      $region51: #{fastspeech2_forward.3} parent=11 // pred_region
        _
      $region52: #{fastspeech2_forward.3} parent=11 // pred_fallthru
        _
      // Predicated region
      $region53: #{fastspeech2_forward.3} parent=11 // pred_check
        %p714 = pneg %p344
      $region54: #{fastspeech2_forward.3} parent=11 // pred_check_branch
        %716 = sbr.rel (%p714) target = $region56
      $region55: #{fastspeech2_forward.3} parent=11 // pred_region
        _
      $region56: #{fastspeech2_forward.3} parent=11 // pred_fallthru
        _
      // Predicated region
      $region57: #{fastspeech2_forward.3} parent=11 // pred_check
        %p717 = pneg %p365
      $region58: #{fastspeech2_forward.3} parent=11 // pred_check_branch
        %719 = sbr.rel (%p717) target = $region60
      $region59: #{fastspeech2_forward.3} parent=11 // pred_region
        _
      $region60: #{fastspeech2_forward.3} parent=11 // pred_fallthru
        _
      // Predicated region
      $region61: #{fastspeech2_forward.3} parent=11 // pred_check
        %p720 = pneg %p386
      $region62: #{fastspeech2_forward.3} parent=11 // pred_check_branch
        %722 = sbr.rel (%p720) target = $region64
      $region63: #{fastspeech2_forward.3} parent=11 // pred_region
        _
      $region64: #{fastspeech2_forward.3} parent=11 // pred_fallthru
        _
      // Predicated region
      $region65: #{fastspeech2_forward.3} parent=11 // pred_check
        %p723 = pneg %p407
      $region66: #{fastspeech2_forward.3} parent=11 // pred_check_branch
        %725 = sbr.rel (%p723) target = $region68
      $region67: #{fastspeech2_forward.3} parent=11 // pred_region
        _
      $region68: #{fastspeech2_forward.3} parent=11 // pred_fallthru
        _
      // Predicated region
      $region69: #{fastspeech2_forward.3} parent=11 // pred_check
        %p726 = pneg %p428
      $region70: #{fastspeech2_forward.3} parent=11 // pred_check_branch
        %728 = sbr.rel (%p726) target = $region72
      $region71: #{fastspeech2_forward.3} parent=11 // pred_region
        _
      $region72: #{fastspeech2_forward.3} parent=11 // pred_fallthru
        _
      // Predicated region
      $region73: #{fastspeech2_forward.3} parent=11 // pred_check
        %p729 = pneg %p449
      $region74: #{fastspeech2_forward.3} parent=11 // pred_check_branch
        %731 = sbr.rel (%p729) target = $region76
      $region75: #{fastspeech2_forward.3} parent=11 // pred_region
        _
      $region76: #{fastspeech2_forward.3} parent=11 // pred_fallthru
        _
      // Predicated region
      $region77: #{fastspeech2_forward.3} parent=11 // pred_check
        %p732 = pneg %p470
      $region78: #{fastspeech2_forward.3} parent=11 // pred_check_branch
        %734 = sbr.rel (%p732) target = $region80
      $region79: #{fastspeech2_forward.3} parent=11 // pred_region
        _
      $region80: #{fastspeech2_forward.3} parent=11 // pred_fallthru
        _
      // Predicated region
      $region81: #{fastspeech2_forward.3} parent=11 // pred_check
        %p735 = pneg %p491
      $region82: #{fastspeech2_forward.3} parent=11 // pred_check_branch
        %737 = sbr.rel (%p735) target = $region84
      $region83: #{fastspeech2_forward.3} parent=11 // pred_region
        _
      $region84: #{fastspeech2_forward.3} parent=11 // pred_fallthru
        _
      // Predicated region
      $region85: #{fastspeech2_forward.3} parent=11 // pred_check
        %p738 = pneg %p512
      $region86: #{fastspeech2_forward.3} parent=11 // pred_check_branch
        %740 = sbr.rel (%p738) target = $region88
      $region87: #{fastspeech2_forward.3} parent=11 // pred_region
        _
      $region88: #{fastspeech2_forward.3} parent=11 // pred_fallthru
        _
      // Predicated region
      $region89: #{fastspeech2_forward.3} parent=11 // pred_check
        %p741 = pneg %p533
      $region90: #{fastspeech2_forward.3} parent=11 // pred_check_branch
        %743 = sbr.rel (%p741) target = $region92
      $region91: #{fastspeech2_forward.3} parent=11 // pred_region
        _
      $region92: #{fastspeech2_forward.3} parent=11 // pred_fallthru
        _
      // Predicated region
      $region93: #{fastspeech2_forward.3} parent=11 // pred_check
        %p744 = pneg %p554
      $region94: #{fastspeech2_forward.3} parent=11 // pred_check_branch
        %746 = sbr.rel (%p744) target = $region96
      $region95: #{fastspeech2_forward.3} parent=11 // pred_region
        _
      $region96: #{fastspeech2_forward.3} parent=11 // pred_fallthru
        _
      // Predicated region
      $region97: #{fastspeech2_forward.3} parent=11 // pred_check
        %p747 = pneg %p575
      $region98: #{fastspeech2_forward.3} parent=11 // pred_check_branch
        %749 = sbr.rel (%p747) target = $region100
      $region99: #{fastspeech2_forward.3} parent=11 // pred_region
        _
      $region100: #{fastspeech2_forward.3} parent=11 // pred_fallthru
        _
      // Predicated region
      $region101: #{fastspeech2_forward.3} parent=11 // pred_check
        %p750 = pneg %p596
      $region102: #{fastspeech2_forward.3} parent=11 // pred_check_branch
        %752 = sbr.rel (%p750) target = $region104
      $region103: #{fastspeech2_forward.3} parent=11 // pred_region
        _
      $region104: #{fastspeech2_forward.3} parent=11 // pred_fallthru
        _
      // Predicated region
      $region105: #{fastspeech2_forward.3} parent=11 // pred_check
        %p753 = pneg %p617
      $region106: #{fastspeech2_forward.3} parent=11 // pred_check_branch
        %755 = sbr.rel (%p753) target = $region108
      $region107: #{fastspeech2_forward.3} parent=11 // pred_region
        _
      $region108: #{fastspeech2_forward.3} parent=11 // pred_fallthru
        _
    $region12: #{fastspeech2_forward.3} parent=5 // pred_fallthru
      _
    %p756 = scmp.lt.s32.totalorder %s35, 2
    // Predicated region
    $region109: #{fastspeech2_forward.3} parent=5 // pred_check
      %p757 = pneg %p756
    $region110: #{fastspeech2_forward.3} parent=5 // pred_check_branch
      %759 = sbr.rel (%p757) target = $region112
    $region111: #{fastspeech2_forward.3} parent=5 // pred_region
      // Predicated region
      $region113: #{fastspeech2_forward.3} parent=111 // pred_check
        %p760 = pneg %p55
      $region114: #{fastspeech2_forward.3} parent=111 // pred_check_branch
        %762 = sbr.rel (%p760) target = $region116
      $region115: #{fastspeech2_forward.3} parent=111 // pred_region
        %p763 = scmp.lt.s32.totalorder %s35, 1
        %s764 = scalar_select %p763, %s35, 1
        %s765 = smul.addr %s764, 4
        %s766 = smul.addr %s765, 8
        %s767 = scalar_lea.vmem %s0, %s766
      $region116: #{fastspeech2_forward.3} parent=111 // pred_fallthru
        _
      // Predicated region
      $region117: #{fastspeech2_forward.3} parent=111 // pred_check
        %p768 = pneg %p81
      $region118: #{fastspeech2_forward.3} parent=111 // pred_check_branch
        %770 = sbr.rel (%p768) target = $region120
      $region119: #{fastspeech2_forward.3} parent=111 // pred_region
        %p771 = scmp.lt.s32.totalorder %s35, 1
        %s772 = scalar_select %p771, %s35, 1
        %s773 = scalar_lea.vmem %s1, %s772
      $region120: #{fastspeech2_forward.3} parent=111 // pred_fallthru
        _
      // Predicated region
      $region121: #{fastspeech2_forward.3} parent=111 // pred_check
        %p774 = pneg %p107
      $region122: #{fastspeech2_forward.3} parent=111 // pred_check_branch
        %776 = sbr.rel (%p774) target = $region124
      $region123: #{fastspeech2_forward.3} parent=111 // pred_region
        %p777 = scmp.lt.s32.totalorder %s35, 1
        %s778 = scalar_select %p777, %s35, 1
        %s779 = smul.addr %s778, 4
        %s780 = smul.addr %s779, 8
        %s781 = scalar_lea.vmem %s2, %s780
      $region124: #{fastspeech2_forward.3} parent=111 // pred_fallthru
        _
    $region112: #{fastspeech2_forward.3} parent=5 // pred_fallthru
      _
    %p782 = scmp.le.s32.totalorder 1, %s35
    %p783 = scmp.lt.s32.totalorder %s35, 3
    %p784 = pnand %p782, %p783
    %p785 = pneg %p784
    // Predicated region
    $region125: #{fastspeech2_forward.3} parent=5 // pred_check
      _
    $region126: #{fastspeech2_forward.3} parent=5 // pred_check_branch
      %787 = sbr.rel (%p784) target = $region128
    $region127: #{fastspeech2_forward.3} parent=5 // pred_region
      %s788 = ssub.s32 %s35, 1
      %p789 = scmp.lt.s32.totalorder %s40, 1
      %s790 = scalar_select %p789, %s40, 1
      %s791 = smul.addr %s790, 4
      %s792 = smul.addr %s791, 8
      %s793 = scalar_lea.vmem %s0, %s792
      %p794 = pneg %p61
      %p795 = pneg %p58
      %p796 = scmp.lt.s32.totalorder %s40, 1
      %s797 = scalar_select %p796, %s40, 1
      %s798 = scalar_lea.vmem %s1, %s797
      %p799 = pneg %p87
      %p800 = pneg %p84
      %p801 = scmp.lt.s32.totalorder %s40, 1
      %s802 = scalar_select %p801, %s40, 1
      %s803 = smul.addr %s802, 4
      %s804 = smul.addr %s803, 8
      %s805 = scalar_lea.vmem %s2, %s804
      %p806 = pneg %p113
      %p807 = pneg %p110
      %p808 = pneg %p134
      %p809 = pneg %p131
      %p810 = pneg %p155
      %p811 = pneg %p152
      %p812 = pneg %p176
      %p813 = pneg %p173
      %p814 = pneg %p197
      %p815 = pneg %p194
      %p816 = pneg %p218
      %p817 = pneg %p215
      %p818 = pneg %p239
      %p819 = pneg %p236
      %p820 = pneg %p260
      %p821 = pneg %p257
      %p822 = pneg %p281
      %p823 = pneg %p278
      %p824 = pneg %p302
      %p825 = pneg %p299
      %p826 = pneg %p323
      %p827 = pneg %p320
      %p828 = pneg %p344
      %p829 = pneg %p341
      %p830 = pneg %p365
      %p831 = pneg %p362
      %p832 = pneg %p386
      %p833 = pneg %p383
      %p834 = pneg %p407
      %p835 = pneg %p404
      %p836 = pneg %p428
      %p837 = pneg %p425
      %p838 = pneg %p449
      %p839 = pneg %p446
      %p840 = pneg %p470
      %p841 = pneg %p467
      %p842 = pneg %p491
      %p843 = pneg %p488
      %p844 = pneg %p512
      %p845 = pneg %p509
      %p846 = pneg %p533
      %p847 = pneg %p530
      %p848 = pneg %p554
      %p849 = pneg %p551
      %p850 = pneg %p575
      %p851 = pneg %p572
      %p852 = pneg %p596
      %p853 = pneg %p593
      %p854 = pneg %p617
      %p855 = pneg %p614
      %p856 = pneg %p643
      %p857 = pneg %p640
      %p858 = scmp.lt.s32.totalorder %s40, 1
      %s859 = scalar_select %p858, %s40, 1
      %s860 = smul.addr %s859, 4
      %s861 = smul.addr %s860, 8
      %s862 = scalar_lea.vmem %s27, %s861
      %p863 = pneg %p669
      %p864 = pneg %p666
      %p865 = scmp.lt.s32.totalorder %s40, 1
      %s866 = scalar_select %p865, %s40, 1
      %s867 = smul.addr %s866, 4
      %s868 = smul.addr %s867, 8
      %s869 = scalar_lea.vmem %s28, %s868
      %p870 = scmp.lt.s32.totalorder %s40, 1
      %s871 = scalar_select %p870, %s40, 1
      %s872 = smul.addr %s871, 4
      %s873 = smul.addr %s872, 8
      %s874 = scalar_lea.vmem %s0, %s873
      %p875 = scmp.lt.s32.totalorder %s40, 1
      %s876 = scalar_select %p875, %s40, 1
      %s877 = scalar_lea.vmem %s1, %s876
      %p878 = scmp.lt.s32.totalorder %s40, 1
      %s879 = scalar_select %p878, %s40, 1
      %s880 = smul.addr %s879, 4
      %s881 = smul.addr %s880, 8
      %s882 = scalar_lea.vmem %s2, %s881
      %p883 = scmp.lt.s32.totalorder %s40, 1
      %s884 = scalar_select %p883, %s40, 1
      %s885 = smul.addr %s884, 4
      %s886 = smul.addr %s885, 8
      %s887 = scalar_lea.vmem %s27, %s886
      %p888 = scmp.lt.s32.totalorder %s40, 1
      %s889 = scalar_select %p888, %s40, 1
      %s890 = smul.addr %s889, 4
      %s891 = smul.addr %s890, 8
      %s892 = scalar_lea.vmem %s28, %s891
      %v893 = vld [vmem:[%s874] sm:$0xff]
      %v894 = vld [vmem:[%s874 + $0x8] sm:$0xff]
      %v895 = vld [vmem:[%s874 + $0x10] sm:$0xff]
      %v896 = vld [vmem:[%s874 + $0x18] sm:$0xff]
      %v897 = vld [vmem:[%s877] sm:$0x1]
      %v898 = vld [vmem:[%s882] sm:$0xff]
      %v899 = vld [vmem:[%s882 + $0x8] sm:$0xff]
      %v900 = vld [vmem:[%s882 + $0x10] sm:$0xff]
      %v901 = vld [vmem:[%s882 + $0x18] sm:$0xff]
      %v902 = vld [vmem:[%s17] sm:$0xff]
      %v903 = vld [vmem:[%s17 + $0x8] sm:$0xff]
      %v904 = vld [vmem:[%s17 + $0x10] sm:$0xff]
      %v905 = vld [vmem:[%s17 + $0x18] sm:$0xff]
      %v906 = vld [vmem:[%s5] sm:$0x1]
      %v908 = vperm.slane %v906, 0
      %vm910 = vcmask 261120
      %v912 = vsel %vm910, %v893, 0
      %v915 = vsel %vm910, %v894, 0
      %v918 = vsel %vm910, %v895, 0
      %v921 = vsel %vm910, %v896, 0
      %923 = vmatpush.msra.mxu0 0.0
      %924 = vmatpush.msra.mxu0 0.0
      %925 = vmatpush.msra.mxu0 0.0
      %926 = vmatpush.msra.mxu0 0.0
      %927 = vmatpush.msra.mxu0 0.0
      %928 = vmatpush.msra.mxu0 0.0
      %929 = vmatpush.msra.mxu0 0.0
      %930 = vmatpush.msra.mxu0 0.0
      %931 = vmatpush.msra.mxu0 0.0
      %932 = vmatpush.msra.mxu0 0.0
      %933 = vmatpush.msra.mxu0 0.0
      %934 = vmatpush.msra.mxu0 0.0
      %935 = vmatpush.msra.mxu0 %v905
      %936 = vmatpush.msra.mxu0 %v904
      %937 = vmatpush.msra.mxu0 %v903
      %938 = vmatpush.msra.mxu0 %v902
      %939 = vmatmul.f32.gmra.mxu0 %v912
      %v940 = vpop.f32.mrf.mxu0
      %v941 = vadd.f32 %v908, %v940
      %942 = vmatmul.f32.gmra.mxu0 %v915
      %v943 = vpop.f32.mrf.mxu0
      %v944 = vadd.f32 %v908, %v943
      %945 = vmatmul.f32.gmra.mxu0 %v918
      %v946 = vpop.f32.mrf.mxu0
      %v947 = vadd.f32 %v908, %v946
      %948 = vmatmul.f32.gmra.mxu0 %v921
      %v949 = vpop.f32.mrf.mxu0
      %v950 = vadd.f32 %v908, %v949
      %951 = vdwg.mxu0
      %v952 = vld [vmem:[%s15] sm:$0xff]
      %v953 = vld [vmem:[%s15 + $0x8] sm:$0xff]
      %v954 = vld [vmem:[%s15 + $0x10] sm:$0xff]
      %v955 = vld [vmem:[%s15 + $0x18] sm:$0xff]
      %v956 = vld [vmem:[%s3] sm:$0x1]
      %v958 = vperm.slane %v956, 0
      %960 = vmatpush.msra.mxu0 0.0
      %961 = vmatpush.msra.mxu0 0.0
      %962 = vmatpush.msra.mxu0 0.0
      %963 = vmatpush.msra.mxu0 0.0
      %964 = vmatpush.msra.mxu0 0.0
      %965 = vmatpush.msra.mxu0 0.0
      %966 = vmatpush.msra.mxu0 0.0
      %967 = vmatpush.msra.mxu0 0.0
      %968 = vmatpush.msra.mxu0 0.0
      %969 = vmatpush.msra.mxu0 0.0
      %970 = vmatpush.msra.mxu0 0.0
      %971 = vmatpush.msra.mxu0 0.0
      %972 = vmatpush.msra.mxu0 %v955
      %973 = vmatpush.msra.mxu0 %v954
      %974 = vmatpush.msra.mxu0 %v953
      %975 = vmatpush.msra.mxu0 %v952
      %976 = vmatmul.f32.gmra.mxu0 %v912
      %v977 = vpop.f32.mrf.mxu0
      %v978 = vadd.f32 %v958, %v977
      %979 = vmatmul.f32.gmra.mxu0 %v915
      %v980 = vpop.f32.mrf.mxu0
      %v981 = vadd.f32 %v958, %v980
      %982 = vmatmul.f32.gmra.mxu0 %v918
      %v983 = vpop.f32.mrf.mxu0
      %v984 = vadd.f32 %v958, %v983
      %985 = vmatmul.f32.gmra.mxu0 %v921
      %v986 = vpop.f32.mrf.mxu0
      %v987 = vadd.f32 %v958, %v986
      %988 = vdwg.mxu0
      %v989 = vld [vmem:[%s18] sm:$0xff]
      %v990 = vld [vmem:[%s18 + $0x8] sm:$0xff]
      %v991 = vld [vmem:[%s18 + $0x10] sm:$0xff]
      %v992 = vld [vmem:[%s18 + $0x18] sm:$0xff]
      %v993 = vld [vmem:[%s6] sm:$0x1]
      %v995 = vperm.slane %v993, 0
      %997 = vmatpush.msra.mxu0 0.0
      %998 = vmatpush.msra.mxu0 0.0
      %999 = vmatpush.msra.mxu0 0.0
      %1000 = vmatpush.msra.mxu0 0.0
      %1001 = vmatpush.msra.mxu0 0.0
      %1002 = vmatpush.msra.mxu0 0.0
      %1003 = vmatpush.msra.mxu0 0.0
      %1004 = vmatpush.msra.mxu0 0.0
      %1005 = vmatpush.msra.mxu0 0.0
      %1006 = vmatpush.msra.mxu0 0.0
      %1007 = vmatpush.msra.mxu0 0.0
      %1008 = vmatpush.msra.mxu0 0.0
      %1009 = vmatpush.msra.mxu0 %v992
      %1010 = vmatpush.msra.mxu0 %v991
      %1011 = vmatpush.msra.mxu0 %v990
      %1012 = vmatpush.msra.mxu0 %v989
      %1013 = vmatmul.f32.gmra.mxu0 %v912
      %v1014 = vpop.f32.mrf.mxu0
      %v1015 = vadd.f32 %v995, %v1014
      %1016 = vmatmul.f32.gmra.mxu0 %v915
      %v1017 = vpop.f32.mrf.mxu0
      %v1018 = vadd.f32 %v995, %v1017
      %1019 = vmatmul.f32.gmra.mxu0 %v918
      %v1020 = vpop.f32.mrf.mxu0
      %v1021 = vadd.f32 %v995, %v1020
      %1022 = vmatmul.f32.gmra.mxu0 %v921
      %v1023 = vpop.f32.mrf.mxu0
      %v1024 = vadd.f32 %v995, %v1023
      %1025 = vdwg.mxu0
      %v1026 = vld [vmem:[%s16] sm:$0xff]
      %v1027 = vld [vmem:[%s16 + $0x8] sm:$0xff]
      %v1028 = vld [vmem:[%s16 + $0x10] sm:$0xff]
      %v1029 = vld [vmem:[%s16 + $0x18] sm:$0xff]
      %v1030 = vld [vmem:[%s4] sm:$0x1]
      %vm1031 = vcmask 130048
      %v1033 = vsel %vm1031, %v941, 0
      %v1036 = vsel %vm1031, %v944, 0
      %v1039 = vsel %vm1031, %v947, 0
      %v1042 = vsel %vm1031, %v950, 0
      %v1045 = vsel %vm1031, %v978, 0
      %v1048 = vsel %vm1031, %v981, 0
      %v1051 = vsel %vm1031, %v984, 0
      %v1054 = vsel %vm1031, %v987, 0
      %1056 = vmatpush.xpose.msra.mxu0 0.0
      %1057 = vmatpush.xpose.msra.mxu0 0.0
      %1058 = vmatpush.xpose.msra.mxu0 0.0
      %1059 = vmatpush.xpose.msra.mxu0 0.0
      %1060 = vmatpush.xpose.msra.mxu0 0.0
      %1061 = vmatpush.xpose.msra.mxu0 0.0
      %1062 = vmatpush.xpose.msra.mxu0 0.0
      %1063 = vmatpush.xpose.msra.mxu0 0.0
      %1064 = vmatpush.xpose.msra.mxu0 0.0
      %1065 = vmatpush.xpose.msra.mxu0 0.0
      %1066 = vmatpush.xpose.msra.mxu0 0.0
      %1067 = vmatpush.xpose.msra.mxu0 0.0
      %1068 = vmatpush.xpose.msra.mxu0 %v1054
      %1069 = vmatpush.xpose.msra.mxu0 %v1051
      %1070 = vmatpush.xpose.msra.mxu0 %v1048
      %1071 = vmatpush.xpose.msra.mxu0 %v1045
      %1072 = vmatmul.f32.gmra.mxu0 %v1033
      %v1073 = vpop.f32.mrf.mxu0
      %v1074 = vadd.f32 0.0, %v1073
      %1075 = vmatmul.f32.gmra.mxu0 %v1036
      %v1076 = vpop.f32.mrf.mxu0
      %v1077 = vadd.f32 0.0, %v1076
      %1078 = vmatmul.f32.gmra.mxu0 %v1039
      %v1079 = vpop.f32.mrf.mxu0
      %v1080 = vadd.f32 0.0, %v1079
      %1081 = vmatmul.f32.gmra.mxu0 %v1042
      %v1082 = vpop.f32.mrf.mxu0
      %v1083 = vadd.f32 0.0, %v1082
      %1084 = vdwg.mxu0
      %v1085 = vmul.f32 %v1074, 0.25
      %v1086 = vmul.f32 %v1077, 0.25
      %v1087 = vmul.f32 %v1080, 0.25
      %v1088 = vmul.f32 %v1083, 0.25
      %v1090 = vperm.slane %v897, 0
      %v1092 = vadd.f32 %v1085, %v1090
      %v1093 = vadd.f32 %v1086, %v1090
      %v1094 = vadd.f32 %v1087, %v1090
      %v1095 = vadd.f32 %v1088, %v1090
      %v1096 = vsel %vm910, %v1092, -inf
      %1097 = vmax.xlane.f32.xlu0 %v1096
      %v1098 = vpop.xlane.xlu0 %1097
      %v1099 = vsel %vm910, %v1093, -inf
      %1100 = vmax.xlane.f32.xlu0 %v1099
      %v1101 = vpop.xlane.xlu0 %1100
      %v1102 = vsel %vm910, %v1094, -inf
      %1103 = vmax.xlane.f32.xlu0 %v1102
      %v1104 = vpop.xlane.xlu0 %1103
      %v1105 = vsel %vm910, %v1095, -inf
      %1106 = vmax.xlane.f32.xlu0 %v1105
      %v1107 = vpop.xlane.xlu0 %1106
      %v1108 = vsub.f32 %v1092, %v1098
      %v1109 = vsub.f32 %v1093, %v1101
      %v1110 = vsub.f32 %v1094, %v1104
      %v1111 = vsub.f32 %v1095, %v1107
      %v1112 = vmul.f32 %v1108, 1.442695
      %v1113 = vpow.pop %v1112
      %v1114 = vmul.f32 %v1109, 1.442695
      %v1115 = vpow.pop %v1114
      %v1116 = vmul.f32 %v1110, 1.442695
      %v1117 = vpow.pop %v1116
      %v1118 = vmul.f32 %v1111, 1.442695
      %v1119 = vpow.pop %v1118
      %v1120 = vsel %vm910, %v1113, 0.0
      %1121 = vadd.xlane.f32.xlu0 %v1120
      %v1122 = vpop.xlane.xlu0 %1121
      %v1123 = vsel %vm910, %v1115, 0.0
      %1124 = vadd.xlane.f32.xlu0 %v1123
      %v1125 = vpop.xlane.xlu0 %1124
      %v1126 = vsel %vm910, %v1117, 0.0
      %1127 = vadd.xlane.f32.xlu0 %v1126
      %v1128 = vpop.xlane.xlu0 %1127
      %v1129 = vsel %vm910, %v1119, 0.0
      %1130 = vadd.xlane.f32.xlu0 %v1129
      %v1131 = vpop.xlane.xlu0 %1130
      %v1132 = vrcp.pop %v1122
      %v1133 = vrcp.pop %v1125
      %v1134 = vrcp.pop %v1128
      %v1135 = vrcp.pop %v1131
      %v1136 = vmul.f32 %v1113, %v1132
      %v1137 = vmul.f32 %v1115, %v1133
      %v1138 = vmul.f32 %v1117, %v1134
      %v1139 = vmul.f32 %v1119, %v1135
      %v1141 = vsel %vm910, %v1136, 0
      %v1144 = vsel %vm910, %v1137, 0
      %v1147 = vsel %vm910, %v1138, 0
      %v1150 = vsel %vm910, %v1139, 0
      %1152 = vmatpush.msra.mxu0 0.0
      %1153 = vmatpush.msra.mxu0 0.0
      %1154 = vmatpush.msra.mxu0 0.0
      %1155 = vmatpush.msra.mxu0 0.0
      %1156 = vmatpush.msra.mxu0 0.0
      %1157 = vmatpush.msra.mxu0 0.0
      %1158 = vmatpush.msra.mxu0 0.0
      %1159 = vmatpush.msra.mxu0 0.0
      %1160 = vmatpush.msra.mxu0 0.0
      %1161 = vmatpush.msra.mxu0 0.0
      %1162 = vmatpush.msra.mxu0 0.0
      %1163 = vmatpush.msra.mxu0 0.0
      %1164 = vmatpush.msra.mxu0 %v1024
      %1165 = vmatpush.msra.mxu0 %v1021
      %1166 = vmatpush.msra.mxu0 %v1018
      %1167 = vmatpush.msra.mxu0 %v1015
      %1168 = vmatmul.f32.gmra.mxu0 %v1141
      %v1169 = vpop.f32.mrf.mxu0
      %v1170 = vadd.f32 0.0, %v1169
      %1171 = vmatmul.f32.gmra.mxu0 %v1144
      %v1172 = vpop.f32.mrf.mxu0
      %v1173 = vadd.f32 0.0, %v1172
      %1174 = vmatmul.f32.gmra.mxu0 %v1147
      %v1175 = vpop.f32.mrf.mxu0
      %v1176 = vadd.f32 0.0, %v1175
      %1177 = vmatmul.f32.gmra.mxu0 %v1150
      %v1178 = vpop.f32.mrf.mxu0
      %v1179 = vadd.f32 0.0, %v1178
      %1180 = vdwg.mxu0
      %v1182 = vsel %vm1031, %v1170, 0
      %v1185 = vsel %vm1031, %v1173, 0
      %v1188 = vsel %vm1031, %v1176, 0
      %v1191 = vsel %vm1031, %v1179, 0
      %1193 = vmatpush.msra.mxu0 0.0
      %1194 = vmatpush.msra.mxu0 0.0
      %1195 = vmatpush.msra.mxu0 0.0
      %1196 = vmatpush.msra.mxu0 0.0
      %1197 = vmatpush.msra.mxu0 0.0
      %1198 = vmatpush.msra.mxu0 0.0
      %1199 = vmatpush.msra.mxu0 0.0
      %1200 = vmatpush.msra.mxu0 0.0
      %1201 = vmatpush.msra.mxu0 0.0
      %1202 = vmatpush.msra.mxu0 0.0
      %1203 = vmatpush.msra.mxu0 0.0
      %1204 = vmatpush.msra.mxu0 0.0
      %1205 = vmatpush.msra.mxu0 0.0
      %1206 = vmatpush.msra.mxu0 0.0
      %1207 = vmatpush.msra.mxu0 %v1027
      %1208 = vmatpush.msra.mxu0 %v1026
      %1209 = vmatmul.f32.gmra.mxu0 %v1182
      %v1210 = vpop.f32.mrf.mxu0
      %v1211 = vadd.f32 0.0, %v1210
      %1212 = vmatmul.f32.gmra.mxu0 %v1185
      %v1213 = vpop.f32.mrf.mxu0
      %v1214 = vadd.f32 0.0, %v1213
      %1215 = vmatmul.f32.gmra.mxu0 %v1188
      %v1216 = vpop.f32.mrf.mxu0
      %v1217 = vadd.f32 0.0, %v1216
      %1218 = vmatmul.f32.gmra.mxu0 %v1191
      %v1219 = vpop.f32.mrf.mxu0
      %v1220 = vadd.f32 0.0, %v1219
      %1221 = vdwg.mxu0
      %v1223 = vperm.slane %v1030, 0
      %v1225 = vadd.f32 %v1223, %v1211
      %v1226 = vadd.f32 %v1223, %v1214
      %v1227 = vadd.f32 %v1223, %v1217
      %v1228 = vadd.f32 %v1223, %v1220
      %1229 = vrot.lane.b32.xlu0 %v941, 112
      %v1230 = vpop.permute.xlu0 %1229
      %1231 = vrot.lane.b32.xlu0 %v944, 112
      %v1232 = vpop.permute.xlu0 %1231
      %1233 = vrot.lane.b32.xlu0 %v947, 112
      %v1234 = vpop.permute.xlu0 %1233
      %1235 = vrot.lane.b32.xlu0 %v950, 112
      %v1236 = vpop.permute.xlu0 %1235
      %1237 = vrot.lane.b32.xlu0 %v978, 112
      %v1238 = vpop.permute.xlu0 %1237
      %1239 = vrot.lane.b32.xlu0 %v981, 112
      %v1240 = vpop.permute.xlu0 %1239
      %1241 = vrot.lane.b32.xlu0 %v984, 112
      %v1242 = vpop.permute.xlu0 %1241
      %1243 = vrot.lane.b32.xlu0 %v987, 112
      %v1244 = vpop.permute.xlu0 %1243
      %v1245 = vsel %vm1031, %v1230, 0
      %v1247 = vsel %vm1031, %v1232, 0
      %v1249 = vsel %vm1031, %v1234, 0
      %v1251 = vsel %vm1031, %v1236, 0
      %v1253 = vsel %vm1031, %v1238, 0
      %v1255 = vsel %vm1031, %v1240, 0
      %v1257 = vsel %vm1031, %v1242, 0
      %v1259 = vsel %vm1031, %v1244, 0
      %1261 = vmatpush.xpose.msra.mxu0 0.0
      %1262 = vmatpush.xpose.msra.mxu0 0.0
      %1263 = vmatpush.xpose.msra.mxu0 0.0
      %1264 = vmatpush.xpose.msra.mxu0 0.0
      %1265 = vmatpush.xpose.msra.mxu0 0.0
      %1266 = vmatpush.xpose.msra.mxu0 0.0
      %1267 = vmatpush.xpose.msra.mxu0 0.0
      %1268 = vmatpush.xpose.msra.mxu0 0.0
      %1269 = vmatpush.xpose.msra.mxu0 0.0
      %1270 = vmatpush.xpose.msra.mxu0 0.0
      %1271 = vmatpush.xpose.msra.mxu0 0.0
      %1272 = vmatpush.xpose.msra.mxu0 0.0
      %1273 = vmatpush.xpose.msra.mxu0 %v1259
      %1274 = vmatpush.xpose.msra.mxu0 %v1257
      %1275 = vmatpush.xpose.msra.mxu0 %v1255
      %1276 = vmatpush.xpose.msra.mxu0 %v1253
      %1277 = vmatmul.f32.gmra.mxu0 %v1245
      %v1278 = vpop.f32.mrf.mxu0
      %v1279 = vadd.f32 0.0, %v1278
      %1280 = vmatmul.f32.gmra.mxu0 %v1247
      %v1281 = vpop.f32.mrf.mxu0
      %v1282 = vadd.f32 0.0, %v1281
      %1283 = vmatmul.f32.gmra.mxu0 %v1249
      %v1284 = vpop.f32.mrf.mxu0
      %v1285 = vadd.f32 0.0, %v1284
      %1286 = vmatmul.f32.gmra.mxu0 %v1251
      %v1287 = vpop.f32.mrf.mxu0
      %v1288 = vadd.f32 0.0, %v1287
      %1289 = vdwg.mxu0
      %v1290 = vmul.f32 %v1279, 0.25
      %v1291 = vmul.f32 %v1282, 0.25
      %v1292 = vmul.f32 %v1285, 0.25
      %v1293 = vmul.f32 %v1288, 0.25
      %v1294 = vadd.f32 %v1290, %v1090
      %v1295 = vadd.f32 %v1291, %v1090
      %v1296 = vadd.f32 %v1292, %v1090
      %v1297 = vadd.f32 %v1293, %v1090
      %v1298 = vsel %vm910, %v1294, -inf
      %1299 = vmax.xlane.f32.xlu0 %v1298
      %v1300 = vpop.xlane.xlu0 %1299
      %v1301 = vsel %vm910, %v1295, -inf
      %1302 = vmax.xlane.f32.xlu0 %v1301
      %v1303 = vpop.xlane.xlu0 %1302
      %v1304 = vsel %vm910, %v1296, -inf
      %1305 = vmax.xlane.f32.xlu0 %v1304
      %v1306 = vpop.xlane.xlu0 %1305
      %v1307 = vsel %vm910, %v1297, -inf
      %1308 = vmax.xlane.f32.xlu0 %v1307
      %v1309 = vpop.xlane.xlu0 %1308
      %v1310 = vsub.f32 %v1294, %v1300
      %v1311 = vsub.f32 %v1295, %v1303
      %v1312 = vsub.f32 %v1296, %v1306
      %v1313 = vsub.f32 %v1297, %v1309
      %v1314 = vmul.f32 %v1310, 1.442695
      %v1315 = vpow.pop %v1314
      %v1316 = vmul.f32 %v1311, 1.442695
      %v1317 = vpow.pop %v1316
      %v1318 = vmul.f32 %v1312, 1.442695
      %v1319 = vpow.pop %v1318
      %v1320 = vmul.f32 %v1313, 1.442695
      %v1321 = vpow.pop %v1320
      %v1322 = vsel %vm910, %v1315, 0.0
      %1323 = vadd.xlane.f32.xlu0 %v1322
      %v1324 = vpop.xlane.xlu0 %1323
      %v1325 = vsel %vm910, %v1317, 0.0
      %1326 = vadd.xlane.f32.xlu0 %v1325
      %v1327 = vpop.xlane.xlu0 %1326
      %v1328 = vsel %vm910, %v1319, 0.0
      %1329 = vadd.xlane.f32.xlu0 %v1328
      %v1330 = vpop.xlane.xlu0 %1329
      %v1331 = vsel %vm910, %v1321, 0.0
      %1332 = vadd.xlane.f32.xlu0 %v1331
      %v1333 = vpop.xlane.xlu0 %1332
      %v1334 = vrcp.pop %v1324
      %v1335 = vrcp.pop %v1327
      %v1336 = vrcp.pop %v1330
      %v1337 = vrcp.pop %v1333
      %v1338 = vmul.f32 %v1315, %v1334
      %v1339 = vmul.f32 %v1317, %v1335
      %v1340 = vmul.f32 %v1319, %v1336
      %v1341 = vmul.f32 %v1321, %v1337
      %1346 = vrot.lane.b32.xlu0 %v1015, 112
      %v1347 = vpop.permute.xlu0 %1346
      %1348 = vrot.lane.b32.xlu0 %v1018, 112
      %v1349 = vpop.permute.xlu0 %1348
      %1350 = vrot.lane.b32.xlu0 %v1021, 112
      %v1351 = vpop.permute.xlu0 %1350
      %1352 = vrot.lane.b32.xlu0 %v1024, 112
      %v1353 = vpop.permute.xlu0 %1352
      %v1359 = vsel %vm910, %v1338, 0
      %v1362 = vsel %vm910, %v1339, 0
      %v1365 = vsel %vm910, %v1340, 0
      %v1368 = vsel %vm910, %v1341, 0
      %1370 = vmatpush.msra.mxu0 0.0
      %1371 = vmatpush.msra.mxu0 0.0
      %1372 = vmatpush.msra.mxu0 0.0
      %1373 = vmatpush.msra.mxu0 0.0
      %1374 = vmatpush.msra.mxu0 0.0
      %1375 = vmatpush.msra.mxu0 0.0
      %1376 = vmatpush.msra.mxu0 0.0
      %1377 = vmatpush.msra.mxu0 0.0
      %1378 = vmatpush.msra.mxu0 0.0
      %1379 = vmatpush.msra.mxu0 0.0
      %1380 = vmatpush.msra.mxu0 0.0
      %1381 = vmatpush.msra.mxu0 0.0
      %1382 = vmatpush.msra.mxu0 %v1353
      %1383 = vmatpush.msra.mxu0 %v1351
      %1384 = vmatpush.msra.mxu0 %v1349
      %1385 = vmatpush.msra.mxu0 %v1347
      %1386 = vmatmul.f32.gmra.mxu0 %v1359
      %v1387 = vpop.f32.mrf.mxu0
      %v1388 = vadd.f32 0.0, %v1387
      %1389 = vmatmul.f32.gmra.mxu0 %v1362
      %v1390 = vpop.f32.mrf.mxu0
      %v1391 = vadd.f32 0.0, %v1390
      %1392 = vmatmul.f32.gmra.mxu0 %v1365
      %v1393 = vpop.f32.mrf.mxu0
      %v1394 = vadd.f32 0.0, %v1393
      %1395 = vmatmul.f32.gmra.mxu0 %v1368
      %v1396 = vpop.f32.mrf.mxu0
      %v1397 = vadd.f32 0.0, %v1396
      %1398 = vdwg.mxu0
      %v1400 = vsel %vm1031, %v1388, 0
      %v1403 = vsel %vm1031, %v1391, 0
      %v1406 = vsel %vm1031, %v1394, 0
      %v1409 = vsel %vm1031, %v1397, 0
      %1411 = vmatpush.msra.mxu0 0.0
      %1412 = vmatpush.msra.mxu0 0.0
      %1413 = vmatpush.msra.mxu0 0.0
      %1414 = vmatpush.msra.mxu0 0.0
      %1415 = vmatpush.msra.mxu0 0.0
      %1416 = vmatpush.msra.mxu0 0.0
      %1417 = vmatpush.msra.mxu0 0.0
      %1418 = vmatpush.msra.mxu0 0.0
      %1419 = vmatpush.msra.mxu0 0.0
      %1420 = vmatpush.msra.mxu0 0.0
      %1421 = vmatpush.msra.mxu0 0.0
      %1422 = vmatpush.msra.mxu0 0.0
      %1423 = vmatpush.msra.mxu0 0.0
      %1424 = vmatpush.msra.mxu0 0.0
      %1425 = vmatpush.msra.mxu0 %v1029
      %1426 = vmatpush.msra.mxu0 %v1028
      %1427 = vmatmul.f32.gmra.mxu0 %v1400
      %v1428 = vpop.f32.mrf.mxu0
      %v1429 = vadd.f32 0.0, %v1428
      %1430 = vmatmul.f32.gmra.mxu0 %v1403
      %v1431 = vpop.f32.mrf.mxu0
      %v1432 = vadd.f32 0.0, %v1431
      %1433 = vmatmul.f32.gmra.mxu0 %v1406
      %v1434 = vpop.f32.mrf.mxu0
      %v1435 = vadd.f32 0.0, %v1434
      %1436 = vmatmul.f32.gmra.mxu0 %v1409
      %v1437 = vpop.f32.mrf.mxu0
      %v1438 = vadd.f32 0.0, %v1437
      %1439 = vdwg.mxu0
      %v1440 = vadd.f32 %v1225, %v1429
      %v1441 = vadd.f32 %v1226, %v1432
      %v1442 = vadd.f32 %v1227, %v1435
      %v1443 = vadd.f32 %v1228, %v1438
      %v1444 = vadd.f32 %v1440, %v893
      %v1445 = vadd.f32 %v1441, %v894
      %v1446 = vadd.f32 %v1442, %v895
      %v1447 = vadd.f32 %v1443, %v896
      %v1448 = vld [vmem:[%s12] sm:$0x1]
      %v1449 = vld [vmem:[%s11] sm:$0x1]
      %v1450 = vsel %vm910, %v1444, 0.0
      %1451 = vadd.xlane.f32.xlu0 %v1450
      %v1452 = vpop.xlane.xlu0 %1451
      %v1453 = vsel %vm910, %v1445, 0.0
      %1454 = vadd.xlane.f32.xlu0 %v1453
      %v1455 = vpop.xlane.xlu0 %1454
      %v1456 = vsel %vm910, %v1446, 0.0
      %1457 = vadd.xlane.f32.xlu0 %v1456
      %v1458 = vpop.xlane.xlu0 %1457
      %v1459 = vsel %vm910, %v1447, 0.0
      %1460 = vadd.xlane.f32.xlu0 %v1459
      %v1461 = vpop.xlane.xlu0 %1460
      %v1462 = vrcp.pop 32.0
      %v1463 = vmul.f32 32.0, %v1462
      %v1464 = vsub.f32 1.0, %v1463
      %v1465 = vmul.f32 %v1462, %v1464
      %v1466 = vadd.f32 %v1462, %v1465
      %vm1467 = vweird.f32 %v1462
      %v1468 = vsel %vm1467, %v1462, %v1466
      %v1469 = vmul.f32 %v1452, %v1468
      %v1470 = vmul.f32 %v1455, %v1468
      %v1471 = vmul.f32 %v1458, %v1468
      %v1472 = vmul.f32 %v1461, %v1468
      %v1473 = vsub.f32 %v1444, %v1469
      %v1474 = vsub.f32 %v1445, %v1470
      %v1475 = vsub.f32 %v1446, %v1471
      %v1476 = vsub.f32 %v1447, %v1472
      %v1477 = vmul.f32 %v1473, %v1473
      %v1478 = vmul.f32 %v1474, %v1474
      %v1479 = vmul.f32 %v1475, %v1475
      %v1480 = vmul.f32 %v1476, %v1476
      %v1481 = vsel %vm910, %v1477, 0.0
      %1482 = vadd.xlane.f32.xlu0 %v1481
      %v1483 = vpop.xlane.xlu0 %1482
      %v1484 = vsel %vm910, %v1478, 0.0
      %1485 = vadd.xlane.f32.xlu0 %v1484
      %v1486 = vpop.xlane.xlu0 %1485
      %v1487 = vsel %vm910, %v1479, 0.0
      %1488 = vadd.xlane.f32.xlu0 %v1487
      %v1489 = vpop.xlane.xlu0 %1488
      %v1490 = vsel %vm910, %v1480, 0.0
      %1491 = vadd.xlane.f32.xlu0 %v1490
      %v1492 = vpop.xlane.xlu0 %1491
      %v1493 = vmul.f32 %v1483, %v1468
      %v1494 = vmul.f32 %v1486, %v1468
      %v1495 = vmul.f32 %v1489, %v1468
      %v1496 = vmul.f32 %v1492, %v1468
      %v1497 = vadd.f32 %v1493, 1e-05
      %v1498 = vadd.f32 %v1494, 1e-05
      %v1499 = vadd.f32 %v1495, 1e-05
      %v1500 = vadd.f32 %v1496, 1e-05
      %v1501 = vrsqrt.pop %v1497
      %v1502 = vmul.f32 %v1501, %v1497
      %v1503 = vmul.f32 %v1502, %v1501
      %v1504 = vmul.f32 0.5, %v1503
      %v1505 = vsub.f32 1.5, %v1504
      %v1506 = vmul.f32 %v1501, %v1505
      %vm1507 = vweird.f32 %v1497
      %vm1508 = vweird.f32 %v1501
      %vm1509 = vmor %vm1507, %vm1508
      %v1510 = vsel %vm1509, %v1501, %v1506
      %v1511 = vrsqrt.pop %v1498
      %v1512 = vmul.f32 %v1511, %v1498
      %v1513 = vmul.f32 %v1512, %v1511
      %v1514 = vmul.f32 0.5, %v1513
      %v1515 = vsub.f32 1.5, %v1514
      %v1516 = vmul.f32 %v1511, %v1515
      %vm1517 = vweird.f32 %v1498
      %vm1518 = vweird.f32 %v1511
      %vm1519 = vmor %vm1517, %vm1518
      %v1520 = vsel %vm1519, %v1511, %v1516
      %v1521 = vrsqrt.pop %v1499
      %v1522 = vmul.f32 %v1521, %v1499
      %v1523 = vmul.f32 %v1522, %v1521
      %v1524 = vmul.f32 0.5, %v1523
      %v1525 = vsub.f32 1.5, %v1524
      %v1526 = vmul.f32 %v1521, %v1525
      %vm1527 = vweird.f32 %v1499
      %vm1528 = vweird.f32 %v1521
      %vm1529 = vmor %vm1527, %vm1528
      %v1530 = vsel %vm1529, %v1521, %v1526
      %v1531 = vrsqrt.pop %v1500
      %v1532 = vmul.f32 %v1531, %v1500
      %v1533 = vmul.f32 %v1532, %v1531
      %v1534 = vmul.f32 0.5, %v1533
      %v1535 = vsub.f32 1.5, %v1534
      %v1536 = vmul.f32 %v1531, %v1535
      %vm1537 = vweird.f32 %v1500
      %vm1538 = vweird.f32 %v1531
      %vm1539 = vmor %vm1537, %vm1538
      %v1540 = vsel %vm1539, %v1531, %v1536
      %v1541 = vmul.f32 %v1473, %v1510
      %v1542 = vmul.f32 %v1474, %v1520
      %v1543 = vmul.f32 %v1475, %v1530
      %v1544 = vmul.f32 %v1476, %v1540
      %v1546 = vperm.slane %v1448, 0
      %v1548 = vmul.f32 %v1541, %v1546
      %v1549 = vmul.f32 %v1542, %v1546
      %v1550 = vmul.f32 %v1543, %v1546
      %v1551 = vmul.f32 %v1544, %v1546
      %v1553 = vperm.slane %v1449, 0
      %v1555 = vadd.f32 %v1548, %v1553
      %v1556 = vadd.f32 %v1549, %v1553
      %v1557 = vadd.f32 %v1550, %v1553
      %v1558 = vadd.f32 %v1551, %v1553
      %1560 = vset.pattern.permute.xlu0 0
      %1561 = vperm.xlu0 %1560, %v898
      %v1562 = vpop.permute.xlu0 %1561
      %1565 = vset.pattern.permute.xlu0 0
      %1566 = vperm.xlu0 %1565, %v899
      %v1567 = vpop.permute.xlu0 %1566
      %1570 = vset.pattern.permute.xlu0 0
      %1571 = vperm.xlu0 %1570, %v900
      %v1572 = vpop.permute.xlu0 %1571
      %1575 = vset.pattern.permute.xlu0 0
      %1576 = vperm.xlu0 %1575, %v901
      %v1577 = vpop.permute.xlu0 %1576
      %v1579 = vmul.f32 %v1555, %v1562
      %v1580 = vmul.f32 %v1556, %v1567
      %v1581 = vmul.f32 %v1557, %v1572
      %v1582 = vmul.f32 %v1558, %v1577
      %v1583 = vld [vmem:[%s8] sm:$0xff]
      %v1584 = vld [vmem:[%s8 + $0x8] sm:$0xff]
      %v1585 = vld [vmem:[%s8 + $0x10] sm:$0xff]
      %v1586 = vld [vmem:[%s8 + $0x18] sm:$0xff]
      %v1587 = vld [vmem:[%s8 + $0x20] sm:$0xff]
      %v1588 = vld [vmem:[%s8 + $0x28] sm:$0xff]
      %v1589 = vld [vmem:[%s8 + $0x30] sm:$0xff]
      %v1590 = vld [vmem:[%s8 + $0x38] sm:$0xff]
      %v1591 = vld [vmem:[%s8 + $0x40] sm:$0xff]
      %v1592 = vld [vmem:[%s8 + $0x48] sm:$0xff]
      %v1593 = vld [vmem:[%s8 + $0x50] sm:$0xff]
      %v1594 = vld [vmem:[%s8 + $0x58] sm:$0xff]
      %v1595 = vld [vmem:[%s7] sm:$0x1]
      %vm1600 = vcmask 1040384
      %v1601 = vrot.slane %v1579, 7
      %v1602 = vrot.slane %v1580, 7
      %v1603 = vsel %vm1600, %v1601, %v1602
      %v1604 = vrot.slane %v1581, 7
      %v1605 = vsel %vm1600, %v1602, %v1604
      %v1606 = vrot.slane %v1582, 7
      %v1607 = vsel %vm1600, %v1604, %v1606
      %v1612 = vsel %vm1600, 0.0, %v1601
      %vm1613 = vcmask 1046528
      %v1614 = vrot.slane %v1579, 1
      %v1615 = vrot.slane %v1580, 1
      %v1616 = vsel %vm1613, %v1614, %v1615
      %v1617 = vrot.slane %v1581, 1
      %v1618 = vsel %vm1613, %v1615, %v1617
      %v1619 = vrot.slane %v1582, 1
      %v1620 = vsel %vm1613, %v1617, %v1619
      %v1622 = vsel %vm1613, %v1619, 0.0
      %1623 = vrot.lane.b32.xlu0 %v1579, 32
      %v1624 = vpop.permute.xlu0 %1623
      %1625 = vrot.lane.b32.xlu0 %v1580, 32
      %v1626 = vpop.permute.xlu0 %1625
      %1627 = vrot.lane.b32.xlu0 %v1581, 32
      %v1628 = vpop.permute.xlu0 %1627
      %1629 = vrot.lane.b32.xlu0 %v1582, 32
      %v1630 = vpop.permute.xlu0 %1629
      %1636 = vrot.lane.b32.xlu0 %v1616, 64
      %v1637 = vpop.permute.xlu0 %1636
      %1638 = vrot.lane.b32.xlu0 %v1618, 64
      %v1639 = vpop.permute.xlu0 %1638
      %1640 = vrot.lane.b32.xlu0 %v1620, 64
      %v1641 = vpop.permute.xlu0 %1640
      %1642 = vrot.lane.b32.xlu0 %v1622, 64
      %v1643 = vpop.permute.xlu0 %1642
      %v1648 = vsel %vm910, %v1612, %v1624
      %v1649 = vsel %vm910, %v1603, %v1626
      %v1650 = vsel %vm910, %v1605, %v1628
      %v1651 = vsel %vm910, %v1607, %v1630
      %vm1652 = vcmask 523264
      %v1653 = vsel %vm1652, %v1648, %v1637
      %v1654 = vsel %vm1652, %v1649, %v1639
      %v1655 = vsel %vm1652, %v1650, %v1641
      %v1656 = vsel %vm1652, %v1651, %v1643
      %v1658 = vperm.slane %v1595, 0
      %vm1660 = vcmask 785408
      %v1662 = vsel %vm1660, %v1653, 0
      %v1665 = vsel %vm1660, %v1654, 0
      %v1668 = vsel %vm1660, %v1655, 0
      %v1671 = vsel %vm1660, %v1656, 0
      %1673 = vmatpush.msra.mxu0 0.0
      %1674 = vmatpush.msra.mxu0 0.0
      %1675 = vmatpush.msra.mxu0 0.0
      %1676 = vmatpush.msra.mxu0 0.0
      %1677 = vmatpush.msra.mxu0 %v1594
      %1678 = vmatpush.msra.mxu0 %v1593
      %1679 = vmatpush.msra.mxu0 %v1592
      %1680 = vmatpush.msra.mxu0 %v1591
      %1681 = vmatpush.msra.mxu0 %v1590
      %1682 = vmatpush.msra.mxu0 %v1589
      %1683 = vmatpush.msra.mxu0 %v1588
      %1684 = vmatpush.msra.mxu0 %v1587
      %1685 = vmatpush.msra.mxu0 %v1586
      %1686 = vmatpush.msra.mxu0 %v1585
      %1687 = vmatpush.msra.mxu0 %v1584
      %1688 = vmatpush.msra.mxu0 %v1583
      %1689 = vmatmul.f32.gmra.mxu0 %v1662
      %v1690 = vpop.f32.mrf.mxu0
      %v1691 = vadd.f32 %v1658, %v1690
      %1692 = vmatmul.f32.gmra.mxu0 %v1665
      %v1693 = vpop.f32.mrf.mxu0
      %v1694 = vadd.f32 %v1658, %v1693
      %1695 = vmatmul.f32.gmra.mxu0 %v1668
      %v1696 = vpop.f32.mrf.mxu0
      %v1697 = vadd.f32 %v1658, %v1696
      %1698 = vmatmul.f32.gmra.mxu0 %v1671
      %v1699 = vpop.f32.mrf.mxu0
      %v1700 = vadd.f32 %v1658, %v1699
      %1701 = vdwg.mxu0
      %v1702 = vmax.f32 %v1691, 0.0
      %v1703 = vmax.f32 %v1694, 0.0
      %v1704 = vmax.f32 %v1697, 0.0
      %v1705 = vmax.f32 %v1700, 0.0
      %v1706 = vld [vmem:[%s10] sm:$0xff]
      %v1707 = vld [vmem:[%s10 + $0x8] sm:$0xff]
      %v1708 = vld [vmem:[%s10 + $0x10] sm:$0xff]
      %v1709 = vld [vmem:[%s10 + $0x18] sm:$0xff]
      %v1710 = vld [vmem:[%s10 + $0x20] sm:$0xff]
      %v1711 = vld [vmem:[%s10 + $0x28] sm:$0xff]
      %v1712 = vld [vmem:[%s10 + $0x30] sm:$0xff]
      %v1713 = vld [vmem:[%s10 + $0x38] sm:$0xff]
      %v1714 = vld [vmem:[%s9] sm:$0x1]
      %v1716 = vperm.slane %v1714, 0
      %v1719 = vsel %vm1652, %v1702, 0
      %v1722 = vsel %vm1652, %v1703, 0
      %v1725 = vsel %vm1652, %v1704, 0
      %v1728 = vsel %vm1652, %v1705, 0
      %1730 = vmatpush.msra.mxu0 0.0
      %1731 = vmatpush.msra.mxu0 0.0
      %1732 = vmatpush.msra.mxu0 0.0
      %1733 = vmatpush.msra.mxu0 0.0
      %1734 = vmatpush.msra.mxu0 0.0
      %1735 = vmatpush.msra.mxu0 0.0
      %1736 = vmatpush.msra.mxu0 0.0
      %1737 = vmatpush.msra.mxu0 0.0
      %1738 = vmatpush.msra.mxu0 %v1713
      %1739 = vmatpush.msra.mxu0 %v1712
      %1740 = vmatpush.msra.mxu0 %v1711
      %1741 = vmatpush.msra.mxu0 %v1710
      %1742 = vmatpush.msra.mxu0 %v1709
      %1743 = vmatpush.msra.mxu0 %v1708
      %1744 = vmatpush.msra.mxu0 %v1707
      %1745 = vmatpush.msra.mxu0 %v1706
      %1746 = vmatmul.f32.gmra.mxu0 %v1719
      %v1747 = vpop.f32.mrf.mxu0
      %v1748 = vadd.f32 %v1716, %v1747
      %1749 = vmatmul.f32.gmra.mxu0 %v1722
      %v1750 = vpop.f32.mrf.mxu0
      %v1751 = vadd.f32 %v1716, %v1750
      %1752 = vmatmul.f32.gmra.mxu0 %v1725
      %v1753 = vpop.f32.mrf.mxu0
      %v1754 = vadd.f32 %v1716, %v1753
      %1755 = vmatmul.f32.gmra.mxu0 %v1728
      %v1756 = vpop.f32.mrf.mxu0
      %v1757 = vadd.f32 %v1716, %v1756
      %1758 = vdwg.mxu0
      %v1759 = vadd.f32 %v1748, %v1579
      %v1760 = vadd.f32 %v1751, %v1580
      %v1761 = vadd.f32 %v1754, %v1581
      %v1762 = vadd.f32 %v1757, %v1582
      %v1763 = vld [vmem:[%s14] sm:$0x1]
      %v1764 = vld [vmem:[%s13] sm:$0x1]
      %v1765 = vsel %vm910, %v1759, 0.0
      %1766 = vadd.xlane.f32.xlu0 %v1765
      %v1767 = vpop.xlane.xlu0 %1766
      %v1768 = vsel %vm910, %v1760, 0.0
      %1769 = vadd.xlane.f32.xlu0 %v1768
      %v1770 = vpop.xlane.xlu0 %1769
      %v1771 = vsel %vm910, %v1761, 0.0
      %1772 = vadd.xlane.f32.xlu0 %v1771
      %v1773 = vpop.xlane.xlu0 %1772
      %v1774 = vsel %vm910, %v1762, 0.0
      %1775 = vadd.xlane.f32.xlu0 %v1774
      %v1776 = vpop.xlane.xlu0 %1775
      %v1777 = vmul.f32 %v1767, %v1468
      %v1778 = vmul.f32 %v1770, %v1468
      %v1779 = vmul.f32 %v1773, %v1468
      %v1780 = vmul.f32 %v1776, %v1468
      %v1781 = vsub.f32 %v1759, %v1777
      %v1782 = vsub.f32 %v1760, %v1778
      %v1783 = vsub.f32 %v1761, %v1779
      %v1784 = vsub.f32 %v1762, %v1780
      %v1785 = vmul.f32 %v1781, %v1781
      %v1786 = vmul.f32 %v1782, %v1782
      %v1787 = vmul.f32 %v1783, %v1783
      %v1788 = vmul.f32 %v1784, %v1784
      %v1789 = vsel %vm910, %v1785, 0.0
      %1790 = vadd.xlane.f32.xlu0 %v1789
      %v1791 = vpop.xlane.xlu0 %1790
      %v1792 = vsel %vm910, %v1786, 0.0
      %1793 = vadd.xlane.f32.xlu0 %v1792
      %v1794 = vpop.xlane.xlu0 %1793
      %v1795 = vsel %vm910, %v1787, 0.0
      %1796 = vadd.xlane.f32.xlu0 %v1795
      %v1797 = vpop.xlane.xlu0 %1796
      %v1798 = vsel %vm910, %v1788, 0.0
      %1799 = vadd.xlane.f32.xlu0 %v1798
      %v1800 = vpop.xlane.xlu0 %1799
      %v1801 = vmul.f32 %v1791, %v1468
      %v1802 = vmul.f32 %v1794, %v1468
      %v1803 = vmul.f32 %v1797, %v1468
      %v1804 = vmul.f32 %v1800, %v1468
      %v1805 = vadd.f32 %v1801, 1e-05
      %v1806 = vadd.f32 %v1802, 1e-05
      %v1807 = vadd.f32 %v1803, 1e-05
      %v1808 = vadd.f32 %v1804, 1e-05
      %v1809 = vrsqrt.pop %v1805
      %v1810 = vmul.f32 %v1809, %v1805
      %v1811 = vmul.f32 %v1810, %v1809
      %v1812 = vmul.f32 0.5, %v1811
      %v1813 = vsub.f32 1.5, %v1812
      %v1814 = vmul.f32 %v1809, %v1813
      %vm1815 = vweird.f32 %v1805
      %vm1816 = vweird.f32 %v1809
      %vm1817 = vmor %vm1815, %vm1816
      %v1818 = vsel %vm1817, %v1809, %v1814
      %v1819 = vrsqrt.pop %v1806
      %v1820 = vmul.f32 %v1819, %v1806
      %v1821 = vmul.f32 %v1820, %v1819
      %v1822 = vmul.f32 0.5, %v1821
      %v1823 = vsub.f32 1.5, %v1822
      %v1824 = vmul.f32 %v1819, %v1823
      %vm1825 = vweird.f32 %v1806
      %vm1826 = vweird.f32 %v1819
      %vm1827 = vmor %vm1825, %vm1826
      %v1828 = vsel %vm1827, %v1819, %v1824
      %v1829 = vrsqrt.pop %v1807
      %v1830 = vmul.f32 %v1829, %v1807
      %v1831 = vmul.f32 %v1830, %v1829
      %v1832 = vmul.f32 0.5, %v1831
      %v1833 = vsub.f32 1.5, %v1832
      %v1834 = vmul.f32 %v1829, %v1833
      %vm1835 = vweird.f32 %v1807
      %vm1836 = vweird.f32 %v1829
      %vm1837 = vmor %vm1835, %vm1836
      %v1838 = vsel %vm1837, %v1829, %v1834
      %v1839 = vrsqrt.pop %v1808
      %v1840 = vmul.f32 %v1839, %v1808
      %v1841 = vmul.f32 %v1840, %v1839
      %v1842 = vmul.f32 0.5, %v1841
      %v1843 = vsub.f32 1.5, %v1842
      %v1844 = vmul.f32 %v1839, %v1843
      %vm1845 = vweird.f32 %v1808
      %vm1846 = vweird.f32 %v1839
      %vm1847 = vmor %vm1845, %vm1846
      %v1848 = vsel %vm1847, %v1839, %v1844
      %v1849 = vmul.f32 %v1781, %v1818
      %v1850 = vmul.f32 %v1782, %v1828
      %v1851 = vmul.f32 %v1783, %v1838
      %v1852 = vmul.f32 %v1784, %v1848
      %v1854 = vperm.slane %v1763, 0
      %v1856 = vmul.f32 %v1849, %v1854
      %v1857 = vmul.f32 %v1850, %v1854
      %v1858 = vmul.f32 %v1851, %v1854
      %v1859 = vmul.f32 %v1852, %v1854
      %v1861 = vperm.slane %v1764, 0
      %v1863 = vadd.f32 %v1856, %v1861
      %v1864 = vadd.f32 %v1857, %v1861
      %v1865 = vadd.f32 %v1858, %v1861
      %v1866 = vadd.f32 %v1859, %v1861
      %v1867 = vmul.f32 %v1863, %v1562
      %v1868 = vmul.f32 %v1864, %v1567
      %v1869 = vmul.f32 %v1865, %v1572
      %v1870 = vmul.f32 %v1866, %v1577
      %s1871 = scalar_lea.vmem %s17, 32
      %v1872 = vld [vmem:[%s1871] sm:$0xff]
      %v1873 = vld [vmem:[%s1871 + $0x8] sm:$0xff]
      %v1874 = vld [vmem:[%s1871 + $0x10] sm:$0xff]
      %v1875 = vld [vmem:[%s1871 + $0x18] sm:$0xff]
      %s1876 = scalar_lea.vmem %s5, 1
      %v1877 = vld [vmem:[%s1876] sm:$0x1]
      %v1879 = vperm.slane %v1877, 0
      %v1882 = vsel %vm910, %v1867, 0
      %v1885 = vsel %vm910, %v1868, 0
      %v1888 = vsel %vm910, %v1869, 0
      %v1891 = vsel %vm910, %v1870, 0
      %1893 = vmatpush.msra.mxu0 0.0
      %1894 = vmatpush.msra.mxu0 0.0
      %1895 = vmatpush.msra.mxu0 0.0
      %1896 = vmatpush.msra.mxu0 0.0
      %1897 = vmatpush.msra.mxu0 0.0
      %1898 = vmatpush.msra.mxu0 0.0
      %1899 = vmatpush.msra.mxu0 0.0
      %1900 = vmatpush.msra.mxu0 0.0
      %1901 = vmatpush.msra.mxu0 0.0
      %1902 = vmatpush.msra.mxu0 0.0
      %1903 = vmatpush.msra.mxu0 0.0
      %1904 = vmatpush.msra.mxu0 0.0
      %1905 = vmatpush.msra.mxu0 %v1875
      %1906 = vmatpush.msra.mxu0 %v1874
      %1907 = vmatpush.msra.mxu0 %v1873
      %1908 = vmatpush.msra.mxu0 %v1872
      %1909 = vmatmul.f32.gmra.mxu0 %v1882
      %v1910 = vpop.f32.mrf.mxu0
      %v1911 = vadd.f32 %v1879, %v1910
      %1912 = vmatmul.f32.gmra.mxu0 %v1885
      %v1913 = vpop.f32.mrf.mxu0
      %v1914 = vadd.f32 %v1879, %v1913
      %1915 = vmatmul.f32.gmra.mxu0 %v1888
      %v1916 = vpop.f32.mrf.mxu0
      %v1917 = vadd.f32 %v1879, %v1916
      %1918 = vmatmul.f32.gmra.mxu0 %v1891
      %v1919 = vpop.f32.mrf.mxu0
      %v1920 = vadd.f32 %v1879, %v1919
      %1921 = vdwg.mxu0
      %s1922 = scalar_lea.vmem %s15, 32
      %v1923 = vld [vmem:[%s1922] sm:$0xff]
      %v1924 = vld [vmem:[%s1922 + $0x8] sm:$0xff]
      %v1925 = vld [vmem:[%s1922 + $0x10] sm:$0xff]
      %v1926 = vld [vmem:[%s1922 + $0x18] sm:$0xff]
      %s1927 = scalar_lea.vmem %s3, 1
      %v1928 = vld [vmem:[%s1927] sm:$0x1]
      %v1930 = vperm.slane %v1928, 0
      %1932 = vmatpush.msra.mxu0 0.0
      %1933 = vmatpush.msra.mxu0 0.0
      %1934 = vmatpush.msra.mxu0 0.0
      %1935 = vmatpush.msra.mxu0 0.0
      %1936 = vmatpush.msra.mxu0 0.0
      %1937 = vmatpush.msra.mxu0 0.0
      %1938 = vmatpush.msra.mxu0 0.0
      %1939 = vmatpush.msra.mxu0 0.0
      %1940 = vmatpush.msra.mxu0 0.0
      %1941 = vmatpush.msra.mxu0 0.0
      %1942 = vmatpush.msra.mxu0 0.0
      %1943 = vmatpush.msra.mxu0 0.0
      %1944 = vmatpush.msra.mxu0 %v1926
      %1945 = vmatpush.msra.mxu0 %v1925
      %1946 = vmatpush.msra.mxu0 %v1924
      %1947 = vmatpush.msra.mxu0 %v1923
      %1948 = vmatmul.f32.gmra.mxu0 %v1882
      %v1949 = vpop.f32.mrf.mxu0
      %v1950 = vadd.f32 %v1930, %v1949
      %1951 = vmatmul.f32.gmra.mxu0 %v1885
      %v1952 = vpop.f32.mrf.mxu0
      %v1953 = vadd.f32 %v1930, %v1952
      %1954 = vmatmul.f32.gmra.mxu0 %v1888
      %v1955 = vpop.f32.mrf.mxu0
      %v1956 = vadd.f32 %v1930, %v1955
      %1957 = vmatmul.f32.gmra.mxu0 %v1891
      %v1958 = vpop.f32.mrf.mxu0
      %v1959 = vadd.f32 %v1930, %v1958
      %1960 = vdwg.mxu0
      %s1961 = scalar_lea.vmem %s18, 32
      %v1962 = vld [vmem:[%s1961] sm:$0xff]
      %v1963 = vld [vmem:[%s1961 + $0x8] sm:$0xff]
      %v1964 = vld [vmem:[%s1961 + $0x10] sm:$0xff]
      %v1965 = vld [vmem:[%s1961 + $0x18] sm:$0xff]
      %s1966 = scalar_lea.vmem %s6, 1
      %v1967 = vld [vmem:[%s1966] sm:$0x1]
      %v1969 = vperm.slane %v1967, 0
      %1971 = vmatpush.msra.mxu0 0.0
      %1972 = vmatpush.msra.mxu0 0.0
      %1973 = vmatpush.msra.mxu0 0.0
      %1974 = vmatpush.msra.mxu0 0.0
      %1975 = vmatpush.msra.mxu0 0.0
      %1976 = vmatpush.msra.mxu0 0.0
      %1977 = vmatpush.msra.mxu0 0.0
      %1978 = vmatpush.msra.mxu0 0.0
      %1979 = vmatpush.msra.mxu0 0.0
      %1980 = vmatpush.msra.mxu0 0.0
      %1981 = vmatpush.msra.mxu0 0.0
      %1982 = vmatpush.msra.mxu0 0.0
      %1983 = vmatpush.msra.mxu0 %v1965
      %1984 = vmatpush.msra.mxu0 %v1964
      %1985 = vmatpush.msra.mxu0 %v1963
      %1986 = vmatpush.msra.mxu0 %v1962
      %1987 = vmatmul.f32.gmra.mxu0 %v1882
      %v1988 = vpop.f32.mrf.mxu0
      %v1989 = vadd.f32 %v1969, %v1988
      %1990 = vmatmul.f32.gmra.mxu0 %v1885
      %v1991 = vpop.f32.mrf.mxu0
      %v1992 = vadd.f32 %v1969, %v1991
      %1993 = vmatmul.f32.gmra.mxu0 %v1888
      %v1994 = vpop.f32.mrf.mxu0
      %v1995 = vadd.f32 %v1969, %v1994
      %1996 = vmatmul.f32.gmra.mxu0 %v1891
      %v1997 = vpop.f32.mrf.mxu0
      %v1998 = vadd.f32 %v1969, %v1997
      %1999 = vdwg.mxu0
      %s2000 = scalar_lea.vmem %s16, 32
      %v2001 = vld [vmem:[%s2000] sm:$0xff]
      %v2002 = vld [vmem:[%s2000 + $0x8] sm:$0xff]
      %v2003 = vld [vmem:[%s2000 + $0x10] sm:$0xff]
      %v2004 = vld [vmem:[%s2000 + $0x18] sm:$0xff]
      %s2005 = scalar_lea.vmem %s4, 1
      %v2006 = vld [vmem:[%s2005] sm:$0x1]
      %v2008 = vsel %vm1031, %v1911, 0
      %v2011 = vsel %vm1031, %v1914, 0
      %v2014 = vsel %vm1031, %v1917, 0
      %v2017 = vsel %vm1031, %v1920, 0
      %v2020 = vsel %vm1031, %v1950, 0
      %v2023 = vsel %vm1031, %v1953, 0
      %v2026 = vsel %vm1031, %v1956, 0
      %v2029 = vsel %vm1031, %v1959, 0
      %2031 = vmatpush.xpose.msra.mxu0 0.0
      %2032 = vmatpush.xpose.msra.mxu0 0.0
      %2033 = vmatpush.xpose.msra.mxu0 0.0
      %2034 = vmatpush.xpose.msra.mxu0 0.0
      %2035 = vmatpush.xpose.msra.mxu0 0.0
      %2036 = vmatpush.xpose.msra.mxu0 0.0
      %2037 = vmatpush.xpose.msra.mxu0 0.0
      %2038 = vmatpush.xpose.msra.mxu0 0.0
      %2039 = vmatpush.xpose.msra.mxu0 0.0
      %2040 = vmatpush.xpose.msra.mxu0 0.0
      %2041 = vmatpush.xpose.msra.mxu0 0.0
      %2042 = vmatpush.xpose.msra.mxu0 0.0
      %2043 = vmatpush.xpose.msra.mxu0 %v2029
      %2044 = vmatpush.xpose.msra.mxu0 %v2026
      %2045 = vmatpush.xpose.msra.mxu0 %v2023
      %2046 = vmatpush.xpose.msra.mxu0 %v2020
      %2047 = vmatmul.f32.gmra.mxu0 %v2008
      %v2048 = vpop.f32.mrf.mxu0
      %v2049 = vadd.f32 0.0, %v2048
      %2050 = vmatmul.f32.gmra.mxu0 %v2011
      %v2051 = vpop.f32.mrf.mxu0
      %v2052 = vadd.f32 0.0, %v2051
      %2053 = vmatmul.f32.gmra.mxu0 %v2014
      %v2054 = vpop.f32.mrf.mxu0
      %v2055 = vadd.f32 0.0, %v2054
      %2056 = vmatmul.f32.gmra.mxu0 %v2017
      %v2057 = vpop.f32.mrf.mxu0
      %v2058 = vadd.f32 0.0, %v2057
      %2059 = vdwg.mxu0
      %v2060 = vmul.f32 %v2049, 0.25
      %v2061 = vmul.f32 %v2052, 0.25
      %v2062 = vmul.f32 %v2055, 0.25
      %v2063 = vmul.f32 %v2058, 0.25
      %v2064 = vadd.f32 %v2060, %v1090
      %v2065 = vadd.f32 %v2061, %v1090
      %v2066 = vadd.f32 %v2062, %v1090
      %v2067 = vadd.f32 %v2063, %v1090
      %v2068 = vsel %vm910, %v2064, -inf
      %2069 = vmax.xlane.f32.xlu0 %v2068
      %v2070 = vpop.xlane.xlu0 %2069
      %v2071 = vsel %vm910, %v2065, -inf
      %2072 = vmax.xlane.f32.xlu0 %v2071
      %v2073 = vpop.xlane.xlu0 %2072
      %v2074 = vsel %vm910, %v2066, -inf
      %2075 = vmax.xlane.f32.xlu0 %v2074
      %v2076 = vpop.xlane.xlu0 %2075
      %v2077 = vsel %vm910, %v2067, -inf
      %2078 = vmax.xlane.f32.xlu0 %v2077
      %v2079 = vpop.xlane.xlu0 %2078
      %v2080 = vsub.f32 %v2064, %v2070
      %v2081 = vsub.f32 %v2065, %v2073
      %v2082 = vsub.f32 %v2066, %v2076
      %v2083 = vsub.f32 %v2067, %v2079
      %v2084 = vmul.f32 %v2080, 1.442695
      %v2085 = vpow.pop %v2084
      %v2086 = vmul.f32 %v2081, 1.442695
      %v2087 = vpow.pop %v2086
      %v2088 = vmul.f32 %v2082, 1.442695
      %v2089 = vpow.pop %v2088
      %v2090 = vmul.f32 %v2083, 1.442695
      %v2091 = vpow.pop %v2090
      %v2092 = vsel %vm910, %v2085, 0.0
      %2093 = vadd.xlane.f32.xlu0 %v2092
      %v2094 = vpop.xlane.xlu0 %2093
      %v2095 = vsel %vm910, %v2087, 0.0
      %2096 = vadd.xlane.f32.xlu0 %v2095
      %v2097 = vpop.xlane.xlu0 %2096
      %v2098 = vsel %vm910, %v2089, 0.0
      %2099 = vadd.xlane.f32.xlu0 %v2098
      %v2100 = vpop.xlane.xlu0 %2099
      %v2101 = vsel %vm910, %v2091, 0.0
      %2102 = vadd.xlane.f32.xlu0 %v2101
      %v2103 = vpop.xlane.xlu0 %2102
      %v2104 = vrcp.pop %v2094
      %v2105 = vrcp.pop %v2097
      %v2106 = vrcp.pop %v2100
      %v2107 = vrcp.pop %v2103
      %v2108 = vmul.f32 %v2085, %v2104
      %v2109 = vmul.f32 %v2087, %v2105
      %v2110 = vmul.f32 %v2089, %v2106
      %v2111 = vmul.f32 %v2091, %v2107
      %v2113 = vsel %vm910, %v2108, 0
      %v2116 = vsel %vm910, %v2109, 0
      %v2119 = vsel %vm910, %v2110, 0
      %v2122 = vsel %vm910, %v2111, 0
      %2124 = vmatpush.msra.mxu0 0.0
      %2125 = vmatpush.msra.mxu0 0.0
      %2126 = vmatpush.msra.mxu0 0.0
      %2127 = vmatpush.msra.mxu0 0.0
      %2128 = vmatpush.msra.mxu0 0.0
      %2129 = vmatpush.msra.mxu0 0.0
      %2130 = vmatpush.msra.mxu0 0.0
      %2131 = vmatpush.msra.mxu0 0.0
      %2132 = vmatpush.msra.mxu0 0.0
      %2133 = vmatpush.msra.mxu0 0.0
      %2134 = vmatpush.msra.mxu0 0.0
      %2135 = vmatpush.msra.mxu0 0.0
      %2136 = vmatpush.msra.mxu0 %v1998
      %2137 = vmatpush.msra.mxu0 %v1995
      %2138 = vmatpush.msra.mxu0 %v1992
      %2139 = vmatpush.msra.mxu0 %v1989
      %2140 = vmatmul.f32.gmra.mxu0 %v2113
      %v2141 = vpop.f32.mrf.mxu0
      %v2142 = vadd.f32 0.0, %v2141
      %2143 = vmatmul.f32.gmra.mxu0 %v2116
      %v2144 = vpop.f32.mrf.mxu0
      %v2145 = vadd.f32 0.0, %v2144
      %2146 = vmatmul.f32.gmra.mxu0 %v2119
      %v2147 = vpop.f32.mrf.mxu0
      %v2148 = vadd.f32 0.0, %v2147
      %2149 = vmatmul.f32.gmra.mxu0 %v2122
      %v2150 = vpop.f32.mrf.mxu0
      %v2151 = vadd.f32 0.0, %v2150
      %2152 = vdwg.mxu0
      %v2154 = vsel %vm1031, %v2142, 0
      %v2157 = vsel %vm1031, %v2145, 0
      %v2160 = vsel %vm1031, %v2148, 0
      %v2163 = vsel %vm1031, %v2151, 0
      %2165 = vmatpush.msra.mxu0 0.0
      %2166 = vmatpush.msra.mxu0 0.0
      %2167 = vmatpush.msra.mxu0 0.0
      %2168 = vmatpush.msra.mxu0 0.0
      %2169 = vmatpush.msra.mxu0 0.0
      %2170 = vmatpush.msra.mxu0 0.0
      %2171 = vmatpush.msra.mxu0 0.0
      %2172 = vmatpush.msra.mxu0 0.0
      %2173 = vmatpush.msra.mxu0 0.0
      %2174 = vmatpush.msra.mxu0 0.0
      %2175 = vmatpush.msra.mxu0 0.0
      %2176 = vmatpush.msra.mxu0 0.0
      %2177 = vmatpush.msra.mxu0 0.0
      %2178 = vmatpush.msra.mxu0 0.0
      %2179 = vmatpush.msra.mxu0 %v2002
      %2180 = vmatpush.msra.mxu0 %v2001
      %2181 = vmatmul.f32.gmra.mxu0 %v2154
      %v2182 = vpop.f32.mrf.mxu0
      %v2183 = vadd.f32 0.0, %v2182
      %2184 = vmatmul.f32.gmra.mxu0 %v2157
      %v2185 = vpop.f32.mrf.mxu0
      %v2186 = vadd.f32 0.0, %v2185
      %2187 = vmatmul.f32.gmra.mxu0 %v2160
      %v2188 = vpop.f32.mrf.mxu0
      %v2189 = vadd.f32 0.0, %v2188
      %2190 = vmatmul.f32.gmra.mxu0 %v2163
      %v2191 = vpop.f32.mrf.mxu0
      %v2192 = vadd.f32 0.0, %v2191
      %2193 = vdwg.mxu0
      %v2195 = vperm.slane %v2006, 0
      %v2197 = vadd.f32 %v2195, %v2183
      %v2198 = vadd.f32 %v2195, %v2186
      %v2199 = vadd.f32 %v2195, %v2189
      %v2200 = vadd.f32 %v2195, %v2192
      %2201 = vrot.lane.b32.xlu0 %v1911, 112
      %v2202 = vpop.permute.xlu0 %2201
      %2203 = vrot.lane.b32.xlu0 %v1914, 112
      %v2204 = vpop.permute.xlu0 %2203
      %2205 = vrot.lane.b32.xlu0 %v1917, 112
      %v2206 = vpop.permute.xlu0 %2205
      %2207 = vrot.lane.b32.xlu0 %v1920, 112
      %v2208 = vpop.permute.xlu0 %2207
      %2209 = vrot.lane.b32.xlu0 %v1950, 112
      %v2210 = vpop.permute.xlu0 %2209
      %2211 = vrot.lane.b32.xlu0 %v1953, 112
      %v2212 = vpop.permute.xlu0 %2211
      %2213 = vrot.lane.b32.xlu0 %v1956, 112
      %v2214 = vpop.permute.xlu0 %2213
      %2215 = vrot.lane.b32.xlu0 %v1959, 112
      %v2216 = vpop.permute.xlu0 %2215
      %v2217 = vsel %vm1031, %v2202, 0
      %v2219 = vsel %vm1031, %v2204, 0
      %v2221 = vsel %vm1031, %v2206, 0
      %v2223 = vsel %vm1031, %v2208, 0
      %v2225 = vsel %vm1031, %v2210, 0
      %v2227 = vsel %vm1031, %v2212, 0
      %v2229 = vsel %vm1031, %v2214, 0
      %v2231 = vsel %vm1031, %v2216, 0
      %2233 = vmatpush.xpose.msra.mxu0 0.0
      %2234 = vmatpush.xpose.msra.mxu0 0.0
      %2235 = vmatpush.xpose.msra.mxu0 0.0
      %2236 = vmatpush.xpose.msra.mxu0 0.0
      %2237 = vmatpush.xpose.msra.mxu0 0.0
      %2238 = vmatpush.xpose.msra.mxu0 0.0
      %2239 = vmatpush.xpose.msra.mxu0 0.0
      %2240 = vmatpush.xpose.msra.mxu0 0.0
      %2241 = vmatpush.xpose.msra.mxu0 0.0
      %2242 = vmatpush.xpose.msra.mxu0 0.0
      %2243 = vmatpush.xpose.msra.mxu0 0.0
      %2244 = vmatpush.xpose.msra.mxu0 0.0
      %2245 = vmatpush.xpose.msra.mxu0 %v2231
      %2246 = vmatpush.xpose.msra.mxu0 %v2229
      %2247 = vmatpush.xpose.msra.mxu0 %v2227
      %2248 = vmatpush.xpose.msra.mxu0 %v2225
      %2249 = vmatmul.f32.gmra.mxu0 %v2217
      %v2250 = vpop.f32.mrf.mxu0
      %v2251 = vadd.f32 0.0, %v2250
      %2252 = vmatmul.f32.gmra.mxu0 %v2219
      %v2253 = vpop.f32.mrf.mxu0
      %v2254 = vadd.f32 0.0, %v2253
      %2255 = vmatmul.f32.gmra.mxu0 %v2221
      %v2256 = vpop.f32.mrf.mxu0
      %v2257 = vadd.f32 0.0, %v2256
      %2258 = vmatmul.f32.gmra.mxu0 %v2223
      %v2259 = vpop.f32.mrf.mxu0
      %v2260 = vadd.f32 0.0, %v2259
      %2261 = vdwg.mxu0
      %v2262 = vmul.f32 %v2251, 0.25
      %v2263 = vmul.f32 %v2254, 0.25
      %v2264 = vmul.f32 %v2257, 0.25
      %v2265 = vmul.f32 %v2260, 0.25
      %v2266 = vadd.f32 %v2262, %v1090
      %v2267 = vadd.f32 %v2263, %v1090
      %v2268 = vadd.f32 %v2264, %v1090
      %v2269 = vadd.f32 %v2265, %v1090
      %v2270 = vsel %vm910, %v2266, -inf
      %2271 = vmax.xlane.f32.xlu0 %v2270
      %v2272 = vpop.xlane.xlu0 %2271
      %v2273 = vsel %vm910, %v2267, -inf
      %2274 = vmax.xlane.f32.xlu0 %v2273
      %v2275 = vpop.xlane.xlu0 %2274
      %v2276 = vsel %vm910, %v2268, -inf
      %2277 = vmax.xlane.f32.xlu0 %v2276
      %v2278 = vpop.xlane.xlu0 %2277
      %v2279 = vsel %vm910, %v2269, -inf
      %2280 = vmax.xlane.f32.xlu0 %v2279
      %v2281 = vpop.xlane.xlu0 %2280
      %v2282 = vsub.f32 %v2266, %v2272
      %v2283 = vsub.f32 %v2267, %v2275
      %v2284 = vsub.f32 %v2268, %v2278
      %v2285 = vsub.f32 %v2269, %v2281
      %v2286 = vmul.f32 %v2282, 1.442695
      %v2287 = vpow.pop %v2286
      %v2288 = vmul.f32 %v2283, 1.442695
      %v2289 = vpow.pop %v2288
      %v2290 = vmul.f32 %v2284, 1.442695
      %v2291 = vpow.pop %v2290
      %v2292 = vmul.f32 %v2285, 1.442695
      %v2293 = vpow.pop %v2292
      %v2294 = vsel %vm910, %v2287, 0.0
      %2295 = vadd.xlane.f32.xlu0 %v2294
      %v2296 = vpop.xlane.xlu0 %2295
      %v2297 = vsel %vm910, %v2289, 0.0
      %2298 = vadd.xlane.f32.xlu0 %v2297
      %v2299 = vpop.xlane.xlu0 %2298
      %v2300 = vsel %vm910, %v2291, 0.0
      %2301 = vadd.xlane.f32.xlu0 %v2300
      %v2302 = vpop.xlane.xlu0 %2301
      %v2303 = vsel %vm910, %v2293, 0.0
      %2304 = vadd.xlane.f32.xlu0 %v2303
      %v2305 = vpop.xlane.xlu0 %2304
      %v2306 = vrcp.pop %v2296
      %v2307 = vrcp.pop %v2299
      %v2308 = vrcp.pop %v2302
      %v2309 = vrcp.pop %v2305
      %v2310 = vmul.f32 %v2287, %v2306
      %v2311 = vmul.f32 %v2289, %v2307
      %v2312 = vmul.f32 %v2291, %v2308
      %v2313 = vmul.f32 %v2293, %v2309
      %2318 = vrot.lane.b32.xlu0 %v1989, 112
      %v2319 = vpop.permute.xlu0 %2318
      %2320 = vrot.lane.b32.xlu0 %v1992, 112
      %v2321 = vpop.permute.xlu0 %2320
      %2322 = vrot.lane.b32.xlu0 %v1995, 112
      %v2323 = vpop.permute.xlu0 %2322
      %2324 = vrot.lane.b32.xlu0 %v1998, 112
      %v2325 = vpop.permute.xlu0 %2324
      %v2331 = vsel %vm910, %v2310, 0
      %v2334 = vsel %vm910, %v2311, 0
      %v2337 = vsel %vm910, %v2312, 0
      %v2340 = vsel %vm910, %v2313, 0
      %2342 = vmatpush.msra.mxu0 0.0
      %2343 = vmatpush.msra.mxu0 0.0
      %2344 = vmatpush.msra.mxu0 0.0
      %2345 = vmatpush.msra.mxu0 0.0
      %2346 = vmatpush.msra.mxu0 0.0
      %2347 = vmatpush.msra.mxu0 0.0
      %2348 = vmatpush.msra.mxu0 0.0
      %2349 = vmatpush.msra.mxu0 0.0
      %2350 = vmatpush.msra.mxu0 0.0
      %2351 = vmatpush.msra.mxu0 0.0
      %2352 = vmatpush.msra.mxu0 0.0
      %2353 = vmatpush.msra.mxu0 0.0
      %2354 = vmatpush.msra.mxu0 %v2325
      %2355 = vmatpush.msra.mxu0 %v2323
      %2356 = vmatpush.msra.mxu0 %v2321
      %2357 = vmatpush.msra.mxu0 %v2319
      %2358 = vmatmul.f32.gmra.mxu0 %v2331
      %v2359 = vpop.f32.mrf.mxu0
      %v2360 = vadd.f32 0.0, %v2359
      %2361 = vmatmul.f32.gmra.mxu0 %v2334
      %v2362 = vpop.f32.mrf.mxu0
      %v2363 = vadd.f32 0.0, %v2362
      %2364 = vmatmul.f32.gmra.mxu0 %v2337
      %v2365 = vpop.f32.mrf.mxu0
      %v2366 = vadd.f32 0.0, %v2365
      %2367 = vmatmul.f32.gmra.mxu0 %v2340
      %v2368 = vpop.f32.mrf.mxu0
      %v2369 = vadd.f32 0.0, %v2368
      %2370 = vdwg.mxu0
      %v2372 = vsel %vm1031, %v2360, 0
      %v2375 = vsel %vm1031, %v2363, 0
      %v2378 = vsel %vm1031, %v2366, 0
      %v2381 = vsel %vm1031, %v2369, 0
      %2383 = vmatpush.msra.mxu0 0.0
      %2384 = vmatpush.msra.mxu0 0.0
      %2385 = vmatpush.msra.mxu0 0.0
      %2386 = vmatpush.msra.mxu0 0.0
      %2387 = vmatpush.msra.mxu0 0.0
      %2388 = vmatpush.msra.mxu0 0.0
      %2389 = vmatpush.msra.mxu0 0.0
      %2390 = vmatpush.msra.mxu0 0.0
      %2391 = vmatpush.msra.mxu0 0.0
      %2392 = vmatpush.msra.mxu0 0.0
      %2393 = vmatpush.msra.mxu0 0.0
      %2394 = vmatpush.msra.mxu0 0.0
      %2395 = vmatpush.msra.mxu0 0.0
      %2396 = vmatpush.msra.mxu0 0.0
      %2397 = vmatpush.msra.mxu0 %v2004
      %2398 = vmatpush.msra.mxu0 %v2003
      %2399 = vmatmul.f32.gmra.mxu0 %v2372
      %v2400 = vpop.f32.mrf.mxu0
      %v2401 = vadd.f32 0.0, %v2400
      %2402 = vmatmul.f32.gmra.mxu0 %v2375
      %v2403 = vpop.f32.mrf.mxu0
      %v2404 = vadd.f32 0.0, %v2403
      %2405 = vmatmul.f32.gmra.mxu0 %v2378
      %v2406 = vpop.f32.mrf.mxu0
      %v2407 = vadd.f32 0.0, %v2406
      %2408 = vmatmul.f32.gmra.mxu0 %v2381
      %v2409 = vpop.f32.mrf.mxu0
      %v2410 = vadd.f32 0.0, %v2409
      %2411 = vdwg.mxu0
      %v2412 = vadd.f32 %v2197, %v2401
      %v2413 = vadd.f32 %v2198, %v2404
      %v2414 = vadd.f32 %v2199, %v2407
      %v2415 = vadd.f32 %v2200, %v2410
      %v2416 = vadd.f32 %v2412, %v1867
      %v2417 = vadd.f32 %v2413, %v1868
      %v2418 = vadd.f32 %v2414, %v1869
      %v2419 = vadd.f32 %v2415, %v1870
      %s2420 = scalar_lea.vmem %s12, 1
      %v2421 = vld [vmem:[%s2420] sm:$0x1]
      %s2422 = scalar_lea.vmem %s11, 1
      %v2423 = vld [vmem:[%s2422] sm:$0x1]
      %v2424 = vsel %vm910, %v2416, 0.0
      %2425 = vadd.xlane.f32.xlu0 %v2424
      %v2426 = vpop.xlane.xlu0 %2425
      %v2427 = vsel %vm910, %v2417, 0.0
      %2428 = vadd.xlane.f32.xlu0 %v2427
      %v2429 = vpop.xlane.xlu0 %2428
      %v2430 = vsel %vm910, %v2418, 0.0
      %2431 = vadd.xlane.f32.xlu0 %v2430
      %v2432 = vpop.xlane.xlu0 %2431
      %v2433 = vsel %vm910, %v2419, 0.0
      %2434 = vadd.xlane.f32.xlu0 %v2433
      %v2435 = vpop.xlane.xlu0 %2434
      %v2436 = vmul.f32 %v2426, %v1468
      %v2437 = vmul.f32 %v2429, %v1468
      %v2438 = vmul.f32 %v2432, %v1468
      %v2439 = vmul.f32 %v2435, %v1468
      %v2440 = vsub.f32 %v2416, %v2436
      %v2441 = vsub.f32 %v2417, %v2437
      %v2442 = vsub.f32 %v2418, %v2438
      %v2443 = vsub.f32 %v2419, %v2439
      %v2444 = vmul.f32 %v2440, %v2440
      %v2445 = vmul.f32 %v2441, %v2441
      %v2446 = vmul.f32 %v2442, %v2442
      %v2447 = vmul.f32 %v2443, %v2443
      %v2448 = vsel %vm910, %v2444, 0.0
      %2449 = vadd.xlane.f32.xlu0 %v2448
      %v2450 = vpop.xlane.xlu0 %2449
      %v2451 = vsel %vm910, %v2445, 0.0
      %2452 = vadd.xlane.f32.xlu0 %v2451
      %v2453 = vpop.xlane.xlu0 %2452
      %v2454 = vsel %vm910, %v2446, 0.0
      %2455 = vadd.xlane.f32.xlu0 %v2454
      %v2456 = vpop.xlane.xlu0 %2455
      %v2457 = vsel %vm910, %v2447, 0.0
      %2458 = vadd.xlane.f32.xlu0 %v2457
      %v2459 = vpop.xlane.xlu0 %2458
      %v2460 = vmul.f32 %v2450, %v1468
      %v2461 = vmul.f32 %v2453, %v1468
      %v2462 = vmul.f32 %v2456, %v1468
      %v2463 = vmul.f32 %v2459, %v1468
      %v2464 = vadd.f32 %v2460, 1e-05
      %v2465 = vadd.f32 %v2461, 1e-05
      %v2466 = vadd.f32 %v2462, 1e-05
      %v2467 = vadd.f32 %v2463, 1e-05
      %v2468 = vrsqrt.pop %v2464
      %v2469 = vmul.f32 %v2468, %v2464
      %v2470 = vmul.f32 %v2469, %v2468
      %v2471 = vmul.f32 0.5, %v2470
      %v2472 = vsub.f32 1.5, %v2471
      %v2473 = vmul.f32 %v2468, %v2472
      %vm2474 = vweird.f32 %v2464
      %vm2475 = vweird.f32 %v2468
      %vm2476 = vmor %vm2474, %vm2475
      %v2477 = vsel %vm2476, %v2468, %v2473
      %v2478 = vrsqrt.pop %v2465
      %v2479 = vmul.f32 %v2478, %v2465
      %v2480 = vmul.f32 %v2479, %v2478
      %v2481 = vmul.f32 0.5, %v2480
      %v2482 = vsub.f32 1.5, %v2481
      %v2483 = vmul.f32 %v2478, %v2482
      %vm2484 = vweird.f32 %v2465
      %vm2485 = vweird.f32 %v2478
      %vm2486 = vmor %vm2484, %vm2485
      %v2487 = vsel %vm2486, %v2478, %v2483
      %v2488 = vrsqrt.pop %v2466
      %v2489 = vmul.f32 %v2488, %v2466
      %v2490 = vmul.f32 %v2489, %v2488
      %v2491 = vmul.f32 0.5, %v2490
      %v2492 = vsub.f32 1.5, %v2491
      %v2493 = vmul.f32 %v2488, %v2492
      %vm2494 = vweird.f32 %v2466
      %vm2495 = vweird.f32 %v2488
      %vm2496 = vmor %vm2494, %vm2495
      %v2497 = vsel %vm2496, %v2488, %v2493
      %v2498 = vrsqrt.pop %v2467
      %v2499 = vmul.f32 %v2498, %v2467
      %v2500 = vmul.f32 %v2499, %v2498
      %v2501 = vmul.f32 0.5, %v2500
      %v2502 = vsub.f32 1.5, %v2501
      %v2503 = vmul.f32 %v2498, %v2502
      %vm2504 = vweird.f32 %v2467
      %vm2505 = vweird.f32 %v2498
      %vm2506 = vmor %vm2504, %vm2505
      %v2507 = vsel %vm2506, %v2498, %v2503
      %v2508 = vmul.f32 %v2440, %v2477
      %v2509 = vmul.f32 %v2441, %v2487
      %v2510 = vmul.f32 %v2442, %v2497
      %v2511 = vmul.f32 %v2443, %v2507
      %v2513 = vperm.slane %v2421, 0
      %v2515 = vmul.f32 %v2508, %v2513
      %v2516 = vmul.f32 %v2509, %v2513
      %v2517 = vmul.f32 %v2510, %v2513
      %v2518 = vmul.f32 %v2511, %v2513
      %v2520 = vperm.slane %v2423, 0
      %v2522 = vadd.f32 %v2515, %v2520
      %v2523 = vadd.f32 %v2516, %v2520
      %v2524 = vadd.f32 %v2517, %v2520
      %v2525 = vadd.f32 %v2518, %v2520
      %v2526 = vmul.f32 %v2522, %v1562
      %v2527 = vmul.f32 %v2523, %v1567
      %v2528 = vmul.f32 %v2524, %v1572
      %v2529 = vmul.f32 %v2525, %v1577
      %s2530 = scalar_lea.vmem %s8, 96
      %v2531 = vld [vmem:[%s2530] sm:$0xff]
      %v2532 = vld [vmem:[%s2530 + $0x8] sm:$0xff]
      %v2533 = vld [vmem:[%s2530 + $0x10] sm:$0xff]
      %v2534 = vld [vmem:[%s2530 + $0x18] sm:$0xff]
      %v2535 = vld [vmem:[%s2530 + $0x20] sm:$0xff]
      %v2536 = vld [vmem:[%s2530 + $0x28] sm:$0xff]
      %v2537 = vld [vmem:[%s2530 + $0x30] sm:$0xff]
      %v2538 = vld [vmem:[%s2530 + $0x38] sm:$0xff]
      %v2539 = vld [vmem:[%s2530 + $0x40] sm:$0xff]
      %v2540 = vld [vmem:[%s2530 + $0x48] sm:$0xff]
      %v2541 = vld [vmem:[%s2530 + $0x50] sm:$0xff]
      %v2542 = vld [vmem:[%s2530 + $0x58] sm:$0xff]
      %s2543 = scalar_lea.vmem %s7, 1
      %v2544 = vld [vmem:[%s2543] sm:$0x1]
      %v2549 = vrot.slane %v2526, 7
      %v2550 = vrot.slane %v2527, 7
      %v2551 = vsel %vm1600, %v2549, %v2550
      %v2552 = vrot.slane %v2528, 7
      %v2553 = vsel %vm1600, %v2550, %v2552
      %v2554 = vrot.slane %v2529, 7
      %v2555 = vsel %vm1600, %v2552, %v2554
      %v2560 = vsel %vm1600, 0.0, %v2549
      %v2561 = vrot.slane %v2526, 1
      %v2562 = vrot.slane %v2527, 1
      %v2563 = vsel %vm1613, %v2561, %v2562
      %v2564 = vrot.slane %v2528, 1
      %v2565 = vsel %vm1613, %v2562, %v2564
      %v2566 = vrot.slane %v2529, 1
      %v2567 = vsel %vm1613, %v2564, %v2566
      %v2569 = vsel %vm1613, %v2566, 0.0
      %2570 = vrot.lane.b32.xlu0 %v2526, 32
      %v2571 = vpop.permute.xlu0 %2570
      %2572 = vrot.lane.b32.xlu0 %v2527, 32
      %v2573 = vpop.permute.xlu0 %2572
      %2574 = vrot.lane.b32.xlu0 %v2528, 32
      %v2575 = vpop.permute.xlu0 %2574
      %2576 = vrot.lane.b32.xlu0 %v2529, 32
      %v2577 = vpop.permute.xlu0 %2576
      %2583 = vrot.lane.b32.xlu0 %v2563, 64
      %v2584 = vpop.permute.xlu0 %2583
      %2585 = vrot.lane.b32.xlu0 %v2565, 64
      %v2586 = vpop.permute.xlu0 %2585
      %2587 = vrot.lane.b32.xlu0 %v2567, 64
      %v2588 = vpop.permute.xlu0 %2587
      %2589 = vrot.lane.b32.xlu0 %v2569, 64
      %v2590 = vpop.permute.xlu0 %2589
      %v2595 = vsel %vm910, %v2560, %v2571
      %v2596 = vsel %vm910, %v2551, %v2573
      %v2597 = vsel %vm910, %v2553, %v2575
      %v2598 = vsel %vm910, %v2555, %v2577
      %v2599 = vsel %vm1652, %v2595, %v2584
      %v2600 = vsel %vm1652, %v2596, %v2586
      %v2601 = vsel %vm1652, %v2597, %v2588
      %v2602 = vsel %vm1652, %v2598, %v2590
      %v2604 = vperm.slane %v2544, 0
      %v2607 = vsel %vm1660, %v2599, 0
      %v2610 = vsel %vm1660, %v2600, 0
      %v2613 = vsel %vm1660, %v2601, 0
      %v2616 = vsel %vm1660, %v2602, 0
      %2618 = vmatpush.msra.mxu0 0.0
      %2619 = vmatpush.msra.mxu0 0.0
      %2620 = vmatpush.msra.mxu0 0.0
      %2621 = vmatpush.msra.mxu0 0.0
      %2622 = vmatpush.msra.mxu0 %v2542
      %2623 = vmatpush.msra.mxu0 %v2541
      %2624 = vmatpush.msra.mxu0 %v2540
      %2625 = vmatpush.msra.mxu0 %v2539
      %2626 = vmatpush.msra.mxu0 %v2538
      %2627 = vmatpush.msra.mxu0 %v2537
      %2628 = vmatpush.msra.mxu0 %v2536
      %2629 = vmatpush.msra.mxu0 %v2535
      %2630 = vmatpush.msra.mxu0 %v2534
      %2631 = vmatpush.msra.mxu0 %v2533
      %2632 = vmatpush.msra.mxu0 %v2532
      %2633 = vmatpush.msra.mxu0 %v2531
      %2634 = vmatmul.f32.gmra.mxu0 %v2607
      %v2635 = vpop.f32.mrf.mxu0
      %v2636 = vadd.f32 %v2604, %v2635
      %2637 = vmatmul.f32.gmra.mxu0 %v2610
      %v2638 = vpop.f32.mrf.mxu0
      %v2639 = vadd.f32 %v2604, %v2638
      %2640 = vmatmul.f32.gmra.mxu0 %v2613
      %v2641 = vpop.f32.mrf.mxu0
      %v2642 = vadd.f32 %v2604, %v2641
      %2643 = vmatmul.f32.gmra.mxu0 %v2616
      %v2644 = vpop.f32.mrf.mxu0
      %v2645 = vadd.f32 %v2604, %v2644
      %2646 = vdwg.mxu0
      %v2647 = vmax.f32 %v2636, 0.0
      %v2648 = vmax.f32 %v2639, 0.0
      %v2649 = vmax.f32 %v2642, 0.0
      %v2650 = vmax.f32 %v2645, 0.0
      %s2651 = scalar_lea.vmem %s10, 64
      %v2652 = vld [vmem:[%s2651] sm:$0xff]
      %v2653 = vld [vmem:[%s2651 + $0x8] sm:$0xff]
      %v2654 = vld [vmem:[%s2651 + $0x10] sm:$0xff]
      %v2655 = vld [vmem:[%s2651 + $0x18] sm:$0xff]
      %v2656 = vld [vmem:[%s2651 + $0x20] sm:$0xff]
      %v2657 = vld [vmem:[%s2651 + $0x28] sm:$0xff]
      %v2658 = vld [vmem:[%s2651 + $0x30] sm:$0xff]
      %v2659 = vld [vmem:[%s2651 + $0x38] sm:$0xff]
      %s2660 = scalar_lea.vmem %s9, 1
      %v2661 = vld [vmem:[%s2660] sm:$0x1]
      %v2663 = vperm.slane %v2661, 0
      %v2666 = vsel %vm1652, %v2647, 0
      %v2669 = vsel %vm1652, %v2648, 0
      %v2672 = vsel %vm1652, %v2649, 0
      %v2675 = vsel %vm1652, %v2650, 0
      %2677 = vmatpush.msra.mxu0 0.0
      %2678 = vmatpush.msra.mxu0 0.0
      %2679 = vmatpush.msra.mxu0 0.0
      %2680 = vmatpush.msra.mxu0 0.0
      %2681 = vmatpush.msra.mxu0 0.0
      %2682 = vmatpush.msra.mxu0 0.0
      %2683 = vmatpush.msra.mxu0 0.0
      %2684 = vmatpush.msra.mxu0 0.0
      %2685 = vmatpush.msra.mxu0 %v2659
      %2686 = vmatpush.msra.mxu0 %v2658
      %2687 = vmatpush.msra.mxu0 %v2657
      %2688 = vmatpush.msra.mxu0 %v2656
      %2689 = vmatpush.msra.mxu0 %v2655
      %2690 = vmatpush.msra.mxu0 %v2654
      %2691 = vmatpush.msra.mxu0 %v2653
      %2692 = vmatpush.msra.mxu0 %v2652
      %2693 = vmatmul.f32.gmra.mxu0 %v2666
      %v2694 = vpop.f32.mrf.mxu0
      %v2695 = vadd.f32 %v2663, %v2694
      %2696 = vmatmul.f32.gmra.mxu0 %v2669
      %v2697 = vpop.f32.mrf.mxu0
      %v2698 = vadd.f32 %v2663, %v2697
      %2699 = vmatmul.f32.gmra.mxu0 %v2672
      %v2700 = vpop.f32.mrf.mxu0
      %v2701 = vadd.f32 %v2663, %v2700
      %2702 = vmatmul.f32.gmra.mxu0 %v2675
      %v2703 = vpop.f32.mrf.mxu0
      %v2704 = vadd.f32 %v2663, %v2703
      %2705 = vdwg.mxu0
      %v2706 = vadd.f32 %v2695, %v2526
      %v2707 = vadd.f32 %v2698, %v2527
      %v2708 = vadd.f32 %v2701, %v2528
      %v2709 = vadd.f32 %v2704, %v2529
      %s2710 = scalar_lea.vmem %s14, 1
      %v2711 = vld [vmem:[%s2710] sm:$0x1]
      %s2712 = scalar_lea.vmem %s13, 1
      %v2713 = vld [vmem:[%s2712] sm:$0x1]
      %v2714 = vsel %vm910, %v2706, 0.0
      %2715 = vadd.xlane.f32.xlu0 %v2714
      %v2716 = vpop.xlane.xlu0 %2715
      %v2717 = vsel %vm910, %v2707, 0.0
      %2718 = vadd.xlane.f32.xlu0 %v2717
      %v2719 = vpop.xlane.xlu0 %2718
      %v2720 = vsel %vm910, %v2708, 0.0
      %2721 = vadd.xlane.f32.xlu0 %v2720
      %v2722 = vpop.xlane.xlu0 %2721
      %v2723 = vsel %vm910, %v2709, 0.0
      %2724 = vadd.xlane.f32.xlu0 %v2723
      %v2725 = vpop.xlane.xlu0 %2724
      %v2726 = vmul.f32 %v2716, %v1468
      %v2727 = vmul.f32 %v2719, %v1468
      %v2728 = vmul.f32 %v2722, %v1468
      %v2729 = vmul.f32 %v2725, %v1468
      %v2730 = vsub.f32 %v2706, %v2726
      %v2731 = vsub.f32 %v2707, %v2727
      %v2732 = vsub.f32 %v2708, %v2728
      %v2733 = vsub.f32 %v2709, %v2729
      %v2734 = vmul.f32 %v2730, %v2730
      %v2735 = vmul.f32 %v2731, %v2731
      %v2736 = vmul.f32 %v2732, %v2732
      %v2737 = vmul.f32 %v2733, %v2733
      %v2738 = vsel %vm910, %v2734, 0.0
      %2739 = vadd.xlane.f32.xlu0 %v2738
      %v2740 = vpop.xlane.xlu0 %2739
      %v2741 = vsel %vm910, %v2735, 0.0
      %2742 = vadd.xlane.f32.xlu0 %v2741
      %v2743 = vpop.xlane.xlu0 %2742
      %v2744 = vsel %vm910, %v2736, 0.0
      %2745 = vadd.xlane.f32.xlu0 %v2744
      %v2746 = vpop.xlane.xlu0 %2745
      %v2747 = vsel %vm910, %v2737, 0.0
      %2748 = vadd.xlane.f32.xlu0 %v2747
      %v2749 = vpop.xlane.xlu0 %2748
      %v2750 = vmul.f32 %v2740, %v1468
      %v2751 = vmul.f32 %v2743, %v1468
      %v2752 = vmul.f32 %v2746, %v1468
      %v2753 = vmul.f32 %v2749, %v1468
      %v2754 = vadd.f32 %v2750, 1e-05
      %v2755 = vadd.f32 %v2751, 1e-05
      %v2756 = vadd.f32 %v2752, 1e-05
      %v2757 = vadd.f32 %v2753, 1e-05
      %v2758 = vrsqrt.pop %v2754
      %v2759 = vmul.f32 %v2758, %v2754
      %v2760 = vmul.f32 %v2759, %v2758
      %v2761 = vmul.f32 0.5, %v2760
      %v2762 = vsub.f32 1.5, %v2761
      %v2763 = vmul.f32 %v2758, %v2762
      %vm2764 = vweird.f32 %v2754
      %vm2765 = vweird.f32 %v2758
      %vm2766 = vmor %vm2764, %vm2765
      %v2767 = vsel %vm2766, %v2758, %v2763
      %v2768 = vrsqrt.pop %v2755
      %v2769 = vmul.f32 %v2768, %v2755
      %v2770 = vmul.f32 %v2769, %v2768
      %v2771 = vmul.f32 0.5, %v2770
      %v2772 = vsub.f32 1.5, %v2771
      %v2773 = vmul.f32 %v2768, %v2772
      %vm2774 = vweird.f32 %v2755
      %vm2775 = vweird.f32 %v2768
      %vm2776 = vmor %vm2774, %vm2775
      %v2777 = vsel %vm2776, %v2768, %v2773
      %v2778 = vrsqrt.pop %v2756
      %v2779 = vmul.f32 %v2778, %v2756
      %v2780 = vmul.f32 %v2779, %v2778
      %v2781 = vmul.f32 0.5, %v2780
      %v2782 = vsub.f32 1.5, %v2781
      %v2783 = vmul.f32 %v2778, %v2782
      %vm2784 = vweird.f32 %v2756
      %vm2785 = vweird.f32 %v2778
      %vm2786 = vmor %vm2784, %vm2785
      %v2787 = vsel %vm2786, %v2778, %v2783
      %v2788 = vrsqrt.pop %v2757
      %v2789 = vmul.f32 %v2788, %v2757
      %v2790 = vmul.f32 %v2789, %v2788
      %v2791 = vmul.f32 0.5, %v2790
      %v2792 = vsub.f32 1.5, %v2791
      %v2793 = vmul.f32 %v2788, %v2792
      %vm2794 = vweird.f32 %v2757
      %vm2795 = vweird.f32 %v2788
      %vm2796 = vmor %vm2794, %vm2795
      %v2797 = vsel %vm2796, %v2788, %v2793
      %v2798 = vmul.f32 %v2730, %v2767
      %v2799 = vmul.f32 %v2731, %v2777
      %v2800 = vmul.f32 %v2732, %v2787
      %v2801 = vmul.f32 %v2733, %v2797
      %v2803 = vperm.slane %v2711, 0
      %v2805 = vmul.f32 %v2798, %v2803
      %v2806 = vmul.f32 %v2799, %v2803
      %v2807 = vmul.f32 %v2800, %v2803
      %v2808 = vmul.f32 %v2801, %v2803
      %v2810 = vperm.slane %v2713, 0
      %v2812 = vadd.f32 %v2805, %v2810
      %v2813 = vadd.f32 %v2806, %v2810
      %v2814 = vadd.f32 %v2807, %v2810
      %v2815 = vadd.f32 %v2808, %v2810
      %v2816 = vmul.f32 %v2812, %v1562
      %v2817 = vmul.f32 %v2813, %v1567
      %v2818 = vmul.f32 %v2814, %v1572
      %v2819 = vmul.f32 %v2815, %v1577
      %v2820 = vld [vmem:[%s20] sm:$0xff]
      %v2821 = vld [vmem:[%s20 + $0x8] sm:$0xff]
      %v2822 = vld [vmem:[%s20 + $0x10] sm:$0xff]
      %v2823 = vld [vmem:[%s20 + $0x18] sm:$0xff]
      %v2824 = vld [vmem:[%s19] sm:$0x1]
      %v2826 = vperm.slane %v2824, 0
      %v2829 = vsel %vm910, %v2816, 0
      %v2832 = vsel %vm910, %v2817, 0
      %v2835 = vsel %vm910, %v2818, 0
      %v2838 = vsel %vm910, %v2819, 0
      %2840 = vmatpush.msra.mxu0 0.0
      %2841 = vmatpush.msra.mxu0 0.0
      %2842 = vmatpush.msra.mxu0 0.0
      %2843 = vmatpush.msra.mxu0 0.0
      %2844 = vmatpush.msra.mxu0 0.0
      %2845 = vmatpush.msra.mxu0 0.0
      %2846 = vmatpush.msra.mxu0 0.0
      %2847 = vmatpush.msra.mxu0 0.0
      %2848 = vmatpush.msra.mxu0 0.0
      %2849 = vmatpush.msra.mxu0 0.0
      %2850 = vmatpush.msra.mxu0 0.0
      %2851 = vmatpush.msra.mxu0 0.0
      %2852 = vmatpush.msra.mxu0 %v2823
      %2853 = vmatpush.msra.mxu0 %v2822
      %2854 = vmatpush.msra.mxu0 %v2821
      %2855 = vmatpush.msra.mxu0 %v2820
      %2856 = vmatmul.f32.gmra.mxu0 %v2829
      %v2857 = vpop.f32.mrf.mxu0
      %v2858 = vadd.f32 %v2826, %v2857
      %2859 = vmatmul.f32.gmra.mxu0 %v2832
      %v2860 = vpop.f32.mrf.mxu0
      %v2861 = vadd.f32 %v2826, %v2860
      %2862 = vmatmul.f32.gmra.mxu0 %v2835
      %v2863 = vpop.f32.mrf.mxu0
      %v2864 = vadd.f32 %v2826, %v2863
      %2865 = vmatmul.f32.gmra.mxu0 %v2838
      %v2866 = vpop.f32.mrf.mxu0
      %v2867 = vadd.f32 %v2826, %v2866
      %2868 = vdwg.mxu0
      %v2869 = vld [vmem:[%s24] sm:$0xff]
      %v2870 = vld [vmem:[%s24 + $0x8] sm:$0xff]
      %v2871 = vld [vmem:[%s24 + $0x10] sm:$0xff]
      %v2872 = vld [vmem:[%s24 + $0x18] sm:$0xff]
      %v2873 = vld [vmem:[%s24 + $0x20] sm:$0xff]
      %v2874 = vld [vmem:[%s24 + $0x28] sm:$0xff]
      %v2875 = vld [vmem:[%s24 + $0x30] sm:$0xff]
      %v2876 = vld [vmem:[%s24 + $0x38] sm:$0xff]
      %v2877 = vld [vmem:[%s24 + $0x40] sm:$0xff]
      %v2878 = vld [vmem:[%s24 + $0x48] sm:$0xff]
      %v2879 = vld [vmem:[%s21] sm:$0x1]
      %vm2884 = vcmask 1041408
      %v2885 = vrot.slane %v2858, 6
      %v2886 = vrot.slane %v2861, 6
      %v2887 = vsel %vm2884, %v2885, %v2886
      %v2888 = vrot.slane %v2864, 6
      %v2889 = vsel %vm2884, %v2886, %v2888
      %v2890 = vrot.slane %v2867, 6
      %v2891 = vsel %vm2884, %v2888, %v2890
      %v2896 = vsel %vm2884, 0.0, %v2885
      %v2897 = vrot.slane %v2858, 7
      %v2898 = vrot.slane %v2861, 7
      %v2899 = vsel %vm1600, %v2897, %v2898
      %v2900 = vrot.slane %v2864, 7
      %v2901 = vsel %vm1600, %v2898, %v2900
      %v2902 = vrot.slane %v2867, 7
      %v2903 = vsel %vm1600, %v2900, %v2902
      %v2905 = vsel %vm1600, 0.0, %v2897
      %v2906 = vrot.slane %v2858, 1
      %v2907 = vrot.slane %v2861, 1
      %v2908 = vsel %vm1613, %v2906, %v2907
      %v2909 = vrot.slane %v2864, 1
      %v2910 = vsel %vm1613, %v2907, %v2909
      %v2911 = vrot.slane %v2867, 1
      %v2912 = vsel %vm1613, %v2909, %v2911
      %v2914 = vsel %vm1613, %v2911, 0.0
      %vm2915 = vcmask 1045504
      %v2916 = vrot.slane %v2858, 2
      %v2917 = vrot.slane %v2861, 2
      %v2918 = vsel %vm2915, %v2916, %v2917
      %v2919 = vrot.slane %v2864, 2
      %v2920 = vsel %vm2915, %v2917, %v2919
      %v2921 = vrot.slane %v2867, 2
      %v2922 = vsel %vm2915, %v2919, %v2921
      %v2924 = vsel %vm2915, %v2921, 0.0
      %2926 = vrot.lane.b32.xlu0 %v2905, 16
      %v2927 = vpop.permute.xlu0 %2926
      %2928 = vrot.lane.b32.xlu0 %v2899, 16
      %v2929 = vpop.permute.xlu0 %2928
      %2930 = vrot.lane.b32.xlu0 %v2901, 16
      %v2931 = vpop.permute.xlu0 %2930
      %2932 = vrot.lane.b32.xlu0 %v2903, 16
      %v2933 = vpop.permute.xlu0 %2932
      %2938 = vrot.lane.b32.xlu0 %v2858, 32
      %v2939 = vpop.permute.xlu0 %2938
      %2940 = vrot.lane.b32.xlu0 %v2861, 32
      %v2941 = vpop.permute.xlu0 %2940
      %2942 = vrot.lane.b32.xlu0 %v2864, 32
      %v2943 = vpop.permute.xlu0 %2942
      %2944 = vrot.lane.b32.xlu0 %v2867, 32
      %v2945 = vpop.permute.xlu0 %2944
      %2951 = vrot.lane.b32.xlu0 %v2908, 48
      %v2952 = vpop.permute.xlu0 %2951
      %2953 = vrot.lane.b32.xlu0 %v2910, 48
      %v2954 = vpop.permute.xlu0 %2953
      %2955 = vrot.lane.b32.xlu0 %v2912, 48
      %v2956 = vpop.permute.xlu0 %2955
      %2957 = vrot.lane.b32.xlu0 %v2914, 48
      %v2958 = vpop.permute.xlu0 %2957
      %2964 = vrot.lane.b32.xlu0 %v2918, 64
      %v2965 = vpop.permute.xlu0 %2964
      %2966 = vrot.lane.b32.xlu0 %v2920, 64
      %v2967 = vpop.permute.xlu0 %2966
      %2968 = vrot.lane.b32.xlu0 %v2922, 64
      %v2969 = vpop.permute.xlu0 %2968
      %2970 = vrot.lane.b32.xlu0 %v2924, 64
      %v2971 = vpop.permute.xlu0 %2970
      %v2976 = vsel %vm1031, %v2896, %v2927
      %v2977 = vsel %vm1031, %v2887, %v2929
      %v2978 = vsel %vm1031, %v2889, %v2931
      %v2979 = vsel %vm1031, %v2891, %v2933
      %v2980 = vsel %vm910, %v2976, %v2939
      %v2981 = vsel %vm910, %v2977, %v2941
      %v2982 = vsel %vm910, %v2978, %v2943
      %v2983 = vsel %vm910, %v2979, %v2945
      %vm2984 = vcmask 392192
      %v2985 = vsel %vm2984, %v2980, %v2952
      %v2986 = vsel %vm2984, %v2981, %v2954
      %v2987 = vsel %vm2984, %v2982, %v2956
      %v2988 = vsel %vm2984, %v2983, %v2958
      %v2989 = vsel %vm1652, %v2985, %v2965
      %v2990 = vsel %vm1652, %v2986, %v2967
      %v2991 = vsel %vm1652, %v2987, %v2969
      %v2992 = vsel %vm1652, %v2988, %v2971
      %v2994 = vperm.slane %v2879, 0
      %vm2996 = vcmask 654336
      %v2998 = vsel %vm2996, %v2989, 0
      %v3001 = vsel %vm2996, %v2990, 0
      %v3004 = vsel %vm2996, %v2991, 0
      %v3007 = vsel %vm2996, %v2992, 0
      %3009 = vmatpush.msra.mxu0 0.0
      %3010 = vmatpush.msra.mxu0 0.0
      %3011 = vmatpush.msra.mxu0 0.0
      %3012 = vmatpush.msra.mxu0 0.0
      %3013 = vmatpush.msra.mxu0 0.0
      %3014 = vmatpush.msra.mxu0 0.0
      %3015 = vmatpush.msra.mxu0 %v2878
      %3016 = vmatpush.msra.mxu0 %v2877
      %3017 = vmatpush.msra.mxu0 %v2876
      %3018 = vmatpush.msra.mxu0 %v2875
      %3019 = vmatpush.msra.mxu0 %v2874
      %3020 = vmatpush.msra.mxu0 %v2873
      %3021 = vmatpush.msra.mxu0 %v2872
      %3022 = vmatpush.msra.mxu0 %v2871
      %3023 = vmatpush.msra.mxu0 %v2870
      %3024 = vmatpush.msra.mxu0 %v2869
      %3025 = vmatmul.f32.gmra.mxu0 %v2998
      %v3026 = vpop.f32.mrf.mxu0
      %v3027 = vadd.f32 %v2994, %v3026
      %3028 = vmatmul.f32.gmra.mxu0 %v3001
      %v3029 = vpop.f32.mrf.mxu0
      %v3030 = vadd.f32 %v2994, %v3029
      %3031 = vmatmul.f32.gmra.mxu0 %v3004
      %v3032 = vpop.f32.mrf.mxu0
      %v3033 = vadd.f32 %v2994, %v3032
      %3034 = vmatmul.f32.gmra.mxu0 %v3007
      %v3035 = vpop.f32.mrf.mxu0
      %v3036 = vadd.f32 %v2994, %v3035
      %3037 = vdwg.mxu0
      %v3038 = vtanh.pop %v3027
      %v3039 = vtanh.pop %v3030
      %v3040 = vtanh.pop %v3033
      %v3041 = vtanh.pop %v3036
      %v3042 = vld [vmem:[%s25] sm:$0xff]
      %v3043 = vld [vmem:[%s25 + $0x8] sm:$0xff]
      %v3044 = vld [vmem:[%s25 + $0x10] sm:$0xff]
      %v3045 = vld [vmem:[%s25 + $0x18] sm:$0xff]
      %v3046 = vld [vmem:[%s25 + $0x20] sm:$0xff]
      %v3047 = vld [vmem:[%s25 + $0x28] sm:$0xff]
      %v3048 = vld [vmem:[%s25 + $0x30] sm:$0xff]
      %v3049 = vld [vmem:[%s25 + $0x38] sm:$0xff]
      %v3050 = vld [vmem:[%s25 + $0x40] sm:$0xff]
      %v3051 = vld [vmem:[%s25 + $0x48] sm:$0xff]
      %v3052 = vld [vmem:[%s25 + $0x50] sm:$0xff]
      %v3053 = vld [vmem:[%s25 + $0x58] sm:$0xff]
      %v3054 = vld [vmem:[%s25 + $0x60] sm:$0xff]
      %v3055 = vld [vmem:[%s25 + $0x68] sm:$0xff]
      %v3056 = vld [vmem:[%s25 + $0x70] sm:$0xff]
      %v3057 = vld [vmem:[%s25 + $0x78] sm:$0xff]
      %v3058 = vld [vmem:[%s25 + $0x80] sm:$0xff]
      %v3059 = vld [vmem:[%s25 + $0x88] sm:$0xff]
      %v3060 = vld [vmem:[%s25 + $0x90] sm:$0xff]
      %v3061 = vld [vmem:[%s25 + $0x98] sm:$0xff]
      %v3062 = vld [vmem:[%s22] sm:$0x1]
      %v3067 = vrot.slane %v3038, 6
      %v3068 = vrot.slane %v3039, 6
      %v3069 = vsel %vm2884, %v3067, %v3068
      %v3070 = vrot.slane %v3040, 6
      %v3071 = vsel %vm2884, %v3068, %v3070
      %v3072 = vrot.slane %v3041, 6
      %v3073 = vsel %vm2884, %v3070, %v3072
      %v3078 = vsel %vm2884, 0.0, %v3067
      %v3079 = vrot.slane %v3038, 7
      %v3080 = vrot.slane %v3039, 7
      %v3081 = vsel %vm1600, %v3079, %v3080
      %v3082 = vrot.slane %v3040, 7
      %v3083 = vsel %vm1600, %v3080, %v3082
      %v3084 = vrot.slane %v3041, 7
      %v3085 = vsel %vm1600, %v3082, %v3084
      %v3087 = vsel %vm1600, 0.0, %v3079
      %v3088 = vrot.slane %v3038, 1
      %v3089 = vrot.slane %v3039, 1
      %v3090 = vsel %vm1613, %v3088, %v3089
      %v3091 = vrot.slane %v3040, 1
      %v3092 = vsel %vm1613, %v3089, %v3091
      %v3093 = vrot.slane %v3041, 1
      %v3094 = vsel %vm1613, %v3091, %v3093
      %v3096 = vsel %vm1613, %v3093, 0.0
      %v3097 = vrot.slane %v3038, 2
      %v3098 = vrot.slane %v3039, 2
      %v3099 = vsel %vm2915, %v3097, %v3098
      %v3100 = vrot.slane %v3040, 2
      %v3101 = vsel %vm2915, %v3098, %v3100
      %v3102 = vrot.slane %v3041, 2
      %v3103 = vsel %vm2915, %v3100, %v3102
      %v3105 = vsel %vm2915, %v3102, 0.0
      %3107 = vrot.lane.b32.xlu0 %v3087, 32
      %v3108 = vpop.permute.xlu0 %3107
      %3109 = vrot.lane.b32.xlu0 %v3081, 32
      %v3110 = vpop.permute.xlu0 %3109
      %3111 = vrot.lane.b32.xlu0 %v3083, 32
      %v3112 = vpop.permute.xlu0 %3111
      %3113 = vrot.lane.b32.xlu0 %v3085, 32
      %v3114 = vpop.permute.xlu0 %3113
      %3119 = vrot.lane.b32.xlu0 %v3038, 64
      %v3120 = vpop.permute.xlu0 %3119
      %3121 = vrot.lane.b32.xlu0 %v3039, 64
      %v3122 = vpop.permute.xlu0 %3121
      %3123 = vrot.lane.b32.xlu0 %v3040, 64
      %v3124 = vpop.permute.xlu0 %3123
      %3125 = vrot.lane.b32.xlu0 %v3041, 64
      %v3126 = vpop.permute.xlu0 %3125
      %3132 = vrot.lane.b32.xlu0 %v3090, 96
      %v3133 = vpop.permute.xlu0 %3132
      %3134 = vrot.lane.b32.xlu0 %v3092, 96
      %v3135 = vpop.permute.xlu0 %3134
      %3136 = vrot.lane.b32.xlu0 %v3094, 96
      %v3137 = vpop.permute.xlu0 %3136
      %3138 = vrot.lane.b32.xlu0 %v3096, 96
      %v3139 = vpop.permute.xlu0 %3138
      %v3144 = vsel %vm910, %v3078, %v3108
      %v3145 = vsel %vm910, %v3069, %v3110
      %v3146 = vsel %vm910, %v3071, %v3112
      %v3147 = vsel %vm910, %v3073, %v3114
      %v3148 = vsel %vm1652, %v3144, %v3120
      %v3149 = vsel %vm1652, %v3145, %v3122
      %v3150 = vsel %vm1652, %v3146, %v3124
      %v3151 = vsel %vm1652, %v3147, %v3126
      %v3152 = vsel %vm1660, %v3148, %v3133
      %v3153 = vsel %vm1660, %v3149, %v3135
      %v3154 = vsel %vm1660, %v3150, %v3137
      %v3155 = vsel %vm1660, %v3151, %v3139
      %v3157 = vperm.slane %v3062, 0
      %v3159 = vsel %vm910, %v3099, 0
      %v3161 = vsel %vm910, %v3101, 0
      %v3163 = vsel %vm910, %v3103, 0
      %v3166 = vsel %vm910, %v3105, 0
      %3168 = vmatpush.msra.mxu0 %v3057
      %3169 = vmatpush.msra.mxu0 %v3056
      %3170 = vmatpush.msra.mxu0 %v3055
      %3171 = vmatpush.msra.mxu0 %v3054
      %3172 = vmatpush.msra.mxu0 %v3053
      %3173 = vmatpush.msra.mxu0 %v3052
      %3174 = vmatpush.msra.mxu0 %v3051
      %3175 = vmatpush.msra.mxu0 %v3050
      %3176 = vmatpush.msra.mxu0 %v3049
      %3177 = vmatpush.msra.mxu0 %v3048
      %3178 = vmatpush.msra.mxu0 %v3047
      %3179 = vmatpush.msra.mxu0 %v3046
      %3180 = vmatpush.msra.mxu0 %v3045
      %3181 = vmatpush.msra.mxu0 %v3044
      %3182 = vmatpush.msra.mxu0 %v3043
      %3183 = vmatpush.msra.mxu0 %v3042
      %3184 = vmatmul.f32.gmra.mxu0 %v3152
      %v3185 = vpop.f32.mrf.mxu0
      %v3186 = vadd.f32 %v3157, %v3185
      %3187 = vmatmul.f32.gmra.mxu0 %v3153
      %v3188 = vpop.f32.mrf.mxu0
      %v3189 = vadd.f32 %v3157, %v3188
      %3190 = vmatmul.f32.gmra.mxu0 %v3154
      %v3191 = vpop.f32.mrf.mxu0
      %v3192 = vadd.f32 %v3157, %v3191
      %3193 = vmatmul.f32.gmra.mxu0 %v3155
      %v3194 = vpop.f32.mrf.mxu0
      %v3195 = vadd.f32 %v3157, %v3194
      %3196 = vdwg.mxu0
      %3197 = vmatpush.msra.mxu0 0.0
      %3198 = vmatpush.msra.mxu0 0.0
      %3199 = vmatpush.msra.mxu0 0.0
      %3200 = vmatpush.msra.mxu0 0.0
      %3201 = vmatpush.msra.mxu0 0.0
      %3202 = vmatpush.msra.mxu0 0.0
      %3203 = vmatpush.msra.mxu0 0.0
      %3204 = vmatpush.msra.mxu0 0.0
      %3205 = vmatpush.msra.mxu0 0.0
      %3206 = vmatpush.msra.mxu0 0.0
      %3207 = vmatpush.msra.mxu0 0.0
      %3208 = vmatpush.msra.mxu0 0.0
      %3209 = vmatpush.msra.mxu0 %v3061
      %3210 = vmatpush.msra.mxu0 %v3060
      %3211 = vmatpush.msra.mxu0 %v3059
      %3212 = vmatpush.msra.mxu0 %v3058
      %3213 = vmatmul.f32.gmra.mxu0 %v3159
      %v3214 = vpop.f32.mrf.mxu0
      %v3215 = vadd.f32 %v3186, %v3214
      %3216 = vmatmul.f32.gmra.mxu0 %v3161
      %v3217 = vpop.f32.mrf.mxu0
      %v3218 = vadd.f32 %v3189, %v3217
      %3219 = vmatmul.f32.gmra.mxu0 %v3163
      %v3220 = vpop.f32.mrf.mxu0
      %v3221 = vadd.f32 %v3192, %v3220
      %3222 = vmatmul.f32.gmra.mxu0 %v3166
      %v3223 = vpop.f32.mrf.mxu0
      %v3224 = vadd.f32 %v3195, %v3223
      %3225 = vdwg.mxu0
      %v3226 = vtanh.pop %v3215
      %v3227 = vtanh.pop %v3218
      %v3228 = vtanh.pop %v3221
      %v3229 = vtanh.pop %v3224
      %v3230 = vld [vmem:[%s26] sm:$0xff]
      %v3231 = vld [vmem:[%s26 + $0x8] sm:$0xff]
      %v3232 = vld [vmem:[%s26 + $0x10] sm:$0xff]
      %v3233 = vld [vmem:[%s26 + $0x18] sm:$0xff]
      %v3234 = vld [vmem:[%s26 + $0x20] sm:$0xff]
      %v3235 = vld [vmem:[%s26 + $0x28] sm:$0xff]
      %v3236 = vld [vmem:[%s26 + $0x30] sm:$0xff]
      %v3237 = vld [vmem:[%s26 + $0x38] sm:$0xff]
      %v3238 = vld [vmem:[%s26 + $0x40] sm:$0xff]
      %v3239 = vld [vmem:[%s26 + $0x48] sm:$0xff]
      %v3240 = vld [vmem:[%s26 + $0x50] sm:$0xff]
      %v3241 = vld [vmem:[%s26 + $0x58] sm:$0xff]
      %v3242 = vld [vmem:[%s26 + $0x60] sm:$0xff]
      %v3243 = vld [vmem:[%s26 + $0x68] sm:$0xff]
      %v3244 = vld [vmem:[%s26 + $0x70] sm:$0xff]
      %v3245 = vld [vmem:[%s26 + $0x78] sm:$0xff]
      %v3246 = vld [vmem:[%s26 + $0x80] sm:$0xff]
      %v3247 = vld [vmem:[%s26 + $0x88] sm:$0xff]
      %v3248 = vld [vmem:[%s26 + $0x90] sm:$0xff]
      %v3249 = vld [vmem:[%s26 + $0x98] sm:$0xff]
      %v3250 = vld [vmem:[%s23] sm:$0x1]
      %v3255 = vrot.slane %v3226, 6
      %v3256 = vrot.slane %v3227, 6
      %v3257 = vsel %vm2884, %v3255, %v3256
      %v3258 = vrot.slane %v3228, 6
      %v3259 = vsel %vm2884, %v3256, %v3258
      %v3260 = vrot.slane %v3229, 6
      %v3261 = vsel %vm2884, %v3258, %v3260
      %v3266 = vsel %vm2884, 0.0, %v3255
      %v3267 = vrot.slane %v3226, 7
      %v3268 = vrot.slane %v3227, 7
      %v3269 = vsel %vm1600, %v3267, %v3268
      %v3270 = vrot.slane %v3228, 7
      %v3271 = vsel %vm1600, %v3268, %v3270
      %v3272 = vrot.slane %v3229, 7
      %v3273 = vsel %vm1600, %v3270, %v3272
      %v3275 = vsel %vm1600, 0.0, %v3267
      %v3276 = vrot.slane %v3226, 1
      %v3277 = vrot.slane %v3227, 1
      %v3278 = vsel %vm1613, %v3276, %v3277
      %v3279 = vrot.slane %v3228, 1
      %v3280 = vsel %vm1613, %v3277, %v3279
      %v3281 = vrot.slane %v3229, 1
      %v3282 = vsel %vm1613, %v3279, %v3281
      %v3284 = vsel %vm1613, %v3281, 0.0
      %v3285 = vrot.slane %v3226, 2
      %v3286 = vrot.slane %v3227, 2
      %v3287 = vsel %vm2915, %v3285, %v3286
      %v3288 = vrot.slane %v3228, 2
      %v3289 = vsel %vm2915, %v3286, %v3288
      %v3290 = vrot.slane %v3229, 2
      %v3291 = vsel %vm2915, %v3288, %v3290
      %v3293 = vsel %vm2915, %v3290, 0.0
      %3295 = vrot.lane.b32.xlu0 %v3275, 32
      %v3296 = vpop.permute.xlu0 %3295
      %3297 = vrot.lane.b32.xlu0 %v3269, 32
      %v3298 = vpop.permute.xlu0 %3297
      %3299 = vrot.lane.b32.xlu0 %v3271, 32
      %v3300 = vpop.permute.xlu0 %3299
      %3301 = vrot.lane.b32.xlu0 %v3273, 32
      %v3302 = vpop.permute.xlu0 %3301
      %3307 = vrot.lane.b32.xlu0 %v3226, 64
      %v3308 = vpop.permute.xlu0 %3307
      %3309 = vrot.lane.b32.xlu0 %v3227, 64
      %v3310 = vpop.permute.xlu0 %3309
      %3311 = vrot.lane.b32.xlu0 %v3228, 64
      %v3312 = vpop.permute.xlu0 %3311
      %3313 = vrot.lane.b32.xlu0 %v3229, 64
      %v3314 = vpop.permute.xlu0 %3313
      %3320 = vrot.lane.b32.xlu0 %v3278, 96
      %v3321 = vpop.permute.xlu0 %3320
      %3322 = vrot.lane.b32.xlu0 %v3280, 96
      %v3323 = vpop.permute.xlu0 %3322
      %3324 = vrot.lane.b32.xlu0 %v3282, 96
      %v3325 = vpop.permute.xlu0 %3324
      %3326 = vrot.lane.b32.xlu0 %v3284, 96
      %v3327 = vpop.permute.xlu0 %3326
      %v3332 = vsel %vm910, %v3266, %v3296
      %v3333 = vsel %vm910, %v3257, %v3298
      %v3334 = vsel %vm910, %v3259, %v3300
      %v3335 = vsel %vm910, %v3261, %v3302
      %v3336 = vsel %vm1652, %v3332, %v3308
      %v3337 = vsel %vm1652, %v3333, %v3310
      %v3338 = vsel %vm1652, %v3334, %v3312
      %v3339 = vsel %vm1652, %v3335, %v3314
      %v3340 = vsel %vm1660, %v3336, %v3321
      %v3341 = vsel %vm1660, %v3337, %v3323
      %v3342 = vsel %vm1660, %v3338, %v3325
      %v3343 = vsel %vm1660, %v3339, %v3327
      %v3345 = vperm.slane %v3250, 0
      %v3347 = vsel %vm910, %v3287, 0
      %v3349 = vsel %vm910, %v3289, 0
      %v3351 = vsel %vm910, %v3291, 0
      %v3354 = vsel %vm910, %v3293, 0
      %3356 = vmatpush.msra.mxu0 %v3245
      %3357 = vmatpush.msra.mxu0 %v3244
      %3358 = vmatpush.msra.mxu0 %v3243
      %3359 = vmatpush.msra.mxu0 %v3242
      %3360 = vmatpush.msra.mxu0 %v3241
      %3361 = vmatpush.msra.mxu0 %v3240
      %3362 = vmatpush.msra.mxu0 %v3239
      %3363 = vmatpush.msra.mxu0 %v3238
      %3364 = vmatpush.msra.mxu0 %v3237
      %3365 = vmatpush.msra.mxu0 %v3236
      %3366 = vmatpush.msra.mxu0 %v3235
      %3367 = vmatpush.msra.mxu0 %v3234
      %3368 = vmatpush.msra.mxu0 %v3233
      %3369 = vmatpush.msra.mxu0 %v3232
      %3370 = vmatpush.msra.mxu0 %v3231
      %3371 = vmatpush.msra.mxu0 %v3230
      %3372 = vmatmul.f32.gmra.mxu0 %v3340
      %v3373 = vpop.f32.mrf.mxu0
      %v3374 = vadd.f32 %v3345, %v3373
      %3375 = vmatmul.f32.gmra.mxu0 %v3341
      %v3376 = vpop.f32.mrf.mxu0
      %v3377 = vadd.f32 %v3345, %v3376
      %3378 = vmatmul.f32.gmra.mxu0 %v3342
      %v3379 = vpop.f32.mrf.mxu0
      %v3380 = vadd.f32 %v3345, %v3379
      %3381 = vmatmul.f32.gmra.mxu0 %v3343
      %v3382 = vpop.f32.mrf.mxu0
      %v3383 = vadd.f32 %v3345, %v3382
      %3384 = vdwg.mxu0
      %3385 = vmatpush.msra.mxu0 0.0
      %3386 = vmatpush.msra.mxu0 0.0
      %3387 = vmatpush.msra.mxu0 0.0
      %3388 = vmatpush.msra.mxu0 0.0
      %3389 = vmatpush.msra.mxu0 0.0
      %3390 = vmatpush.msra.mxu0 0.0
      %3391 = vmatpush.msra.mxu0 0.0
      %3392 = vmatpush.msra.mxu0 0.0
      %3393 = vmatpush.msra.mxu0 0.0
      %3394 = vmatpush.msra.mxu0 0.0
      %3395 = vmatpush.msra.mxu0 0.0
      %3396 = vmatpush.msra.mxu0 0.0
      %3397 = vmatpush.msra.mxu0 %v3249
      %3398 = vmatpush.msra.mxu0 %v3248
      %3399 = vmatpush.msra.mxu0 %v3247
      %3400 = vmatpush.msra.mxu0 %v3246
      %3401 = vmatmul.f32.gmra.mxu0 %v3347
      %v3402 = vpop.f32.mrf.mxu0
      %v3403 = vadd.f32 %v3374, %v3402
      %3404 = vmatmul.f32.gmra.mxu0 %v3349
      %v3405 = vpop.f32.mrf.mxu0
      %v3406 = vadd.f32 %v3377, %v3405
      %3407 = vmatmul.f32.gmra.mxu0 %v3351
      %v3408 = vpop.f32.mrf.mxu0
      %v3409 = vadd.f32 %v3380, %v3408
      %3410 = vmatmul.f32.gmra.mxu0 %v3354
      %v3411 = vpop.f32.mrf.mxu0
      %v3412 = vadd.f32 %v3383, %v3411
      %3413 = vdwg.mxu0
      %3414 = vst.msk [vmem:[%s887] sm:$0xff] %vm1031, %v2858
      %3415 = vst.msk [vmem:[%s887 + $0x8] sm:$0xff] %vm1031, %v2861
      %3416 = vst.msk [vmem:[%s887 + $0x10] sm:$0xff] %vm1031, %v2864
      %3417 = vst.msk [vmem:[%s887 + $0x18] sm:$0xff] %vm1031, %v2867
      %v3418 = vadd.f32 %v3403, %v2858
      %v3419 = vadd.f32 %v3406, %v2861
      %v3420 = vadd.f32 %v3409, %v2864
      %v3421 = vadd.f32 %v3412, %v2867
      %3422 = vst.msk [vmem:[%s892] sm:$0xff] %vm1031, %v3418
      %3423 = vst.msk [vmem:[%s892 + $0x8] sm:$0xff] %vm1031, %v3419
      %3424 = vst.msk [vmem:[%s892 + $0x10] sm:$0xff] %vm1031, %v3420
      %3425 = vst.msk [vmem:[%s892 + $0x18] sm:$0xff] %vm1031, %v3421
      %p3426 = scmp.lt.s32.totalorder %s40, 1
      %s3427 = scalar_select %p3426, %s40, 1
      %s3428 = smul.addr %s3427, 4
      %s3429 = smul.addr %s3428, 8
      %s3430 = scalar_lea.vmem %s27, %s3429
      %p3431 = scmp.lt.s32.totalorder %s40, 1
      %s3432 = scalar_select %p3431, %s40, 1
      %s3433 = smul.addr %s3432, 4
      %s3434 = smul.addr %s3433, 8
      %s3435 = scalar_lea.vmem %s28, %s3434
      // Predicated region
      $region129: #{fastspeech2_forward.3} parent=127 // pred_check
        %p3436 = pneg %p640
      $region130: #{fastspeech2_forward.3} parent=127 // pred_check_branch
        %3438 = sbr.rel (%p3436) target = $region132
      $region131: #{fastspeech2_forward.3} parent=127 // pred_region
        _
      $region132: #{fastspeech2_forward.3} parent=127 // pred_fallthru
        _
      // Predicated region
      $region133: #{fastspeech2_forward.3} parent=127 // pred_check
        %p3439 = pneg %p666
      $region134: #{fastspeech2_forward.3} parent=127 // pred_check_branch
        %3441 = sbr.rel (%p3439) target = $region136
      $region135: #{fastspeech2_forward.3} parent=127 // pred_region
        _
      $region136: #{fastspeech2_forward.3} parent=127 // pred_fallthru
        _
    $region128: #{fastspeech2_forward.3} parent=5 // pred_fallthru
      _
    %p3442 = scmp.le.s32.totalorder 2, %s35
    // Predicated region
    $region137: #{fastspeech2_forward.3} parent=5 // pred_check
      %p3443 = pneg %p3442
    $region138: #{fastspeech2_forward.3} parent=5 // pred_check_branch
      %3445 = sbr.rel (%p3443) target = $region140
    $region139: #{fastspeech2_forward.3} parent=5 // pred_region
      %s3446 = ssub.s32 %s35, 2
      // Predicated region
      $region141: #{fastspeech2_forward.3} parent=139 // pred_check
        %p3447 = pneg %p646
      $region142: #{fastspeech2_forward.3} parent=139 // pred_check_branch
        %3449 = sbr.rel (%p3447) target = $region144
      $region143: #{fastspeech2_forward.3} parent=139 // pred_region
        %p3450 = scmp.lt.s32.totalorder %s41, 1
        %s3451 = scalar_select %p3450, %s41, 1
        %s3452 = smul.addr %s3451, 4
        %s3453 = smul.addr %s3452, 8
        %s3454 = scalar_lea.vmem %s27, %s3453
      $region144: #{fastspeech2_forward.3} parent=139 // pred_fallthru
        _
      // Predicated region
      $region145: #{fastspeech2_forward.3} parent=139 // pred_check
        %p3455 = pneg %p672
      $region146: #{fastspeech2_forward.3} parent=139 // pred_check_branch
        %3457 = sbr.rel (%p3455) target = $region148
      $region147: #{fastspeech2_forward.3} parent=139 // pred_region
        %p3458 = scmp.lt.s32.totalorder %s41, 1
        %s3459 = scalar_select %p3458, %s41, 1
        %s3460 = smul.addr %s3459, 4
        %s3461 = smul.addr %s3460, 8
        %s3462 = scalar_lea.vmem %s28, %s3461
      $region148: #{fastspeech2_forward.3} parent=139 // pred_fallthru
        _
    $region140: #{fastspeech2_forward.3} parent=5 // pred_fallthru
      _
  $region6: #{fastspeech2_forward.3} parent=0 // loop_footer
    %s39 = sadd.s32 1, %s35
  $region7: #{fastspeech2_forward.3} parent=0 // loop_footer_branch
    %34 = sbr.rel target = $region3
  $region8: #{fastspeech2_forward.3} parent=0 // loop_exit
    _

</llo_original>
